<compile_context>
chip_gen: v7x
topology: tpu7x:2x2x1
jax: 0.10.0
libtpu: 0.0.40
codegen_flags: <defaults>
</compile_context>

<pallas_src>
import numpy as np
import jax
import jax.numpy as jnp
from jax.experimental import pallas as pl
from jax.experimental.pallas import tpu as pltpu

# ----- STOI constants (pystoi) ------------------------------------------------
FS = 10000          # STOI internal sample rate; loss_stoi built with sample_rate=FS
N_FRAME = 256       # analysis window length at 10 kHz
NFFT = 512
NFREQ = NFFT // 2   # 256 -- Nyquist bin dropped (unused by the OBM, asserted)
NUMBAND = 15
NUMBAND_PAD = 16    # lane-packed output width (15 bands + frame energy)
MINFREQ = 150
N_SEG = 30          # frames per intermediate-intelligibility segment
BETA = -15.0        # lower SDR bound (dB)
DYN_RANGE = 40.0    # VAD dynamic range (dB)
EPS = 1e-8
HOP = N_FRAME // 2
TM = 256            # frame-row tile for kernel 1 (multiple of 128/256, all gens)


# ----- deterministic parameter construction (same math as pystoi.utils) -------
def thirdoct(fs, nfft, num_bands, min_freq):
    f = np.linspace(0, fs, nfft + 1)[: nfft // 2 + 1]
    k = np.arange(num_bands, dtype=np.float64)
    freq_low = min_freq * 2.0 ** ((2 * k - 1) / 6.0)
    freq_high = min_freq * 2.0 ** ((2 * k + 1) / 6.0)
    obm = np.zeros((num_bands, len(f)), dtype=np.float64)
    for i in range(num_bands):
        fl_ii = int(np.argmin((f - freq_low[i]) ** 2))
        fh_ii = int(np.argmin((f - freq_high[i]) ** 2))
        obm[i, fl_ii:fh_ii] = 1.0
    return obm


def make_constants():
    win = np.hanning(N_FRAME + 2)[1:-1].astype(np.float32).reshape(1, N_FRAME)
    n = np.arange(N_FRAME)[:, None].astype(np.float64)
    kk = np.arange(NFREQ)[None, :].astype(np.float64)        # bins 0..255 (no Nyquist)
    ang = 2.0 * np.pi * n * kk / NFFT
    dft_cos = np.cos(ang)
    dft_sin = -np.sin(ang)
    # fused cos|sin matrix -> single (256, 512) MXU pass
    dft_cs = np.concatenate([dft_cos, dft_sin], axis=1).astype(np.float32)
    obm = thirdoct(FS, NFFT, NUMBAND, MINFREQ)                # (15, 257)
    # Guard the Nyquist-bin drop: no 1/3-octave band may touch bin 256.
    assert np.all(obm[:, NFREQ:] == 0.0), "Nyquist bin must be unused by the OBM"
    obm_t = np.zeros((NFREQ, NUMBAND_PAD), dtype=np.float32)  # pad bands 15 -> 16
    obm_t[:, :NUMBAND] = obm[:, :NFREQ].T
    return jnp.asarray(win), jnp.asarray(dft_cs), jnp.asarray(obm_t)


# ----- Pallas kernel 1: window + fused real-DFT + power + OBM + energy --------
def _spec_obm_kernel(frames_ref, win_ref, dftcs_ref, obmt_ref, out_ref):
    xw = frames_ref[...] * win_ref[...]                               # (TM, 256)
    # TODO(synk): bf16 inputs with f32 accumulation would ~3x the MXU rate on
    # v6e/v7x; kept f32 pending a numerical check against torch_stoi.
    reim = jnp.dot(xw, dftcs_ref[...],
                   preferred_element_type=jnp.float32)                # (TM, 512)
    power = reim[:, :NFREQ] ** 2 + reim[:, NFREQ:] ** 2               # (TM, 256)
    tob = jnp.sqrt(jnp.dot(power, obmt_ref[...],
                           preferred_element_type=jnp.float32))       # (TM, 16)
    en = jnp.sum(xw * xw, axis=-1, keepdims=True)                     # (TM, 1)
    # lane-packed output: cols 0..14 = band envelopes, col 15 = frame energy
    lane = jax.lax.broadcasted_iota(jnp.int32, out_ref.shape, 1)
    out_ref[...] = jnp.where(lane == NUMBAND, en, tob)


def spectro_obm(frames, win, dft_cs, obm_t):
    r_pad = frames.shape[0]                                           # multiple of TM
    return pl.pallas_call(
        _spec_obm_kernel,
        out_shape=jax.ShapeDtypeStruct((r_pad, NUMBAND_PAD), jnp.float32),
        grid=(r_pad // TM,),
        in_specs=[
            pl.BlockSpec((TM, N_FRAME), lambda i: (i, 0)),
            pl.BlockSpec((1, N_FRAME), lambda i: (0, 0)),
            pl.BlockSpec((N_FRAME, 2 * NFREQ), lambda i: (0, 0)),
            pl.BlockSpec((NFREQ, NUMBAND_PAD), lambda i: (0, 0)),
        ],
        out_specs=pl.BlockSpec((TM, NUMBAND_PAD), lambda i: (i, 0)),
        compiler_params=pltpu.CompilerParams(
            dimension_semantics=("parallel",)),
    )(frames, win, dft_cs, obm_t)


# ----- Pallas kernel 2: in-kernel 30-frame segmentation + correlations --------
def _seg_corr_kernel(x_ref, y_ref, m_ref, rho_ref):
    # x_ref/y_ref: (NUMBAND, M) band envelopes; m_ref: (1, M) VAD mask (0/1)
    # rho_ref: (NUMBAND, C) with C = M - N_SEG + 1
    c = rho_ref.shape[-1]
    x = x_ref[...]
    y = y_ref[...]
    m = m_ref[...]

    # pass 1: sliding masked sums over the 30-frame window (all segments at once)
    msum = jnp.zeros(m[:, 0:c].shape, jnp.float32)
    smx = jnp.zeros(x[:, 0:c].shape, jnp.float32)
    smx2 = jnp.zeros_like(smx)
    smy2 = jnp.zeros_like(smx)
    for j in range(N_SEG):
        mj = m[:, j:j + c]
        xj = x[:, j:j + c]
        yj = y[:, j:j + c]
        msum = msum + mj
        smx = smx + mj * xj
        smx2 = smx2 + mj * xj * xj
        smy2 = smy2 + mj * yj * yj

    nx = jnp.sqrt(smx2)                          # ||x*m|| per segment (m in {0,1})
    ny = jnp.sqrt(smy2)
    alpha = nx / (ny + EPS)                      # energy match
    clip_c = 10.0 ** (-BETA / 20.0)
    one_p_c = 1.0 + clip_c
    msum_eps = msum + EPS
    mu_x = smx / msum_eps

    # pass 2: masked mean of the SDR-clipped estimate
    smyp = jnp.zeros_like(smx)
    for j in range(N_SEG):
        mj = m[:, j:j + c]
        xj = x[:, j:j + c]
        yj = y[:, j:j + c]
        ypj = jnp.minimum(yj * alpha, xj * one_p_c)
        smyp = smyp + mj * ypj
    mu_y = smyp / msum_eps

    # pass 3: centered masked second moments + cross term
    num = jnp.zeros_like(smx)
    vx = jnp.zeros_like(smx)
    vy = jnp.zeros_like(smx)
    for j in range(N_SEG):
        mj = m[:, j:j + c]
        xj = x[:, j:j + c]
        yj = y[:, j:j + c]
        ypj = jnp.minimum(yj * alpha, xj * one_p_c)
        dx = xj - mu_x
        dy = ypj - mu_y
        num = num + mj * dx * dy
        vx = vx + mj * dx * dx
        vy = vy + mj * dy * dy

    rho_ref[...] = num / ((jnp.sqrt(vx) + EPS) * (jnp.sqrt(vy) + EPS))


def seg_corr(x_tob, y_tob, mask):
    b, nb, m = x_tob.shape
    c = m - N_SEG + 1
    return pl.pallas_call(
        _seg_corr_kernel,
        out_shape=jax.ShapeDtypeStruct((b, nb, c), jnp.float32),
        grid=(b,),
        in_specs=[
            pl.BlockSpec((None, nb, m), lambda i: (i, 0, 0)),
            pl.BlockSpec((None, nb, m), lambda i: (i, 0, 0)),
            pl.BlockSpec((None, 1, m), lambda i: (i, 0, 0)),
        ],
        out_specs=pl.BlockSpec((None, nb, c), lambda i: (i, 0, 0)),
        compiler_params=pltpu.CompilerParams(
            dimension_semantics=("parallel",)),
    )(x_tob, y_tob, mask)


# ----- glue -------------------------------------------------------------------
def _frame_signal(x, n_frames):
    """hop = win/2 framing via two half-window strips (no XLA gather)."""
    b = x.shape[0]
    n_blocks = n_frames + 1
    blk = x[:, :n_blocks * HOP].reshape(b, n_blocks, HOP)
    frames = jnp.concatenate([blk[:, :n_frames, :], blk[:, 1:, :]], axis=-1)
    return frames.reshape(b * n_frames, N_FRAME)


def loss_stoi_forward(est, clean, consts):
    win, dft_cs, obm_t = consts

    # loss_stoi.forward: truncate to common length, then NegSTOI(...).mean()
    data_len = min(est.shape[-1], clean.shape[-1])
    est = est[..., :data_len]
    clean = clean[..., :data_len]
    # NegSTOILoss packs any leading dims into batch
    est = est.reshape(-1, data_len)
    clean = clean.reshape(-1, data_len)
    B, T = est.shape

    # framing (win=256, hop=128; edge frames handled as in torch_stoi)
    n_frames = (T - N_FRAME) // HOP
    assert n_frames >= N_SEG, "signal too short for STOI (needs >= 30 frames)"
    M = n_frames

    clean_f = _frame_signal(clean, M)
    est_f = _frame_signal(est, M)

    # one pallas_call for both signals (constants DMA'd once), rows padded to TM
    frames_all = jnp.concatenate([clean_f, est_f], axis=0)            # (2*B*M, 256)
    R = frames_all.shape[0]
    R_pad = ((R + TM - 1) // TM) * TM
    if R_pad != R:
        frames_all = jnp.pad(frames_all, ((0, R_pad - R), (0, 0)))

    spec = spectro_obm(frames_all, win, dft_cs, obm_t)[:R]            # (2*B*M, 16)
    tob = spec[:, :NUMBAND]
    x_tob = tob[:B * M].reshape(B, M, NUMBAND).transpose(0, 2, 1)     # (B, 15, M)
    y_tob = tob[B * M:].reshape(B, M, NUMBAND).transpose(0, 2, 1)
    x_en = spec[:B * M, NUMBAND].reshape(B, M)                        # clean frame energy

    # VAD mask: clean frames within DYN_RANGE dB of the loudest frame
    e_db = 20.0 * jnp.log10(jnp.sqrt(x_en) + EPS)
    mask = (e_db > (jnp.max(e_db, axis=1, keepdims=True) - DYN_RANGE))
    mask = mask.astype(jnp.float32)[:, None, :]                       # (B, 1, M)

    # Pallas: in-kernel 30-frame segmentation + band correlations
    rho = seg_corr(x_tob, y_tob, mask)                                # (B, 15, C)

    d = jnp.mean(rho, axis=(1, 2))                                    # (B,)
    # TODO(synk): torch_stoi rescales the denominator by the fraction of
    # VAD-active segments; for fully-voiced inputs the two are identical.
    neg_stoi = -d                                                     # NegSTOILoss, (B,)
    return jnp.mean(neg_stoi)                                         # loss_stoi: .mean()


if __name__ == "__main__":
    key = jax.random.PRNGKey(0)
    k1, k2 = jax.random.split(key)
    # small-but-valid shapes: B=2 utterances of 4608 samples @ 10 kHz
    # -> 34 STFT frames (STOI needs >= 30), 5 intelligibility segments.
    B, T = 2, 4608
    clean = jax.random.normal(k1, (B, T), dtype=jnp.float32)
    est = clean + 0.3 * jax.random.normal(k2, (B, T), dtype=jnp.float32)

    consts = make_constants()
    fwd = jax.jit(lambda e, c: loss_stoi_forward(e, c, consts))
    out = fwd(est, clean)
    jax.block_until_ready(out)
    assert out.shape == () and out.dtype == jnp.float32
    print("KERNEL_OK")
</pallas_src>

<mosaic_0001>
module attributes {stable_mosaic.version = 11 : i64} {
  func.func @_spec_obm_kernel(%arg0: i32, %arg1: memref<256x256xf32, #tpu.memory_space<vmem>>, %arg2: memref<1x256xf32, #tpu.memory_space<vmem>>, %arg3: memref<256x512xf32, #tpu.memory_space<vmem>>, %arg4: memref<256x16xf32, #tpu.memory_space<vmem>>, %arg5: memref<256x16xf32, #tpu.memory_space<vmem>>) attributes {dimension_semantics = [#tpu.dimension_semantics<parallel>], iteration_bounds = array<i64: 1>, scalar_prefetch = 0 : i64, scratch_operands = 0 : i64, tpu.core_type = #tpu.core_type<tc>, window_params = [{transform_indices = @transform_0, window_bounds = array<i64: 256, 256>}, {pipeline_mode = #tpu.pipeline_mode<synchronous>, transform_indices = @transform_1, window_bounds = array<i64: 1, 256>}, {pipeline_mode = #tpu.pipeline_mode<synchronous>, transform_indices = @transform_2, window_bounds = array<i64: 256, 512>}, {pipeline_mode = #tpu.pipeline_mode<synchronous>, transform_indices = @transform_3, window_bounds = array<i64: 256, 16>}, {transform_indices = @transform_4, window_bounds = array<i64: 256, 16>}]} {
    %c0 = arith.constant 0 : index
    %c0_0 = arith.constant 0 : index
    %0 = vector.load %arg1[%c0, %c0_0] : memref<256x256xf32, #tpu.memory_space<vmem>>, vector<256x256xf32>
    %c0_1 = arith.constant 0 : index
    %c0_2 = arith.constant 0 : index
    %1 = vector.load %arg2[%c0_1, %c0_2] : memref<1x256xf32, #tpu.memory_space<vmem>>, vector<1x256xf32>
    %2 = vector.broadcast %1 : vector<1x256xf32> to vector<256x256xf32>
    %3 = arith.mulf %0, %2 : vector<256x256xf32>
    %c0_3 = arith.constant 0 : index
    %c0_4 = arith.constant 0 : index
    %4 = vector.load %arg3[%c0_3, %c0_4] : memref<256x512xf32, #tpu.memory_space<vmem>>, vector<256x512xf32>
    %cst = arith.constant dense<0.000000e+00> : vector<256x512xf32>
    %5 = tpu.matmul %3, %4, %cst {dimension_numbers = #tpu.dot_dimension_numbers<[1], [0], [0], [1], [0, 0, 1, 1], [], []>} : vector<256x256xf32>, vector<256x512xf32>, vector<256x512xf32> -> vector<256x512xf32>
    %6 = vector.extract_strided_slice %5 {offsets = [0, 0], sizes = [256, 256], strides = [1, 1]} : vector<256x512xf32> to vector<256x256xf32>
    %7 = arith.mulf %6, %6 : vector<256x256xf32>
    %8 = vector.extract_strided_slice %5 {offsets = [0, 256], sizes = [256, 256], strides = [1, 1]} : vector<256x512xf32> to vector<256x256xf32>
    %9 = arith.mulf %8, %8 : vector<256x256xf32>
    %10 = arith.addf %7, %9 : vector<256x256xf32>
    %c0_5 = arith.constant 0 : index
    %c0_6 = arith.constant 0 : index
    %11 = vector.load %arg4[%c0_5, %c0_6] : memref<256x16xf32, #tpu.memory_space<vmem>>, vector<256x16xf32>
    %cst_7 = arith.constant dense<0.000000e+00> : vector<256x16xf32>
    %12 = tpu.matmul %10, %11, %cst_7 {dimension_numbers = #tpu.dot_dimension_numbers<[1], [0], [0], [1], [0, 0, 1, 1], [], []>} : vector<256x256xf32>, vector<256x16xf32>, vector<256x16xf32> -> vector<256x16xf32>
    %13 = math.sqrt %12 : vector<256x16xf32>
    %14 = arith.mulf %3, %3 : vector<256x256xf32>
    %cst_8 = arith.constant dense<0.000000e+00> : vector<256xf32>
    %15 = vector.multi_reduction <add>, %14, %cst_8 [1] : vector<256x256xf32> to vector<256xf32>
    %16 = vector.shape_cast %15 : vector<256xf32> to vector<256x1xf32>
    %17 = tpu.iota {dimensions = array<i32: 1>} : vector<256x16xi32>
    %c15_i32 = arith.constant 15 : i32
    %18 = vector.broadcast %c15_i32 : i32 to vector<256x16xi32>
    %19 = arith.cmpi eq, %17, %18 : vector<256x16xi32>
    %20 = vector.shape_cast %16 : vector<256x1xf32> to vector<256x1xf32>
    %21 = vector.broadcast %20 : vector<256x1xf32> to vector<256x16xf32>
    %22 = arith.select %19, %21, %13 : vector<256x16xi1>, vector<256x16xf32>
    %c0_9 = arith.constant 0 : index
    %c0_10 = arith.constant 0 : index
    %23 = vector.load %arg5[%c0_9, %c0_10] : memref<256x16xf32, #tpu.memory_space<vmem>>, vector<256x16xf32>
    tpu.vector_store %arg5[%c0_9, %c0_10], %22 {strides = array<i32>} : memref<256x16xf32, #tpu.memory_space<vmem>>, vector<256x16xf32>,
    return
  }
  func.func @transform_0(%arg0: i32) -> (i32, i32) {
    %c0_i32 = arith.constant 0 : i32
    %c0_i32_0 = arith.constant 0 : i32
    return %arg0, %c0_i32 : i32, i32
  }
  func.func @transform_1(%arg0: i32) -> (i32, i32) {
    %c0_i32 = arith.constant 0 : i32
    %c0_i32_0 = arith.constant 0 : i32
    %c0_i32_1 = arith.constant 0 : i32
    return %c0_i32, %c0_i32_0 : i32, i32
  }
  func.func @transform_2(%arg0: i32) -> (i32, i32) {
    %c0_i32 = arith.constant 0 : i32
    %c0_i32_0 = arith.constant 0 : i32
    %c0_i32_1 = arith.constant 0 : i32
    return %c0_i32, %c0_i32_0 : i32, i32
  }
  func.func @transform_3(%arg0: i32) -> (i32, i32) {
    %c0_i32 = arith.constant 0 : i32
    %c0_i32_0 = arith.constant 0 : i32
    %c0_i32_1 = arith.constant 0 : i32
    return %c0_i32, %c0_i32_0 : i32, i32
  }
  func.func @transform_4(%arg0: i32) -> (i32, i32) {
    %c0_i32 = arith.constant 0 : i32
    %c0_i32_0 = arith.constant 0 : i32
    return %arg0, %c0_i32 : i32, i32
  }
}

module attributes {stable_mosaic.version = 11 : i64} {
  func.func @_seg_corr_kernel(%arg0: i32, %arg1: memref<1x15x34xf32, #tpu.memory_space<vmem>>, %arg2: memref<1x15x34xf32, #tpu.memory_space<vmem>>, %arg3: memref<1x1x34xf32, #tpu.memory_space<vmem>>, %arg4: memref<1x15x5xf32, #tpu.memory_space<vmem>>) attributes {dimension_semantics = [#tpu.dimension_semantics<parallel>], iteration_bounds = array<i64: 2>, scalar_prefetch = 0 : i64, scratch_operands = 0 : i64, tpu.core_type = #tpu.core_type<tc>, window_params = [{transform_indices = @transform_0, window_bounds = array<i64: 1, 15, 34>}, {transform_indices = @transform_1, window_bounds = array<i64: 1, 15, 34>}, {transform_indices = @transform_2, window_bounds = array<i64: 1, 1, 34>}, {transform_indices = @transform_3, window_bounds = array<i64: 1, 15, 5>}]} {
    %c0 = arith.constant 0 : index
    %c0_0 = arith.constant 0 : index
    %c0_1 = arith.constant 0 : index
    %0 = vector.load %arg1[%c0, %c0_0, %c0_1] : memref<1x15x34xf32, #tpu.memory_space<vmem>>, vector<1x15x34xf32>
    %1 = vector.shape_cast %0 : vector<1x15x34xf32> to vector<15x34xf32>
    %c0_2 = arith.constant 0 : index
    %c0_3 = arith.constant 0 : index
    %c0_4 = arith.constant 0 : index
    %2 = vector.load %arg2[%c0_2, %c0_3, %c0_4] : memref<1x15x34xf32, #tpu.memory_space<vmem>>, vector<1x15x34xf32>
    %3 = vector.shape_cast %2 : vector<1x15x34xf32> to vector<15x34xf32>
    %c0_5 = arith.constant 0 : index
    %c0_6 = arith.constant 0 : index
    %c0_7 = arith.constant 0 : index
    %4 = vector.load %arg3[%c0_5, %c0_6, %c0_7] : memref<1x1x34xf32, #tpu.memory_space<vmem>>, vector<1x1x34xf32>
    %5 = vector.shape_cast %4 : vector<1x1x34xf32> to vector<1x34xf32>
    %cst = arith.constant 0.000000e+00 : f32
    %6 = vector.broadcast %cst : f32 to vector<1x5xf32>
    %cst_8 = arith.constant 0.000000e+00 : f32
    %7 = vector.broadcast %cst_8 : f32 to vector<15x5xf32>
    %cst_9 = arith.constant 0.000000e+00 : f32
    %8 = vector.broadcast %cst_9 : f32 to vector<15x5xf32>
    %cst_10 = arith.constant 0.000000e+00 : f32
    %9 = vector.broadcast %cst_10 : f32 to vector<15x5xf32>
    %10 = vector.extract_strided_slice %5 {offsets = [0, 0], sizes = [1, 5], strides = [1, 1]} : vector<1x34xf32> to vector<1x5xf32>
    %11 = vector.extract_strided_slice %1 {offsets = [0, 0], sizes = [15, 5], strides = [1, 1]} : vector<15x34xf32> to vector<15x5xf32>
    %12 = vector.extract_strided_slice %3 {offsets = [0, 0], sizes = [15, 5], strides = [1, 1]} : vector<15x34xf32> to vector<15x5xf32>
    %13 = arith.addf %6, %10 : vector<1x5xf32>
    %14 = vector.broadcast %10 : vector<1x5xf32> to vector<15x5xf32>
    %15 = arith.mulf %14, %11 : vector<15x5xf32>
    %16 = arith.addf %7, %15 : vector<15x5xf32>
    %17 = vector.broadcast %10 : vector<1x5xf32> to vector<15x5xf32>
    %18 = arith.mulf %17, %11 : vector<15x5xf32>
    %19 = arith.mulf %18, %11 : vector<15x5xf32>
    %20 = arith.addf %8, %19 : vector<15x5xf32>
    %21 = vector.broadcast %10 : vector<1x5xf32> to vector<15x5xf32>
    %22 = arith.mulf %21, %12 : vector<15x5xf32>
    %23 = arith.mulf %22, %12 : vector<15x5xf32>
    %24 = arith.addf %9, %23 : vector<15x5xf32>
    %25 = vector.extract_strided_slice %5 {offsets = [0, 1], sizes = [1, 5], strides = [1, 1]} : vector<1x34xf32> to vector<1x5xf32>
    %26 = vector.extract_strided_slice %1 {offsets = [0, 1], sizes = [15, 5], strides = [1, 1]} : vector<15x34xf32> to vector<15x5xf32>
    %27 = vector.extract_strided_slice %3 {offsets = [0, 1], sizes = [15, 5], strides = [1, 1]} : vector<15x34xf32> to vector<15x5xf32>
    %28 = arith.addf %13, %25 : vector<1x5xf32>
    %29 = vector.broadcast %25 : vector<1x5xf32> to vector<15x5xf32>
    %30 = arith.mulf %29, %26 : vector<15x5xf32>
    %31 = arith.addf %16, %30 : vector<15x5xf32>
    %32 = vector.broadcast %25 : vector<1x5xf32> to vector<15x5xf32>
    %33 = arith.mulf %32, %26 : vector<15x5xf32>
    %34 = arith.mulf %33, %26 : vector<15x5xf32>
    %35 = arith.addf %20, %34 : vector<15x5xf32>
    %36 = vector.broadcast %25 : vector<1x5xf32> to vector<15x5xf32>
    %37 = arith.mulf %36, %27 : vector<15x5xf32>
    %38 = arith.mulf %37, %27 : vector<15x5xf32>
    %39 = arith.addf %24, %38 : vector<15x5xf32>
    %40 = vector.extract_strided_slice %5 {offsets = [0, 2], sizes = [1, 5], strides = [1, 1]} : vector<1x34xf32> to vector<1x5xf32>
    %41 = vector.extract_strided_slice %1 {offsets = [0, 2], sizes = [15, 5], strides = [1, 1]} : vector<15x34xf32> to vector<15x5xf32>
    %42 = vector.extract_strided_slice %3 {offsets = [0, 2], sizes = [15, 5], strides = [1, 1]} : vector<15x34xf32> to vector<15x5xf32>
    %43 = arith.addf %28, %40 : vector<1x5xf32>
    %44 = vector.broadcast %40 : vector<1x5xf32> to vector<15x5xf32>
    %45 = arith.mulf %44, %41 : vector<15x5xf32>
    %46 = arith.addf %31, %45 : vector<15x5xf32>
    %47 = vector.broadcast %40 : vector<1x5xf32> to vector<15x5xf32>
    %48 = arith.mulf %47, %41 : vector<15x5xf32>
    %49 = arith.mulf %48, %41 : vector<15x5xf32>
    %50 = arith.addf %35, %49 : vector<15x5xf32>
    %51 = vector.broadcast %40 : vector<1x5xf32> to vector<15x5xf32>
    %52 = arith.mulf %51, %42 : vector<15x5xf32>
    %53 = arith.mulf %52, %42 : vector<15x5xf32>
    %54 = arith.addf %39, %53 : vector<15x5xf32>
    %55 = vector.extract_strided_slice %5 {offsets = [0, 3], sizes = [1, 5], strides = [1, 1]} : vector<1x34xf32> to vector<1x5xf32>
    %56 = vector.extract_strided_slice %1 {offsets = [0, 3], sizes = [15, 5], strides = [1, 1]} : vector<15x34xf32> to vector<15x5xf32>
    %57 = vector.extract_strided_slice %3 {offsets = [0, 3], sizes = [15, 5], strides = [1, 1]} : vector<15x34xf32> to vector<15x5xf32>
    %58 = arith.addf %43, %55 : vector<1x5xf32>
    %59 = vector.broadcast %55 : vector<1x5xf32> to vector<15x5xf32>
    %60 = arith.mulf %59, %56 : vector<15x5xf32>
    %61 = arith.addf %46, %60 : vector<15x5xf32>
    %62 = vector.broadcast %55 : vector<1x5xf32> to vector<15x5xf32>
    %63 = arith.mulf %62, %56 : vector<15x5xf32>
    %64 = arith.mulf %63, %56 : vector<15x5xf32>
    %65 = arith.addf %50, %64 : vector<15x5xf32>
    %66 = vector.broadcast %55 : vector<1x5xf32> to vector<15x5xf32>
    %67 = arith.mulf %66, %57 : vector<15x5xf32>
    %68 = arith.mulf %67, %57 : vector<15x5xf32>
    %69 = arith.addf %54, %68 : vector<15x5xf32>
    %70 = vector.extract_strided_slice %5 {offsets = [0, 4], sizes = [1, 5], strides = [1, 1]} : vector<1x34xf32> to vector<1x5xf32>
    %71 = vector.extract_strided_slice %1 {offsets = [0, 4], sizes = [15, 5], strides = [1, 1]} : vector<15x34xf32> to vector<15x5xf32>
    %72 = vector.extract_strided_slice %3 {offsets = [0, 4], sizes = [15, 5], strides = [1, 1]} : vector<15x34xf32> to vector<15x5xf32>
    %73 = arith.addf %58, %70 : vector<1x5xf32>
    %74 = vector.broadcast %70 : vector<1x5xf32> to vector<15x5xf32>
    %75 = arith.mulf %74, %71 : vector<15x5xf32>
    %76 = arith.addf %61, %75 : vector<15x5xf32>
    %77 = vector.broadcast %70 : vector<1x5xf32> to vector<15x5xf32>
    %78 = arith.mulf %77, %71 : vector<15x5xf32>
    %79 = arith.mulf %78, %71 : vector<15x5xf32>
    %80 = arith.addf %65, %79 : vector<15x5xf32>
    %81 = vector.broadcast %70 : vector<1x5xf32> to vector<15x5xf32>
    %82 = arith.mulf %81, %72 : vector<15x5xf32>
    %83 = arith.mulf %82, %72 : vector<15x5xf32>
    %84 = arith.addf %69, %83 : vector<15x5xf32>
    %85 = vector.extract_strided_slice %5 {offsets = [0, 5], sizes = [1, 5], strides = [1, 1]} : vector<1x34xf32> to vector<1x5xf32>
    %86 = vector.extract_strided_slice %1 {offsets = [0, 5], sizes = [15, 5], strides = [1, 1]} : vector<15x34xf32> to vector<15x5xf32>
    %87 = vector.extract_strided_slice %3 {offsets = [0, 5], sizes = [15, 5], strides = [1, 1]} : vector<15x34xf32> to vector<15x5xf32>
    %88 = arith.addf %73, %85 : vector<1x5xf32>
    %89 = vector.broadcast %85 : vector<1x5xf32> to vector<15x5xf32>
    %90 = arith.mulf %89, %86 : vector<15x5xf32>
    %91 = arith.addf %76, %90 : vector<15x5xf32>
    %92 = vector.broadcast %85 : vector<1x5xf32> to vector<15x5xf32>
    %93 = arith.mulf %92, %86 : vector<15x5xf32>
    %94 = arith.mulf %93, %86 : vector<15x5xf32>
    %95 = arith.addf %80, %94 : vector<15x5xf32>
    %96 = vector.broadcast %85 : vector<1x5xf32> to vector<15x5xf32>
    %97 = arith.mulf %96, %87 : vector<15x5xf32>
    %98 = arith.mulf %97, %87 : vector<15x5xf32>
    %99 = arith.addf %84, %98 : vector<15x5xf32>
    %100 = vector.extract_strided_slice %5 {offsets = [0, 6], sizes = [1, 5], strides = [1, 1]} : vector<1x34xf32> to vector<1x5xf32>
    %101 = vector.extract_strided_slice %1 {offsets = [0, 6], sizes = [15, 5], strides = [1, 1]} : vector<15x34xf32> to vector<15x5xf32>
    %102 = vector.extract_strided_slice %3 {offsets = [0, 6], sizes = [15, 5], strides = [1, 1]} : vector<15x34xf32> to vector<15x5xf32>
    %103 = arith.addf %88, %100 : vector<1x5xf32>
    %104 = vector.broadcast %100 : vector<1x5xf32> to vector<15x5xf32>
    %105 = arith.mulf %104, %101 : vector<15x5xf32>
    %106 = arith.addf %91, %105 : vector<15x5xf32>
    %107 = vector.broadcast %100 : vector<1x5xf32> to vector<15x5xf32>
    %108 = arith.mulf %107, %101 : vector<15x5xf32>
    %109 = arith.mulf %108, %101 : vector<15x5xf32>
    %110 = arith.addf %95, %109 : vector<15x5xf32>
    %111 = vector.broadcast %100 : vector<1x5xf32> to vector<15x5xf32>
    %112 = arith.mulf %111, %102 : vector<15x5xf32>
    %113 = arith.mulf %112, %102 : vector<15x5xf32>
    %114 = arith.addf %99, %113 : vector<15x5xf32>
    %115 = vector.extract_strided_slice %5 {offsets = [0, 7], sizes = [1, 5], strides = [1, 1]} : vector<1x34xf32> to vector<1x5xf32>
    %116 = vector.extract_strided_slice %1 {offsets = [0, 7], sizes = [15, 5], strides = [1, 1]} : vector<15x34xf32> to vector<15x5xf32>
    %117 = vector.extract_strided_slice %3 {offsets = [0, 7], sizes = [15, 5], strides = [1, 1]} : vector<15x34xf32> to vector<15x5xf32>
    %118 = arith.addf %103, %115 : vector<1x5xf32>
    %119 = vector.broadcast %115 : vector<1x5xf32> to vector<15x5xf32>
    %120 = arith.mulf %119, %116 : vector<15x5xf32>
    %121 = arith.addf %106, %120 : vector<15x5xf32>
    %122 = vector.broadcast %115 : vector<1x5xf32> to vector<15x5xf32>
    %123 = arith.mulf %122, %116 : vector<15x5xf32>
    %124 = arith.mulf %123, %116 : vector<15x5xf32>
    %125 = arith.addf %110, %124 : vector<15x5xf32>
    %126 = vector.broadcast %115 : vector<1x5xf32> to vector<15x5xf32>
    %127 = arith.mulf %126, %117 : vector<15x5xf32>
    %128 = arith.mulf %127, %117 : vector<15x5xf32>
    %129 = arith.addf %114, %128 : vector<15x5xf32>
    %130 = vector.extract_strided_slice %5 {offsets = [0, 8], sizes = [1, 5], strides = [1, 1]} : vector<1x34xf32> to vector<1x5xf32>
    %131 = vector.extract_strided_slice %1 {offsets = [0, 8], sizes = [15, 5], strides = [1, 1]} : vector<15x34xf32> to vector<15x5xf32>
    %132 = vector.extract_strided_slice %3 {offsets = [0, 8], sizes = [15, 5], strides = [1, 1]} : vector<15x34xf32> to vector<15x5xf32>
    %133 = arith.addf %118, %130 : vector<1x5xf32>
    %134 = vector.broadcast %130 : vector<1x5xf32> to vector<15x5xf32>
    %135 = arith.mulf %134, %131 : vector<15x5xf32>
    %136 = arith.addf %121, %135 : vector<15x5xf32>
    %137 = vector.broadcast %130 : vector<1x5xf32> to vector<15x5xf32>
    %138 = arith.mulf %137, %131 : vector<15x5xf32>
    %139 = arith.mulf %138, %131 : vector<15x5xf32>
    %140 = arith.addf %125, %139 : vector<15x5xf32>
    %141 = vector.broadcast %130 : vector<1x5xf32> to vector<15x5xf32>
    %142 = arith.mulf %141, %132 : vector<15x5xf32>
    %143 = arith.mulf %142, %132 : vector<15x5xf32>
    %144 = arith.addf %129, %143 : vector<15x5xf32>
    %145 = vector.extract_strided_slice %5 {offsets = [0, 9], sizes = [1, 5], strides = [1, 1]} : vector<1x34xf32> to vector<1x5xf32>
    %146 = vector.extract_strided_slice %1 {offsets = [0, 9], sizes = [15, 5], strides = [1, 1]} : vector<15x34xf32> to vector<15x5xf32>
    %147 = vector.extract_strided_slice %3 {offsets = [0, 9], sizes = [15, 5], strides = [1, 1]} : vector<15x34xf32> to vector<15x5xf32>
    %148 = arith.addf %133, %145 : vector<1x5xf32>
    %149 = vector.broadcast %145 : vector<1x5xf32> to vector<15x5xf32>
    %150 = arith.mulf %149, %146 : vector<15x5xf32>
    %151 = arith.addf %136, %150 : vector<15x5xf32>
    %152 = vector.broadcast %145 : vector<1x5xf32> to vector<15x5xf32>
    %153 = arith.mulf %152, %146 : vector<15x5xf32>
    %154 = arith.mulf %153, %146 : vector<15x5xf32>
    %155 = arith.addf %140, %154 : vector<15x5xf32>
    %156 = vector.broadcast %145 : vector<1x5xf32> to vector<15x5xf32>
    %157 = arith.mulf %156, %147 : vector<15x5xf32>
    %158 = arith.mulf %157, %147 : vector<15x5xf32>
    %159 = arith.addf %144, %158 : vector<15x5xf32>
    %160 = vector.extract_strided_slice %5 {offsets = [0, 10], sizes = [1, 5], strides = [1, 1]} : vector<1x34xf32> to vector<1x5xf32>
    %161 = vector.extract_strided_slice %1 {offsets = [0, 10], sizes = [15, 5], strides = [1, 1]} : vector<15x34xf32> to vector<15x5xf32>
    %162 = vector.extract_strided_slice %3 {offsets = [0, 10], sizes = [15, 5], strides = [1, 1]} : vector<15x34xf32> to vector<15x5xf32>
    %163 = arith.addf %148, %160 : vector<1x5xf32>
    %164 = vector.broadcast %160 : vector<1x5xf32> to vector<15x5xf32>
    %165 = arith.mulf %164, %161 : vector<15x5xf32>
    %166 = arith.addf %151, %165 : vector<15x5xf32>
    %167 = vector.broadcast %160 : vector<1x5xf32> to vector<15x5xf32>
    %168 = arith.mulf %167, %161 : vector<15x5xf32>
    %169 = arith.mulf %168, %161 : vector<15x5xf32>
    %170 = arith.addf %155, %169 : vector<15x5xf32>
    %171 = vector.broadcast %160 : vector<1x5xf32> to vector<15x5xf32>
    %172 = arith.mulf %171, %162 : vector<15x5xf32>
    %173 = arith.mulf %172, %162 : vector<15x5xf32>
    %174 = arith.addf %159, %173 : vector<15x5xf32>
    %175 = vector.extract_strided_slice %5 {offsets = [0, 11], sizes = [1, 5], strides = [1, 1]} : vector<1x34xf32> to vector<1x5xf32>
    %176 = vector.extract_strided_slice %1 {offsets = [0, 11], sizes = [15, 5], strides = [1, 1]} : vector<15x34xf32> to vector<15x5xf32>
    %177 = vector.extract_strided_slice %3 {offsets = [0, 11], sizes = [15, 5], strides = [1, 1]} : vector<15x34xf32> to vector<15x5xf32>
    %178 = arith.addf %163, %175 : vector<1x5xf32>
    %179 = vector.broadcast %175 : vector<1x5xf32> to vector<15x5xf32>
    %180 = arith.mulf %179, %176 : vector<15x5xf32>
    %181 = arith.addf %166, %180 : vector<15x5xf32>
    %182 = vector.broadcast %175 : vector<1x5xf32> to vector<15x5xf32>
    %183 = arith.mulf %182, %176 : vector<15x5xf32>
    %184 = arith.mulf %183, %176 : vector<15x5xf32>
    %185 = arith.addf %170, %184 : vector<15x5xf32>
    %186 = vector.broadcast %175 : vector<1x5xf32> to vector<15x5xf32>
    %187 = arith.mulf %186, %177 : vector<15x5xf32>
    %188 = arith.mulf %187, %177 : vector<15x5xf32>
    %189 = arith.addf %174, %188 : vector<15x5xf32>
    %190 = vector.extract_strided_slice %5 {offsets = [0, 12], sizes = [1, 5], strides = [1, 1]} : vector<1x34xf32> to vector<1x5xf32>
    %191 = vector.extract_strided_slice %1 {offsets = [0, 12], sizes = [15, 5], strides = [1, 1]} : vector<15x34xf32> to vector<15x5xf32>
    %192 = vector.extract_strided_slice %3 {offsets = [0, 12], sizes = [15, 5], strides = [1, 1]} : vector<15x34xf32> to vector<15x5xf32>
    %193 = arith.addf %178, %190 : vector<1x5xf32>
    %194 = vector.broadcast %190 : vector<1x5xf32> to vector<15x5xf32>
    %195 = arith.mulf %194, %191 : vector<15x5xf32>
    %196 = arith.addf %181, %195 : vector<15x5xf32>
    %197 = vector.broadcast %190 : vector<1x5xf32> to vector<15x5xf32>
    %198 = arith.mulf %197, %191 : vector<15x5xf32>
    %199 = arith.mulf %198, %191 : vector<15x5xf32>
    %200 = arith.addf %185, %199 : vector<15x5xf32>
    %201 = vector.broadcast %190 : vector<1x5xf32> to vector<15x5xf32>
    %202 = arith.mulf %201, %192 : vector<15x5xf32>
    %203 = arith.mulf %202, %192 : vector<15x5xf32>
    %204 = arith.addf %189, %203 : vector<15x5xf32>
    %205 = vector.extract_strided_slice %5 {offsets = [0, 13], sizes = [1, 5], strides = [1, 1]} : vector<1x34xf32> to vector<1x5xf32>
    %206 = vector.extract_strided_slice %1 {offsets = [0, 13], sizes = [15, 5], strides = [1, 1]} : vector<15x34xf32> to vector<15x5xf32>
    %207 = vector.extract_strided_slice %3 {offsets = [0, 13], sizes = [15, 5], strides = [1, 1]} : vector<15x34xf32> to vector<15x5xf32>
    %208 = arith.addf %193, %205 : vector<1x5xf32>
    %209 = vector.broadcast %205 : vector<1x5xf32> to vector<15x5xf32>
    %210 = arith.mulf %209, %206 : vector<15x5xf32>
    %211 = arith.addf %196, %210 : vector<15x5xf32>
    %212 = vector.broadcast %205 : vector<1x5xf32> to vector<15x5xf32>
    %213 = arith.mulf %212, %206 : vector<15x5xf32>
    %214 = arith.mulf %213, %206 : vector<15x5xf32>
    %215 = arith.addf %200, %214 : vector<15x5xf32>
    %216 = vector.broadcast %205 : vector<1x5xf32> to vector<15x5xf32>
    %217 = arith.mulf %216, %207 : vector<15x5xf32>
    %218 = arith.mulf %217, %207 : vector<15x5xf32>
    %219 = arith.addf %204, %218 : vector<15x5xf32>
    %220 = vector.extract_strided_slice %5 {offsets = [0, 14], sizes = [1, 5], strides = [1, 1]} : vector<1x34xf32> to vector<1x5xf32>
    %221 = vector.extract_strided_slice %1 {offsets = [0, 14], sizes = [15, 5], strides = [1, 1]} : vector<15x34xf32> to vector<15x5xf32>
    %222 = vector.extract_strided_slice %3 {offsets = [0, 14], sizes = [15, 5], strides = [1, 1]} : vector<15x34xf32> to vector<15x5xf32>
    %223 = arith.addf %208, %220 : vector<1x5xf32>
    %224 = vector.broadcast %220 : vector<1x5xf32> to vector<15x5xf32>
    %225 = arith.mulf %224, %221 : vector<15x5xf32>
    %226 = arith.addf %211, %225 : vector<15x5xf32>
    %227 = vector.broadcast %220 : vector<1x5xf32> to vector<15x5xf32>
    %228 = arith.mulf %227, %221 : vector<15x5xf32>
    %229 = arith.mulf %228, %221 : vector<15x5xf32>
    %230 = arith.addf %215, %229 : vector<15x5xf32>
    %231 = vector.broadcast %220 : vector<1x5xf32> to vector<15x5xf32>
    %232 = arith.mulf %231, %222 : vector<15x5xf32>
    %233 = arith.mulf %232, %222 : vector<15x5xf32>
    %234 = arith.addf %219, %233 : vector<15x5xf32>
    %235 = vector.extract_strided_slice %5 {offsets = [0, 15], sizes = [1, 5], strides = [1, 1]} : vector<1x34xf32> to vector<1x5xf32>
    %236 = vector.extract_strided_slice %1 {offsets = [0, 15], sizes = [15, 5], strides = [1, 1]} : vector<15x34xf32> to vector<15x5xf32>
    %237 = vector.extract_strided_slice %3 {offsets = [0, 15], sizes = [15, 5], strides = [1, 1]} : vector<15x34xf32> to vector<15x5xf32>
    %238 = arith.addf %223, %235 : vector<1x5xf32>
    %239 = vector.broadcast %235 : vector<1x5xf32> to vector<15x5xf32>
    %240 = arith.mulf %239, %236 : vector<15x5xf32>
    %241 = arith.addf %226, %240 : vector<15x5xf32>
    %242 = vector.broadcast %235 : vector<1x5xf32> to vector<15x5xf32>
    %243 = arith.mulf %242, %236 : vector<15x5xf32>
    %244 = arith.mulf %243, %236 : vector<15x5xf32>
    %245 = arith.addf %230, %244 : vector<15x5xf32>
    %246 = vector.broadcast %235 : vector<1x5xf32> to vector<15x5xf32>
    %247 = arith.mulf %246, %237 : vector<15x5xf32>
    %248 = arith.mulf %247, %237 : vector<15x5xf32>
    %249 = arith.addf %234, %248 : vector<15x5xf32>
    %250 = vector.extract_strided_slice %5 {offsets = [0, 16], sizes = [1, 5], strides = [1, 1]} : vector<1x34xf32> to vector<1x5xf32>
    %251 = vector.extract_strided_slice %1 {offsets = [0, 16], sizes = [15, 5], strides = [1, 1]} : vector<15x34xf32> to vector<15x5xf32>
    %252 = vector.extract_strided_slice %3 {offsets = [0, 16], sizes = [15, 5], strides = [1, 1]} : vector<15x34xf32> to vector<15x5xf32>
    %253 = arith.addf %238, %250 : vector<1x5xf32>
    %254 = vector.broadcast %250 : vector<1x5xf32> to vector<15x5xf32>
    %255 = arith.mulf %254, %251 : vector<15x5xf32>
    %256 = arith.addf %241, %255 : vector<15x5xf32>
    %257 = vector.broadcast %250 : vector<1x5xf32> to vector<15x5xf32>
    %258 = arith.mulf %257, %251 : vector<15x5xf32>
    %259 = arith.mulf %258, %251 : vector<15x5xf32>
    %260 = arith.addf %245, %259 : vector<15x5xf32>
    %261 = vector.broadcast %250 : vector<1x5xf32> to vector<15x5xf32>
    %262 = arith.mulf %261, %252 : vector<15x5xf32>
    %263 = arith.mulf %262, %252 : vector<15x5xf32>
    %264 = arith.addf %249, %263 : vector<15x5xf32>
    %265 = vector.extract_strided_slice %5 {offsets = [0, 17], sizes = [1, 5], strides = [1, 1]} : vector<1x34xf32> to vector<1x5xf32>
    %266 = vector.extract_strided_slice %1 {offsets = [0, 17], sizes = [15, 5], strides = [1, 1]} : vector<15x34xf32> to vector<15x5xf32>
    %267 = vector.extract_strided_slice %3 {offsets = [0, 17], sizes = [15, 5], strides = [1, 1]} : vector<15x34xf32> to vector<15x5xf32>
    %268 = arith.addf %253, %265 : vector<1x5xf32>
    %269 = vector.broadcast %265 : vector<1x5xf32> to vector<15x5xf32>
    %270 = arith.mulf %269, %266 : vector<15x5xf32>
    %271 = arith.addf %256, %270 : vector<15x5xf32>
    %272 = vector.broadcast %265 : vector<1x5xf32> to vector<15x5xf32>
    %273 = arith.mulf %272, %266 : vector<15x5xf32>
    %274 = arith.mulf %273, %266 : vector<15x5xf32>
    %275 = arith.addf %260, %274 : vector<15x5xf32>
    %276 = vector.broadcast %265 : vector<1x5xf32> to vector<15x5xf32>
    %277 = arith.mulf %276, %267 : vector<15x5xf32>
    %278 = arith.mulf %277, %267 : vector<15x5xf32>
    %279 = arith.addf %264, %278 : vector<15x5xf32>
    %280 = vector.extract_strided_slice %5 {offsets = [0, 18], sizes = [1, 5], strides = [1, 1]} : vector<1x34xf32> to vector<1x5xf32>
    %281 = vector.extract_strided_slice %1 {offsets = [0, 18], sizes = [15, 5], strides = [1, 1]} : vector<15x34xf32> to vector<15x5xf32>
    %282 = vector.extract_strided_slice %3 {offsets = [0, 18], sizes = [15, 5], strides = [1, 1]} : vector<15x34xf32> to vector<15x5xf32>
    %283 = arith.addf %268, %280 : vector<1x5xf32>
    %284 = vector.broadcast %280 : vector<1x5xf32> to vector<15x5xf32>
    %285 = arith.mulf %284, %281 : vector<15x5xf32>
    %286 = arith.addf %271, %285 : vector<15x5xf32>
    %287 = vector.broadcast %280 : vector<1x5xf32> to vector<15x5xf32>
    %288 = arith.mulf %287, %281 : vector<15x5xf32>
    %289 = arith.mulf %288, %281 : vector<15x5xf32>
    %290 = arith.addf %275, %289 : vector<15x5xf32>
    %291 = vector.broadcast %280 : vector<1x5xf32> to vector<15x5xf32>
    %292 = arith.mulf %291, %282 : vector<15x5xf32>
    %293 = arith.mulf %292, %282 : vector<15x5xf32>
    %294 = arith.addf %279, %293 : vector<15x5xf32>
    %295 = vector.extract_strided_slice %5 {offsets = [0, 19], sizes = [1, 5], strides = [1, 1]} : vector<1x34xf32> to vector<1x5xf32>
    %296 = vector.extract_strided_slice %1 {offsets = [0, 19], sizes = [15, 5], strides = [1, 1]} : vector<15x34xf32> to vector<15x5xf32>
    %297 = vector.extract_strided_slice %3 {offsets = [0, 19], sizes = [15, 5], strides = [1, 1]} : vector<15x34xf32> to vector<15x5xf32>
    %298 = arith.addf %283, %295 : vector<1x5xf32>
    %299 = vector.broadcast %295 : vector<1x5xf32> to vector<15x5xf32>
    %300 = arith.mulf %299, %296 : vector<15x5xf32>
    %301 = arith.addf %286, %300 : vector<15x5xf32>
    %302 = vector.broadcast %295 : vector<1x5xf32> to vector<15x5xf32>
    %303 = arith.mulf %302, %296 : vector<15x5xf32>
    %304 = arith.mulf %303, %296 : vector<15x5xf32>
    %305 = arith.addf %290, %304 : vector<15x5xf32>
    %306 = vector.broadcast %295 : vector<1x5xf32> to vector<15x5xf32>
    %307 = arith.mulf %306, %297 : vector<15x5xf32>
    %308 = arith.mulf %307, %297 : vector<15x5xf32>
    %309 = arith.addf %294, %308 : vector<15x5xf32>
    %310 = vector.extract_strided_slice %5 {offsets = [0, 20], sizes = [1, 5], strides = [1, 1]} : vector<1x34xf32> to vector<1x5xf32>
    %311 = vector.extract_strided_slice %1 {offsets = [0, 20], sizes = [15, 5], strides = [1, 1]} : vector<15x34xf32> to vector<15x5xf32>
    %312 = vector.extract_strided_slice %3 {offsets = [0, 20], sizes = [15, 5], strides = [1, 1]} : vector<15x34xf32> to vector<15x5xf32>
    %313 = arith.addf %298, %310 : vector<1x5xf32>
    %314 = vector.broadcast %310 : vector<1x5xf32> to vector<15x5xf32>
    %315 = arith.mulf %314, %311 : vector<15x5xf32>
    %316 = arith.addf %301, %315 : vector<15x5xf32>
    %317 = vector.broadcast %310 : vector<1x5xf32> to vector<15x5xf32>
    %318 = arith.mulf %317, %311 : vector<15x5xf32>
    %319 = arith.mulf %318, %311 : vector<15x5xf32>
    %320 = arith.addf %305, %319 : vector<15x5xf32>
    %321 = vector.broadcast %310 : vector<1x5xf32> to vector<15x5xf32>
    %322 = arith.mulf %321, %312 : vector<15x5xf32>
    %323 = arith.mulf %322, %312 : vector<15x5xf32>
    %324 = arith.addf %309, %323 : vector<15x5xf32>
    %325 = vector.extract_strided_slice %5 {offsets = [0, 21], sizes = [1, 5], strides = [1, 1]} : vector<1x34xf32> to vector<1x5xf32>
    %326 = vector.extract_strided_slice %1 {offsets = [0, 21], sizes = [15, 5], strides = [1, 1]} : vector<15x34xf32> to vector<15x5xf32>
    %327 = vector.extract_strided_slice %3 {offsets = [0, 21], sizes = [15, 5], strides = [1, 1]} : vector<15x34xf32> to vector<15x5xf32>
    %328 = arith.addf %313, %325 : vector<1x5xf32>
    %329 = vector.broadcast %325 : vector<1x5xf32> to vector<15x5xf32>
    %330 = arith.mulf %329, %326 : vector<15x5xf32>
    %331 = arith.addf %316, %330 : vector<15x5xf32>
    %332 = vector.broadcast %325 : vector<1x5xf32> to vector<15x5xf32>
    %333 = arith.mulf %332, %326 : vector<15x5xf32>
    %334 = arith.mulf %333, %326 : vector<15x5xf32>
    %335 = arith.addf %320, %334 : vector<15x5xf32>
    %336 = vector.broadcast %325 : vector<1x5xf32> to vector<15x5xf32>
    %337 = arith.mulf %336, %327 : vector<15x5xf32>
    %338 = arith.mulf %337, %327 : vector<15x5xf32>
    %339 = arith.addf %324, %338 : vector<15x5xf32>
    %340 = vector.extract_strided_slice %5 {offsets = [0, 22], sizes = [1, 5], strides = [1, 1]} : vector<1x34xf32> to vector<1x5xf32>
    %341 = vector.extract_strided_slice %1 {offsets = [0, 22], sizes = [15, 5], strides = [1, 1]} : vector<15x34xf32> to vector<15x5xf32>
    %342 = vector.extract_strided_slice %3 {offsets = [0, 22], sizes = [15, 5], strides = [1, 1]} : vector<15x34xf32> to vector<15x5xf32>
    %343 = arith.addf %328, %340 : vector<1x5xf32>
    %344 = vector.broadcast %340 : vector<1x5xf32> to vector<15x5xf32>
    %345 = arith.mulf %344, %341 : vector<15x5xf32>
    %346 = arith.addf %331, %345 : vector<15x5xf32>
    %347 = vector.broadcast %340 : vector<1x5xf32> to vector<15x5xf32>
    %348 = arith.mulf %347, %341 : vector<15x5xf32>
    %349 = arith.mulf %348, %341 : vector<15x5xf32>
    %350 = arith.addf %335, %349 : vector<15x5xf32>
    %351 = vector.broadcast %340 : vector<1x5xf32> to vector<15x5xf32>
    %352 = arith.mulf %351, %342 : vector<15x5xf32>
    %353 = arith.mulf %352, %342 : vector<15x5xf32>
    %354 = arith.addf %339, %353 : vector<15x5xf32>
    %355 = vector.extract_strided_slice %5 {offsets = [0, 23], sizes = [1, 5], strides = [1, 1]} : vector<1x34xf32> to vector<1x5xf32>
    %356 = vector.extract_strided_slice %1 {offsets = [0, 23], sizes = [15, 5], strides = [1, 1]} : vector<15x34xf32> to vector<15x5xf32>
    %357 = vector.extract_strided_slice %3 {offsets = [0, 23], sizes = [15, 5], strides = [1, 1]} : vector<15x34xf32> to vector<15x5xf32>
    %358 = arith.addf %343, %355 : vector<1x5xf32>
    %359 = vector.broadcast %355 : vector<1x5xf32> to vector<15x5xf32>
    %360 = arith.mulf %359, %356 : vector<15x5xf32>
    %361 = arith.addf %346, %360 : vector<15x5xf32>
    %362 = vector.broadcast %355 : vector<1x5xf32> to vector<15x5xf32>
    %363 = arith.mulf %362, %356 : vector<15x5xf32>
    %364 = arith.mulf %363, %356 : vector<15x5xf32>
    %365 = arith.addf %350, %364 : vector<15x5xf32>
    %366 = vector.broadcast %355 : vector<1x5xf32> to vector<15x5xf32>
    %367 = arith.mulf %366, %357 : vector<15x5xf32>
    %368 = arith.mulf %367, %357 : vector<15x5xf32>
    %369 = arith.addf %354, %368 : vector<15x5xf32>
    %370 = vector.extract_strided_slice %5 {offsets = [0, 24], sizes = [1, 5], strides = [1, 1]} : vector<1x34xf32> to vector<1x5xf32>
    %371 = vector.extract_strided_slice %1 {offsets = [0, 24], sizes = [15, 5], strides = [1, 1]} : vector<15x34xf32> to vector<15x5xf32>
    %372 = vector.extract_strided_slice %3 {offsets = [0, 24], sizes = [15, 5], strides = [1, 1]} : vector<15x34xf32> to vector<15x5xf32>
    %373 = arith.addf %358, %370 : vector<1x5xf32>
    %374 = vector.broadcast %370 : vector<1x5xf32> to vector<15x5xf32>
    %375 = arith.mulf %374, %371 : vector<15x5xf32>
    %376 = arith.addf %361, %375 : vector<15x5xf32>
    %377 = vector.broadcast %370 : vector<1x5xf32> to vector<15x5xf32>
    %378 = arith.mulf %377, %371 : vector<15x5xf32>
    %379 = arith.mulf %378, %371 : vector<15x5xf32>
    %380 = arith.addf %365, %379 : vector<15x5xf32>
    %381 = vector.broadcast %370 : vector<1x5xf32> to vector<15x5xf32>
    %382 = arith.mulf %381, %372 : vector<15x5xf32>
    %383 = arith.mulf %382, %372 : vector<15x5xf32>
    %384 = arith.addf %369, %383 : vector<15x5xf32>
    %385 = vector.extract_strided_slice %5 {offsets = [0, 25], sizes = [1, 5], strides = [1, 1]} : vector<1x34xf32> to vector<1x5xf32>
    %386 = vector.extract_strided_slice %1 {offsets = [0, 25], sizes = [15, 5], strides = [1, 1]} : vector<15x34xf32> to vector<15x5xf32>
    %387 = vector.extract_strided_slice %3 {offsets = [0, 25], sizes = [15, 5], strides = [1, 1]} : vector<15x34xf32> to vector<15x5xf32>
    %388 = arith.addf %373, %385 : vector<1x5xf32>
    %389 = vector.broadcast %385 : vector<1x5xf32> to vector<15x5xf32>
    %390 = arith.mulf %389, %386 : vector<15x5xf32>
    %391 = arith.addf %376, %390 : vector<15x5xf32>
    %392 = vector.broadcast %385 : vector<1x5xf32> to vector<15x5xf32>
    %393 = arith.mulf %392, %386 : vector<15x5xf32>
    %394 = arith.mulf %393, %386 : vector<15x5xf32>
    %395 = arith.addf %380, %394 : vector<15x5xf32>
    %396 = vector.broadcast %385 : vector<1x5xf32> to vector<15x5xf32>
    %397 = arith.mulf %396, %387 : vector<15x5xf32>
    %398 = arith.mulf %397, %387 : vector<15x5xf32>
    %399 = arith.addf %384, %398 : vector<15x5xf32>
    %400 = vector.extract_strided_slice %5 {offsets = [0, 26], sizes = [1, 5], strides = [1, 1]} : vector<1x34xf32> to vector<1x5xf32>
    %401 = vector.extract_strided_slice %1 {offsets = [0, 26], sizes = [15, 5], strides = [1, 1]} : vector<15x34xf32> to vector<15x5xf32>
    %402 = vector.extract_strided_slice %3 {offsets = [0, 26], sizes = [15, 5], strides = [1, 1]} : vector<15x34xf32> to vector<15x5xf32>
    %403 = arith.addf %388, %400 : vector<1x5xf32>
    %404 = vector.broadcast %400 : vector<1x5xf32> to vector<15x5xf32>
    %405 = arith.mulf %404, %401 : vector<15x5xf32>
    %406 = arith.addf %391, %405 : vector<15x5xf32>
    %407 = vector.broadcast %400 : vector<1x5xf32> to vector<15x5xf32>
    %408 = arith.mulf %407, %401 : vector<15x5xf32>
    %409 = arith.mulf %408, %401 : vector<15x5xf32>
    %410 = arith.addf %395, %409 : vector<15x5xf32>
    %411 = vector.broadcast %400 : vector<1x5xf32> to vector<15x5xf32>
    %412 = arith.mulf %411, %402 : vector<15x5xf32>
    %413 = arith.mulf %412, %402 : vector<15x5xf32>
    %414 = arith.addf %399, %413 : vector<15x5xf32>
    %415 = vector.extract_strided_slice %5 {offsets = [0, 27], sizes = [1, 5], strides = [1, 1]} : vector<1x34xf32> to vector<1x5xf32>
    %416 = vector.extract_strided_slice %1 {offsets = [0, 27], sizes = [15, 5], strides = [1, 1]} : vector<15x34xf32> to vector<15x5xf32>
    %417 = vector.extract_strided_slice %3 {offsets = [0, 27], sizes = [15, 5], strides = [1, 1]} : vector<15x34xf32> to vector<15x5xf32>
    %418 = arith.addf %403, %415 : vector<1x5xf32>
    %419 = vector.broadcast %415 : vector<1x5xf32> to vector<15x5xf32>
    %420 = arith.mulf %419, %416 : vector<15x5xf32>
    %421 = arith.addf %406, %420 : vector<15x5xf32>
    %422 = vector.broadcast %415 : vector<1x5xf32> to vector<15x5xf32>
    %423 = arith.mulf %422, %416 : vector<15x5xf32>
    %424 = arith.mulf %423, %416 : vector<15x5xf32>
    %425 = arith.addf %410, %424 : vector<15x5xf32>
    %426 = vector.broadcast %415 : vector<1x5xf32> to vector<15x5xf32>
    %427 = arith.mulf %426, %417 : vector<15x5xf32>
    %428 = arith.mulf %427, %417 : vector<15x5xf32>
    %429 = arith.addf %414, %428 : vector<15x5xf32>
    %430 = vector.extract_strided_slice %5 {offsets = [0, 28], sizes = [1, 5], strides = [1, 1]} : vector<1x34xf32> to vector<1x5xf32>
    %431 = vector.extract_strided_slice %1 {offsets = [0, 28], sizes = [15, 5], strides = [1, 1]} : vector<15x34xf32> to vector<15x5xf32>
    %432 = vector.extract_strided_slice %3 {offsets = [0, 28], sizes = [15, 5], strides = [1, 1]} : vector<15x34xf32> to vector<15x5xf32>
    %433 = arith.addf %418, %430 : vector<1x5xf32>
    %434 = vector.broadcast %430 : vector<1x5xf32> to vector<15x5xf32>
    %435 = arith.mulf %434, %431 : vector<15x5xf32>
    %436 = arith.addf %421, %435 : vector<15x5xf32>
    %437 = vector.broadcast %430 : vector<1x5xf32> to vector<15x5xf32>
    %438 = arith.mulf %437, %431 : vector<15x5xf32>
    %439 = arith.mulf %438, %431 : vector<15x5xf32>
    %440 = arith.addf %425, %439 : vector<15x5xf32>
    %441 = vector.broadcast %430 : vector<1x5xf32> to vector<15x5xf32>
    %442 = arith.mulf %441, %432 : vector<15x5xf32>
    %443 = arith.mulf %442, %432 : vector<15x5xf32>
    %444 = arith.addf %429, %443 : vector<15x5xf32>
    %445 = vector.extract_strided_slice %5 {offsets = [0, 29], sizes = [1, 5], strides = [1, 1]} : vector<1x34xf32> to vector<1x5xf32>
    %446 = vector.extract_strided_slice %1 {offsets = [0, 29], sizes = [15, 5], strides = [1, 1]} : vector<15x34xf32> to vector<15x5xf32>
    %447 = vector.extract_strided_slice %3 {offsets = [0, 29], sizes = [15, 5], strides = [1, 1]} : vector<15x34xf32> to vector<15x5xf32>
    %448 = arith.addf %433, %445 : vector<1x5xf32>
    %449 = vector.broadcast %445 : vector<1x5xf32> to vector<15x5xf32>
    %450 = arith.mulf %449, %446 : vector<15x5xf32>
    %451 = arith.addf %436, %450 : vector<15x5xf32>
    %452 = vector.broadcast %445 : vector<1x5xf32> to vector<15x5xf32>
    %453 = arith.mulf %452, %446 : vector<15x5xf32>
    %454 = arith.mulf %453, %446 : vector<15x5xf32>
    %455 = arith.addf %440, %454 : vector<15x5xf32>
    %456 = vector.broadcast %445 : vector<1x5xf32> to vector<15x5xf32>
    %457 = arith.mulf %456, %447 : vector<15x5xf32>
    %458 = arith.mulf %457, %447 : vector<15x5xf32>
    %459 = arith.addf %444, %458 : vector<15x5xf32>
    %460 = math.sqrt %455 : vector<15x5xf32>
    %461 = math.sqrt %459 : vector<15x5xf32>
    %cst_11 = arith.constant 9.99999993E-9 : f32
    %462 = vector.broadcast %cst_11 : f32 to vector<15x5xf32>
    %463 = arith.addf %461, %462 : vector<15x5xf32>
    %464 = arith.divf %460, %463 : vector<15x5xf32>
    %cst_12 = arith.constant 9.99999993E-9 : f32
    %465 = vector.broadcast %cst_12 : f32 to vector<1x5xf32>
    %466 = arith.addf %448, %465 : vector<1x5xf32>
    %467 = vector.broadcast %466 : vector<1x5xf32> to vector<15x5xf32>
    %468 = arith.divf %451, %467 : vector<15x5xf32>
    %cst_13 = arith.constant 0.000000e+00 : f32
    %469 = vector.broadcast %cst_13 : f32 to vector<15x5xf32>
    %470 = vector.extract_strided_slice %5 {offsets = [0, 0], sizes = [1, 5], strides = [1, 1]} : vector<1x34xf32> to vector<1x5xf32>
    %471 = vector.extract_strided_slice %1 {offsets = [0, 0], sizes = [15, 5], strides = [1, 1]} : vector<15x34xf32> to vector<15x5xf32>
    %472 = vector.extract_strided_slice %3 {offsets = [0, 0], sizes = [15, 5], strides = [1, 1]} : vector<15x34xf32> to vector<15x5xf32>
    %473 = arith.mulf %472, %464 : vector<15x5xf32>
    %cst_14 = arith.constant 6.62341309 : f32
    %474 = vector.broadcast %cst_14 : f32 to vector<15x5xf32>
    %475 = arith.mulf %471, %474 : vector<15x5xf32>
    %476 = arith.minimumf %473, %475 : vector<15x5xf32>
    %477 = vector.broadcast %470 : vector<1x5xf32> to vector<15x5xf32>
    %478 = arith.mulf %477, %476 : vector<15x5xf32>
    %479 = arith.addf %469, %478 : vector<15x5xf32>
    %480 = vector.extract_strided_slice %5 {offsets = [0, 1], sizes = [1, 5], strides = [1, 1]} : vector<1x34xf32> to vector<1x5xf32>
    %481 = vector.extract_strided_slice %1 {offsets = [0, 1], sizes = [15, 5], strides = [1, 1]} : vector<15x34xf32> to vector<15x5xf32>
    %482 = vector.extract_strided_slice %3 {offsets = [0, 1], sizes = [15, 5], strides = [1, 1]} : vector<15x34xf32> to vector<15x5xf32>
    %483 = arith.mulf %482, %464 : vector<15x5xf32>
    %cst_15 = arith.constant 6.62341309 : f32
    %484 = vector.broadcast %cst_15 : f32 to vector<15x5xf32>
    %485 = arith.mulf %481, %484 : vector<15x5xf32>
    %486 = arith.minimumf %483, %485 : vector<15x5xf32>
    %487 = vector.broadcast %480 : vector<1x5xf32> to vector<15x5xf32>
    %488 = arith.mulf %487, %486 : vector<15x5xf32>
    %489 = arith.addf %479, %488 : vector<15x5xf32>
    %490 = vector.extract_strided_slice %5 {offsets = [0, 2], sizes = [1, 5], strides = [1, 1]} : vector<1x34xf32> to vector<1x5xf32>
    %491 = vector.extract_strided_slice %1 {offsets = [0, 2], sizes = [15, 5], strides = [1, 1]} : vector<15x34xf32> to vector<15x5xf32>
    %492 = vector.extract_strided_slice %3 {offsets = [0, 2], sizes = [15, 5], strides = [1, 1]} : vector<15x34xf32> to vector<15x5xf32>
    %493 = arith.mulf %492, %464 : vector<15x5xf32>
    %cst_16 = arith.constant 6.62341309 : f32
    %494 = vector.broadcast %cst_16 : f32 to vector<15x5xf32>
    %495 = arith.mulf %491, %494 : vector<15x5xf32>
    %496 = arith.minimumf %493, %495 : vector<15x5xf32>
    %497 = vector.broadcast %490 : vector<1x5xf32> to vector<15x5xf32>
    %498 = arith.mulf %497, %496 : vector<15x5xf32>
    %499 = arith.addf %489, %498 : vector<15x5xf32>
    %500 = vector.extract_strided_slice %5 {offsets = [0, 3], sizes = [1, 5], strides = [1, 1]} : vector<1x34xf32> to vector<1x5xf32>
    %501 = vector.extract_strided_slice %1 {offsets = [0, 3], sizes = [15, 5], strides = [1, 1]} : vector<15x34xf32> to vector<15x5xf32>
    %502 = vector.extract_strided_slice %3 {offsets = [0, 3], sizes = [15, 5], strides = [1, 1]} : vector<15x34xf32> to vector<15x5xf32>
    %503 = arith.mulf %502, %464 : vector<15x5xf32>
    %cst_17 = arith.constant 6.62341309 : f32
    %504 = vector.broadcast %cst_17 : f32 to vector<15x5xf32>
    %505 = arith.mulf %501, %504 : vector<15x5xf32>
    %506 = arith.minimumf %503, %505 : vector<15x5xf32>
    %507 = vector.broadcast %500 : vector<1x5xf32> to vector<15x5xf32>
    %508 = arith.mulf %507, %506 : vector<15x5xf32>
    %509 = arith.addf %499, %508 : vector<15x5xf32>
    %510 = vector.extract_strided_slice %5 {offsets = [0, 4], sizes = [1, 5], strides = [1, 1]} : vector<1x34xf32> to vector<1x5xf32>
    %511 = vector.extract_strided_slice %1 {offsets = [0, 4], sizes = [15, 5], strides = [1, 1]} : vector<15x34xf32> to vector<15x5xf32>
    %512 = vector.extract_strided_slice %3 {offsets = [0, 4], sizes = [15, 5], strides = [1, 1]} : vector<15x34xf32> to vector<15x5xf32>
    %513 = arith.mulf %512, %464 : vector<15x5xf32>
    %cst_18 = arith.constant 6.62341309 : f32
    %514 = vector.broadcast %cst_18 : f32 to vector<15x5xf32>
    %515 = arith.mulf %511, %514 : vector<15x5xf32>
    %516 = arith.minimumf %513, %515 : vector<15x5xf32>
    %517 = vector.broadcast %510 : vector<1x5xf32> to vector<15x5xf32>
    %518 = arith.mulf %517, %516 : vector<15x5xf32>
    %519 = arith.addf %509, %518 : vector<15x5xf32>
    %520 = vector.extract_strided_slice %5 {offsets = [0, 5], sizes = [1, 5], strides = [1, 1]} : vector<1x34xf32> to vector<1x5xf32>
    %521 = vector.extract_strided_slice %1 {offsets = [0, 5], sizes = [15, 5], strides = [1, 1]} : vector<15x34xf32> to vector<15x5xf32>
    %522 = vector.extract_strided_slice %3 {offsets = [0, 5], sizes = [15, 5], strides = [1, 1]} : vector<15x34xf32> to vector<15x5xf32>
    %523 = arith.mulf %522, %464 : vector<15x5xf32>
    %cst_19 = arith.constant 6.62341309 : f32
    %524 = vector.broadcast %cst_19 : f32 to vector<15x5xf32>
    %525 = arith.mulf %521, %524 : vector<15x5xf32>
    %526 = arith.minimumf %523, %525 : vector<15x5xf32>
    %527 = vector.broadcast %520 : vector<1x5xf32> to vector<15x5xf32>
    %528 = arith.mulf %527, %526 : vector<15x5xf32>
    %529 = arith.addf %519, %528 : vector<15x5xf32>
    %530 = vector.extract_strided_slice %5 {offsets = [0, 6], sizes = [1, 5], strides = [1, 1]} : vector<1x34xf32> to vector<1x5xf32>
    %531 = vector.extract_strided_slice %1 {offsets = [0, 6], sizes = [15, 5], strides = [1, 1]} : vector<15x34xf32> to vector<15x5xf32>
    %532 = vector.extract_strided_slice %3 {offsets = [0, 6], sizes = [15, 5], strides = [1, 1]} : vector<15x34xf32> to vector<15x5xf32>
    %533 = arith.mulf %532, %464 : vector<15x5xf32>
    %cst_20 = arith.constant 6.62341309 : f32
    %534 = vector.broadcast %cst_20 : f32 to vector<15x5xf32>
    %535 = arith.mulf %531, %534 : vector<15x5xf32>
    %536 = arith.minimumf %533, %535 : vector<15x5xf32>
    %537 = vector.broadcast %530 : vector<1x5xf32> to vector<15x5xf32>
    %538 = arith.mulf %537, %536 : vector<15x5xf32>
    %539 = arith.addf %529, %538 : vector<15x5xf32>
    %540 = vector.extract_strided_slice %5 {offsets = [0, 7], sizes = [1, 5], strides = [1, 1]} : vector<1x34xf32> to vector<1x5xf32>
    %541 = vector.extract_strided_slice %1 {offsets = [0, 7], sizes = [15, 5], strides = [1, 1]} : vector<15x34xf32> to vector<15x5xf32>
    %542 = vector.extract_strided_slice %3 {offsets = [0, 7], sizes = [15, 5], strides = [1, 1]} : vector<15x34xf32> to vector<15x5xf32>
    %543 = arith.mulf %542, %464 : vector<15x5xf32>
    %cst_21 = arith.constant 6.62341309 : f32
    %544 = vector.broadcast %cst_21 : f32 to vector<15x5xf32>
    %545 = arith.mulf %541, %544 : vector<15x5xf32>
    %546 = arith.minimumf %543, %545 : vector<15x5xf32>
    %547 = vector.broadcast %540 : vector<1x5xf32> to vector<15x5xf32>
    %548 = arith.mulf %547, %546 : vector<15x5xf32>
    %549 = arith.addf %539, %548 : vector<15x5xf32>
    %550 = vector.extract_strided_slice %5 {offsets = [0, 8], sizes = [1, 5], strides = [1, 1]} : vector<1x34xf32> to vector<1x5xf32>
    %551 = vector.extract_strided_slice %1 {offsets = [0, 8], sizes = [15, 5], strides = [1, 1]} : vector<15x34xf32> to vector<15x5xf32>
    %552 = vector.extract_strided_slice %3 {offsets = [0, 8], sizes = [15, 5], strides = [1, 1]} : vector<15x34xf32> to vector<15x5xf32>
    %553 = arith.mulf %552, %464 : vector<15x5xf32>
    %cst_22 = arith.constant 6.62341309 : f32
    %554 = vector.broadcast %cst_22 : f32 to vector<15x5xf32>
    %555 = arith.mulf %551, %554 : vector<15x5xf32>
    %556 = arith.minimumf %553, %555 : vector<15x5xf32>
    %557 = vector.broadcast %550 : vector<1x5xf32> to vector<15x5xf32>
    %558 = arith.mulf %557, %556 : vector<15x5xf32>
    %559 = arith.addf %549, %558 : vector<15x5xf32>
    %560 = vector.extract_strided_slice %5 {offsets = [0, 9], sizes = [1, 5], strides = [1, 1]} : vector<1x34xf32> to vector<1x5xf32>
    %561 = vector.extract_strided_slice %1 {offsets = [0, 9], sizes = [15, 5], strides = [1, 1]} : vector<15x34xf32> to vector<15x5xf32>
    %562 = vector.extract_strided_slice %3 {offsets = [0, 9], sizes = [15, 5], strides = [1, 1]} : vector<15x34xf32> to vector<15x5xf32>
    %563 = arith.mulf %562, %464 : vector<15x5xf32>
    %cst_23 = arith.constant 6.62341309 : f32
    %564 = vector.broadcast %cst_23 : f32 to vector<15x5xf32>
    %565 = arith.mulf %561, %564 : vector<15x5xf32>
    %566 = arith.minimumf %563, %565 : vector<15x5xf32>
    %567 = vector.broadcast %560 : vector<1x5xf32> to vector<15x5xf32>
    %568 = arith.mulf %567, %566 : vector<15x5xf32>
    %569 = arith.addf %559, %568 : vector<15x5xf32>
    %570 = vector.extract_strided_slice %5 {offsets = [0, 10], sizes = [1, 5], strides = [1, 1]} : vector<1x34xf32> to vector<1x5xf32>
    %571 = vector.extract_strided_slice %1 {offsets = [0, 10], sizes = [15, 5], strides = [1, 1]} : vector<15x34xf32> to vector<15x5xf32>
    %572 = vector.extract_strided_slice %3 {offsets = [0, 10], sizes = [15, 5], strides = [1, 1]} : vector<15x34xf32> to vector<15x5xf32>
    %573 = arith.mulf %572, %464 : vector<15x5xf32>
    %cst_24 = arith.constant 6.62341309 : f32
    %574 = vector.broadcast %cst_24 : f32 to vector<15x5xf32>
    %575 = arith.mulf %571, %574 : vector<15x5xf32>
    %576 = arith.minimumf %573, %575 : vector<15x5xf32>
    %577 = vector.broadcast %570 : vector<1x5xf32> to vector<15x5xf32>
    %578 = arith.mulf %577, %576 : vector<15x5xf32>
    %579 = arith.addf %569, %578 : vector<15x5xf32>
    %580 = vector.extract_strided_slice %5 {offsets = [0, 11], sizes = [1, 5], strides = [1, 1]} : vector<1x34xf32> to vector<1x5xf32>
    %581 = vector.extract_strided_slice %1 {offsets = [0, 11], sizes = [15, 5], strides = [1, 1]} : vector<15x34xf32> to vector<15x5xf32>
    %582 = vector.extract_strided_slice %3 {offsets = [0, 11], sizes = [15, 5], strides = [1, 1]} : vector<15x34xf32> to vector<15x5xf32>
    %583 = arith.mulf %582, %464 : vector<15x5xf32>
    %cst_25 = arith.constant 6.62341309 : f32
    %584 = vector.broadcast %cst_25 : f32 to vector<15x5xf32>
    %585 = arith.mulf %581, %584 : vector<15x5xf32>
    %586 = arith.minimumf %583, %585 : vector<15x5xf32>
    %587 = vector.broadcast %580 : vector<1x5xf32> to vector<15x5xf32>
    %588 = arith.mulf %587, %586 : vector<15x5xf32>
    %589 = arith.addf %579, %588 : vector<15x5xf32>
    %590 = vector.extract_strided_slice %5 {offsets = [0, 12], sizes = [1, 5], strides = [1, 1]} : vector<1x34xf32> to vector<1x5xf32>
    %591 = vector.extract_strided_slice %1 {offsets = [0, 12], sizes = [15, 5], strides = [1, 1]} : vector<15x34xf32> to vector<15x5xf32>
    %592 = vector.extract_strided_slice %3 {offsets = [0, 12], sizes = [15, 5], strides = [1, 1]} : vector<15x34xf32> to vector<15x5xf32>
    %593 = arith.mulf %592, %464 : vector<15x5xf32>
    %cst_26 = arith.constant 6.62341309 : f32
    %594 = vector.broadcast %cst_26 : f32 to vector<15x5xf32>
    %595 = arith.mulf %591, %594 : vector<15x5xf32>
    %596 = arith.minimumf %593, %595 : vector<15x5xf32>
    %597 = vector.broadcast %590 : vector<1x5xf32> to vector<15x5xf32>
    %598 = arith.mulf %597, %596 : vector<15x5xf32>
    %599 = arith.addf %589, %598 : vector<15x5xf32>
    %600 = vector.extract_strided_slice %5 {offsets = [0, 13], sizes = [1, 5], strides = [1, 1]} : vector<1x34xf32> to vector<1x5xf32>
    %601 = vector.extract_strided_slice %1 {offsets = [0, 13], sizes = [15, 5], strides = [1, 1]} : vector<15x34xf32> to vector<15x5xf32>
    %602 = vector.extract_strided_slice %3 {offsets = [0, 13], sizes = [15, 5], strides = [1, 1]} : vector<15x34xf32> to vector<15x5xf32>
    %603 = arith.mulf %602, %464 : vector<15x5xf32>
    %cst_27 = arith.constant 6.62341309 : f32
    %604 = vector.broadcast %cst_27 : f32 to vector<15x5xf32>
    %605 = arith.mulf %601, %604 : vector<15x5xf32>
    %606 = arith.minimumf %603, %605 : vector<15x5xf32>
    %607 = vector.broadcast %600 : vector<1x5xf32> to vector<15x5xf32>
    %608 = arith.mulf %607, %606 : vector<15x5xf32>
    %609 = arith.addf %599, %608 : vector<15x5xf32>
    %610 = vector.extract_strided_slice %5 {offsets = [0, 14], sizes = [1, 5], strides = [1, 1]} : vector<1x34xf32> to vector<1x5xf32>
    %611 = vector.extract_strided_slice %1 {offsets = [0, 14], sizes = [15, 5], strides = [1, 1]} : vector<15x34xf32> to vector<15x5xf32>
    %612 = vector.extract_strided_slice %3 {offsets = [0, 14], sizes = [15, 5], strides = [1, 1]} : vector<15x34xf32> to vector<15x5xf32>
    %613 = arith.mulf %612, %464 : vector<15x5xf32>
    %cst_28 = arith.constant 6.62341309 : f32
    %614 = vector.broadcast %cst_28 : f32 to vector<15x5xf32>
    %615 = arith.mulf %611, %614 : vector<15x5xf32>
    %616 = arith.minimumf %613, %615 : vector<15x5xf32>
    %617 = vector.broadcast %610 : vector<1x5xf32> to vector<15x5xf32>
    %618 = arith.mulf %617, %616 : vector<15x5xf32>
    %619 = arith.addf %609, %618 : vector<15x5xf32>
    %620 = vector.extract_strided_slice %5 {offsets = [0, 15], sizes = [1, 5], strides = [1, 1]} : vector<1x34xf32> to vector<1x5xf32>
    %621 = vector.extract_strided_slice %1 {offsets = [0, 15], sizes = [15, 5], strides = [1, 1]} : vector<15x34xf32> to vector<15x5xf32>
    %622 = vector.extract_strided_slice %3 {offsets = [0, 15], sizes = [15, 5], strides = [1, 1]} : vector<15x34xf32> to vector<15x5xf32>
    %623 = arith.mulf %622, %464 : vector<15x5xf32>
    %cst_29 = arith.constant 6.62341309 : f32
    %624 = vector.broadcast %cst_29 : f32 to vector<15x5xf32>
    %625 = arith.mulf %621, %624 : vector<15x5xf32>
    %626 = arith.minimumf %623, %625 : vector<15x5xf32>
    %627 = vector.broadcast %620 : vector<1x5xf32> to vector<15x5xf32>
    %628 = arith.mulf %627, %626 : vector<15x5xf32>
    %629 = arith.addf %619, %628 : vector<15x5xf32>
    %630 = vector.extract_strided_slice %5 {offsets = [0, 16], sizes = [1, 5], strides = [1, 1]} : vector<1x34xf32> to vector<1x5xf32>
    %631 = vector.extract_strided_slice %1 {offsets = [0, 16], sizes = [15, 5], strides = [1, 1]} : vector<15x34xf32> to vector<15x5xf32>
    %632 = vector.extract_strided_slice %3 {offsets = [0, 16], sizes = [15, 5], strides = [1, 1]} : vector<15x34xf32> to vector<15x5xf32>
    %633 = arith.mulf %632, %464 : vector<15x5xf32>
    %cst_30 = arith.constant 6.62341309 : f32
    %634 = vector.broadcast %cst_30 : f32 to vector<15x5xf32>
    %635 = arith.mulf %631, %634 : vector<15x5xf32>
    %636 = arith.minimumf %633, %635 : vector<15x5xf32>
    %637 = vector.broadcast %630 : vector<1x5xf32> to vector<15x5xf32>
    %638 = arith.mulf %637, %636 : vector<15x5xf32>
    %639 = arith.addf %629, %638 : vector<15x5xf32>
    %640 = vector.extract_strided_slice %5 {offsets = [0, 17], sizes = [1, 5], strides = [1, 1]} : vector<1x34xf32> to vector<1x5xf32>
    %641 = vector.extract_strided_slice %1 {offsets = [0, 17], sizes = [15, 5], strides = [1, 1]} : vector<15x34xf32> to vector<15x5xf32>
    %642 = vector.extract_strided_slice %3 {offsets = [0, 17], sizes = [15, 5], strides = [1, 1]} : vector<15x34xf32> to vector<15x5xf32>
    %643 = arith.mulf %642, %464 : vector<15x5xf32>
    %cst_31 = arith.constant 6.62341309 : f32
    %644 = vector.broadcast %cst_31 : f32 to vector<15x5xf32>
    %645 = arith.mulf %641, %644 : vector<15x5xf32>
    %646 = arith.minimumf %643, %645 : vector<15x5xf32>
    %647 = vector.broadcast %640 : vector<1x5xf32> to vector<15x5xf32>
    %648 = arith.mulf %647, %646 : vector<15x5xf32>
    %649 = arith.addf %639, %648 : vector<15x5xf32>
    %650 = vector.extract_strided_slice %5 {offsets = [0, 18], sizes = [1, 5], strides = [1, 1]} : vector<1x34xf32> to vector<1x5xf32>
    %651 = vector.extract_strided_slice %1 {offsets = [0, 18], sizes = [15, 5], strides = [1, 1]} : vector<15x34xf32> to vector<15x5xf32>
    %652 = vector.extract_strided_slice %3 {offsets = [0, 18], sizes = [15, 5], strides = [1, 1]} : vector<15x34xf32> to vector<15x5xf32>
    %653 = arith.mulf %652, %464 : vector<15x5xf32>
    %cst_32 = arith.constant 6.62341309 : f32
    %654 = vector.broadcast %cst_32 : f32 to vector<15x5xf32>
    %655 = arith.mulf %651, %654 : vector<15x5xf32>
    %656 = arith.minimumf %653, %655 : vector<15x5xf32>
    %657 = vector.broadcast %650 : vector<1x5xf32> to vector<15x5xf32>
    %658 = arith.mulf %657, %656 : vector<15x5xf32>
    %659 = arith.addf %649, %658 : vector<15x5xf32>
    %660 = vector.extract_strided_slice %5 {offsets = [0, 19], sizes = [1, 5], strides = [1, 1]} : vector<1x34xf32> to vector<1x5xf32>
    %661 = vector.extract_strided_slice %1 {offsets = [0, 19], sizes = [15, 5], strides = [1, 1]} : vector<15x34xf32> to vector<15x5xf32>
    %662 = vector.extract_strided_slice %3 {offsets = [0, 19], sizes = [15, 5], strides = [1, 1]} : vector<15x34xf32> to vector<15x5xf32>
    %663 = arith.mulf %662, %464 : vector<15x5xf32>
    %cst_33 = arith.constant 6.62341309 : f32
    %664 = vector.broadcast %cst_33 : f32 to vector<15x5xf32>
    %665 = arith.mulf %661, %664 : vector<15x5xf32>
    %666 = arith.minimumf %663, %665 : vector<15x5xf32>
    %667 = vector.broadcast %660 : vector<1x5xf32> to vector<15x5xf32>
    %668 = arith.mulf %667, %666 : vector<15x5xf32>
    %669 = arith.addf %659, %668 : vector<15x5xf32>
    %670 = vector.extract_strided_slice %5 {offsets = [0, 20], sizes = [1, 5], strides = [1, 1]} : vector<1x34xf32> to vector<1x5xf32>
    %671 = vector.extract_strided_slice %1 {offsets = [0, 20], sizes = [15, 5], strides = [1, 1]} : vector<15x34xf32> to vector<15x5xf32>
    %672 = vector.extract_strided_slice %3 {offsets = [0, 20], sizes = [15, 5], strides = [1, 1]} : vector<15x34xf32> to vector<15x5xf32>
    %673 = arith.mulf %672, %464 : vector<15x5xf32>
    %cst_34 = arith.constant 6.62341309 : f32
    %674 = vector.broadcast %cst_34 : f32 to vector<15x5xf32>
    %675 = arith.mulf %671, %674 : vector<15x5xf32>
    %676 = arith.minimumf %673, %675 : vector<15x5xf32>
    %677 = vector.broadcast %670 : vector<1x5xf32> to vector<15x5xf32>
    %678 = arith.mulf %677, %676 : vector<15x5xf32>
    %679 = arith.addf %669, %678 : vector<15x5xf32>
    %680 = vector.extract_strided_slice %5 {offsets = [0, 21], sizes = [1, 5], strides = [1, 1]} : vector<1x34xf32> to vector<1x5xf32>
    %681 = vector.extract_strided_slice %1 {offsets = [0, 21], sizes = [15, 5], strides = [1, 1]} : vector<15x34xf32> to vector<15x5xf32>
    %682 = vector.extract_strided_slice %3 {offsets = [0, 21], sizes = [15, 5], strides = [1, 1]} : vector<15x34xf32> to vector<15x5xf32>
    %683 = arith.mulf %682, %464 : vector<15x5xf32>
    %cst_35 = arith.constant 6.62341309 : f32
    %684 = vector.broadcast %cst_35 : f32 to vector<15x5xf32>
    %685 = arith.mulf %681, %684 : vector<15x5xf32>
    %686 = arith.minimumf %683, %685 : vector<15x5xf32>
    %687 = vector.broadcast %680 : vector<1x5xf32> to vector<15x5xf32>
    %688 = arith.mulf %687, %686 : vector<15x5xf32>
    %689 = arith.addf %679, %688 : vector<15x5xf32>
    %690 = vector.extract_strided_slice %5 {offsets = [0, 22], sizes = [1, 5], strides = [1, 1]} : vector<1x34xf32> to vector<1x5xf32>
    %691 = vector.extract_strided_slice %1 {offsets = [0, 22], sizes = [15, 5], strides = [1, 1]} : vector<15x34xf32> to vector<15x5xf32>
    %692 = vector.extract_strided_slice %3 {offsets = [0, 22], sizes = [15, 5], strides = [1, 1]} : vector<15x34xf32> to vector<15x5xf32>
    %693 = arith.mulf %692, %464 : vector<15x5xf32>
    %cst_36 = arith.constant 6.62341309 : f32
    %694 = vector.broadcast %cst_36 : f32 to vector<15x5xf32>
    %695 = arith.mulf %691, %694 : vector<15x5xf32>
    %696 = arith.minimumf %693, %695 : vector<15x5xf32>
    %697 = vector.broadcast %690 : vector<1x5xf32> to vector<15x5xf32>
    %698 = arith.mulf %697, %696 : vector<15x5xf32>
    %699 = arith.addf %689, %698 : vector<15x5xf32>
    %700 = vector.extract_strided_slice %5 {offsets = [0, 23], sizes = [1, 5], strides = [1, 1]} : vector<1x34xf32> to vector<1x5xf32>
    %701 = vector.extract_strided_slice %1 {offsets = [0, 23], sizes = [15, 5], strides = [1, 1]} : vector<15x34xf32> to vector<15x5xf32>
    %702 = vector.extract_strided_slice %3 {offsets = [0, 23], sizes = [15, 5], strides = [1, 1]} : vector<15x34xf32> to vector<15x5xf32>
    %703 = arith.mulf %702, %464 : vector<15x5xf32>
    %cst_37 = arith.constant 6.62341309 : f32
    %704 = vector.broadcast %cst_37 : f32 to vector<15x5xf32>
    %705 = arith.mulf %701, %704 : vector<15x5xf32>
    %706 = arith.minimumf %703, %705 : vector<15x5xf32>
    %707 = vector.broadcast %700 : vector<1x5xf32> to vector<15x5xf32>
    %708 = arith.mulf %707, %706 : vector<15x5xf32>
    %709 = arith.addf %699, %708 : vector<15x5xf32>
    %710 = vector.extract_strided_slice %5 {offsets = [0, 24], sizes = [1, 5], strides = [1, 1]} : vector<1x34xf32> to vector<1x5xf32>
    %711 = vector.extract_strided_slice %1 {offsets = [0, 24], sizes = [15, 5], strides = [1, 1]} : vector<15x34xf32> to vector<15x5xf32>
    %712 = vector.extract_strided_slice %3 {offsets = [0, 24], sizes = [15, 5], strides = [1, 1]} : vector<15x34xf32> to vector<15x5xf32>
    %713 = arith.mulf %712, %464 : vector<15x5xf32>
    %cst_38 = arith.constant 6.62341309 : f32
    %714 = vector.broadcast %cst_38 : f32 to vector<15x5xf32>
    %715 = arith.mulf %711, %714 : vector<15x5xf32>
    %716 = arith.minimumf %713, %715 : vector<15x5xf32>
    %717 = vector.broadcast %710 : vector<1x5xf32> to vector<15x5xf32>
    %718 = arith.mulf %717, %716 : vector<15x5xf32>
    %719 = arith.addf %709, %718 : vector<15x5xf32>
    %720 = vector.extract_strided_slice %5 {offsets = [0, 25], sizes = [1, 5], strides = [1, 1]} : vector<1x34xf32> to vector<1x5xf32>
    %721 = vector.extract_strided_slice %1 {offsets = [0, 25], sizes = [15, 5], strides = [1, 1]} : vector<15x34xf32> to vector<15x5xf32>
    %722 = vector.extract_strided_slice %3 {offsets = [0, 25], sizes = [15, 5], strides = [1, 1]} : vector<15x34xf32> to vector<15x5xf32>
    %723 = arith.mulf %722, %464 : vector<15x5xf32>
    %cst_39 = arith.constant 6.62341309 : f32
    %724 = vector.broadcast %cst_39 : f32 to vector<15x5xf32>
    %725 = arith.mulf %721, %724 : vector<15x5xf32>
    %726 = arith.minimumf %723, %725 : vector<15x5xf32>
    %727 = vector.broadcast %720 : vector<1x5xf32> to vector<15x5xf32>
    %728 = arith.mulf %727, %726 : vector<15x5xf32>
    %729 = arith.addf %719, %728 : vector<15x5xf32>
    %730 = vector.extract_strided_slice %5 {offsets = [0, 26], sizes = [1, 5], strides = [1, 1]} : vector<1x34xf32> to vector<1x5xf32>
    %731 = vector.extract_strided_slice %1 {offsets = [0, 26], sizes = [15, 5], strides = [1, 1]} : vector<15x34xf32> to vector<15x5xf32>
    %732 = vector.extract_strided_slice %3 {offsets = [0, 26], sizes = [15, 5], strides = [1, 1]} : vector<15x34xf32> to vector<15x5xf32>
    %733 = arith.mulf %732, %464 : vector<15x5xf32>
    %cst_40 = arith.constant 6.62341309 : f32
    %734 = vector.broadcast %cst_40 : f32 to vector<15x5xf32>
    %735 = arith.mulf %731, %734 : vector<15x5xf32>
    %736 = arith.minimumf %733, %735 : vector<15x5xf32>
    %737 = vector.broadcast %730 : vector<1x5xf32> to vector<15x5xf32>
    %738 = arith.mulf %737, %736 : vector<15x5xf32>
    %739 = arith.addf %729, %738 : vector<15x5xf32>
    %740 = vector.extract_strided_slice %5 {offsets = [0, 27], sizes = [1, 5], strides = [1, 1]} : vector<1x34xf32> to vector<1x5xf32>
    %741 = vector.extract_strided_slice %1 {offsets = [0, 27], sizes = [15, 5], strides = [1, 1]} : vector<15x34xf32> to vector<15x5xf32>
    %742 = vector.extract_strided_slice %3 {offsets = [0, 27], sizes = [15, 5], strides = [1, 1]} : vector<15x34xf32> to vector<15x5xf32>
    %743 = arith.mulf %742, %464 : vector<15x5xf32>
    %cst_41 = arith.constant 6.62341309 : f32
    %744 = vector.broadcast %cst_41 : f32 to vector<15x5xf32>
    %745 = arith.mulf %741, %744 : vector<15x5xf32>
    %746 = arith.minimumf %743, %745 : vector<15x5xf32>
    %747 = vector.broadcast %740 : vector<1x5xf32> to vector<15x5xf32>
    %748 = arith.mulf %747, %746 : vector<15x5xf32>
    %749 = arith.addf %739, %748 : vector<15x5xf32>
    %750 = vector.extract_strided_slice %5 {offsets = [0, 28], sizes = [1, 5], strides = [1, 1]} : vector<1x34xf32> to vector<1x5xf32>
    %751 = vector.extract_strided_slice %1 {offsets = [0, 28], sizes = [15, 5], strides = [1, 1]} : vector<15x34xf32> to vector<15x5xf32>
    %752 = vector.extract_strided_slice %3 {offsets = [0, 28], sizes = [15, 5], strides = [1, 1]} : vector<15x34xf32> to vector<15x5xf32>
    %753 = arith.mulf %752, %464 : vector<15x5xf32>
    %cst_42 = arith.constant 6.62341309 : f32
    %754 = vector.broadcast %cst_42 : f32 to vector<15x5xf32>
    %755 = arith.mulf %751, %754 : vector<15x5xf32>
    %756 = arith.minimumf %753, %755 : vector<15x5xf32>
    %757 = vector.broadcast %750 : vector<1x5xf32> to vector<15x5xf32>
    %758 = arith.mulf %757, %756 : vector<15x5xf32>
    %759 = arith.addf %749, %758 : vector<15x5xf32>
    %760 = vector.extract_strided_slice %5 {offsets = [0, 29], sizes = [1, 5], strides = [1, 1]} : vector<1x34xf32> to vector<1x5xf32>
    %761 = vector.extract_strided_slice %1 {offsets = [0, 29], sizes = [15, 5], strides = [1, 1]} : vector<15x34xf32> to vector<15x5xf32>
    %762 = vector.extract_strided_slice %3 {offsets = [0, 29], sizes = [15, 5], strides = [1, 1]} : vector<15x34xf32> to vector<15x5xf32>
    %763 = arith.mulf %762, %464 : vector<15x5xf32>
    %cst_43 = arith.constant 6.62341309 : f32
    %764 = vector.broadcast %cst_43 : f32 to vector<15x5xf32>
    %765 = arith.mulf %761, %764 : vector<15x5xf32>
    %766 = arith.minimumf %763, %765 : vector<15x5xf32>
    %767 = vector.broadcast %760 : vector<1x5xf32> to vector<15x5xf32>
    %768 = arith.mulf %767, %766 : vector<15x5xf32>
    %769 = arith.addf %759, %768 : vector<15x5xf32>
    %770 = vector.broadcast %466 : vector<1x5xf32> to vector<15x5xf32>
    %771 = arith.divf %769, %770 : vector<15x5xf32>
    %cst_44 = arith.constant 0.000000e+00 : f32
    %772 = vector.broadcast %cst_44 : f32 to vector<15x5xf32>
    %cst_45 = arith.constant 0.000000e+00 : f32
    %773 = vector.broadcast %cst_45 : f32 to vector<15x5xf32>
    %cst_46 = arith.constant 0.000000e+00 : f32
    %774 = vector.broadcast %cst_46 : f32 to vector<15x5xf32>
    %775 = vector.extract_strided_slice %5 {offsets = [0, 0], sizes = [1, 5], strides = [1, 1]} : vector<1x34xf32> to vector<1x5xf32>
    %776 = vector.extract_strided_slice %1 {offsets = [0, 0], sizes = [15, 5], strides = [1, 1]} : vector<15x34xf32> to vector<15x5xf32>
    %777 = vector.extract_strided_slice %3 {offsets = [0, 0], sizes = [15, 5], strides = [1, 1]} : vector<15x34xf32> to vector<15x5xf32>
    %778 = arith.mulf %777, %464 : vector<15x5xf32>
    %cst_47 = arith.constant 6.62341309 : f32
    %779 = vector.broadcast %cst_47 : f32 to vector<15x5xf32>
    %780 = arith.mulf %776, %779 : vector<15x5xf32>
    %781 = arith.minimumf %778, %780 : vector<15x5xf32>
    %782 = arith.subf %776, %468 : vector<15x5xf32>
    %783 = arith.subf %781, %771 : vector<15x5xf32>
    %784 = vector.broadcast %775 : vector<1x5xf32> to vector<15x5xf32>
    %785 = arith.mulf %784, %782 : vector<15x5xf32>
    %786 = arith.mulf %785, %783 : vector<15x5xf32>
    %787 = arith.addf %772, %786 : vector<15x5xf32>
    %788 = vector.broadcast %775 : vector<1x5xf32> to vector<15x5xf32>
    %789 = arith.mulf %788, %782 : vector<15x5xf32>
    %790 = arith.mulf %789, %782 : vector<15x5xf32>
    %791 = arith.addf %773, %790 : vector<15x5xf32>
    %792 = vector.broadcast %775 : vector<1x5xf32> to vector<15x5xf32>
    %793 = arith.mulf %792, %783 : vector<15x5xf32>
    %794 = arith.mulf %793, %783 : vector<15x5xf32>
    %795 = arith.addf %774, %794 : vector<15x5xf32>
    %796 = vector.extract_strided_slice %5 {offsets = [0, 1], sizes = [1, 5], strides = [1, 1]} : vector<1x34xf32> to vector<1x5xf32>
    %797 = vector.extract_strided_slice %1 {offsets = [0, 1], sizes = [15, 5], strides = [1, 1]} : vector<15x34xf32> to vector<15x5xf32>
    %798 = vector.extract_strided_slice %3 {offsets = [0, 1], sizes = [15, 5], strides = [1, 1]} : vector<15x34xf32> to vector<15x5xf32>
    %799 = arith.mulf %798, %464 : vector<15x5xf32>
    %cst_48 = arith.constant 6.62341309 : f32
    %800 = vector.broadcast %cst_48 : f32 to vector<15x5xf32>
    %801 = arith.mulf %797, %800 : vector<15x5xf32>
    %802 = arith.minimumf %799, %801 : vector<15x5xf32>
    %803 = arith.subf %797, %468 : vector<15x5xf32>
    %804 = arith.subf %802, %771 : vector<15x5xf32>
    %805 = vector.broadcast %796 : vector<1x5xf32> to vector<15x5xf32>
    %806 = arith.mulf %805, %803 : vector<15x5xf32>
    %807 = arith.mulf %806, %804 : vector<15x5xf32>
    %808 = arith.addf %787, %807 : vector<15x5xf32>
    %809 = vector.broadcast %796 : vector<1x5xf32> to vector<15x5xf32>
    %810 = arith.mulf %809, %803 : vector<15x5xf32>
    %811 = arith.mulf %810, %803 : vector<15x5xf32>
    %812 = arith.addf %791, %811 : vector<15x5xf32>
    %813 = vector.broadcast %796 : vector<1x5xf32> to vector<15x5xf32>
    %814 = arith.mulf %813, %804 : vector<15x5xf32>
    %815 = arith.mulf %814, %804 : vector<15x5xf32>
    %816 = arith.addf %795, %815 : vector<15x5xf32>
    %817 = vector.extract_strided_slice %5 {offsets = [0, 2], sizes = [1, 5], strides = [1, 1]} : vector<1x34xf32> to vector<1x5xf32>
    %818 = vector.extract_strided_slice %1 {offsets = [0, 2], sizes = [15, 5], strides = [1, 1]} : vector<15x34xf32> to vector<15x5xf32>
    %819 = vector.extract_strided_slice %3 {offsets = [0, 2], sizes = [15, 5], strides = [1, 1]} : vector<15x34xf32> to vector<15x5xf32>
    %820 = arith.mulf %819, %464 : vector<15x5xf32>
    %cst_49 = arith.constant 6.62341309 : f32
    %821 = vector.broadcast %cst_49 : f32 to vector<15x5xf32>
    %822 = arith.mulf %818, %821 : vector<15x5xf32>
    %823 = arith.minimumf %820, %822 : vector<15x5xf32>
    %824 = arith.subf %818, %468 : vector<15x5xf32>
    %825 = arith.subf %823, %771 : vector<15x5xf32>
    %826 = vector.broadcast %817 : vector<1x5xf32> to vector<15x5xf32>
    %827 = arith.mulf %826, %824 : vector<15x5xf32>
    %828 = arith.mulf %827, %825 : vector<15x5xf32>
    %829 = arith.addf %808, %828 : vector<15x5xf32>
    %830 = vector.broadcast %817 : vector<1x5xf32> to vector<15x5xf32>
    %831 = arith.mulf %830, %824 : vector<15x5xf32>
    %832 = arith.mulf %831, %824 : vector<15x5xf32>
    %833 = arith.addf %812, %832 : vector<15x5xf32>
    %834 = vector.broadcast %817 : vector<1x5xf32> to vector<15x5xf32>
    %835 = arith.mulf %834, %825 : vector<15x5xf32>
    %836 = arith.mulf %835, %825 : vector<15x5xf32>
    %837 = arith.addf %816, %836 : vector<15x5xf32>
    %838 = vector.extract_strided_slice %5 {offsets = [0, 3], sizes = [1, 5], strides = [1, 1]} : vector<1x34xf32> to vector<1x5xf32>
    %839 = vector.extract_strided_slice %1 {offsets = [0, 3], sizes = [15, 5], strides = [1, 1]} : vector<15x34xf32> to vector<15x5xf32>
    %840 = vector.extract_strided_slice %3 {offsets = [0, 3], sizes = [15, 5], strides = [1, 1]} : vector<15x34xf32> to vector<15x5xf32>
    %841 = arith.mulf %840, %464 : vector<15x5xf32>
    %cst_50 = arith.constant 6.62341309 : f32
    %842 = vector.broadcast %cst_50 : f32 to vector<15x5xf32>
    %843 = arith.mulf %839, %842 : vector<15x5xf32>
    %844 = arith.minimumf %841, %843 : vector<15x5xf32>
    %845 = arith.subf %839, %468 : vector<15x5xf32>
    %846 = arith.subf %844, %771 : vector<15x5xf32>
    %847 = vector.broadcast %838 : vector<1x5xf32> to vector<15x5xf32>
    %848 = arith.mulf %847, %845 : vector<15x5xf32>
    %849 = arith.mulf %848, %846 : vector<15x5xf32>
    %850 = arith.addf %829, %849 : vector<15x5xf32>
    %851 = vector.broadcast %838 : vector<1x5xf32> to vector<15x5xf32>
    %852 = arith.mulf %851, %845 : vector<15x5xf32>
    %853 = arith.mulf %852, %845 : vector<15x5xf32>
    %854 = arith.addf %833, %853 : vector<15x5xf32>
    %855 = vector.broadcast %838 : vector<1x5xf32> to vector<15x5xf32>
    %856 = arith.mulf %855, %846 : vector<15x5xf32>
    %857 = arith.mulf %856, %846 : vector<15x5xf32>
    %858 = arith.addf %837, %857 : vector<15x5xf32>
    %859 = vector.extract_strided_slice %5 {offsets = [0, 4], sizes = [1, 5], strides = [1, 1]} : vector<1x34xf32> to vector<1x5xf32>
    %860 = vector.extract_strided_slice %1 {offsets = [0, 4], sizes = [15, 5], strides = [1, 1]} : vector<15x34xf32> to vector<15x5xf32>
    %861 = vector.extract_strided_slice %3 {offsets = [0, 4], sizes = [15, 5], strides = [1, 1]} : vector<15x34xf32> to vector<15x5xf32>
    %862 = arith.mulf %861, %464 : vector<15x5xf32>
    %cst_51 = arith.constant 6.62341309 : f32
    %863 = vector.broadcast %cst_51 : f32 to vector<15x5xf32>
    %864 = arith.mulf %860, %863 : vector<15x5xf32>
    %865 = arith.minimumf %862, %864 : vector<15x5xf32>
    %866 = arith.subf %860, %468 : vector<15x5xf32>
    %867 = arith.subf %865, %771 : vector<15x5xf32>
    %868 = vector.broadcast %859 : vector<1x5xf32> to vector<15x5xf32>
    %869 = arith.mulf %868, %866 : vector<15x5xf32>
    %870 = arith.mulf %869, %867 : vector<15x5xf32>
    %871 = arith.addf %850, %870 : vector<15x5xf32>
    %872 = vector.broadcast %859 : vector<1x5xf32> to vector<15x5xf32>
    %873 = arith.mulf %872, %866 : vector<15x5xf32>
    %874 = arith.mulf %873, %866 : vector<15x5xf32>
    %875 = arith.addf %854, %874 : vector<15x5xf32>
    %876 = vector.broadcast %859 : vector<1x5xf32> to vector<15x5xf32>
    %877 = arith.mulf %876, %867 : vector<15x5xf32>
    %878 = arith.mulf %877, %867 : vector<15x5xf32>
    %879 = arith.addf %858, %878 : vector<15x5xf32>
    %880 = vector.extract_strided_slice %5 {offsets = [0, 5], sizes = [1, 5], strides = [1, 1]} : vector<1x34xf32> to vector<1x5xf32>
    %881 = vector.extract_strided_slice %1 {offsets = [0, 5], sizes = [15, 5], strides = [1, 1]} : vector<15x34xf32> to vector<15x5xf32>
    %882 = vector.extract_strided_slice %3 {offsets = [0, 5], sizes = [15, 5], strides = [1, 1]} : vector<15x34xf32> to vector<15x5xf32>
    %883 = arith.mulf %882, %464 : vector<15x5xf32>
    %cst_52 = arith.constant 6.62341309 : f32
    %884 = vector.broadcast %cst_52 : f32 to vector<15x5xf32>
    %885 = arith.mulf %881, %884 : vector<15x5xf32>
    %886 = arith.minimumf %883, %885 : vector<15x5xf32>
    %887 = arith.subf %881, %468 : vector<15x5xf32>
    %888 = arith.subf %886, %771 : vector<15x5xf32>
    %889 = vector.broadcast %880 : vector<1x5xf32> to vector<15x5xf32>
    %890 = arith.mulf %889, %887 : vector<15x5xf32>
    %891 = arith.mulf %890, %888 : vector<15x5xf32>
    %892 = arith.addf %871, %891 : vector<15x5xf32>
    %893 = vector.broadcast %880 : vector<1x5xf32> to vector<15x5xf32>
    %894 = arith.mulf %893, %887 : vector<15x5xf32>
    %895 = arith.mulf %894, %887 : vector<15x5xf32>
    %896 = arith.addf %875, %895 : vector<15x5xf32>
    %897 = vector.broadcast %880 : vector<1x5xf32> to vector<15x5xf32>
    %898 = arith.mulf %897, %888 : vector<15x5xf32>
    %899 = arith.mulf %898, %888 : vector<15x5xf32>
    %900 = arith.addf %879, %899 : vector<15x5xf32>
    %901 = vector.extract_strided_slice %5 {offsets = [0, 6], sizes = [1, 5], strides = [1, 1]} : vector<1x34xf32> to vector<1x5xf32>
    %902 = vector.extract_strided_slice %1 {offsets = [0, 6], sizes = [15, 5], strides = [1, 1]} : vector<15x34xf32> to vector<15x5xf32>
    %903 = vector.extract_strided_slice %3 {offsets = [0, 6], sizes = [15, 5], strides = [1, 1]} : vector<15x34xf32> to vector<15x5xf32>
    %904 = arith.mulf %903, %464 : vector<15x5xf32>
    %cst_53 = arith.constant 6.62341309 : f32
    %905 = vector.broadcast %cst_53 : f32 to vector<15x5xf32>
    %906 = arith.mulf %902, %905 : vector<15x5xf32>
    %907 = arith.minimumf %904, %906 : vector<15x5xf32>
    %908 = arith.subf %902, %468 : vector<15x5xf32>
    %909 = arith.subf %907, %771 : vector<15x5xf32>
    %910 = vector.broadcast %901 : vector<1x5xf32> to vector<15x5xf32>
    %911 = arith.mulf %910, %908 : vector<15x5xf32>
    %912 = arith.mulf %911, %909 : vector<15x5xf32>
    %913 = arith.addf %892, %912 : vector<15x5xf32>
    %914 = vector.broadcast %901 : vector<1x5xf32> to vector<15x5xf32>
    %915 = arith.mulf %914, %908 : vector<15x5xf32>
    %916 = arith.mulf %915, %908 : vector<15x5xf32>
    %917 = arith.addf %896, %916 : vector<15x5xf32>
    %918 = vector.broadcast %901 : vector<1x5xf32> to vector<15x5xf32>
    %919 = arith.mulf %918, %909 : vector<15x5xf32>
    %920 = arith.mulf %919, %909 : vector<15x5xf32>
    %921 = arith.addf %900, %920 : vector<15x5xf32>
    %922 = vector.extract_strided_slice %5 {offsets = [0, 7], sizes = [1, 5], strides = [1, 1]} : vector<1x34xf32> to vector<1x5xf32>
    %923 = vector.extract_strided_slice %1 {offsets = [0, 7], sizes = [15, 5], strides = [1, 1]} : vector<15x34xf32> to vector<15x5xf32>
    %924 = vector.extract_strided_slice %3 {offsets = [0, 7], sizes = [15, 5], strides = [1, 1]} : vector<15x34xf32> to vector<15x5xf32>
    %925 = arith.mulf %924, %464 : vector<15x5xf32>
    %cst_54 = arith.constant 6.62341309 : f32
    %926 = vector.broadcast %cst_54 : f32 to vector<15x5xf32>
    %927 = arith.mulf %923, %926 : vector<15x5xf32>
    %928 = arith.minimumf %925, %927 : vector<15x5xf32>
    %929 = arith.subf %923, %468 : vector<15x5xf32>
    %930 = arith.subf %928, %771 : vector<15x5xf32>
    %931 = vector.broadcast %922 : vector<1x5xf32> to vector<15x5xf32>
    %932 = arith.mulf %931, %929 : vector<15x5xf32>
    %933 = arith.mulf %932, %930 : vector<15x5xf32>
    %934 = arith.addf %913, %933 : vector<15x5xf32>
    %935 = vector.broadcast %922 : vector<1x5xf32> to vector<15x5xf32>
    %936 = arith.mulf %935, %929 : vector<15x5xf32>
    %937 = arith.mulf %936, %929 : vector<15x5xf32>
    %938 = arith.addf %917, %937 : vector<15x5xf32>
    %939 = vector.broadcast %922 : vector<1x5xf32> to vector<15x5xf32>
    %940 = arith.mulf %939, %930 : vector<15x5xf32>
    %941 = arith.mulf %940, %930 : vector<15x5xf32>
    %942 = arith.addf %921, %941 : vector<15x5xf32>
    %943 = vector.extract_strided_slice %5 {offsets = [0, 8], sizes = [1, 5], strides = [1, 1]} : vector<1x34xf32> to vector<1x5xf32>
    %944 = vector.extract_strided_slice %1 {offsets = [0, 8], sizes = [15, 5], strides = [1, 1]} : vector<15x34xf32> to vector<15x5xf32>
    %945 = vector.extract_strided_slice %3 {offsets = [0, 8], sizes = [15, 5], strides = [1, 1]} : vector<15x34xf32> to vector<15x5xf32>
    %946 = arith.mulf %945, %464 : vector<15x5xf32>
    %cst_55 = arith.constant 6.62341309 : f32
    %947 = vector.broadcast %cst_55 : f32 to vector<15x5xf32>
    %948 = arith.mulf %944, %947 : vector<15x5xf32>
    %949 = arith.minimumf %946, %948 : vector<15x5xf32>
    %950 = arith.subf %944, %468 : vector<15x5xf32>
    %951 = arith.subf %949, %771 : vector<15x5xf32>
    %952 = vector.broadcast %943 : vector<1x5xf32> to vector<15x5xf32>
    %953 = arith.mulf %952, %950 : vector<15x5xf32>
    %954 = arith.mulf %953, %951 : vector<15x5xf32>
    %955 = arith.addf %934, %954 : vector<15x5xf32>
    %956 = vector.broadcast %943 : vector<1x5xf32> to vector<15x5xf32>
    %957 = arith.mulf %956, %950 : vector<15x5xf32>
    %958 = arith.mulf %957, %950 : vector<15x5xf32>
    %959 = arith.addf %938, %958 : vector<15x5xf32>
    %960 = vector.broadcast %943 : vector<1x5xf32> to vector<15x5xf32>
    %961 = arith.mulf %960, %951 : vector<15x5xf32>
    %962 = arith.mulf %961, %951 : vector<15x5xf32>
    %963 = arith.addf %942, %962 : vector<15x5xf32>
    %964 = vector.extract_strided_slice %5 {offsets = [0, 9], sizes = [1, 5], strides = [1, 1]} : vector<1x34xf32> to vector<1x5xf32>
    %965 = vector.extract_strided_slice %1 {offsets = [0, 9], sizes = [15, 5], strides = [1, 1]} : vector<15x34xf32> to vector<15x5xf32>
    %966 = vector.extract_strided_slice %3 {offsets = [0, 9], sizes = [15, 5], strides = [1, 1]} : vector<15x34xf32> to vector<15x5xf32>
    %967 = arith.mulf %966, %464 : vector<15x5xf32>
    %cst_56 = arith.constant 6.62341309 : f32
    %968 = vector.broadcast %cst_56 : f32 to vector<15x5xf32>
    %969 = arith.mulf %965, %968 : vector<15x5xf32>
    %970 = arith.minimumf %967, %969 : vector<15x5xf32>
    %971 = arith.subf %965, %468 : vector<15x5xf32>
    %972 = arith.subf %970, %771 : vector<15x5xf32>
    %973 = vector.broadcast %964 : vector<1x5xf32> to vector<15x5xf32>
    %974 = arith.mulf %973, %971 : vector<15x5xf32>
    %975 = arith.mulf %974, %972 : vector<15x5xf32>
    %976 = arith.addf %955, %975 : vector<15x5xf32>
    %977 = vector.broadcast %964 : vector<1x5xf32> to vector<15x5xf32>
    %978 = arith.mulf %977, %971 : vector<15x5xf32>
    %979 = arith.mulf %978, %971 : vector<15x5xf32>
    %980 = arith.addf %959, %979 : vector<15x5xf32>
    %981 = vector.broadcast %964 : vector<1x5xf32> to vector<15x5xf32>
    %982 = arith.mulf %981, %972 : vector<15x5xf32>
    %983 = arith.mulf %982, %972 : vector<15x5xf32>
    %984 = arith.addf %963, %983 : vector<15x5xf32>
    %985 = vector.extract_strided_slice %5 {offsets = [0, 10], sizes = [1, 5], strides = [1, 1]} : vector<1x34xf32> to vector<1x5xf32>
    %986 = vector.extract_strided_slice %1 {offsets = [0, 10], sizes = [15, 5], strides = [1, 1]} : vector<15x34xf32> to vector<15x5xf32>
    %987 = vector.extract_strided_slice %3 {offsets = [0, 10], sizes = [15, 5], strides = [1, 1]} : vector<15x34xf32> to vector<15x5xf32>
    %988 = arith.mulf %987, %464 : vector<15x5xf32>
    %cst_57 = arith.constant 6.62341309 : f32
    %989 = vector.broadcast %cst_57 : f32 to vector<15x5xf32>
    %990 = arith.mulf %986, %989 : vector<15x5xf32>
    %991 = arith.minimumf %988, %990 : vector<15x5xf32>
    %992 = arith.subf %986, %468 : vector<15x5xf32>
    %993 = arith.subf %991, %771 : vector<15x5xf32>
    %994 = vector.broadcast %985 : vector<1x5xf32> to vector<15x5xf32>
    %995 = arith.mulf %994, %992 : vector<15x5xf32>
    %996 = arith.mulf %995, %993 : vector<15x5xf32>
    %997 = arith.addf %976, %996 : vector<15x5xf32>
    %998 = vector.broadcast %985 : vector<1x5xf32> to vector<15x5xf32>
    %999 = arith.mulf %998, %992 : vector<15x5xf32>
    %1000 = arith.mulf %999, %992 : vector<15x5xf32>
    %1001 = arith.addf %980, %1000 : vector<15x5xf32>
    %1002 = vector.broadcast %985 : vector<1x5xf32> to vector<15x5xf32>
    %1003 = arith.mulf %1002, %993 : vector<15x5xf32>
    %1004 = arith.mulf %1003, %993 : vector<15x5xf32>
    %1005 = arith.addf %984, %1004 : vector<15x5xf32>
    %1006 = vector.extract_strided_slice %5 {offsets = [0, 11], sizes = [1, 5], strides = [1, 1]} : vector<1x34xf32> to vector<1x5xf32>
    %1007 = vector.extract_strided_slice %1 {offsets = [0, 11], sizes = [15, 5], strides = [1, 1]} : vector<15x34xf32> to vector<15x5xf32>
    %1008 = vector.extract_strided_slice %3 {offsets = [0, 11], sizes = [15, 5], strides = [1, 1]} : vector<15x34xf32> to vector<15x5xf32>
    %1009 = arith.mulf %1008, %464 : vector<15x5xf32>
    %cst_58 = arith.constant 6.62341309 : f32
    %1010 = vector.broadcast %cst_58 : f32 to vector<15x5xf32>
    %1011 = arith.mulf %1007, %1010 : vector<15x5xf32>
    %1012 = arith.minimumf %1009, %1011 : vector<15x5xf32>
    %1013 = arith.subf %1007, %468 : vector<15x5xf32>
    %1014 = arith.subf %1012, %771 : vector<15x5xf32>
    %1015 = vector.broadcast %1006 : vector<1x5xf32> to vector<15x5xf32>
    %1016 = arith.mulf %1015, %1013 : vector<15x5xf32>
    %1017 = arith.mulf %1016, %1014 : vector<15x5xf32>
    %1018 = arith.addf %997, %1017 : vector<15x5xf32>
    %1019 = vector.broadcast %1006 : vector<1x5xf32> to vector<15x5xf32>
    %1020 = arith.mulf %1019, %1013 : vector<15x5xf32>
    %1021 = arith.mulf %1020, %1013 : vector<15x5xf32>
    %1022 = arith.addf %1001, %1021 : vector<15x5xf32>
    %1023 = vector.broadcast %1006 : vector<1x5xf32> to vector<15x5xf32>
    %1024 = arith.mulf %1023, %1014 : vector<15x5xf32>
    %1025 = arith.mulf %1024, %1014 : vector<15x5xf32>
    %1026 = arith.addf %1005, %1025 : vector<15x5xf32>
    %1027 = vector.extract_strided_slice %5 {offsets = [0, 12], sizes = [1, 5], strides = [1, 1]} : vector<1x34xf32> to vector<1x5xf32>
    %1028 = vector.extract_strided_slice %1 {offsets = [0, 12], sizes = [15, 5], strides = [1, 1]} : vector<15x34xf32> to vector<15x5xf32>
    %1029 = vector.extract_strided_slice %3 {offsets = [0, 12], sizes = [15, 5], strides = [1, 1]} : vector<15x34xf32> to vector<15x5xf32>
    %1030 = arith.mulf %1029, %464 : vector<15x5xf32>
    %cst_59 = arith.constant 6.62341309 : f32
    %1031 = vector.broadcast %cst_59 : f32 to vector<15x5xf32>
    %1032 = arith.mulf %1028, %1031 : vector<15x5xf32>
    %1033 = arith.minimumf %1030, %1032 : vector<15x5xf32>
    %1034 = arith.subf %1028, %468 : vector<15x5xf32>
    %1035 = arith.subf %1033, %771 : vector<15x5xf32>
    %1036 = vector.broadcast %1027 : vector<1x5xf32> to vector<15x5xf32>
    %1037 = arith.mulf %1036, %1034 : vector<15x5xf32>
    %1038 = arith.mulf %1037, %1035 : vector<15x5xf32>
    %1039 = arith.addf %1018, %1038 : vector<15x5xf32>
    %1040 = vector.broadcast %1027 : vector<1x5xf32> to vector<15x5xf32>
    %1041 = arith.mulf %1040, %1034 : vector<15x5xf32>
    %1042 = arith.mulf %1041, %1034 : vector<15x5xf32>
    %1043 = arith.addf %1022, %1042 : vector<15x5xf32>
    %1044 = vector.broadcast %1027 : vector<1x5xf32> to vector<15x5xf32>
    %1045 = arith.mulf %1044, %1035 : vector<15x5xf32>
    %1046 = arith.mulf %1045, %1035 : vector<15x5xf32>
    %1047 = arith.addf %1026, %1046 : vector<15x5xf32>
    %1048 = vector.extract_strided_slice %5 {offsets = [0, 13], sizes = [1, 5], strides = [1, 1]} : vector<1x34xf32> to vector<1x5xf32>
    %1049 = vector.extract_strided_slice %1 {offsets = [0, 13], sizes = [15, 5], strides = [1, 1]} : vector<15x34xf32> to vector<15x5xf32>
    %1050 = vector.extract_strided_slice %3 {offsets = [0, 13], sizes = [15, 5], strides = [1, 1]} : vector<15x34xf32> to vector<15x5xf32>
    %1051 = arith.mulf %1050, %464 : vector<15x5xf32>
    %cst_60 = arith.constant 6.62341309 : f32
    %1052 = vector.broadcast %cst_60 : f32 to vector<15x5xf32>
    %1053 = arith.mulf %1049, %1052 : vector<15x5xf32>
    %1054 = arith.minimumf %1051, %1053 : vector<15x5xf32>
    %1055 = arith.subf %1049, %468 : vector<15x5xf32>
    %1056 = arith.subf %1054, %771 : vector<15x5xf32>
    %1057 = vector.broadcast %1048 : vector<1x5xf32> to vector<15x5xf32>
    %1058 = arith.mulf %1057, %1055 : vector<15x5xf32>
    %1059 = arith.mulf %1058, %1056 : vector<15x5xf32>
    %1060 = arith.addf %1039, %1059 : vector<15x5xf32>
    %1061 = vector.broadcast %1048 : vector<1x5xf32> to vector<15x5xf32>
    %1062 = arith.mulf %1061, %1055 : vector<15x5xf32>
    %1063 = arith.mulf %1062, %1055 : vector<15x5xf32>
    %1064 = arith.addf %1043, %1063 : vector<15x5xf32>
    %1065 = vector.broadcast %1048 : vector<1x5xf32> to vector<15x5xf32>
    %1066 = arith.mulf %1065, %1056 : vector<15x5xf32>
    %1067 = arith.mulf %1066, %1056 : vector<15x5xf32>
    %1068 = arith.addf %1047, %1067 : vector<15x5xf32>
    %1069 = vector.extract_strided_slice %5 {offsets = [0, 14], sizes = [1, 5], strides = [1, 1]} : vector<1x34xf32> to vector<1x5xf32>
    %1070 = vector.extract_strided_slice %1 {offsets = [0, 14], sizes = [15, 5], strides = [1, 1]} : vector<15x34xf32> to vector<15x5xf32>
    %1071 = vector.extract_strided_slice %3 {offsets = [0, 14], sizes = [15, 5], strides = [1, 1]} : vector<15x34xf32> to vector<15x5xf32>
    %1072 = arith.mulf %1071, %464 : vector<15x5xf32>
    %cst_61 = arith.constant 6.62341309 : f32
    %1073 = vector.broadcast %cst_61 : f32 to vector<15x5xf32>
    %1074 = arith.mulf %1070, %1073 : vector<15x5xf32>
    %1075 = arith.minimumf %1072, %1074 : vector<15x5xf32>
    %1076 = arith.subf %1070, %468 : vector<15x5xf32>
    %1077 = arith.subf %1075, %771 : vector<15x5xf32>
    %1078 = vector.broadcast %1069 : vector<1x5xf32> to vector<15x5xf32>
    %1079 = arith.mulf %1078, %1076 : vector<15x5xf32>
    %1080 = arith.mulf %1079, %1077 : vector<15x5xf32>
    %1081 = arith.addf %1060, %1080 : vector<15x5xf32>
    %1082 = vector.broadcast %1069 : vector<1x5xf32> to vector<15x5xf32>
    %1083 = arith.mulf %1082, %1076 : vector<15x5xf32>
    %1084 = arith.mulf %1083, %1076 : vector<15x5xf32>
    %1085 = arith.addf %1064, %1084 : vector<15x5xf32>
    %1086 = vector.broadcast %1069 : vector<1x5xf32> to vector<15x5xf32>
    %1087 = arith.mulf %1086, %1077 : vector<15x5xf32>
    %1088 = arith.mulf %1087, %1077 : vector<15x5xf32>
    %1089 = arith.addf %1068, %1088 : vector<15x5xf32>
    %1090 = vector.extract_strided_slice %5 {offsets = [0, 15], sizes = [1, 5], strides = [1, 1]} : vector<1x34xf32> to vector<1x5xf32>
    %1091 = vector.extract_strided_slice %1 {offsets = [0, 15], sizes = [15, 5], strides = [1, 1]} : vector<15x34xf32> to vector<15x5xf32>
    %1092 = vector.extract_strided_slice %3 {offsets = [0, 15], sizes = [15, 5], strides = [1, 1]} : vector<15x34xf32> to vector<15x5xf32>
    %1093 = arith.mulf %1092, %464 : vector<15x5xf32>
    %cst_62 = arith.constant 6.62341309 : f32
    %1094 = vector.broadcast %cst_62 : f32 to vector<15x5xf32>
    %1095 = arith.mulf %1091, %1094 : vector<15x5xf32>
    %1096 = arith.minimumf %1093, %1095 : vector<15x5xf32>
    %1097 = arith.subf %1091, %468 : vector<15x5xf32>
    %1098 = arith.subf %1096, %771 : vector<15x5xf32>
    %1099 = vector.broadcast %1090 : vector<1x5xf32> to vector<15x5xf32>
    %1100 = arith.mulf %1099, %1097 : vector<15x5xf32>
    %1101 = arith.mulf %1100, %1098 : vector<15x5xf32>
    %1102 = arith.addf %1081, %1101 : vector<15x5xf32>
    %1103 = vector.broadcast %1090 : vector<1x5xf32> to vector<15x5xf32>
    %1104 = arith.mulf %1103, %1097 : vector<15x5xf32>
    %1105 = arith.mulf %1104, %1097 : vector<15x5xf32>
    %1106 = arith.addf %1085, %1105 : vector<15x5xf32>
    %1107 = vector.broadcast %1090 : vector<1x5xf32> to vector<15x5xf32>
    %1108 = arith.mulf %1107, %1098 : vector<15x5xf32>
    %1109 = arith.mulf %1108, %1098 : vector<15x5xf32>
    %1110 = arith.addf %1089, %1109 : vector<15x5xf32>
    %1111 = vector.extract_strided_slice %5 {offsets = [0, 16], sizes = [1, 5], strides = [1, 1]} : vector<1x34xf32> to vector<1x5xf32>
    %1112 = vector.extract_strided_slice %1 {offsets = [0, 16], sizes = [15, 5], strides = [1, 1]} : vector<15x34xf32> to vector<15x5xf32>
    %1113 = vector.extract_strided_slice %3 {offsets = [0, 16], sizes = [15, 5], strides = [1, 1]} : vector<15x34xf32> to vector<15x5xf32>
    %1114 = arith.mulf %1113, %464 : vector<15x5xf32>
    %cst_63 = arith.constant 6.62341309 : f32
    %1115 = vector.broadcast %cst_63 : f32 to vector<15x5xf32>
    %1116 = arith.mulf %1112, %1115 : vector<15x5xf32>
    %1117 = arith.minimumf %1114, %1116 : vector<15x5xf32>
    %1118 = arith.subf %1112, %468 : vector<15x5xf32>
    %1119 = arith.subf %1117, %771 : vector<15x5xf32>
    %1120 = vector.broadcast %1111 : vector<1x5xf32> to vector<15x5xf32>
    %1121 = arith.mulf %1120, %1118 : vector<15x5xf32>
    %1122 = arith.mulf %1121, %1119 : vector<15x5xf32>
    %1123 = arith.addf %1102, %1122 : vector<15x5xf32>
    %1124 = vector.broadcast %1111 : vector<1x5xf32> to vector<15x5xf32>
    %1125 = arith.mulf %1124, %1118 : vector<15x5xf32>
    %1126 = arith.mulf %1125, %1118 : vector<15x5xf32>
    %1127 = arith.addf %1106, %1126 : vector<15x5xf32>
    %1128 = vector.broadcast %1111 : vector<1x5xf32> to vector<15x5xf32>
    %1129 = arith.mulf %1128, %1119 : vector<15x5xf32>
    %1130 = arith.mulf %1129, %1119 : vector<15x5xf32>
    %1131 = arith.addf %1110, %1130 : vector<15x5xf32>
    %1132 = vector.extract_strided_slice %5 {offsets = [0, 17], sizes = [1, 5], strides = [1, 1]} : vector<1x34xf32> to vector<1x5xf32>
    %1133 = vector.extract_strided_slice %1 {offsets = [0, 17], sizes = [15, 5], strides = [1, 1]} : vector<15x34xf32> to vector<15x5xf32>
    %1134 = vector.extract_strided_slice %3 {offsets = [0, 17], sizes = [15, 5], strides = [1, 1]} : vector<15x34xf32> to vector<15x5xf32>
    %1135 = arith.mulf %1134, %464 : vector<15x5xf32>
    %cst_64 = arith.constant 6.62341309 : f32
    %1136 = vector.broadcast %cst_64 : f32 to vector<15x5xf32>
    %1137 = arith.mulf %1133, %1136 : vector<15x5xf32>
    %1138 = arith.minimumf %1135, %1137 : vector<15x5xf32>
    %1139 = arith.subf %1133, %468 : vector<15x5xf32>
    %1140 = arith.subf %1138, %771 : vector<15x5xf32>
    %1141 = vector.broadcast %1132 : vector<1x5xf32> to vector<15x5xf32>
    %1142 = arith.mulf %1141, %1139 : vector<15x5xf32>
    %1143 = arith.mulf %1142, %1140 : vector<15x5xf32>
    %1144 = arith.addf %1123, %1143 : vector<15x5xf32>
    %1145 = vector.broadcast %1132 : vector<1x5xf32> to vector<15x5xf32>
    %1146 = arith.mulf %1145, %1139 : vector<15x5xf32>
    %1147 = arith.mulf %1146, %1139 : vector<15x5xf32>
    %1148 = arith.addf %1127, %1147 : vector<15x5xf32>
    %1149 = vector.broadcast %1132 : vector<1x5xf32> to vector<15x5xf32>
    %1150 = arith.mulf %1149, %1140 : vector<15x5xf32>
    %1151 = arith.mulf %1150, %1140 : vector<15x5xf32>
    %1152 = arith.addf %1131, %1151 : vector<15x5xf32>
    %1153 = vector.extract_strided_slice %5 {offsets = [0, 18], sizes = [1, 5], strides = [1, 1]} : vector<1x34xf32> to vector<1x5xf32>
    %1154 = vector.extract_strided_slice %1 {offsets = [0, 18], sizes = [15, 5], strides = [1, 1]} : vector<15x34xf32> to vector<15x5xf32>
    %1155 = vector.extract_strided_slice %3 {offsets = [0, 18], sizes = [15, 5], strides = [1, 1]} : vector<15x34xf32> to vector<15x5xf32>
    %1156 = arith.mulf %1155, %464 : vector<15x5xf32>
    %cst_65 = arith.constant 6.62341309 : f32
    %1157 = vector.broadcast %cst_65 : f32 to vector<15x5xf32>
    %1158 = arith.mulf %1154, %1157 : vector<15x5xf32>
    %1159 = arith.minimumf %1156, %1158 : vector<15x5xf32>
    %1160 = arith.subf %1154, %468 : vector<15x5xf32>
    %1161 = arith.subf %1159, %771 : vector<15x5xf32>
    %1162 = vector.broadcast %1153 : vector<1x5xf32> to vector<15x5xf32>
    %1163 = arith.mulf %1162, %1160 : vector<15x5xf32>
    %1164 = arith.mulf %1163, %1161 : vector<15x5xf32>
    %1165 = arith.addf %1144, %1164 : vector<15x5xf32>
    %1166 = vector.broadcast %1153 : vector<1x5xf32> to vector<15x5xf32>
    %1167 = arith.mulf %1166, %1160 : vector<15x5xf32>
    %1168 = arith.mulf %1167, %1160 : vector<15x5xf32>
    %1169 = arith.addf %1148, %1168 : vector<15x5xf32>
    %1170 = vector.broadcast %1153 : vector<1x5xf32> to vector<15x5xf32>
    %1171 = arith.mulf %1170, %1161 : vector<15x5xf32>
    %1172 = arith.mulf %1171, %1161 : vector<15x5xf32>
    %1173 = arith.addf %1152, %1172 : vector<15x5xf32>
    %1174 = vector.extract_strided_slice %5 {offsets = [0, 19], sizes = [1, 5], strides = [1, 1]} : vector<1x34xf32> to vector<1x5xf32>
    %1175 = vector.extract_strided_slice %1 {offsets = [0, 19], sizes = [15, 5], strides = [1, 1]} : vector<15x34xf32> to vector<15x5xf32>
    %1176 = vector.extract_strided_slice %3 {offsets = [0, 19], sizes = [15, 5], strides = [1, 1]} : vector<15x34xf32> to vector<15x5xf32>
    %1177 = arith.mulf %1176, %464 : vector<15x5xf32>
    %cst_66 = arith.constant 6.62341309 : f32
    %1178 = vector.broadcast %cst_66 : f32 to vector<15x5xf32>
    %1179 = arith.mulf %1175, %1178 : vector<15x5xf32>
    %1180 = arith.minimumf %1177, %1179 : vector<15x5xf32>
    %1181 = arith.subf %1175, %468 : vector<15x5xf32>
    %1182 = arith.subf %1180, %771 : vector<15x5xf32>
    %1183 = vector.broadcast %1174 : vector<1x5xf32> to vector<15x5xf32>
    %1184 = arith.mulf %1183, %1181 : vector<15x5xf32>
    %1185 = arith.mulf %1184, %1182 : vector<15x5xf32>
    %1186 = arith.addf %1165, %1185 : vector<15x5xf32>
    %1187 = vector.broadcast %1174 : vector<1x5xf32> to vector<15x5xf32>
    %1188 = arith.mulf %1187, %1181 : vector<15x5xf32>
    %1189 = arith.mulf %1188, %1181 : vector<15x5xf32>
    %1190 = arith.addf %1169, %1189 : vector<15x5xf32>
    %1191 = vector.broadcast %1174 : vector<1x5xf32> to vector<15x5xf32>
    %1192 = arith.mulf %1191, %1182 : vector<15x5xf32>
    %1193 = arith.mulf %1192, %1182 : vector<15x5xf32>
    %1194 = arith.addf %1173, %1193 : vector<15x5xf32>
    %1195 = vector.extract_strided_slice %5 {offsets = [0, 20], sizes = [1, 5], strides = [1, 1]} : vector<1x34xf32> to vector<1x5xf32>
    %1196 = vector.extract_strided_slice %1 {offsets = [0, 20], sizes = [15, 5], strides = [1, 1]} : vector<15x34xf32> to vector<15x5xf32>
    %1197 = vector.extract_strided_slice %3 {offsets = [0, 20], sizes = [15, 5], strides = [1, 1]} : vector<15x34xf32> to vector<15x5xf32>
    %1198 = arith.mulf %1197, %464 : vector<15x5xf32>
    %cst_67 = arith.constant 6.62341309 : f32
    %1199 = vector.broadcast %cst_67 : f32 to vector<15x5xf32>
    %1200 = arith.mulf %1196, %1199 : vector<15x5xf32>
    %1201 = arith.minimumf %1198, %1200 : vector<15x5xf32>
    %1202 = arith.subf %1196, %468 : vector<15x5xf32>
    %1203 = arith.subf %1201, %771 : vector<15x5xf32>
    %1204 = vector.broadcast %1195 : vector<1x5xf32> to vector<15x5xf32>
    %1205 = arith.mulf %1204, %1202 : vector<15x5xf32>
    %1206 = arith.mulf %1205, %1203 : vector<15x5xf32>
    %1207 = arith.addf %1186, %1206 : vector<15x5xf32>
    %1208 = vector.broadcast %1195 : vector<1x5xf32> to vector<15x5xf32>
    %1209 = arith.mulf %1208, %1202 : vector<15x5xf32>
    %1210 = arith.mulf %1209, %1202 : vector<15x5xf32>
    %1211 = arith.addf %1190, %1210 : vector<15x5xf32>
    %1212 = vector.broadcast %1195 : vector<1x5xf32> to vector<15x5xf32>
    %1213 = arith.mulf %1212, %1203 : vector<15x5xf32>
    %1214 = arith.mulf %1213, %1203 : vector<15x5xf32>
    %1215 = arith.addf %1194, %1214 : vector<15x5xf32>
    %1216 = vector.extract_strided_slice %5 {offsets = [0, 21], sizes = [1, 5], strides = [1, 1]} : vector<1x34xf32> to vector<1x5xf32>
    %1217 = vector.extract_strided_slice %1 {offsets = [0, 21], sizes = [15, 5], strides = [1, 1]} : vector<15x34xf32> to vector<15x5xf32>
    %1218 = vector.extract_strided_slice %3 {offsets = [0, 21], sizes = [15, 5], strides = [1, 1]} : vector<15x34xf32> to vector<15x5xf32>
    %1219 = arith.mulf %1218, %464 : vector<15x5xf32>
    %cst_68 = arith.constant 6.62341309 : f32
    %1220 = vector.broadcast %cst_68 : f32 to vector<15x5xf32>
    %1221 = arith.mulf %1217, %1220 : vector<15x5xf32>
    %1222 = arith.minimumf %1219, %1221 : vector<15x5xf32>
    %1223 = arith.subf %1217, %468 : vector<15x5xf32>
    %1224 = arith.subf %1222, %771 : vector<15x5xf32>
    %1225 = vector.broadcast %1216 : vector<1x5xf32> to vector<15x5xf32>
    %1226 = arith.mulf %1225, %1223 : vector<15x5xf32>
    %1227 = arith.mulf %1226, %1224 : vector<15x5xf32>
    %1228 = arith.addf %1207, %1227 : vector<15x5xf32>
    %1229 = vector.broadcast %1216 : vector<1x5xf32> to vector<15x5xf32>
    %1230 = arith.mulf %1229, %1223 : vector<15x5xf32>
    %1231 = arith.mulf %1230, %1223 : vector<15x5xf32>
    %1232 = arith.addf %1211, %1231 : vector<15x5xf32>
    %1233 = vector.broadcast %1216 : vector<1x5xf32> to vector<15x5xf32>
    %1234 = arith.mulf %1233, %1224 : vector<15x5xf32>
    %1235 = arith.mulf %1234, %1224 : vector<15x5xf32>
    %1236 = arith.addf %1215, %1235 : vector<15x5xf32>
    %1237 = vector.extract_strided_slice %5 {offsets = [0, 22], sizes = [1, 5], strides = [1, 1]} : vector<1x34xf32> to vector<1x5xf32>
    %1238 = vector.extract_strided_slice %1 {offsets = [0, 22], sizes = [15, 5], strides = [1, 1]} : vector<15x34xf32> to vector<15x5xf32>
    %1239 = vector.extract_strided_slice %3 {offsets = [0, 22], sizes = [15, 5], strides = [1, 1]} : vector<15x34xf32> to vector<15x5xf32>
    %1240 = arith.mulf %1239, %464 : vector<15x5xf32>
    %cst_69 = arith.constant 6.62341309 : f32
    %1241 = vector.broadcast %cst_69 : f32 to vector<15x5xf32>
    %1242 = arith.mulf %1238, %1241 : vector<15x5xf32>
    %1243 = arith.minimumf %1240, %1242 : vector<15x5xf32>
    %1244 = arith.subf %1238, %468 : vector<15x5xf32>
    %1245 = arith.subf %1243, %771 : vector<15x5xf32>
    %1246 = vector.broadcast %1237 : vector<1x5xf32> to vector<15x5xf32>
    %1247 = arith.mulf %1246, %1244 : vector<15x5xf32>
    %1248 = arith.mulf %1247, %1245 : vector<15x5xf32>
    %1249 = arith.addf %1228, %1248 : vector<15x5xf32>
    %1250 = vector.broadcast %1237 : vector<1x5xf32> to vector<15x5xf32>
    %1251 = arith.mulf %1250, %1244 : vector<15x5xf32>
    %1252 = arith.mulf %1251, %1244 : vector<15x5xf32>
    %1253 = arith.addf %1232, %1252 : vector<15x5xf32>
    %1254 = vector.broadcast %1237 : vector<1x5xf32> to vector<15x5xf32>
    %1255 = arith.mulf %1254, %1245 : vector<15x5xf32>
    %1256 = arith.mulf %1255, %1245 : vector<15x5xf32>
    %1257 = arith.addf %1236, %1256 : vector<15x5xf32>
    %1258 = vector.extract_strided_slice %5 {offsets = [0, 23], sizes = [1, 5], strides = [1, 1]} : vector<1x34xf32> to vector<1x5xf32>
    %1259 = vector.extract_strided_slice %1 {offsets = [0, 23], sizes = [15, 5], strides = [1, 1]} : vector<15x34xf32> to vector<15x5xf32>
    %1260 = vector.extract_strided_slice %3 {offsets = [0, 23], sizes = [15, 5], strides = [1, 1]} : vector<15x34xf32> to vector<15x5xf32>
    %1261 = arith.mulf %1260, %464 : vector<15x5xf32>
    %cst_70 = arith.constant 6.62341309 : f32
    %1262 = vector.broadcast %cst_70 : f32 to vector<15x5xf32>
    %1263 = arith.mulf %1259, %1262 : vector<15x5xf32>
    %1264 = arith.minimumf %1261, %1263 : vector<15x5xf32>
    %1265 = arith.subf %1259, %468 : vector<15x5xf32>
    %1266 = arith.subf %1264, %771 : vector<15x5xf32>
    %1267 = vector.broadcast %1258 : vector<1x5xf32> to vector<15x5xf32>
    %1268 = arith.mulf %1267, %1265 : vector<15x5xf32>
    %1269 = arith.mulf %1268, %1266 : vector<15x5xf32>
    %1270 = arith.addf %1249, %1269 : vector<15x5xf32>
    %1271 = vector.broadcast %1258 : vector<1x5xf32> to vector<15x5xf32>
    %1272 = arith.mulf %1271, %1265 : vector<15x5xf32>
    %1273 = arith.mulf %1272, %1265 : vector<15x5xf32>
    %1274 = arith.addf %1253, %1273 : vector<15x5xf32>
    %1275 = vector.broadcast %1258 : vector<1x5xf32> to vector<15x5xf32>
    %1276 = arith.mulf %1275, %1266 : vector<15x5xf32>
    %1277 = arith.mulf %1276, %1266 : vector<15x5xf32>
    %1278 = arith.addf %1257, %1277 : vector<15x5xf32>
    %1279 = vector.extract_strided_slice %5 {offsets = [0, 24], sizes = [1, 5], strides = [1, 1]} : vector<1x34xf32> to vector<1x5xf32>
    %1280 = vector.extract_strided_slice %1 {offsets = [0, 24], sizes = [15, 5], strides = [1, 1]} : vector<15x34xf32> to vector<15x5xf32>
    %1281 = vector.extract_strided_slice %3 {offsets = [0, 24], sizes = [15, 5], strides = [1, 1]} : vector<15x34xf32> to vector<15x5xf32>
    %1282 = arith.mulf %1281, %464 : vector<15x5xf32>
    %cst_71 = arith.constant 6.62341309 : f32
    %1283 = vector.broadcast %cst_71 : f32 to vector<15x5xf32>
    %1284 = arith.mulf %1280, %1283 : vector<15x5xf32>
    %1285 = arith.minimumf %1282, %1284 : vector<15x5xf32>
    %1286 = arith.subf %1280, %468 : vector<15x5xf32>
    %1287 = arith.subf %1285, %771 : vector<15x5xf32>
    %1288 = vector.broadcast %1279 : vector<1x5xf32> to vector<15x5xf32>
    %1289 = arith.mulf %1288, %1286 : vector<15x5xf32>
    %1290 = arith.mulf %1289, %1287 : vector<15x5xf32>
    %1291 = arith.addf %1270, %1290 : vector<15x5xf32>
    %1292 = vector.broadcast %1279 : vector<1x5xf32> to vector<15x5xf32>
    %1293 = arith.mulf %1292, %1286 : vector<15x5xf32>
    %1294 = arith.mulf %1293, %1286 : vector<15x5xf32>
    %1295 = arith.addf %1274, %1294 : vector<15x5xf32>
    %1296 = vector.broadcast %1279 : vector<1x5xf32> to vector<15x5xf32>
    %1297 = arith.mulf %1296, %1287 : vector<15x5xf32>
    %1298 = arith.mulf %1297, %1287 : vector<15x5xf32>
    %1299 = arith.addf %1278, %1298 : vector<15x5xf32>
    %1300 = vector.extract_strided_slice %5 {offsets = [0, 25], sizes = [1, 5], strides = [1, 1]} : vector<1x34xf32> to vector<1x5xf32>
    %1301 = vector.extract_strided_slice %1 {offsets = [0, 25], sizes = [15, 5], strides = [1, 1]} : vector<15x34xf32> to vector<15x5xf32>
    %1302 = vector.extract_strided_slice %3 {offsets = [0, 25], sizes = [15, 5], strides = [1, 1]} : vector<15x34xf32> to vector<15x5xf32>
    %1303 = arith.mulf %1302, %464 : vector<15x5xf32>
    %cst_72 = arith.constant 6.62341309 : f32
    %1304 = vector.broadcast %cst_72 : f32 to vector<15x5xf32>
    %1305 = arith.mulf %1301, %1304 : vector<15x5xf32>
    %1306 = arith.minimumf %1303, %1305 : vector<15x5xf32>
    %1307 = arith.subf %1301, %468 : vector<15x5xf32>
    %1308 = arith.subf %1306, %771 : vector<15x5xf32>
    %1309 = vector.broadcast %1300 : vector<1x5xf32> to vector<15x5xf32>
    %1310 = arith.mulf %1309, %1307 : vector<15x5xf32>
    %1311 = arith.mulf %1310, %1308 : vector<15x5xf32>
    %1312 = arith.addf %1291, %1311 : vector<15x5xf32>
    %1313 = vector.broadcast %1300 : vector<1x5xf32> to vector<15x5xf32>
    %1314 = arith.mulf %1313, %1307 : vector<15x5xf32>
    %1315 = arith.mulf %1314, %1307 : vector<15x5xf32>
    %1316 = arith.addf %1295, %1315 : vector<15x5xf32>
    %1317 = vector.broadcast %1300 : vector<1x5xf32> to vector<15x5xf32>
    %1318 = arith.mulf %1317, %1308 : vector<15x5xf32>
    %1319 = arith.mulf %1318, %1308 : vector<15x5xf32>
    %1320 = arith.addf %1299, %1319 : vector<15x5xf32>
    %1321 = vector.extract_strided_slice %5 {offsets = [0, 26], sizes = [1, 5], strides = [1, 1]} : vector<1x34xf32> to vector<1x5xf32>
    %1322 = vector.extract_strided_slice %1 {offsets = [0, 26], sizes = [15, 5], strides = [1, 1]} : vector<15x34xf32> to vector<15x5xf32>
    %1323 = vector.extract_strided_slice %3 {offsets = [0, 26], sizes = [15, 5], strides = [1, 1]} : vector<15x34xf32> to vector<15x5xf32>
    %1324 = arith.mulf %1323, %464 : vector<15x5xf32>
    %cst_73 = arith.constant 6.62341309 : f32
    %1325 = vector.broadcast %cst_73 : f32 to vector<15x5xf32>
    %1326 = arith.mulf %1322, %1325 : vector<15x5xf32>
    %1327 = arith.minimumf %1324, %1326 : vector<15x5xf32>
    %1328 = arith.subf %1322, %468 : vector<15x5xf32>
    %1329 = arith.subf %1327, %771 : vector<15x5xf32>
    %1330 = vector.broadcast %1321 : vector<1x5xf32> to vector<15x5xf32>
    %1331 = arith.mulf %1330, %1328 : vector<15x5xf32>
    %1332 = arith.mulf %1331, %1329 : vector<15x5xf32>
    %1333 = arith.addf %1312, %1332 : vector<15x5xf32>
    %1334 = vector.broadcast %1321 : vector<1x5xf32> to vector<15x5xf32>
    %1335 = arith.mulf %1334, %1328 : vector<15x5xf32>
    %1336 = arith.mulf %1335, %1328 : vector<15x5xf32>
    %1337 = arith.addf %1316, %1336 : vector<15x5xf32>
    %1338 = vector.broadcast %1321 : vector<1x5xf32> to vector<15x5xf32>
    %1339 = arith.mulf %1338, %1329 : vector<15x5xf32>
    %1340 = arith.mulf %1339, %1329 : vector<15x5xf32>
    %1341 = arith.addf %1320, %1340 : vector<15x5xf32>
    %1342 = vector.extract_strided_slice %5 {offsets = [0, 27], sizes = [1, 5], strides = [1, 1]} : vector<1x34xf32> to vector<1x5xf32>
    %1343 = vector.extract_strided_slice %1 {offsets = [0, 27], sizes = [15, 5], strides = [1, 1]} : vector<15x34xf32> to vector<15x5xf32>
    %1344 = vector.extract_strided_slice %3 {offsets = [0, 27], sizes = [15, 5], strides = [1, 1]} : vector<15x34xf32> to vector<15x5xf32>
    %1345 = arith.mulf %1344, %464 : vector<15x5xf32>
    %cst_74 = arith.constant 6.62341309 : f32
    %1346 = vector.broadcast %cst_74 : f32 to vector<15x5xf32>
    %1347 = arith.mulf %1343, %1346 : vector<15x5xf32>
    %1348 = arith.minimumf %1345, %1347 : vector<15x5xf32>
    %1349 = arith.subf %1343, %468 : vector<15x5xf32>
    %1350 = arith.subf %1348, %771 : vector<15x5xf32>
    %1351 = vector.broadcast %1342 : vector<1x5xf32> to vector<15x5xf32>
    %1352 = arith.mulf %1351, %1349 : vector<15x5xf32>
    %1353 = arith.mulf %1352, %1350 : vector<15x5xf32>
    %1354 = arith.addf %1333, %1353 : vector<15x5xf32>
    %1355 = vector.broadcast %1342 : vector<1x5xf32> to vector<15x5xf32>
    %1356 = arith.mulf %1355, %1349 : vector<15x5xf32>
    %1357 = arith.mulf %1356, %1349 : vector<15x5xf32>
    %1358 = arith.addf %1337, %1357 : vector<15x5xf32>
    %1359 = vector.broadcast %1342 : vector<1x5xf32> to vector<15x5xf32>
    %1360 = arith.mulf %1359, %1350 : vector<15x5xf32>
    %1361 = arith.mulf %1360, %1350 : vector<15x5xf32>
    %1362 = arith.addf %1341, %1361 : vector<15x5xf32>
    %1363 = vector.extract_strided_slice %5 {offsets = [0, 28], sizes = [1, 5], strides = [1, 1]} : vector<1x34xf32> to vector<1x5xf32>
    %1364 = vector.extract_strided_slice %1 {offsets = [0, 28], sizes = [15, 5], strides = [1, 1]} : vector<15x34xf32> to vector<15x5xf32>
    %1365 = vector.extract_strided_slice %3 {offsets = [0, 28], sizes = [15, 5], strides = [1, 1]} : vector<15x34xf32> to vector<15x5xf32>
    %1366 = arith.mulf %1365, %464 : vector<15x5xf32>
    %cst_75 = arith.constant 6.62341309 : f32
    %1367 = vector.broadcast %cst_75 : f32 to vector<15x5xf32>
    %1368 = arith.mulf %1364, %1367 : vector<15x5xf32>
    %1369 = arith.minimumf %1366, %1368 : vector<15x5xf32>
    %1370 = arith.subf %1364, %468 : vector<15x5xf32>
    %1371 = arith.subf %1369, %771 : vector<15x5xf32>
    %1372 = vector.broadcast %1363 : vector<1x5xf32> to vector<15x5xf32>
    %1373 = arith.mulf %1372, %1370 : vector<15x5xf32>
    %1374 = arith.mulf %1373, %1371 : vector<15x5xf32>
    %1375 = arith.addf %1354, %1374 : vector<15x5xf32>
    %1376 = vector.broadcast %1363 : vector<1x5xf32> to vector<15x5xf32>
    %1377 = arith.mulf %1376, %1370 : vector<15x5xf32>
    %1378 = arith.mulf %1377, %1370 : vector<15x5xf32>
    %1379 = arith.addf %1358, %1378 : vector<15x5xf32>
    %1380 = vector.broadcast %1363 : vector<1x5xf32> to vector<15x5xf32>
    %1381 = arith.mulf %1380, %1371 : vector<15x5xf32>
    %1382 = arith.mulf %1381, %1371 : vector<15x5xf32>
    %1383 = arith.addf %1362, %1382 : vector<15x5xf32>
    %1384 = vector.extract_strided_slice %5 {offsets = [0, 29], sizes = [1, 5], strides = [1, 1]} : vector<1x34xf32> to vector<1x5xf32>
    %1385 = vector.extract_strided_slice %1 {offsets = [0, 29], sizes = [15, 5], strides = [1, 1]} : vector<15x34xf32> to vector<15x5xf32>
    %1386 = vector.extract_strided_slice %3 {offsets = [0, 29], sizes = [15, 5], strides = [1, 1]} : vector<15x34xf32> to vector<15x5xf32>
    %1387 = arith.mulf %1386, %464 : vector<15x5xf32>
    %cst_76 = arith.constant 6.62341309 : f32
    %1388 = vector.broadcast %cst_76 : f32 to vector<15x5xf32>
    %1389 = arith.mulf %1385, %1388 : vector<15x5xf32>
    %1390 = arith.minimumf %1387, %1389 : vector<15x5xf32>
    %1391 = arith.subf %1385, %468 : vector<15x5xf32>
    %1392 = arith.subf %1390, %771 : vector<15x5xf32>
    %1393 = vector.broadcast %1384 : vector<1x5xf32> to vector<15x5xf32>
    %1394 = arith.mulf %1393, %1391 : vector<15x5xf32>
    %1395 = arith.mulf %1394, %1392 : vector<15x5xf32>
    %1396 = arith.addf %1375, %1395 : vector<15x5xf32>
    %1397 = vector.broadcast %1384 : vector<1x5xf32> to vector<15x5xf32>
    %1398 = arith.mulf %1397, %1391 : vector<15x5xf32>
    %1399 = arith.mulf %1398, %1391 : vector<15x5xf32>
    %1400 = arith.addf %1379, %1399 : vector<15x5xf32>
    %1401 = vector.broadcast %1384 : vector<1x5xf32> to vector<15x5xf32>
    %1402 = arith.mulf %1401, %1392 : vector<15x5xf32>
    %1403 = arith.mulf %1402, %1392 : vector<15x5xf32>
    %1404 = arith.addf %1383, %1403 : vector<15x5xf32>
    %1405 = math.sqrt %1400 : vector<15x5xf32>
    %cst_77 = arith.constant 9.99999993E-9 : f32
    %1406 = vector.broadcast %cst_77 : f32 to vector<15x5xf32>
    %1407 = arith.addf %1405, %1406 : vector<15x5xf32>
    %1408 = math.sqrt %1404 : vector<15x5xf32>
    %cst_78 = arith.constant 9.99999993E-9 : f32
    %1409 = vector.broadcast %cst_78 : f32 to vector<15x5xf32>
    %1410 = arith.addf %1408, %1409 : vector<15x5xf32>
    %1411 = arith.mulf %1407, %1410 : vector<15x5xf32>
    %1412 = arith.divf %1396, %1411 : vector<15x5xf32>
    %c0_79 = arith.constant 0 : index
    %c0_80 = arith.constant 0 : index
    %c0_81 = arith.constant 0 : index
    %1413 = vector.load %arg4[%c0_79, %c0_80, %c0_81] : memref<1x15x5xf32, #tpu.memory_space<vmem>>, vector<1x15x5xf32>
    %1414 = vector.shape_cast %1413 : vector<1x15x5xf32> to vector<15x5xf32>
    %1415 = vector.shape_cast %1412 : vector<15x5xf32> to vector<1x15x5xf32>
    tpu.vector_store %arg4[%c0_79, %c0_80, %c0_81], %1415 {strides = array<i32>} : memref<1x15x5xf32, #tpu.memory_space<vmem>>, vector<1x15x5xf32>,
    return
  }
  func.func @transform_0(%arg0: i32) -> (i32, i32, i32) {
    %c0_i32 = arith.constant 0 : i32
    %c0_i32_0 = arith.constant 0 : i32
    %c0_i32_1 = arith.constant 0 : i32
    return %arg0, %c0_i32, %c0_i32_0 : i32, i32, i32
  }
  func.func @transform_1(%arg0: i32) -> (i32, i32, i32) {
    %c0_i32 = arith.constant 0 : i32
    %c0_i32_0 = arith.constant 0 : i32
    %c0_i32_1 = arith.constant 0 : i32
    return %arg0, %c0_i32, %c0_i32_0 : i32, i32, i32
  }
  func.func @transform_2(%arg0: i32) -> (i32, i32, i32) {
    %c0_i32 = arith.constant 0 : i32
    %c0_i32_0 = arith.constant 0 : i32
    %c0_i32_1 = arith.constant 0 : i32
    return %arg0, %c0_i32, %c0_i32_0 : i32, i32, i32
  }
  func.func @transform_3(%arg0: i32) -> (i32, i32, i32) {
    %c0_i32 = arith.constant 0 : i32
    %c0_i32_0 = arith.constant 0 : i32
    %c0_i32_1 = arith.constant 0 : i32
    return %arg0, %c0_i32, %c0_i32_0 : i32, i32, i32
  }
}

</mosaic_0001>

<llo_original>
// kernel: _lambda_.2
$region0: #{_lambda_.2}
  #allocation0 [shape = 'u32[]', space=smem, size = 0x4, offset = 0x4, fixed_abs, tag = 'smem constant byte address 0x4 - core index']
  #allocation1 [shape = 'u32[144,128]{1,0:T(1,128)}', space=vmem, size = 0x12000, scoped, tag = 'internal scratch']
  %s0 = inlined_call_operand.vmem [shape: f32[256,256], index: 0, kind: input, shape index: {}]
  %s1 = inlined_call_operand.vmem [shape: f32[1,256], index: 1, kind: input, shape index: {}]
  %s2 = inlined_call_operand.vmem [shape: f32[256,512], index: 2, kind: input, shape index: {}]
  %s3 = inlined_call_operand.vmem [shape: f32[256,16], index: 3, kind: input, shape index: {}]
  %s4 = inlined_call_operand.vmem [shape: f32[256,16], index: 4, kind: output, shape index: {}]
  %s5 = sld [smem:[#allocation0]]
  $region26: #{_lambda_.2} parent=0
    _
  %s7 = ssub.s32 1, %s5
  %s8 = scalar_select 0, %s7, %s5
  // Predicated region
  $region2: #{_lambda_.2} parent=0 // pred_check
    _
  $region3: #{_lambda_.2} parent=0 // pred_check_branch
    %10 = sbr.rel (0) target = $region5
  $region4: #{_lambda_.2} parent=0 // pred_region
    _
  $region5: #{_lambda_.2} parent=0 // pred_fallthru
    _
  // Predicated region
  $region6: #{_lambda_.2} parent=0 // pred_check
    _
  $region7: #{_lambda_.2} parent=0 // pred_check_branch
    %12 = sbr.rel (0) target = $region9
  $region8: #{_lambda_.2} parent=0 // pred_region
    _
  $region9: #{_lambda_.2} parent=0 // pred_fallthru
    _
  // Predicated region
  $region10: #{_lambda_.2} parent=0 // pred_check
    _
  $region11: #{_lambda_.2} parent=0 // pred_check_branch
    %14 = sbr.rel (0) target = $region13
  $region12: #{_lambda_.2} parent=0 // pred_region
    _
  $region13: #{_lambda_.2} parent=0 // pred_fallthru
    _
  // Predicated region
  $region14: #{_lambda_.2} parent=0 // pred_check
    _
  $region15: #{_lambda_.2} parent=0 // pred_check_branch
    %16 = sbr.rel (0) target = $region17
  $region16: #{_lambda_.2} parent=0 // pred_region
    _
  $region17: #{_lambda_.2} parent=0 // pred_fallthru
    _
  %v17 = vld [vmem:[%s0] sm:$0xff]
  %v18 = vld [vmem:[%s0 + $0x8] sm:$0xff]
  %v19 = vld [vmem:[%s0 + $0x10] sm:$0xff]
  %v20 = vld [vmem:[%s0 + $0x18] sm:$0xff]
  %v21 = vld [vmem:[%s0 + $0x20] sm:$0xff]
  %v22 = vld [vmem:[%s0 + $0x28] sm:$0xff]
  %v23 = vld [vmem:[%s0 + $0x30] sm:$0xff]
  %v24 = vld [vmem:[%s0 + $0x38] sm:$0xff]
  %v25 = vld [vmem:[%s0 + $0x40] sm:$0xff]
  %v26 = vld [vmem:[%s0 + $0x48] sm:$0xff]
  %v27 = vld [vmem:[%s0 + $0x50] sm:$0xff]
  %v28 = vld [vmem:[%s0 + $0x58] sm:$0xff]
  %v29 = vld [vmem:[%s0 + $0x60] sm:$0xff]
  %v30 = vld [vmem:[%s0 + $0x68] sm:$0xff]
  %v31 = vld [vmem:[%s0 + $0x70] sm:$0xff]
  %v32 = vld [vmem:[%s0 + $0x78] sm:$0xff]
  %v33 = vld [vmem:[%s0 + $0x80] sm:$0xff]
  %v34 = vld [vmem:[%s0 + $0x88] sm:$0xff]
  %v35 = vld [vmem:[%s0 + $0x90] sm:$0xff]
  %v36 = vld [vmem:[%s0 + $0x98] sm:$0xff]
  %v37 = vld [vmem:[%s0 + $0xa0] sm:$0xff]
  %v38 = vld [vmem:[%s0 + $0xa8] sm:$0xff]
  %v39 = vld [vmem:[%s0 + $0xb0] sm:$0xff]
  %v40 = vld [vmem:[%s0 + $0xb8] sm:$0xff]
  %v41 = vld [vmem:[%s0 + $0xc0] sm:$0xff]
  %v42 = vld [vmem:[%s0 + $0xc8] sm:$0xff]
  %v43 = vld [vmem:[%s0 + $0xd0] sm:$0xff]
  %v44 = vld [vmem:[%s0 + $0xd8] sm:$0xff]
  %v45 = vld [vmem:[%s0 + $0xe0] sm:$0xff]
  %v46 = vld [vmem:[%s0 + $0xe8] sm:$0xff]
  %v47 = vld [vmem:[%s0 + $0xf0] sm:$0xff]
  %v48 = vld [vmem:[%s0 + $0xf8] sm:$0xff]
  %v49 = vld [vmem:[%s0 + $0x100] sm:$0xff]
  %v50 = vld [vmem:[%s0 + $0x108] sm:$0xff]
  %v51 = vld [vmem:[%s0 + $0x110] sm:$0xff]
  %v52 = vld [vmem:[%s0 + $0x118] sm:$0xff]
  %v53 = vld [vmem:[%s0 + $0x120] sm:$0xff]
  %v54 = vld [vmem:[%s0 + $0x128] sm:$0xff]
  %v55 = vld [vmem:[%s0 + $0x130] sm:$0xff]
  %v56 = vld [vmem:[%s0 + $0x138] sm:$0xff]
  %v57 = vld [vmem:[%s0 + $0x140] sm:$0xff]
  %v58 = vld [vmem:[%s0 + $0x148] sm:$0xff]
  %v59 = vld [vmem:[%s0 + $0x150] sm:$0xff]
  %v60 = vld [vmem:[%s0 + $0x158] sm:$0xff]
  %v61 = vld [vmem:[%s0 + $0x160] sm:$0xff]
  %v62 = vld [vmem:[%s0 + $0x168] sm:$0xff]
  %v63 = vld [vmem:[%s0 + $0x170] sm:$0xff]
  %v64 = vld [vmem:[%s0 + $0x178] sm:$0xff]
  %v65 = vld [vmem:[%s0 + $0x180] sm:$0xff]
  %v66 = vld [vmem:[%s0 + $0x188] sm:$0xff]
  %v67 = vld [vmem:[%s0 + $0x190] sm:$0xff]
  %v68 = vld [vmem:[%s0 + $0x198] sm:$0xff]
  %v69 = vld [vmem:[%s0 + $0x1a0] sm:$0xff]
  %v70 = vld [vmem:[%s0 + $0x1a8] sm:$0xff]
  %v71 = vld [vmem:[%s0 + $0x1b0] sm:$0xff]
  %v72 = vld [vmem:[%s0 + $0x1b8] sm:$0xff]
  %v73 = vld [vmem:[%s0 + $0x1c0] sm:$0xff]
  %v74 = vld [vmem:[%s0 + $0x1c8] sm:$0xff]
  %v75 = vld [vmem:[%s0 + $0x1d0] sm:$0xff]
  %v76 = vld [vmem:[%s0 + $0x1d8] sm:$0xff]
  %v77 = vld [vmem:[%s0 + $0x1e0] sm:$0xff]
  %v78 = vld [vmem:[%s0 + $0x1e8] sm:$0xff]
  %v79 = vld [vmem:[%s0 + $0x1f0] sm:$0xff]
  %v80 = vld [vmem:[%s0 + $0x1f8] sm:$0xff]
  %v81 = vld [vmem:[%s1] sm:$0x3]
  %v83 = vlaneseq
  %v84 = vshrl.u32 %v83, 7
  %v85 = vsub.s32 0, %v84
  %v86 = vrot.slane %v81, %v85
  %v87 = vlaneseq
  %v88 = vshrl.u32 %v87, 7
  %v89 = vsub.s32 1, %v88
  %v90 = vrot.slane %v81, %v89
  %v93 = vmul.f32 %v17, %v86
  %v94 = vmul.f32 %v18, %v90
  %v95 = vmul.f32 %v19, %v86
  %v96 = vmul.f32 %v20, %v90
  %v97 = vmul.f32 %v21, %v86
  %v98 = vmul.f32 %v22, %v90
  %v99 = vmul.f32 %v23, %v86
  %v100 = vmul.f32 %v24, %v90
  %v101 = vmul.f32 %v25, %v86
  %v102 = vmul.f32 %v26, %v90
  %v103 = vmul.f32 %v27, %v86
  %v104 = vmul.f32 %v28, %v90
  %v105 = vmul.f32 %v29, %v86
  %v106 = vmul.f32 %v30, %v90
  %v107 = vmul.f32 %v31, %v86
  %v108 = vmul.f32 %v32, %v90
  %v109 = vmul.f32 %v33, %v86
  %v110 = vmul.f32 %v34, %v90
  %v111 = vmul.f32 %v35, %v86
  %v112 = vmul.f32 %v36, %v90
  %v113 = vmul.f32 %v37, %v86
  %v114 = vmul.f32 %v38, %v90
  %v115 = vmul.f32 %v39, %v86
  %v116 = vmul.f32 %v40, %v90
  %v117 = vmul.f32 %v41, %v86
  %v118 = vmul.f32 %v42, %v90
  %v119 = vmul.f32 %v43, %v86
  %v120 = vmul.f32 %v44, %v90
  %v121 = vmul.f32 %v45, %v86
  %v122 = vmul.f32 %v46, %v90
  %v123 = vmul.f32 %v47, %v86
  %v124 = vmul.f32 %v48, %v90
  %v125 = vmul.f32 %v49, %v86
  %v126 = vmul.f32 %v50, %v90
  %v127 = vmul.f32 %v51, %v86
  %v128 = vmul.f32 %v52, %v90
  %v129 = vmul.f32 %v53, %v86
  %v130 = vmul.f32 %v54, %v90
  %v131 = vmul.f32 %v55, %v86
  %v132 = vmul.f32 %v56, %v90
  %v133 = vmul.f32 %v57, %v86
  %v134 = vmul.f32 %v58, %v90
  %v135 = vmul.f32 %v59, %v86
  %v136 = vmul.f32 %v60, %v90
  %v137 = vmul.f32 %v61, %v86
  %v138 = vmul.f32 %v62, %v90
  %v139 = vmul.f32 %v63, %v86
  %v140 = vmul.f32 %v64, %v90
  %v141 = vmul.f32 %v65, %v86
  %v142 = vmul.f32 %v66, %v90
  %v143 = vmul.f32 %v67, %v86
  %v144 = vmul.f32 %v68, %v90
  %v145 = vmul.f32 %v69, %v86
  %v146 = vmul.f32 %v70, %v90
  %v147 = vmul.f32 %v71, %v86
  %v148 = vmul.f32 %v72, %v90
  %v149 = vmul.f32 %v73, %v86
  %v150 = vmul.f32 %v74, %v90
  %v151 = vmul.f32 %v75, %v86
  %v152 = vmul.f32 %v76, %v90
  %v153 = vmul.f32 %v77, %v86
  %v154 = vmul.f32 %v78, %v90
  %v155 = vmul.f32 %v79, %v86
  %v156 = vmul.f32 %v80, %v90
  %v157 = vld [vmem:[%s2] sm:$0xff]
  %v158 = vld [vmem:[%s2 + $0x8] sm:$0xff]
  %v159 = vld [vmem:[%s2 + $0x10] sm:$0xff]
  %v160 = vld [vmem:[%s2 + $0x18] sm:$0xff]
  %v161 = vld [vmem:[%s2 + $0x20] sm:$0xff]
  %v162 = vld [vmem:[%s2 + $0x28] sm:$0xff]
  %v163 = vld [vmem:[%s2 + $0x30] sm:$0xff]
  %v164 = vld [vmem:[%s2 + $0x38] sm:$0xff]
  %v165 = vld [vmem:[%s2 + $0x40] sm:$0xff]
  %v166 = vld [vmem:[%s2 + $0x48] sm:$0xff]
  %v167 = vld [vmem:[%s2 + $0x50] sm:$0xff]
  %v168 = vld [vmem:[%s2 + $0x58] sm:$0xff]
  %v169 = vld [vmem:[%s2 + $0x60] sm:$0xff]
  %v170 = vld [vmem:[%s2 + $0x68] sm:$0xff]
  %v171 = vld [vmem:[%s2 + $0x70] sm:$0xff]
  %v172 = vld [vmem:[%s2 + $0x78] sm:$0xff]
  %v173 = vld [vmem:[%s2 + $0x80] sm:$0xff]
  %v174 = vld [vmem:[%s2 + $0x88] sm:$0xff]
  %v175 = vld [vmem:[%s2 + $0x90] sm:$0xff]
  %v176 = vld [vmem:[%s2 + $0x98] sm:$0xff]
  %v177 = vld [vmem:[%s2 + $0xa0] sm:$0xff]
  %v178 = vld [vmem:[%s2 + $0xa8] sm:$0xff]
  %v179 = vld [vmem:[%s2 + $0xb0] sm:$0xff]
  %v180 = vld [vmem:[%s2 + $0xb8] sm:$0xff]
  %v181 = vld [vmem:[%s2 + $0xc0] sm:$0xff]
  %v182 = vld [vmem:[%s2 + $0xc8] sm:$0xff]
  %v183 = vld [vmem:[%s2 + $0xd0] sm:$0xff]
  %v184 = vld [vmem:[%s2 + $0xd8] sm:$0xff]
  %v185 = vld [vmem:[%s2 + $0xe0] sm:$0xff]
  %v186 = vld [vmem:[%s2 + $0xe8] sm:$0xff]
  %v187 = vld [vmem:[%s2 + $0xf0] sm:$0xff]
  %v188 = vld [vmem:[%s2 + $0xf8] sm:$0xff]
  %v189 = vld [vmem:[%s2 + $0x100] sm:$0xff]
  %v190 = vld [vmem:[%s2 + $0x108] sm:$0xff]
  %v191 = vld [vmem:[%s2 + $0x110] sm:$0xff]
  %v192 = vld [vmem:[%s2 + $0x118] sm:$0xff]
  %v193 = vld [vmem:[%s2 + $0x120] sm:$0xff]
  %v194 = vld [vmem:[%s2 + $0x128] sm:$0xff]
  %v195 = vld [vmem:[%s2 + $0x130] sm:$0xff]
  %v196 = vld [vmem:[%s2 + $0x138] sm:$0xff]
  %v197 = vld [vmem:[%s2 + $0x140] sm:$0xff]
  %v198 = vld [vmem:[%s2 + $0x148] sm:$0xff]
  %v199 = vld [vmem:[%s2 + $0x150] sm:$0xff]
  %v200 = vld [vmem:[%s2 + $0x158] sm:$0xff]
  %v201 = vld [vmem:[%s2 + $0x160] sm:$0xff]
  %v202 = vld [vmem:[%s2 + $0x168] sm:$0xff]
  %v203 = vld [vmem:[%s2 + $0x170] sm:$0xff]
  %v204 = vld [vmem:[%s2 + $0x178] sm:$0xff]
  %v205 = vld [vmem:[%s2 + $0x180] sm:$0xff]
  %v206 = vld [vmem:[%s2 + $0x188] sm:$0xff]
  %v207 = vld [vmem:[%s2 + $0x190] sm:$0xff]
  %v208 = vld [vmem:[%s2 + $0x198] sm:$0xff]
  %v209 = vld [vmem:[%s2 + $0x1a0] sm:$0xff]
  %v210 = vld [vmem:[%s2 + $0x1a8] sm:$0xff]
  %v211 = vld [vmem:[%s2 + $0x1b0] sm:$0xff]
  %v212 = vld [vmem:[%s2 + $0x1b8] sm:$0xff]
  %v213 = vld [vmem:[%s2 + $0x1c0] sm:$0xff]
  %v214 = vld [vmem:[%s2 + $0x1c8] sm:$0xff]
  %v215 = vld [vmem:[%s2 + $0x1d0] sm:$0xff]
  %v216 = vld [vmem:[%s2 + $0x1d8] sm:$0xff]
  %v217 = vld [vmem:[%s2 + $0x1e0] sm:$0xff]
  %v218 = vld [vmem:[%s2 + $0x1e8] sm:$0xff]
  %v219 = vld [vmem:[%s2 + $0x1f0] sm:$0xff]
  %v220 = vld [vmem:[%s2 + $0x1f8] sm:$0xff]
  %v221 = vld [vmem:[%s2 + $0x200] sm:$0xff]
  %v222 = vld [vmem:[%s2 + $0x208] sm:$0xff]
  %v223 = vld [vmem:[%s2 + $0x210] sm:$0xff]
  %v224 = vld [vmem:[%s2 + $0x218] sm:$0xff]
  %v225 = vld [vmem:[%s2 + $0x220] sm:$0xff]
  %v226 = vld [vmem:[%s2 + $0x228] sm:$0xff]
  %v227 = vld [vmem:[%s2 + $0x230] sm:$0xff]
  %v228 = vld [vmem:[%s2 + $0x238] sm:$0xff]
  %v229 = vld [vmem:[%s2 + $0x240] sm:$0xff]
  %v230 = vld [vmem:[%s2 + $0x248] sm:$0xff]
  %v231 = vld [vmem:[%s2 + $0x250] sm:$0xff]
  %v232 = vld [vmem:[%s2 + $0x258] sm:$0xff]
  %v233 = vld [vmem:[%s2 + $0x260] sm:$0xff]
  %v234 = vld [vmem:[%s2 + $0x268] sm:$0xff]
  %v235 = vld [vmem:[%s2 + $0x270] sm:$0xff]
  %v236 = vld [vmem:[%s2 + $0x278] sm:$0xff]
  %v237 = vld [vmem:[%s2 + $0x280] sm:$0xff]
  %v238 = vld [vmem:[%s2 + $0x288] sm:$0xff]
  %v239 = vld [vmem:[%s2 + $0x290] sm:$0xff]
  %v240 = vld [vmem:[%s2 + $0x298] sm:$0xff]
  %v241 = vld [vmem:[%s2 + $0x2a0] sm:$0xff]
  %v242 = vld [vmem:[%s2 + $0x2a8] sm:$0xff]
  %v243 = vld [vmem:[%s2 + $0x2b0] sm:$0xff]
  %v244 = vld [vmem:[%s2 + $0x2b8] sm:$0xff]
  %v245 = vld [vmem:[%s2 + $0x2c0] sm:$0xff]
  %v246 = vld [vmem:[%s2 + $0x2c8] sm:$0xff]
  %v247 = vld [vmem:[%s2 + $0x2d0] sm:$0xff]
  %v248 = vld [vmem:[%s2 + $0x2d8] sm:$0xff]
  %v249 = vld [vmem:[%s2 + $0x2e0] sm:$0xff]
  %v250 = vld [vmem:[%s2 + $0x2e8] sm:$0xff]
  %v251 = vld [vmem:[%s2 + $0x2f0] sm:$0xff]
  %v252 = vld [vmem:[%s2 + $0x2f8] sm:$0xff]
  %v253 = vld [vmem:[%s2 + $0x300] sm:$0xff]
  %v254 = vld [vmem:[%s2 + $0x308] sm:$0xff]
  %v255 = vld [vmem:[%s2 + $0x310] sm:$0xff]
  %v256 = vld [vmem:[%s2 + $0x318] sm:$0xff]
  %v257 = vld [vmem:[%s2 + $0x320] sm:$0xff]
  %v258 = vld [vmem:[%s2 + $0x328] sm:$0xff]
  %v259 = vld [vmem:[%s2 + $0x330] sm:$0xff]
  %v260 = vld [vmem:[%s2 + $0x338] sm:$0xff]
  %v261 = vld [vmem:[%s2 + $0x340] sm:$0xff]
  %v262 = vld [vmem:[%s2 + $0x348] sm:$0xff]
  %v263 = vld [vmem:[%s2 + $0x350] sm:$0xff]
  %v264 = vld [vmem:[%s2 + $0x358] sm:$0xff]
  %v265 = vld [vmem:[%s2 + $0x360] sm:$0xff]
  %v266 = vld [vmem:[%s2 + $0x368] sm:$0xff]
  %v267 = vld [vmem:[%s2 + $0x370] sm:$0xff]
  %v268 = vld [vmem:[%s2 + $0x378] sm:$0xff]
  %v269 = vld [vmem:[%s2 + $0x380] sm:$0xff]
  %v270 = vld [vmem:[%s2 + $0x388] sm:$0xff]
  %v271 = vld [vmem:[%s2 + $0x390] sm:$0xff]
  %v272 = vld [vmem:[%s2 + $0x398] sm:$0xff]
  %v273 = vld [vmem:[%s2 + $0x3a0] sm:$0xff]
  %v274 = vld [vmem:[%s2 + $0x3a8] sm:$0xff]
  %v275 = vld [vmem:[%s2 + $0x3b0] sm:$0xff]
  %v276 = vld [vmem:[%s2 + $0x3b8] sm:$0xff]
  %v277 = vld [vmem:[%s2 + $0x3c0] sm:$0xff]
  %v278 = vld [vmem:[%s2 + $0x3c8] sm:$0xff]
  %v279 = vld [vmem:[%s2 + $0x3d0] sm:$0xff]
  %v280 = vld [vmem:[%s2 + $0x3d8] sm:$0xff]
  %v281 = vld [vmem:[%s2 + $0x3e0] sm:$0xff]
  %v282 = vld [vmem:[%s2 + $0x3e8] sm:$0xff]
  %v283 = vld [vmem:[%s2 + $0x3f0] sm:$0xff]
  %v284 = vld [vmem:[%s2 + $0x3f8] sm:$0xff]
  %285 = vmatprep.subr.mxu0 %v158
  %286 = vmatpush1.msra.mxu0 %v157
  %287 = vmatprep.subr.mxu0 %v162
  %288 = vmatpush1.msra.mxu0 %v161
  %289 = vmatprep.subr.mxu0 %v166
  %290 = vmatpush1.msra.mxu0 %v165
  %291 = vmatprep.subr.mxu0 %v170
  %292 = vmatpush1.msra.mxu0 %v169
  %293 = vmatprep.subr.mxu0 %v174
  %294 = vmatpush1.msra.mxu0 %v173
  %295 = vmatprep.subr.mxu0 %v178
  %296 = vmatpush1.msra.mxu0 %v177
  %297 = vmatprep.subr.mxu0 %v182
  %298 = vmatpush1.msra.mxu0 %v181
  %299 = vmatprep.subr.mxu0 %v186
  %300 = vmatpush1.msra.mxu0 %v185
  %301 = vmatprep.subr.mxu0 %v190
  %302 = vmatpush1.msra.mxu0 %v189
  %303 = vmatprep.subr.mxu0 %v194
  %304 = vmatpush1.msra.mxu0 %v193
  %305 = vmatprep.subr.mxu0 %v198
  %306 = vmatpush1.msra.mxu0 %v197
  %307 = vmatprep.subr.mxu0 %v202
  %308 = vmatpush1.msra.mxu0 %v201
  %309 = vmatprep.subr.mxu0 %v206
  %310 = vmatpush1.msra.mxu0 %v205
  %311 = vmatprep.subr.mxu0 %v210
  %312 = vmatpush1.msra.mxu0 %v209
  %313 = vmatprep.subr.mxu0 %v214
  %314 = vmatpush1.msra.mxu0 %v213
  %315 = vmatprep.subr.mxu0 %v218
  %316 = vmatpush1.msra.mxu0 %v217
  %317 = vmatprep.subr.mxu0 %v222
  %318 = vmatpush1.msra.mxu0 %v221
  %319 = vmatprep.subr.mxu0 %v226
  %320 = vmatpush1.msra.mxu0 %v225
  %321 = vmatprep.subr.mxu0 %v230
  %322 = vmatpush1.msra.mxu0 %v229
  %323 = vmatprep.subr.mxu0 %v234
  %324 = vmatpush1.msra.mxu0 %v233
  %325 = vmatprep.subr.mxu0 %v238
  %326 = vmatpush1.msra.mxu0 %v237
  %327 = vmatprep.subr.mxu0 %v242
  %328 = vmatpush1.msra.mxu0 %v241
  %329 = vmatprep.subr.mxu0 %v246
  %330 = vmatpush1.msra.mxu0 %v245
  %331 = vmatprep.subr.mxu0 %v250
  %332 = vmatpush1.msra.mxu0 %v249
  %333 = vmatprep.subr.mxu0 %v254
  %334 = vmatpush1.msra.mxu0 %v253
  %335 = vmatprep.subr.mxu0 %v258
  %336 = vmatpush1.msra.mxu0 %v257
  %337 = vmatprep.subr.mxu0 %v262
  %338 = vmatpush1.msra.mxu0 %v261
  %339 = vmatprep.subr.mxu0 %v266
  %340 = vmatpush1.msra.mxu0 %v265
  %341 = vmatprep.subr.mxu0 %v270
  %342 = vmatpush1.msra.mxu0 %v269
  %343 = vmatprep.subr.mxu0 %v274
  %344 = vmatpush1.msra.mxu0 %v273
  %345 = vmatprep.subr.mxu0 %v278
  %346 = vmatpush1.msra.mxu0 %v277
  %347 = vmatprep.subr.mxu0 %v282
  %348 = vmatpush1.msra.mxu0 %v281
  %349 = vmatprep.mubr.f32.mxu0 %v94
  %350 = vmatmul.mubr.f32.gmra.mrb[0].mxu0 %v93
  %v351 = vpop.f32.mrb[0].mxu0
  %v352 = vadd.f32 0.0, %v351
  %v353 = vpop.f32.mrb[0].mxu0
  %v354 = vadd.f32 0.0, %v353
  %355 = vmatprep.mubr.f32.mxu0 %v96
  %356 = vmatmul.mubr.f32.gmra.mrb[0].mxu0 %v95
  %v357 = vpop.f32.mrb[0].mxu0
  %v358 = vadd.f32 0.0, %v357
  %v359 = vpop.f32.mrb[0].mxu0
  %v360 = vadd.f32 0.0, %v359
  %361 = vmatprep.mubr.f32.mxu0 %v98
  %362 = vmatmul.mubr.f32.gmra.mrb[0].mxu0 %v97
  %v363 = vpop.f32.mrb[0].mxu0
  %v364 = vadd.f32 0.0, %v363
  %v365 = vpop.f32.mrb[0].mxu0
  %v366 = vadd.f32 0.0, %v365
  %367 = vmatprep.mubr.f32.mxu0 %v100
  %368 = vmatmul.mubr.f32.gmra.mrb[0].mxu0 %v99
  %v369 = vpop.f32.mrb[0].mxu0
  %v370 = vadd.f32 0.0, %v369
  %v371 = vpop.f32.mrb[0].mxu0
  %v372 = vadd.f32 0.0, %v371
  %373 = vmatprep.mubr.f32.mxu0 %v102
  %374 = vmatmul.mubr.f32.gmra.mrb[0].mxu0 %v101
  %v375 = vpop.f32.mrb[0].mxu0
  %v376 = vadd.f32 0.0, %v375
  %v377 = vpop.f32.mrb[0].mxu0
  %v378 = vadd.f32 0.0, %v377
  %379 = vmatprep.mubr.f32.mxu0 %v104
  %380 = vmatmul.mubr.f32.gmra.mrb[0].mxu0 %v103
  %v381 = vpop.f32.mrb[0].mxu0
  %v382 = vadd.f32 0.0, %v381
  %v383 = vpop.f32.mrb[0].mxu0
  %v384 = vadd.f32 0.0, %v383
  %385 = vmatprep.mubr.f32.mxu0 %v106
  %386 = vmatmul.mubr.f32.gmra.mrb[0].mxu0 %v105
  %v387 = vpop.f32.mrb[0].mxu0
  %v388 = vadd.f32 0.0, %v387
  %v389 = vpop.f32.mrb[0].mxu0
  %v390 = vadd.f32 0.0, %v389
  %391 = vmatprep.mubr.f32.mxu0 %v108
  %392 = vmatmul.mubr.f32.gmra.mrb[0].mxu0 %v107
  %v393 = vpop.f32.mrb[0].mxu0
  %v394 = vadd.f32 0.0, %v393
  %v395 = vpop.f32.mrb[0].mxu0
  %v396 = vadd.f32 0.0, %v395
  %397 = vmatprep.mubr.f32.mxu0 %v110
  %398 = vmatmul.mubr.f32.gmra.mrb[0].mxu0 %v109
  %v399 = vpop.f32.mrb[0].mxu0
  %v400 = vadd.f32 0.0, %v399
  %v401 = vpop.f32.mrb[0].mxu0
  %v402 = vadd.f32 0.0, %v401
  %403 = vmatprep.mubr.f32.mxu0 %v112
  %404 = vmatmul.mubr.f32.gmra.mrb[0].mxu0 %v111
  %v405 = vpop.f32.mrb[0].mxu0
  %v406 = vadd.f32 0.0, %v405
  %v407 = vpop.f32.mrb[0].mxu0
  %v408 = vadd.f32 0.0, %v407
  %409 = vmatprep.mubr.f32.mxu0 %v114
  %410 = vmatmul.mubr.f32.gmra.mrb[0].mxu0 %v113
  %v411 = vpop.f32.mrb[0].mxu0
  %v412 = vadd.f32 0.0, %v411
  %v413 = vpop.f32.mrb[0].mxu0
  %v414 = vadd.f32 0.0, %v413
  %415 = vmatprep.mubr.f32.mxu0 %v116
  %416 = vmatmul.mubr.f32.gmra.mrb[0].mxu0 %v115
  %v417 = vpop.f32.mrb[0].mxu0
  %v418 = vadd.f32 0.0, %v417
  %v419 = vpop.f32.mrb[0].mxu0
  %v420 = vadd.f32 0.0, %v419
  %421 = vmatprep.mubr.f32.mxu0 %v118
  %422 = vmatmul.mubr.f32.gmra.mrb[0].mxu0 %v117
  %v423 = vpop.f32.mrb[0].mxu0
  %v424 = vadd.f32 0.0, %v423
  %v425 = vpop.f32.mrb[0].mxu0
  %v426 = vadd.f32 0.0, %v425
  %427 = vmatprep.mubr.f32.mxu0 %v120
  %428 = vmatmul.mubr.f32.gmra.mrb[0].mxu0 %v119
  %v429 = vpop.f32.mrb[0].mxu0
  %v430 = vadd.f32 0.0, %v429
  %v431 = vpop.f32.mrb[0].mxu0
  %v432 = vadd.f32 0.0, %v431
  %433 = vmatprep.mubr.f32.mxu0 %v122
  %434 = vmatmul.mubr.f32.gmra.mrb[0].mxu0 %v121
  %v435 = vpop.f32.mrb[0].mxu0
  %v436 = vadd.f32 0.0, %v435
  %v437 = vpop.f32.mrb[0].mxu0
  %v438 = vadd.f32 0.0, %v437
  %439 = vmatprep.mubr.f32.mxu0 %v124
  %440 = vmatmul.mubr.f32.gmra.mrb[0].mxu0 %v123
  %v441 = vpop.f32.mrb[0].mxu0
  %v442 = vadd.f32 0.0, %v441
  %v443 = vpop.f32.mrb[0].mxu0
  %v444 = vadd.f32 0.0, %v443
  %445 = vmatprep.mubr.f32.mxu0 %v126
  %446 = vmatmul.mubr.f32.gmra.mrb[0].mxu0 %v125
  %v447 = vpop.f32.mrb[0].mxu0
  %v448 = vadd.f32 0.0, %v447
  %v449 = vpop.f32.mrb[0].mxu0
  %v450 = vadd.f32 0.0, %v449
  %451 = vmatprep.mubr.f32.mxu0 %v128
  %452 = vmatmul.mubr.f32.gmra.mrb[0].mxu0 %v127
  %v453 = vpop.f32.mrb[0].mxu0
  %v454 = vadd.f32 0.0, %v453
  %v455 = vpop.f32.mrb[0].mxu0
  %v456 = vadd.f32 0.0, %v455
  %457 = vmatprep.mubr.f32.mxu0 %v130
  %458 = vmatmul.mubr.f32.gmra.mrb[0].mxu0 %v129
  %v459 = vpop.f32.mrb[0].mxu0
  %v460 = vadd.f32 0.0, %v459
  %v461 = vpop.f32.mrb[0].mxu0
  %v462 = vadd.f32 0.0, %v461
  %463 = vmatprep.mubr.f32.mxu0 %v132
  %464 = vmatmul.mubr.f32.gmra.mrb[0].mxu0 %v131
  %v465 = vpop.f32.mrb[0].mxu0
  %v466 = vadd.f32 0.0, %v465
  %v467 = vpop.f32.mrb[0].mxu0
  %v468 = vadd.f32 0.0, %v467
  %469 = vmatprep.mubr.f32.mxu0 %v134
  %470 = vmatmul.mubr.f32.gmra.mrb[0].mxu0 %v133
  %v471 = vpop.f32.mrb[0].mxu0
  %v472 = vadd.f32 0.0, %v471
  %v473 = vpop.f32.mrb[0].mxu0
  %v474 = vadd.f32 0.0, %v473
  %475 = vmatprep.mubr.f32.mxu0 %v136
  %476 = vmatmul.mubr.f32.gmra.mrb[0].mxu0 %v135
  %v477 = vpop.f32.mrb[0].mxu0
  %v478 = vadd.f32 0.0, %v477
  %v479 = vpop.f32.mrb[0].mxu0
  %v480 = vadd.f32 0.0, %v479
  %481 = vmatprep.mubr.f32.mxu0 %v138
  %482 = vmatmul.mubr.f32.gmra.mrb[0].mxu0 %v137
  %v483 = vpop.f32.mrb[0].mxu0
  %v484 = vadd.f32 0.0, %v483
  %v485 = vpop.f32.mrb[0].mxu0
  %v486 = vadd.f32 0.0, %v485
  %487 = vmatprep.mubr.f32.mxu0 %v140
  %488 = vmatmul.mubr.f32.gmra.mrb[0].mxu0 %v139
  %v489 = vpop.f32.mrb[0].mxu0
  %v490 = vadd.f32 0.0, %v489
  %v491 = vpop.f32.mrb[0].mxu0
  %v492 = vadd.f32 0.0, %v491
  %493 = vmatprep.mubr.f32.mxu0 %v142
  %494 = vmatmul.mubr.f32.gmra.mrb[0].mxu0 %v141
  %v495 = vpop.f32.mrb[0].mxu0
  %v496 = vadd.f32 0.0, %v495
  %v497 = vpop.f32.mrb[0].mxu0
  %v498 = vadd.f32 0.0, %v497
  %499 = vmatprep.mubr.f32.mxu0 %v144
  %500 = vmatmul.mubr.f32.gmra.mrb[0].mxu0 %v143
  %v501 = vpop.f32.mrb[0].mxu0
  %v502 = vadd.f32 0.0, %v501
  %v503 = vpop.f32.mrb[0].mxu0
  %v504 = vadd.f32 0.0, %v503
  %505 = vmatprep.mubr.f32.mxu0 %v146
  %506 = vmatmul.mubr.f32.gmra.mrb[0].mxu0 %v145
  %v507 = vpop.f32.mrb[0].mxu0
  %v508 = vadd.f32 0.0, %v507
  %v509 = vpop.f32.mrb[0].mxu0
  %v510 = vadd.f32 0.0, %v509
  %511 = vmatprep.mubr.f32.mxu0 %v148
  %512 = vmatmul.mubr.f32.gmra.mrb[0].mxu0 %v147
  %v513 = vpop.f32.mrb[0].mxu0
  %v514 = vadd.f32 0.0, %v513
  %v515 = vpop.f32.mrb[0].mxu0
  %v516 = vadd.f32 0.0, %v515
  %517 = vmatprep.mubr.f32.mxu0 %v150
  %518 = vmatmul.mubr.f32.gmra.mrb[0].mxu0 %v149
  %v519 = vpop.f32.mrb[0].mxu0
  %v520 = vadd.f32 0.0, %v519
  %v521 = vpop.f32.mrb[0].mxu0
  %v522 = vadd.f32 0.0, %v521
  %523 = vmatprep.mubr.f32.mxu0 %v152
  %524 = vmatmul.mubr.f32.gmra.mrb[0].mxu0 %v151
  %v525 = vpop.f32.mrb[0].mxu0
  %v526 = vadd.f32 0.0, %v525
  %v527 = vpop.f32.mrb[0].mxu0
  %v528 = vadd.f32 0.0, %v527
  %529 = vmatprep.mubr.f32.mxu0 %v154
  %530 = vmatmul.mubr.f32.gmra.mrb[0].mxu0 %v153
  %v531 = vpop.f32.mrb[0].mxu0
  %v532 = vadd.f32 0.0, %v531
  %v533 = vpop.f32.mrb[0].mxu0
  %v534 = vadd.f32 0.0, %v533
  %535 = vmatprep.mubr.f32.mxu0 %v156
  %536 = vmatmul.mubr.f32.gmra.mrb[0].mxu0 %v155
  %v537 = vpop.f32.mrb[0].mxu0
  %v538 = vadd.f32 0.0, %v537
  %v539 = vpop.f32.mrb[0].mxu0
  %v540 = vadd.f32 0.0, %v539
  %541 = vdwg.mxu0
  %542 = vmatprep.subr.mxu0 %v160
  %543 = vmatpush1.msra.mxu0 %v159
  %544 = vmatprep.subr.mxu0 %v164
  %545 = vmatpush1.msra.mxu0 %v163
  %546 = vmatprep.subr.mxu0 %v168
  %547 = vmatpush1.msra.mxu0 %v167
  %548 = vmatprep.subr.mxu0 %v172
  %549 = vmatpush1.msra.mxu0 %v171
  %550 = vmatprep.subr.mxu0 %v176
  %551 = vmatpush1.msra.mxu0 %v175
  %552 = vmatprep.subr.mxu0 %v180
  %553 = vmatpush1.msra.mxu0 %v179
  %554 = vmatprep.subr.mxu0 %v184
  %555 = vmatpush1.msra.mxu0 %v183
  %556 = vmatprep.subr.mxu0 %v188
  %557 = vmatpush1.msra.mxu0 %v187
  %558 = vmatprep.subr.mxu0 %v192
  %559 = vmatpush1.msra.mxu0 %v191
  %560 = vmatprep.subr.mxu0 %v196
  %561 = vmatpush1.msra.mxu0 %v195
  %562 = vmatprep.subr.mxu0 %v200
  %563 = vmatpush1.msra.mxu0 %v199
  %564 = vmatprep.subr.mxu0 %v204
  %565 = vmatpush1.msra.mxu0 %v203
  %566 = vmatprep.subr.mxu0 %v208
  %567 = vmatpush1.msra.mxu0 %v207
  %568 = vmatprep.subr.mxu0 %v212
  %569 = vmatpush1.msra.mxu0 %v211
  %570 = vmatprep.subr.mxu0 %v216
  %571 = vmatpush1.msra.mxu0 %v215
  %572 = vmatprep.subr.mxu0 %v220
  %573 = vmatpush1.msra.mxu0 %v219
  %574 = vmatprep.subr.mxu0 %v224
  %575 = vmatpush1.msra.mxu0 %v223
  %576 = vmatprep.subr.mxu0 %v228
  %577 = vmatpush1.msra.mxu0 %v227
  %578 = vmatprep.subr.mxu0 %v232
  %579 = vmatpush1.msra.mxu0 %v231
  %580 = vmatprep.subr.mxu0 %v236
  %581 = vmatpush1.msra.mxu0 %v235
  %582 = vmatprep.subr.mxu0 %v240
  %583 = vmatpush1.msra.mxu0 %v239
  %584 = vmatprep.subr.mxu0 %v244
  %585 = vmatpush1.msra.mxu0 %v243
  %586 = vmatprep.subr.mxu0 %v248
  %587 = vmatpush1.msra.mxu0 %v247
  %588 = vmatprep.subr.mxu0 %v252
  %589 = vmatpush1.msra.mxu0 %v251
  %590 = vmatprep.subr.mxu0 %v256
  %591 = vmatpush1.msra.mxu0 %v255
  %592 = vmatprep.subr.mxu0 %v260
  %593 = vmatpush1.msra.mxu0 %v259
  %594 = vmatprep.subr.mxu0 %v264
  %595 = vmatpush1.msra.mxu0 %v263
  %596 = vmatprep.subr.mxu0 %v268
  %597 = vmatpush1.msra.mxu0 %v267
  %598 = vmatprep.subr.mxu0 %v272
  %599 = vmatpush1.msra.mxu0 %v271
  %600 = vmatprep.subr.mxu0 %v276
  %601 = vmatpush1.msra.mxu0 %v275
  %602 = vmatprep.subr.mxu0 %v280
  %603 = vmatpush1.msra.mxu0 %v279
  %604 = vmatprep.subr.mxu0 %v284
  %605 = vmatpush1.msra.mxu0 %v283
  %606 = vmatprep.mubr.f32.mxu0 %v94
  %607 = vmatmul.mubr.f32.gmra.mrb[0].mxu0 %v93
  %v608 = vpop.f32.mrb[0].mxu0
  %v609 = vadd.f32 0.0, %v608
  %v610 = vpop.f32.mrb[0].mxu0
  %v611 = vadd.f32 0.0, %v610
  %612 = vmatprep.mubr.f32.mxu0 %v96
  %613 = vmatmul.mubr.f32.gmra.mrb[0].mxu0 %v95
  %v614 = vpop.f32.mrb[0].mxu0
  %v615 = vadd.f32 0.0, %v614
  %v616 = vpop.f32.mrb[0].mxu0
  %v617 = vadd.f32 0.0, %v616
  %618 = vmatprep.mubr.f32.mxu0 %v98
  %619 = vmatmul.mubr.f32.gmra.mrb[0].mxu0 %v97
  %v620 = vpop.f32.mrb[0].mxu0
  %v621 = vadd.f32 0.0, %v620
  %v622 = vpop.f32.mrb[0].mxu0
  %v623 = vadd.f32 0.0, %v622
  %624 = vmatprep.mubr.f32.mxu0 %v100
  %625 = vmatmul.mubr.f32.gmra.mrb[0].mxu0 %v99
  %v626 = vpop.f32.mrb[0].mxu0
  %v627 = vadd.f32 0.0, %v626
  %v628 = vpop.f32.mrb[0].mxu0
  %v629 = vadd.f32 0.0, %v628
  %630 = vmatprep.mubr.f32.mxu0 %v102
  %631 = vmatmul.mubr.f32.gmra.mrb[0].mxu0 %v101
  %v632 = vpop.f32.mrb[0].mxu0
  %v633 = vadd.f32 0.0, %v632
  %v634 = vpop.f32.mrb[0].mxu0
  %v635 = vadd.f32 0.0, %v634
  %636 = vmatprep.mubr.f32.mxu0 %v104
  %637 = vmatmul.mubr.f32.gmra.mrb[0].mxu0 %v103
  %v638 = vpop.f32.mrb[0].mxu0
  %v639 = vadd.f32 0.0, %v638
  %v640 = vpop.f32.mrb[0].mxu0
  %v641 = vadd.f32 0.0, %v640
  %642 = vmatprep.mubr.f32.mxu0 %v106
  %643 = vmatmul.mubr.f32.gmra.mrb[0].mxu0 %v105
  %v644 = vpop.f32.mrb[0].mxu0
  %v645 = vadd.f32 0.0, %v644
  %v646 = vpop.f32.mrb[0].mxu0
  %v647 = vadd.f32 0.0, %v646
  %648 = vmatprep.mubr.f32.mxu0 %v108
  %649 = vmatmul.mubr.f32.gmra.mrb[0].mxu0 %v107
  %v650 = vpop.f32.mrb[0].mxu0
  %v651 = vadd.f32 0.0, %v650
  %v652 = vpop.f32.mrb[0].mxu0
  %v653 = vadd.f32 0.0, %v652
  %654 = vmatprep.mubr.f32.mxu0 %v110
  %655 = vmatmul.mubr.f32.gmra.mrb[0].mxu0 %v109
  %v656 = vpop.f32.mrb[0].mxu0
  %v657 = vadd.f32 0.0, %v656
  %v658 = vpop.f32.mrb[0].mxu0
  %v659 = vadd.f32 0.0, %v658
  %660 = vmatprep.mubr.f32.mxu0 %v112
  %661 = vmatmul.mubr.f32.gmra.mrb[0].mxu0 %v111
  %v662 = vpop.f32.mrb[0].mxu0
  %v663 = vadd.f32 0.0, %v662
  %v664 = vpop.f32.mrb[0].mxu0
  %v665 = vadd.f32 0.0, %v664
  %666 = vmatprep.mubr.f32.mxu0 %v114
  %667 = vmatmul.mubr.f32.gmra.mrb[0].mxu0 %v113
  %v668 = vpop.f32.mrb[0].mxu0
  %v669 = vadd.f32 0.0, %v668
  %v670 = vpop.f32.mrb[0].mxu0
  %v671 = vadd.f32 0.0, %v670
  %672 = vmatprep.mubr.f32.mxu0 %v116
  %673 = vmatmul.mubr.f32.gmra.mrb[0].mxu0 %v115
  %v674 = vpop.f32.mrb[0].mxu0
  %v675 = vadd.f32 0.0, %v674
  %v676 = vpop.f32.mrb[0].mxu0
  %v677 = vadd.f32 0.0, %v676
  %678 = vmatprep.mubr.f32.mxu0 %v118
  %679 = vmatmul.mubr.f32.gmra.mrb[0].mxu0 %v117
  %v680 = vpop.f32.mrb[0].mxu0
  %v681 = vadd.f32 0.0, %v680
  %v682 = vpop.f32.mrb[0].mxu0
  %v683 = vadd.f32 0.0, %v682
  %684 = vmatprep.mubr.f32.mxu0 %v120
  %685 = vmatmul.mubr.f32.gmra.mrb[0].mxu0 %v119
  %v686 = vpop.f32.mrb[0].mxu0
  %v687 = vadd.f32 0.0, %v686
  %v688 = vpop.f32.mrb[0].mxu0
  %v689 = vadd.f32 0.0, %v688
  %690 = vmatprep.mubr.f32.mxu0 %v122
  %691 = vmatmul.mubr.f32.gmra.mrb[0].mxu0 %v121
  %v692 = vpop.f32.mrb[0].mxu0
  %v693 = vadd.f32 0.0, %v692
  %v694 = vpop.f32.mrb[0].mxu0
  %v695 = vadd.f32 0.0, %v694
  %696 = vmatprep.mubr.f32.mxu0 %v124
  %697 = vmatmul.mubr.f32.gmra.mrb[0].mxu0 %v123
  %v698 = vpop.f32.mrb[0].mxu0
  %v699 = vadd.f32 0.0, %v698
  %v700 = vpop.f32.mrb[0].mxu0
  %v701 = vadd.f32 0.0, %v700
  %702 = vmatprep.mubr.f32.mxu0 %v126
  %703 = vmatmul.mubr.f32.gmra.mrb[0].mxu0 %v125
  %v704 = vpop.f32.mrb[0].mxu0
  %v705 = vadd.f32 0.0, %v704
  %v706 = vpop.f32.mrb[0].mxu0
  %v707 = vadd.f32 0.0, %v706
  %708 = vmatprep.mubr.f32.mxu0 %v128
  %709 = vmatmul.mubr.f32.gmra.mrb[0].mxu0 %v127
  %v710 = vpop.f32.mrb[0].mxu0
  %v711 = vadd.f32 0.0, %v710
  %v712 = vpop.f32.mrb[0].mxu0
  %v713 = vadd.f32 0.0, %v712
  %714 = vmatprep.mubr.f32.mxu0 %v130
  %715 = vmatmul.mubr.f32.gmra.mrb[0].mxu0 %v129
  %v716 = vpop.f32.mrb[0].mxu0
  %v717 = vadd.f32 0.0, %v716
  %v718 = vpop.f32.mrb[0].mxu0
  %v719 = vadd.f32 0.0, %v718
  %720 = vmatprep.mubr.f32.mxu0 %v132
  %721 = vmatmul.mubr.f32.gmra.mrb[0].mxu0 %v131
  %v722 = vpop.f32.mrb[0].mxu0
  %v723 = vadd.f32 0.0, %v722
  %v724 = vpop.f32.mrb[0].mxu0
  %v725 = vadd.f32 0.0, %v724
  %726 = vmatprep.mubr.f32.mxu0 %v134
  %727 = vmatmul.mubr.f32.gmra.mrb[0].mxu0 %v133
  %v728 = vpop.f32.mrb[0].mxu0
  %v729 = vadd.f32 0.0, %v728
  %v730 = vpop.f32.mrb[0].mxu0
  %v731 = vadd.f32 0.0, %v730
  %732 = vmatprep.mubr.f32.mxu0 %v136
  %733 = vmatmul.mubr.f32.gmra.mrb[0].mxu0 %v135
  %v734 = vpop.f32.mrb[0].mxu0
  %v735 = vadd.f32 0.0, %v734
  %v736 = vpop.f32.mrb[0].mxu0
  %v737 = vadd.f32 0.0, %v736
  %738 = vmatprep.mubr.f32.mxu0 %v138
  %739 = vmatmul.mubr.f32.gmra.mrb[0].mxu0 %v137
  %v740 = vpop.f32.mrb[0].mxu0
  %v741 = vadd.f32 0.0, %v740
  %v742 = vpop.f32.mrb[0].mxu0
  %v743 = vadd.f32 0.0, %v742
  %744 = vmatprep.mubr.f32.mxu0 %v140
  %745 = vmatmul.mubr.f32.gmra.mrb[0].mxu0 %v139
  %v746 = vpop.f32.mrb[0].mxu0
  %v747 = vadd.f32 0.0, %v746
  %v748 = vpop.f32.mrb[0].mxu0
  %v749 = vadd.f32 0.0, %v748
  %750 = vmatprep.mubr.f32.mxu0 %v142
  %751 = vmatmul.mubr.f32.gmra.mrb[0].mxu0 %v141
  %v752 = vpop.f32.mrb[0].mxu0
  %v753 = vadd.f32 0.0, %v752
  %v754 = vpop.f32.mrb[0].mxu0
  %v755 = vadd.f32 0.0, %v754
  %756 = vmatprep.mubr.f32.mxu0 %v144
  %757 = vmatmul.mubr.f32.gmra.mrb[0].mxu0 %v143
  %v758 = vpop.f32.mrb[0].mxu0
  %v759 = vadd.f32 0.0, %v758
  %v760 = vpop.f32.mrb[0].mxu0
  %v761 = vadd.f32 0.0, %v760
  %762 = vmatprep.mubr.f32.mxu0 %v146
  %763 = vmatmul.mubr.f32.gmra.mrb[0].mxu0 %v145
  %v764 = vpop.f32.mrb[0].mxu0
  %v765 = vadd.f32 0.0, %v764
  %v766 = vpop.f32.mrb[0].mxu0
  %v767 = vadd.f32 0.0, %v766
  %768 = vmatprep.mubr.f32.mxu0 %v148
  %769 = vmatmul.mubr.f32.gmra.mrb[0].mxu0 %v147
  %v770 = vpop.f32.mrb[0].mxu0
  %v771 = vadd.f32 0.0, %v770
  %v772 = vpop.f32.mrb[0].mxu0
  %v773 = vadd.f32 0.0, %v772
  %774 = vmatprep.mubr.f32.mxu0 %v150
  %775 = vmatmul.mubr.f32.gmra.mrb[0].mxu0 %v149
  %v776 = vpop.f32.mrb[0].mxu0
  %v777 = vadd.f32 0.0, %v776
  %v778 = vpop.f32.mrb[0].mxu0
  %v779 = vadd.f32 0.0, %v778
  %780 = vmatprep.mubr.f32.mxu0 %v152
  %781 = vmatmul.mubr.f32.gmra.mrb[0].mxu0 %v151
  %v782 = vpop.f32.mrb[0].mxu0
  %v783 = vadd.f32 0.0, %v782
  %v784 = vpop.f32.mrb[0].mxu0
  %v785 = vadd.f32 0.0, %v784
  %786 = vmatprep.mubr.f32.mxu0 %v154
  %787 = vmatmul.mubr.f32.gmra.mrb[0].mxu0 %v153
  %v788 = vpop.f32.mrb[0].mxu0
  %v789 = vadd.f32 0.0, %v788
  %v790 = vpop.f32.mrb[0].mxu0
  %v791 = vadd.f32 0.0, %v790
  %792 = vmatprep.mubr.f32.mxu0 %v156
  %793 = vmatmul.mubr.f32.gmra.mrb[0].mxu0 %v155
  %v794 = vpop.f32.mrb[0].mxu0
  %v795 = vadd.f32 0.0, %v794
  %v796 = vpop.f32.mrb[0].mxu0
  %v797 = vadd.f32 0.0, %v796
  %798 = vdwg.mxu0
  %v799 = vmul.f32 %v352, %v352
  %v800 = vmul.f32 %v354, %v354
  %v801 = vmul.f32 %v358, %v358
  %v802 = vmul.f32 %v360, %v360
  %v803 = vmul.f32 %v364, %v364
  %v804 = vmul.f32 %v366, %v366
  %v805 = vmul.f32 %v370, %v370
  %v806 = vmul.f32 %v372, %v372
  %v807 = vmul.f32 %v376, %v376
  %v808 = vmul.f32 %v378, %v378
  %v809 = vmul.f32 %v382, %v382
  %v810 = vmul.f32 %v384, %v384
  %v811 = vmul.f32 %v388, %v388
  %v812 = vmul.f32 %v390, %v390
  %v813 = vmul.f32 %v394, %v394
  %v814 = vmul.f32 %v396, %v396
  %v815 = vmul.f32 %v400, %v400
  %v816 = vmul.f32 %v402, %v402
  %v817 = vmul.f32 %v406, %v406
  %v818 = vmul.f32 %v408, %v408
  %v819 = vmul.f32 %v412, %v412
  %v820 = vmul.f32 %v414, %v414
  %v821 = vmul.f32 %v418, %v418
  %v822 = vmul.f32 %v420, %v420
  %v823 = vmul.f32 %v424, %v424
  %v824 = vmul.f32 %v426, %v426
  %v825 = vmul.f32 %v430, %v430
  %v826 = vmul.f32 %v432, %v432
  %v827 = vmul.f32 %v436, %v436
  %v828 = vmul.f32 %v438, %v438
  %v829 = vmul.f32 %v442, %v442
  %v830 = vmul.f32 %v444, %v444
  %v831 = vmul.f32 %v448, %v448
  %v832 = vmul.f32 %v450, %v450
  %v833 = vmul.f32 %v454, %v454
  %v834 = vmul.f32 %v456, %v456
  %v835 = vmul.f32 %v460, %v460
  %v836 = vmul.f32 %v462, %v462
  %v837 = vmul.f32 %v466, %v466
  %v838 = vmul.f32 %v468, %v468
  %v839 = vmul.f32 %v472, %v472
  %v840 = vmul.f32 %v474, %v474
  %v841 = vmul.f32 %v478, %v478
  %v842 = vmul.f32 %v480, %v480
  %v843 = vmul.f32 %v484, %v484
  %v844 = vmul.f32 %v486, %v486
  %v845 = vmul.f32 %v490, %v490
  %v846 = vmul.f32 %v492, %v492
  %v847 = vmul.f32 %v496, %v496
  %v848 = vmul.f32 %v498, %v498
  %v849 = vmul.f32 %v502, %v502
  %v850 = vmul.f32 %v504, %v504
  %v851 = vmul.f32 %v508, %v508
  %v852 = vmul.f32 %v510, %v510
  %v853 = vmul.f32 %v514, %v514
  %v854 = vmul.f32 %v516, %v516
  %v855 = vmul.f32 %v520, %v520
  %v856 = vmul.f32 %v522, %v522
  %v857 = vmul.f32 %v526, %v526
  %v858 = vmul.f32 %v528, %v528
  %v859 = vmul.f32 %v532, %v532
  %v860 = vmul.f32 %v534, %v534
  %v861 = vmul.f32 %v538, %v538
  %v862 = vmul.f32 %v540, %v540
  %v863 = vmul.f32 %v609, %v609
  %v864 = vmul.f32 %v611, %v611
  %v865 = vmul.f32 %v615, %v615
  %v866 = vmul.f32 %v617, %v617
  %v867 = vmul.f32 %v621, %v621
  %v868 = vmul.f32 %v623, %v623
  %v869 = vmul.f32 %v627, %v627
  %v870 = vmul.f32 %v629, %v629
  %v871 = vmul.f32 %v633, %v633
  %v872 = vmul.f32 %v635, %v635
  %v873 = vmul.f32 %v639, %v639
  %v874 = vmul.f32 %v641, %v641
  %v875 = vmul.f32 %v645, %v645
  %v876 = vmul.f32 %v647, %v647
  %v877 = vmul.f32 %v651, %v651
  %v878 = vmul.f32 %v653, %v653
  %v879 = vmul.f32 %v657, %v657
  %v880 = vmul.f32 %v659, %v659
  %v881 = vmul.f32 %v663, %v663
  %v882 = vmul.f32 %v665, %v665
  %v883 = vmul.f32 %v669, %v669
  %v884 = vmul.f32 %v671, %v671
  %v885 = vmul.f32 %v675, %v675
  %v886 = vmul.f32 %v677, %v677
  %v887 = vmul.f32 %v681, %v681
  %v888 = vmul.f32 %v683, %v683
  %v889 = vmul.f32 %v687, %v687
  %v890 = vmul.f32 %v689, %v689
  %v891 = vmul.f32 %v693, %v693
  %v892 = vmul.f32 %v695, %v695
  %v893 = vmul.f32 %v699, %v699
  %v894 = vmul.f32 %v701, %v701
  %v895 = vmul.f32 %v705, %v705
  %v896 = vmul.f32 %v707, %v707
  %v897 = vmul.f32 %v711, %v711
  %v898 = vmul.f32 %v713, %v713
  %v899 = vmul.f32 %v717, %v717
  %v900 = vmul.f32 %v719, %v719
  %v901 = vmul.f32 %v723, %v723
  %v902 = vmul.f32 %v725, %v725
  %v903 = vmul.f32 %v729, %v729
  %v904 = vmul.f32 %v731, %v731
  %v905 = vmul.f32 %v735, %v735
  %v906 = vmul.f32 %v737, %v737
  %v907 = vmul.f32 %v741, %v741
  %v908 = vmul.f32 %v743, %v743
  %v909 = vmul.f32 %v747, %v747
  %v910 = vmul.f32 %v749, %v749
  %v911 = vmul.f32 %v753, %v753
  %v912 = vmul.f32 %v755, %v755
  %v913 = vmul.f32 %v759, %v759
  %v914 = vmul.f32 %v761, %v761
  %v915 = vmul.f32 %v765, %v765
  %v916 = vmul.f32 %v767, %v767
  %v917 = vmul.f32 %v771, %v771
  %v918 = vmul.f32 %v773, %v773
  %v919 = vmul.f32 %v777, %v777
  %v920 = vmul.f32 %v779, %v779
  %v921 = vmul.f32 %v783, %v783
  %v922 = vmul.f32 %v785, %v785
  %v923 = vmul.f32 %v789, %v789
  %v924 = vmul.f32 %v791, %v791
  %v925 = vmul.f32 %v795, %v795
  %v926 = vmul.f32 %v797, %v797
  %v927 = vadd.f32 %v799, %v863
  %v928 = vadd.f32 %v800, %v864
  %v929 = vadd.f32 %v801, %v865
  %v930 = vadd.f32 %v802, %v866
  %v931 = vadd.f32 %v803, %v867
  %v932 = vadd.f32 %v804, %v868
  %v933 = vadd.f32 %v805, %v869
  %v934 = vadd.f32 %v806, %v870
  %v935 = vadd.f32 %v807, %v871
  %v936 = vadd.f32 %v808, %v872
  %v937 = vadd.f32 %v809, %v873
  %v938 = vadd.f32 %v810, %v874
  %v939 = vadd.f32 %v811, %v875
  %v940 = vadd.f32 %v812, %v876
  %v941 = vadd.f32 %v813, %v877
  %v942 = vadd.f32 %v814, %v878
  %v943 = vadd.f32 %v815, %v879
  %v944 = vadd.f32 %v816, %v880
  %v945 = vadd.f32 %v817, %v881
  %v946 = vadd.f32 %v818, %v882
  %v947 = vadd.f32 %v819, %v883
  %v948 = vadd.f32 %v820, %v884
  %v949 = vadd.f32 %v821, %v885
  %v950 = vadd.f32 %v822, %v886
  %v951 = vadd.f32 %v823, %v887
  %v952 = vadd.f32 %v824, %v888
  %v953 = vadd.f32 %v825, %v889
  %v954 = vadd.f32 %v826, %v890
  %v955 = vadd.f32 %v827, %v891
  %v956 = vadd.f32 %v828, %v892
  %v957 = vadd.f32 %v829, %v893
  %v958 = vadd.f32 %v830, %v894
  %v959 = vadd.f32 %v831, %v895
  %v960 = vadd.f32 %v832, %v896
  %v961 = vadd.f32 %v833, %v897
  %v962 = vadd.f32 %v834, %v898
  %v963 = vadd.f32 %v835, %v899
  %v964 = vadd.f32 %v836, %v900
  %v965 = vadd.f32 %v837, %v901
  %v966 = vadd.f32 %v838, %v902
  %v967 = vadd.f32 %v839, %v903
  %v968 = vadd.f32 %v840, %v904
  %v969 = vadd.f32 %v841, %v905
  %v970 = vadd.f32 %v842, %v906
  %v971 = vadd.f32 %v843, %v907
  %v972 = vadd.f32 %v844, %v908
  %v973 = vadd.f32 %v845, %v909
  %v974 = vadd.f32 %v846, %v910
  %v975 = vadd.f32 %v847, %v911
  %v976 = vadd.f32 %v848, %v912
  %v977 = vadd.f32 %v849, %v913
  %v978 = vadd.f32 %v850, %v914
  %v979 = vadd.f32 %v851, %v915
  %v980 = vadd.f32 %v852, %v916
  %v981 = vadd.f32 %v853, %v917
  %v982 = vadd.f32 %v854, %v918
  %v983 = vadd.f32 %v855, %v919
  %v984 = vadd.f32 %v856, %v920
  %v985 = vadd.f32 %v857, %v921
  %v986 = vadd.f32 %v858, %v922
  %v987 = vadd.f32 %v859, %v923
  %v988 = vadd.f32 %v860, %v924
  %v989 = vadd.f32 %v861, %v925
  %v990 = vadd.f32 %v862, %v926
  %v991 = vld [vmem:[%s3] sm:$0xff]
  %v992 = vld [vmem:[%s3 + $0x8] sm:$0xff]
  %v993 = vld [vmem:[%s3 + $0x10] sm:$0xff]
  %v994 = vld [vmem:[%s3 + $0x18] sm:$0xff]
  %v995 = vld [vmem:[%s3 + $0x20] sm:$0xff]
  %v996 = vld [vmem:[%s3 + $0x28] sm:$0xff]
  %v997 = vld [vmem:[%s3 + $0x30] sm:$0xff]
  %v998 = vld [vmem:[%s3 + $0x38] sm:$0xff]
  %v999 = vld [vmem:[%s3 + $0x40] sm:$0xff]
  %v1000 = vld [vmem:[%s3 + $0x48] sm:$0xff]
  %v1001 = vld [vmem:[%s3 + $0x50] sm:$0xff]
  %v1002 = vld [vmem:[%s3 + $0x58] sm:$0xff]
  %v1003 = vld [vmem:[%s3 + $0x60] sm:$0xff]
  %v1004 = vld [vmem:[%s3 + $0x68] sm:$0xff]
  %v1005 = vld [vmem:[%s3 + $0x70] sm:$0xff]
  %v1006 = vld [vmem:[%s3 + $0x78] sm:$0xff]
  %v1007 = vld [vmem:[%s3 + $0x80] sm:$0xff]
  %v1008 = vld [vmem:[%s3 + $0x88] sm:$0xff]
  %v1009 = vld [vmem:[%s3 + $0x90] sm:$0xff]
  %v1010 = vld [vmem:[%s3 + $0x98] sm:$0xff]
  %v1011 = vld [vmem:[%s3 + $0xa0] sm:$0xff]
  %v1012 = vld [vmem:[%s3 + $0xa8] sm:$0xff]
  %v1013 = vld [vmem:[%s3 + $0xb0] sm:$0xff]
  %v1014 = vld [vmem:[%s3 + $0xb8] sm:$0xff]
  %v1015 = vld [vmem:[%s3 + $0xc0] sm:$0xff]
  %v1016 = vld [vmem:[%s3 + $0xc8] sm:$0xff]
  %v1017 = vld [vmem:[%s3 + $0xd0] sm:$0xff]
  %v1018 = vld [vmem:[%s3 + $0xd8] sm:$0xff]
  %v1019 = vld [vmem:[%s3 + $0xe0] sm:$0xff]
  %v1020 = vld [vmem:[%s3 + $0xe8] sm:$0xff]
  %v1021 = vld [vmem:[%s3 + $0xf0] sm:$0xff]
  %v1022 = vld [vmem:[%s3 + $0xf8] sm:$0xff]
  %1023 = vmatprep.subr.mxu0 0.0
  %1024 = vmatpush1.msra.mxu0 %v991
  %1025 = vmatprep.subr.mxu0 0.0
  %1026 = vmatpush1.msra.mxu0 %v992
  %1027 = vmatprep.subr.mxu0 0.0
  %1028 = vmatpush1.msra.mxu0 %v993
  %1029 = vmatprep.subr.mxu0 0.0
  %1030 = vmatpush1.msra.mxu0 %v994
  %1031 = vmatprep.subr.mxu0 0.0
  %1032 = vmatpush1.msra.mxu0 %v995
  %1033 = vmatprep.subr.mxu0 0.0
  %1034 = vmatpush1.msra.mxu0 %v996
  %1035 = vmatprep.subr.mxu0 0.0
  %1036 = vmatpush1.msra.mxu0 %v997
  %1037 = vmatprep.subr.mxu0 0.0
  %1038 = vmatpush1.msra.mxu0 %v998
  %1039 = vmatprep.subr.mxu0 0.0
  %1040 = vmatpush1.msra.mxu0 %v999
  %1041 = vmatprep.subr.mxu0 0.0
  %1042 = vmatpush1.msra.mxu0 %v1000
  %1043 = vmatprep.subr.mxu0 0.0
  %1044 = vmatpush1.msra.mxu0 %v1001
  %1045 = vmatprep.subr.mxu0 0.0
  %1046 = vmatpush1.msra.mxu0 %v1002
  %1047 = vmatprep.subr.mxu0 0.0
  %1048 = vmatpush1.msra.mxu0 %v1003
  %1049 = vmatprep.subr.mxu0 0.0
  %1050 = vmatpush1.msra.mxu0 %v1004
  %1051 = vmatprep.subr.mxu0 0.0
  %1052 = vmatpush1.msra.mxu0 %v1005
  %1053 = vmatprep.subr.mxu0 0.0
  %1054 = vmatpush1.msra.mxu0 %v1006
  %1055 = vmatprep.subr.mxu0 0.0
  %1056 = vmatpush1.msra.mxu0 %v1007
  %1057 = vmatprep.subr.mxu0 0.0
  %1058 = vmatpush1.msra.mxu0 %v1008
  %1059 = vmatprep.subr.mxu0 0.0
  %1060 = vmatpush1.msra.mxu0 %v1009
  %1061 = vmatprep.subr.mxu0 0.0
  %1062 = vmatpush1.msra.mxu0 %v1010
  %1063 = vmatprep.subr.mxu0 0.0
  %1064 = vmatpush1.msra.mxu0 %v1011
  %1065 = vmatprep.subr.mxu0 0.0
  %1066 = vmatpush1.msra.mxu0 %v1012
  %1067 = vmatprep.subr.mxu0 0.0
  %1068 = vmatpush1.msra.mxu0 %v1013
  %1069 = vmatprep.subr.mxu0 0.0
  %1070 = vmatpush1.msra.mxu0 %v1014
  %1071 = vmatprep.subr.mxu0 0.0
  %1072 = vmatpush1.msra.mxu0 %v1015
  %1073 = vmatprep.subr.mxu0 0.0
  %1074 = vmatpush1.msra.mxu0 %v1016
  %1075 = vmatprep.subr.mxu0 0.0
  %1076 = vmatpush1.msra.mxu0 %v1017
  %1077 = vmatprep.subr.mxu0 0.0
  %1078 = vmatpush1.msra.mxu0 %v1018
  %1079 = vmatprep.subr.mxu0 0.0
  %1080 = vmatpush1.msra.mxu0 %v1019
  %1081 = vmatprep.subr.mxu0 0.0
  %1082 = vmatpush1.msra.mxu0 %v1020
  %1083 = vmatprep.subr.mxu0 0.0
  %1084 = vmatpush1.msra.mxu0 %v1021
  %1085 = vmatprep.subr.mxu0 0.0
  %1086 = vmatpush1.msra.mxu0 %v1022
  %1087 = vmatprep.mubr.f32.mxu0 %v928
  %1088 = vmatmul.mubr.f32.gmra.mrb[0].mxu0 %v927
  %v1089 = vpop.f32.mrb[0].mxu0
  %v1090 = vadd.f32 0.0, %v1089
  %v1091 = vpop.f32.mrb[0].mxu0
  %1092 = vmatprep.mubr.f32.mxu0 %v930
  %1093 = vmatmul.mubr.f32.gmra.mrb[0].mxu0 %v929
  %v1094 = vpop.f32.mrb[0].mxu0
  %v1095 = vadd.f32 0.0, %v1094
  %v1096 = vpop.f32.mrb[0].mxu0
  %1097 = vmatprep.mubr.f32.mxu0 %v932
  %1098 = vmatmul.mubr.f32.gmra.mrb[0].mxu0 %v931
  %v1099 = vpop.f32.mrb[0].mxu0
  %v1100 = vadd.f32 0.0, %v1099
  %v1101 = vpop.f32.mrb[0].mxu0
  %1102 = vmatprep.mubr.f32.mxu0 %v934
  %1103 = vmatmul.mubr.f32.gmra.mrb[0].mxu0 %v933
  %v1104 = vpop.f32.mrb[0].mxu0
  %v1105 = vadd.f32 0.0, %v1104
  %v1106 = vpop.f32.mrb[0].mxu0
  %1107 = vmatprep.mubr.f32.mxu0 %v936
  %1108 = vmatmul.mubr.f32.gmra.mrb[0].mxu0 %v935
  %v1109 = vpop.f32.mrb[0].mxu0
  %v1110 = vadd.f32 0.0, %v1109
  %v1111 = vpop.f32.mrb[0].mxu0
  %1112 = vmatprep.mubr.f32.mxu0 %v938
  %1113 = vmatmul.mubr.f32.gmra.mrb[0].mxu0 %v937
  %v1114 = vpop.f32.mrb[0].mxu0
  %v1115 = vadd.f32 0.0, %v1114
  %v1116 = vpop.f32.mrb[0].mxu0
  %1117 = vmatprep.mubr.f32.mxu0 %v940
  %1118 = vmatmul.mubr.f32.gmra.mrb[0].mxu0 %v939
  %v1119 = vpop.f32.mrb[0].mxu0
  %v1120 = vadd.f32 0.0, %v1119
  %v1121 = vpop.f32.mrb[0].mxu0
  %1122 = vmatprep.mubr.f32.mxu0 %v942
  %1123 = vmatmul.mubr.f32.gmra.mrb[0].mxu0 %v941
  %v1124 = vpop.f32.mrb[0].mxu0
  %v1125 = vadd.f32 0.0, %v1124
  %v1126 = vpop.f32.mrb[0].mxu0
  %1127 = vmatprep.mubr.f32.mxu0 %v944
  %1128 = vmatmul.mubr.f32.gmra.mrb[0].mxu0 %v943
  %v1129 = vpop.f32.mrb[0].mxu0
  %v1130 = vadd.f32 0.0, %v1129
  %v1131 = vpop.f32.mrb[0].mxu0
  %1132 = vmatprep.mubr.f32.mxu0 %v946
  %1133 = vmatmul.mubr.f32.gmra.mrb[0].mxu0 %v945
  %v1134 = vpop.f32.mrb[0].mxu0
  %v1135 = vadd.f32 0.0, %v1134
  %v1136 = vpop.f32.mrb[0].mxu0
  %1137 = vmatprep.mubr.f32.mxu0 %v948
  %1138 = vmatmul.mubr.f32.gmra.mrb[0].mxu0 %v947
  %v1139 = vpop.f32.mrb[0].mxu0
  %v1140 = vadd.f32 0.0, %v1139
  %v1141 = vpop.f32.mrb[0].mxu0
  %1142 = vmatprep.mubr.f32.mxu0 %v950
  %1143 = vmatmul.mubr.f32.gmra.mrb[0].mxu0 %v949
  %v1144 = vpop.f32.mrb[0].mxu0
  %v1145 = vadd.f32 0.0, %v1144
  %v1146 = vpop.f32.mrb[0].mxu0
  %1147 = vmatprep.mubr.f32.mxu0 %v952
  %1148 = vmatmul.mubr.f32.gmra.mrb[0].mxu0 %v951
  %v1149 = vpop.f32.mrb[0].mxu0
  %v1150 = vadd.f32 0.0, %v1149
  %v1151 = vpop.f32.mrb[0].mxu0
  %1152 = vmatprep.mubr.f32.mxu0 %v954
  %1153 = vmatmul.mubr.f32.gmra.mrb[0].mxu0 %v953
  %v1154 = vpop.f32.mrb[0].mxu0
  %v1155 = vadd.f32 0.0, %v1154
  %v1156 = vpop.f32.mrb[0].mxu0
  %1157 = vmatprep.mubr.f32.mxu0 %v956
  %1158 = vmatmul.mubr.f32.gmra.mrb[0].mxu0 %v955
  %v1159 = vpop.f32.mrb[0].mxu0
  %v1160 = vadd.f32 0.0, %v1159
  %v1161 = vpop.f32.mrb[0].mxu0
  %1162 = vmatprep.mubr.f32.mxu0 %v958
  %1163 = vmatmul.mubr.f32.gmra.mrb[0].mxu0 %v957
  %v1164 = vpop.f32.mrb[0].mxu0
  %v1165 = vadd.f32 0.0, %v1164
  %v1166 = vpop.f32.mrb[0].mxu0
  %1167 = vmatprep.mubr.f32.mxu0 %v960
  %1168 = vmatmul.mubr.f32.gmra.mrb[0].mxu0 %v959
  %v1169 = vpop.f32.mrb[0].mxu0
  %v1170 = vadd.f32 0.0, %v1169
  %v1171 = vpop.f32.mrb[0].mxu0
  %1172 = vmatprep.mubr.f32.mxu0 %v962
  %1173 = vmatmul.mubr.f32.gmra.mrb[0].mxu0 %v961
  %v1174 = vpop.f32.mrb[0].mxu0
  %v1175 = vadd.f32 0.0, %v1174
  %v1176 = vpop.f32.mrb[0].mxu0
  %1177 = vmatprep.mubr.f32.mxu0 %v964
  %1178 = vmatmul.mubr.f32.gmra.mrb[0].mxu0 %v963
  %v1179 = vpop.f32.mrb[0].mxu0
  %v1180 = vadd.f32 0.0, %v1179
  %v1181 = vpop.f32.mrb[0].mxu0
  %1182 = vmatprep.mubr.f32.mxu0 %v966
  %1183 = vmatmul.mubr.f32.gmra.mrb[0].mxu0 %v965
  %v1184 = vpop.f32.mrb[0].mxu0
  %v1185 = vadd.f32 0.0, %v1184
  %v1186 = vpop.f32.mrb[0].mxu0
  %1187 = vmatprep.mubr.f32.mxu0 %v968
  %1188 = vmatmul.mubr.f32.gmra.mrb[0].mxu0 %v967
  %v1189 = vpop.f32.mrb[0].mxu0
  %v1190 = vadd.f32 0.0, %v1189
  %v1191 = vpop.f32.mrb[0].mxu0
  %1192 = vmatprep.mubr.f32.mxu0 %v970
  %1193 = vmatmul.mubr.f32.gmra.mrb[0].mxu0 %v969
  %v1194 = vpop.f32.mrb[0].mxu0
  %v1195 = vadd.f32 0.0, %v1194
  %v1196 = vpop.f32.mrb[0].mxu0
  %1197 = vmatprep.mubr.f32.mxu0 %v972
  %1198 = vmatmul.mubr.f32.gmra.mrb[0].mxu0 %v971
  %v1199 = vpop.f32.mrb[0].mxu0
  %v1200 = vadd.f32 0.0, %v1199
  %v1201 = vpop.f32.mrb[0].mxu0
  %1202 = vmatprep.mubr.f32.mxu0 %v974
  %1203 = vmatmul.mubr.f32.gmra.mrb[0].mxu0 %v973
  %v1204 = vpop.f32.mrb[0].mxu0
  %v1205 = vadd.f32 0.0, %v1204
  %v1206 = vpop.f32.mrb[0].mxu0
  %1207 = vmatprep.mubr.f32.mxu0 %v976
  %1208 = vmatmul.mubr.f32.gmra.mrb[0].mxu0 %v975
  %v1209 = vpop.f32.mrb[0].mxu0
  %v1210 = vadd.f32 0.0, %v1209
  %v1211 = vpop.f32.mrb[0].mxu0
  %1212 = vmatprep.mubr.f32.mxu0 %v978
  %1213 = vmatmul.mubr.f32.gmra.mrb[0].mxu0 %v977
  %v1214 = vpop.f32.mrb[0].mxu0
  %v1215 = vadd.f32 0.0, %v1214
  %v1216 = vpop.f32.mrb[0].mxu0
  %1217 = vmatprep.mubr.f32.mxu0 %v980
  %1218 = vmatmul.mubr.f32.gmra.mrb[0].mxu0 %v979
  %v1219 = vpop.f32.mrb[0].mxu0
  %v1220 = vadd.f32 0.0, %v1219
  %v1221 = vpop.f32.mrb[0].mxu0
  %1222 = vmatprep.mubr.f32.mxu0 %v982
  %1223 = vmatmul.mubr.f32.gmra.mrb[0].mxu0 %v981
  %v1224 = vpop.f32.mrb[0].mxu0
  %v1225 = vadd.f32 0.0, %v1224
  %v1226 = vpop.f32.mrb[0].mxu0
  %1227 = vmatprep.mubr.f32.mxu0 %v984
  %1228 = vmatmul.mubr.f32.gmra.mrb[0].mxu0 %v983
  %v1229 = vpop.f32.mrb[0].mxu0
  %v1230 = vadd.f32 0.0, %v1229
  %v1231 = vpop.f32.mrb[0].mxu0
  %1232 = vmatprep.mubr.f32.mxu0 %v986
  %1233 = vmatmul.mubr.f32.gmra.mrb[0].mxu0 %v985
  %v1234 = vpop.f32.mrb[0].mxu0
  %v1235 = vadd.f32 0.0, %v1234
  %v1236 = vpop.f32.mrb[0].mxu0
  %1237 = vmatprep.mubr.f32.mxu0 %v988
  %1238 = vmatmul.mubr.f32.gmra.mrb[0].mxu0 %v987
  %v1239 = vpop.f32.mrb[0].mxu0
  %v1240 = vadd.f32 0.0, %v1239
  %v1241 = vpop.f32.mrb[0].mxu0
  %1242 = vmatprep.mubr.f32.mxu0 %v990
  %1243 = vmatmul.mubr.f32.gmra.mrb[0].mxu0 %v989
  %v1244 = vpop.f32.mrb[0].mxu0
  %v1245 = vadd.f32 0.0, %v1244
  %v1246 = vpop.f32.mrb[0].mxu0
  %1247 = vdwg.mxu0
  %v1248 = vrsqrt.pop %v1090
  %v1249 = vmul.f32 %v1090, %v1248
  %vm1250 = vcmp.eq.f32.partialorder %v1090, inf
  %v1251 = vsel %vm1250, %v1090, %v1249
  %vm1252 = vcmp.eq.f32.partialorder %v1090, 0.0
  %v1253 = vand.u32 %v1090, 2147483648
  %v1254 = vsel %vm1252, %v1253, %v1251
  %v1255 = vrsqrt.pop %v1095
  %v1256 = vmul.f32 %v1095, %v1255
  %vm1257 = vcmp.eq.f32.partialorder %v1095, inf
  %v1258 = vsel %vm1257, %v1095, %v1256
  %vm1259 = vcmp.eq.f32.partialorder %v1095, 0.0
  %v1260 = vand.u32 %v1095, 2147483648
  %v1261 = vsel %vm1259, %v1260, %v1258
  %v1262 = vrsqrt.pop %v1100
  %v1263 = vmul.f32 %v1100, %v1262
  %vm1264 = vcmp.eq.f32.partialorder %v1100, inf
  %v1265 = vsel %vm1264, %v1100, %v1263
  %vm1266 = vcmp.eq.f32.partialorder %v1100, 0.0
  %v1267 = vand.u32 %v1100, 2147483648
  %v1268 = vsel %vm1266, %v1267, %v1265
  %v1269 = vrsqrt.pop %v1105
  %v1270 = vmul.f32 %v1105, %v1269
  %vm1271 = vcmp.eq.f32.partialorder %v1105, inf
  %v1272 = vsel %vm1271, %v1105, %v1270
  %vm1273 = vcmp.eq.f32.partialorder %v1105, 0.0
  %v1274 = vand.u32 %v1105, 2147483648
  %v1275 = vsel %vm1273, %v1274, %v1272
  %v1276 = vrsqrt.pop %v1110
  %v1277 = vmul.f32 %v1110, %v1276
  %vm1278 = vcmp.eq.f32.partialorder %v1110, inf
  %v1279 = vsel %vm1278, %v1110, %v1277
  %vm1280 = vcmp.eq.f32.partialorder %v1110, 0.0
  %v1281 = vand.u32 %v1110, 2147483648
  %v1282 = vsel %vm1280, %v1281, %v1279
  %v1283 = vrsqrt.pop %v1115
  %v1284 = vmul.f32 %v1115, %v1283
  %vm1285 = vcmp.eq.f32.partialorder %v1115, inf
  %v1286 = vsel %vm1285, %v1115, %v1284
  %vm1287 = vcmp.eq.f32.partialorder %v1115, 0.0
  %v1288 = vand.u32 %v1115, 2147483648
  %v1289 = vsel %vm1287, %v1288, %v1286
  %v1290 = vrsqrt.pop %v1120
  %v1291 = vmul.f32 %v1120, %v1290
  %vm1292 = vcmp.eq.f32.partialorder %v1120, inf
  %v1293 = vsel %vm1292, %v1120, %v1291
  %vm1294 = vcmp.eq.f32.partialorder %v1120, 0.0
  %v1295 = vand.u32 %v1120, 2147483648
  %v1296 = vsel %vm1294, %v1295, %v1293
  %v1297 = vrsqrt.pop %v1125
  %v1298 = vmul.f32 %v1125, %v1297
  %vm1299 = vcmp.eq.f32.partialorder %v1125, inf
  %v1300 = vsel %vm1299, %v1125, %v1298
  %vm1301 = vcmp.eq.f32.partialorder %v1125, 0.0
  %v1302 = vand.u32 %v1125, 2147483648
  %v1303 = vsel %vm1301, %v1302, %v1300
  %v1304 = vrsqrt.pop %v1130
  %v1305 = vmul.f32 %v1130, %v1304
  %vm1306 = vcmp.eq.f32.partialorder %v1130, inf
  %v1307 = vsel %vm1306, %v1130, %v1305
  %vm1308 = vcmp.eq.f32.partialorder %v1130, 0.0
  %v1309 = vand.u32 %v1130, 2147483648
  %v1310 = vsel %vm1308, %v1309, %v1307
  %v1311 = vrsqrt.pop %v1135
  %v1312 = vmul.f32 %v1135, %v1311
  %vm1313 = vcmp.eq.f32.partialorder %v1135, inf
  %v1314 = vsel %vm1313, %v1135, %v1312
  %vm1315 = vcmp.eq.f32.partialorder %v1135, 0.0
  %v1316 = vand.u32 %v1135, 2147483648
  %v1317 = vsel %vm1315, %v1316, %v1314
  %v1318 = vrsqrt.pop %v1140
  %v1319 = vmul.f32 %v1140, %v1318
  %vm1320 = vcmp.eq.f32.partialorder %v1140, inf
  %v1321 = vsel %vm1320, %v1140, %v1319
  %vm1322 = vcmp.eq.f32.partialorder %v1140, 0.0
  %v1323 = vand.u32 %v1140, 2147483648
  %v1324 = vsel %vm1322, %v1323, %v1321
  %v1325 = vrsqrt.pop %v1145
  %v1326 = vmul.f32 %v1145, %v1325
  %vm1327 = vcmp.eq.f32.partialorder %v1145, inf
  %v1328 = vsel %vm1327, %v1145, %v1326
  %vm1329 = vcmp.eq.f32.partialorder %v1145, 0.0
  %v1330 = vand.u32 %v1145, 2147483648
  %v1331 = vsel %vm1329, %v1330, %v1328
  %v1332 = vrsqrt.pop %v1150
  %v1333 = vmul.f32 %v1150, %v1332
  %vm1334 = vcmp.eq.f32.partialorder %v1150, inf
  %v1335 = vsel %vm1334, %v1150, %v1333
  %vm1336 = vcmp.eq.f32.partialorder %v1150, 0.0
  %v1337 = vand.u32 %v1150, 2147483648
  %v1338 = vsel %vm1336, %v1337, %v1335
  %v1339 = vrsqrt.pop %v1155
  %v1340 = vmul.f32 %v1155, %v1339
  %vm1341 = vcmp.eq.f32.partialorder %v1155, inf
  %v1342 = vsel %vm1341, %v1155, %v1340
  %vm1343 = vcmp.eq.f32.partialorder %v1155, 0.0
  %v1344 = vand.u32 %v1155, 2147483648
  %v1345 = vsel %vm1343, %v1344, %v1342
  %v1346 = vrsqrt.pop %v1160
  %v1347 = vmul.f32 %v1160, %v1346
  %vm1348 = vcmp.eq.f32.partialorder %v1160, inf
  %v1349 = vsel %vm1348, %v1160, %v1347
  %vm1350 = vcmp.eq.f32.partialorder %v1160, 0.0
  %v1351 = vand.u32 %v1160, 2147483648
  %v1352 = vsel %vm1350, %v1351, %v1349
  %v1353 = vrsqrt.pop %v1165
  %v1354 = vmul.f32 %v1165, %v1353
  %vm1355 = vcmp.eq.f32.partialorder %v1165, inf
  %v1356 = vsel %vm1355, %v1165, %v1354
  %vm1357 = vcmp.eq.f32.partialorder %v1165, 0.0
  %v1358 = vand.u32 %v1165, 2147483648
  %v1359 = vsel %vm1357, %v1358, %v1356
  %v1360 = vrsqrt.pop %v1170
  %v1361 = vmul.f32 %v1170, %v1360
  %vm1362 = vcmp.eq.f32.partialorder %v1170, inf
  %v1363 = vsel %vm1362, %v1170, %v1361
  %vm1364 = vcmp.eq.f32.partialorder %v1170, 0.0
  %v1365 = vand.u32 %v1170, 2147483648
  %v1366 = vsel %vm1364, %v1365, %v1363
  %v1367 = vrsqrt.pop %v1175
  %v1368 = vmul.f32 %v1175, %v1367
  %vm1369 = vcmp.eq.f32.partialorder %v1175, inf
  %v1370 = vsel %vm1369, %v1175, %v1368
  %vm1371 = vcmp.eq.f32.partialorder %v1175, 0.0
  %v1372 = vand.u32 %v1175, 2147483648
  %v1373 = vsel %vm1371, %v1372, %v1370
  %v1374 = vrsqrt.pop %v1180
  %v1375 = vmul.f32 %v1180, %v1374
  %vm1376 = vcmp.eq.f32.partialorder %v1180, inf
  %v1377 = vsel %vm1376, %v1180, %v1375
  %vm1378 = vcmp.eq.f32.partialorder %v1180, 0.0
  %v1379 = vand.u32 %v1180, 2147483648
  %v1380 = vsel %vm1378, %v1379, %v1377
  %v1381 = vrsqrt.pop %v1185
  %v1382 = vmul.f32 %v1185, %v1381
  %vm1383 = vcmp.eq.f32.partialorder %v1185, inf
  %v1384 = vsel %vm1383, %v1185, %v1382
  %vm1385 = vcmp.eq.f32.partialorder %v1185, 0.0
  %v1386 = vand.u32 %v1185, 2147483648
  %v1387 = vsel %vm1385, %v1386, %v1384
  %v1388 = vrsqrt.pop %v1190
  %v1389 = vmul.f32 %v1190, %v1388
  %vm1390 = vcmp.eq.f32.partialorder %v1190, inf
  %v1391 = vsel %vm1390, %v1190, %v1389
  %vm1392 = vcmp.eq.f32.partialorder %v1190, 0.0
  %v1393 = vand.u32 %v1190, 2147483648
  %v1394 = vsel %vm1392, %v1393, %v1391
  %v1395 = vrsqrt.pop %v1195
  %v1396 = vmul.f32 %v1195, %v1395
  %vm1397 = vcmp.eq.f32.partialorder %v1195, inf
  %v1398 = vsel %vm1397, %v1195, %v1396
  %vm1399 = vcmp.eq.f32.partialorder %v1195, 0.0
  %v1400 = vand.u32 %v1195, 2147483648
  %v1401 = vsel %vm1399, %v1400, %v1398
  %v1402 = vrsqrt.pop %v1200
  %v1403 = vmul.f32 %v1200, %v1402
  %vm1404 = vcmp.eq.f32.partialorder %v1200, inf
  %v1405 = vsel %vm1404, %v1200, %v1403
  %vm1406 = vcmp.eq.f32.partialorder %v1200, 0.0
  %v1407 = vand.u32 %v1200, 2147483648
  %v1408 = vsel %vm1406, %v1407, %v1405
  %v1409 = vrsqrt.pop %v1205
  %v1410 = vmul.f32 %v1205, %v1409
  %vm1411 = vcmp.eq.f32.partialorder %v1205, inf
  %v1412 = vsel %vm1411, %v1205, %v1410
  %vm1413 = vcmp.eq.f32.partialorder %v1205, 0.0
  %v1414 = vand.u32 %v1205, 2147483648
  %v1415 = vsel %vm1413, %v1414, %v1412
  %v1416 = vrsqrt.pop %v1210
  %v1417 = vmul.f32 %v1210, %v1416
  %vm1418 = vcmp.eq.f32.partialorder %v1210, inf
  %v1419 = vsel %vm1418, %v1210, %v1417
  %vm1420 = vcmp.eq.f32.partialorder %v1210, 0.0
  %v1421 = vand.u32 %v1210, 2147483648
  %v1422 = vsel %vm1420, %v1421, %v1419
  %v1423 = vrsqrt.pop %v1215
  %v1424 = vmul.f32 %v1215, %v1423
  %vm1425 = vcmp.eq.f32.partialorder %v1215, inf
  %v1426 = vsel %vm1425, %v1215, %v1424
  %vm1427 = vcmp.eq.f32.partialorder %v1215, 0.0
  %v1428 = vand.u32 %v1215, 2147483648
  %v1429 = vsel %vm1427, %v1428, %v1426
  %v1430 = vrsqrt.pop %v1220
  %v1431 = vmul.f32 %v1220, %v1430
  %vm1432 = vcmp.eq.f32.partialorder %v1220, inf
  %v1433 = vsel %vm1432, %v1220, %v1431
  %vm1434 = vcmp.eq.f32.partialorder %v1220, 0.0
  %v1435 = vand.u32 %v1220, 2147483648
  %v1436 = vsel %vm1434, %v1435, %v1433
  %v1437 = vrsqrt.pop %v1225
  %v1438 = vmul.f32 %v1225, %v1437
  %vm1439 = vcmp.eq.f32.partialorder %v1225, inf
  %v1440 = vsel %vm1439, %v1225, %v1438
  %vm1441 = vcmp.eq.f32.partialorder %v1225, 0.0
  %v1442 = vand.u32 %v1225, 2147483648
  %v1443 = vsel %vm1441, %v1442, %v1440
  %v1444 = vrsqrt.pop %v1230
  %v1445 = vmul.f32 %v1230, %v1444
  %vm1446 = vcmp.eq.f32.partialorder %v1230, inf
  %v1447 = vsel %vm1446, %v1230, %v1445
  %vm1448 = vcmp.eq.f32.partialorder %v1230, 0.0
  %v1449 = vand.u32 %v1230, 2147483648
  %v1450 = vsel %vm1448, %v1449, %v1447
  %v1451 = vrsqrt.pop %v1235
  %v1452 = vmul.f32 %v1235, %v1451
  %vm1453 = vcmp.eq.f32.partialorder %v1235, inf
  %v1454 = vsel %vm1453, %v1235, %v1452
  %vm1455 = vcmp.eq.f32.partialorder %v1235, 0.0
  %v1456 = vand.u32 %v1235, 2147483648
  %v1457 = vsel %vm1455, %v1456, %v1454
  %v1458 = vrsqrt.pop %v1240
  %v1459 = vmul.f32 %v1240, %v1458
  %vm1460 = vcmp.eq.f32.partialorder %v1240, inf
  %v1461 = vsel %vm1460, %v1240, %v1459
  %vm1462 = vcmp.eq.f32.partialorder %v1240, 0.0
  %v1463 = vand.u32 %v1240, 2147483648
  %v1464 = vsel %vm1462, %v1463, %v1461
  %v1465 = vrsqrt.pop %v1245
  %v1466 = vmul.f32 %v1245, %v1465
  %vm1467 = vcmp.eq.f32.partialorder %v1245, inf
  %v1468 = vsel %vm1467, %v1245, %v1466
  %vm1469 = vcmp.eq.f32.partialorder %v1245, 0.0
  %v1470 = vand.u32 %v1245, 2147483648
  %v1471 = vsel %vm1469, %v1470, %v1468
  %v1472 = vmul.f32 %v93, %v93
  %v1473 = vmul.f32 %v94, %v94
  %v1474 = vmul.f32 %v95, %v95
  %v1475 = vmul.f32 %v96, %v96
  %v1476 = vmul.f32 %v97, %v97
  %v1477 = vmul.f32 %v98, %v98
  %v1478 = vmul.f32 %v99, %v99
  %v1479 = vmul.f32 %v100, %v100
  %v1480 = vmul.f32 %v101, %v101
  %v1481 = vmul.f32 %v102, %v102
  %v1482 = vmul.f32 %v103, %v103
  %v1483 = vmul.f32 %v104, %v104
  %v1484 = vmul.f32 %v105, %v105
  %v1485 = vmul.f32 %v106, %v106
  %v1486 = vmul.f32 %v107, %v107
  %v1487 = vmul.f32 %v108, %v108
  %v1488 = vmul.f32 %v109, %v109
  %v1489 = vmul.f32 %v110, %v110
  %v1490 = vmul.f32 %v111, %v111
  %v1491 = vmul.f32 %v112, %v112
  %v1492 = vmul.f32 %v113, %v113
  %v1493 = vmul.f32 %v114, %v114
  %v1494 = vmul.f32 %v115, %v115
  %v1495 = vmul.f32 %v116, %v116
  %v1496 = vmul.f32 %v117, %v117
  %v1497 = vmul.f32 %v118, %v118
  %v1498 = vmul.f32 %v119, %v119
  %v1499 = vmul.f32 %v120, %v120
  %v1500 = vmul.f32 %v121, %v121
  %v1501 = vmul.f32 %v122, %v122
  %v1502 = vmul.f32 %v123, %v123
  %v1503 = vmul.f32 %v124, %v124
  %v1504 = vmul.f32 %v125, %v125
  %v1505 = vmul.f32 %v126, %v126
  %v1506 = vmul.f32 %v127, %v127
  %v1507 = vmul.f32 %v128, %v128
  %v1508 = vmul.f32 %v129, %v129
  %v1509 = vmul.f32 %v130, %v130
  %v1510 = vmul.f32 %v131, %v131
  %v1511 = vmul.f32 %v132, %v132
  %v1512 = vmul.f32 %v133, %v133
  %v1513 = vmul.f32 %v134, %v134
  %v1514 = vmul.f32 %v135, %v135
  %v1515 = vmul.f32 %v136, %v136
  %v1516 = vmul.f32 %v137, %v137
  %v1517 = vmul.f32 %v138, %v138
  %v1518 = vmul.f32 %v139, %v139
  %v1519 = vmul.f32 %v140, %v140
  %v1520 = vmul.f32 %v141, %v141
  %v1521 = vmul.f32 %v142, %v142
  %v1522 = vmul.f32 %v143, %v143
  %v1523 = vmul.f32 %v144, %v144
  %v1524 = vmul.f32 %v145, %v145
  %v1525 = vmul.f32 %v146, %v146
  %v1526 = vmul.f32 %v147, %v147
  %v1527 = vmul.f32 %v148, %v148
  %v1528 = vmul.f32 %v149, %v149
  %v1529 = vmul.f32 %v150, %v150
  %v1530 = vmul.f32 %v151, %v151
  %v1531 = vmul.f32 %v152, %v152
  %v1532 = vmul.f32 %v153, %v153
  %v1533 = vmul.f32 %v154, %v154
  %v1534 = vmul.f32 %v155, %v155
  %v1535 = vmul.f32 %v156, %v156
  %v1536 = vadd.f32 %v1472, %v1473
  %1537 = vadd.xlane.f32.xlu0 %v1536
  %v1538 = vpop.xlane.xlu0 %1537
  %v1539 = vadd.f32 %v1474, %v1475
  %1540 = vadd.xlane.f32.xlu0 %v1539
  %v1541 = vpop.xlane.xlu0 %1540
  %v1542 = vadd.f32 %v1476, %v1477
  %1543 = vadd.xlane.f32.xlu0 %v1542
  %v1544 = vpop.xlane.xlu0 %1543
  %v1545 = vadd.f32 %v1478, %v1479
  %1546 = vadd.xlane.f32.xlu0 %v1545
  %v1547 = vpop.xlane.xlu0 %1546
  %v1548 = vadd.f32 %v1480, %v1481
  %1549 = vadd.xlane.f32.xlu0 %v1548
  %v1550 = vpop.xlane.xlu0 %1549
  %v1551 = vadd.f32 %v1482, %v1483
  %1552 = vadd.xlane.f32.xlu0 %v1551
  %v1553 = vpop.xlane.xlu0 %1552
  %v1554 = vadd.f32 %v1484, %v1485
  %1555 = vadd.xlane.f32.xlu0 %v1554
  %v1556 = vpop.xlane.xlu0 %1555
  %v1557 = vadd.f32 %v1486, %v1487
  %1558 = vadd.xlane.f32.xlu0 %v1557
  %v1559 = vpop.xlane.xlu0 %1558
  %v1560 = vadd.f32 %v1488, %v1489
  %1561 = vadd.xlane.f32.xlu0 %v1560
  %v1562 = vpop.xlane.xlu0 %1561
  %v1563 = vadd.f32 %v1490, %v1491
  %1564 = vadd.xlane.f32.xlu0 %v1563
  %v1565 = vpop.xlane.xlu0 %1564
  %v1566 = vadd.f32 %v1492, %v1493
  %1567 = vadd.xlane.f32.xlu0 %v1566
  %v1568 = vpop.xlane.xlu0 %1567
  %v1569 = vadd.f32 %v1494, %v1495
  %1570 = vadd.xlane.f32.xlu0 %v1569
  %v1571 = vpop.xlane.xlu0 %1570
  %v1572 = vadd.f32 %v1496, %v1497
  %1573 = vadd.xlane.f32.xlu0 %v1572
  %v1574 = vpop.xlane.xlu0 %1573
  %v1575 = vadd.f32 %v1498, %v1499
  %1576 = vadd.xlane.f32.xlu0 %v1575
  %v1577 = vpop.xlane.xlu0 %1576
  %v1578 = vadd.f32 %v1500, %v1501
  %1579 = vadd.xlane.f32.xlu0 %v1578
  %v1580 = vpop.xlane.xlu0 %1579
  %v1581 = vadd.f32 %v1502, %v1503
  %1582 = vadd.xlane.f32.xlu0 %v1581
  %v1583 = vpop.xlane.xlu0 %1582
  %v1584 = vadd.f32 %v1504, %v1505
  %1585 = vadd.xlane.f32.xlu0 %v1584
  %v1586 = vpop.xlane.xlu0 %1585
  %v1587 = vadd.f32 %v1506, %v1507
  %1588 = vadd.xlane.f32.xlu0 %v1587
  %v1589 = vpop.xlane.xlu0 %1588
  %v1590 = vadd.f32 %v1508, %v1509
  %1591 = vadd.xlane.f32.xlu0 %v1590
  %v1592 = vpop.xlane.xlu0 %1591
  %v1593 = vadd.f32 %v1510, %v1511
  %1594 = vadd.xlane.f32.xlu0 %v1593
  %v1595 = vpop.xlane.xlu0 %1594
  %v1596 = vadd.f32 %v1512, %v1513
  %1597 = vadd.xlane.f32.xlu0 %v1596
  %v1598 = vpop.xlane.xlu0 %1597
  %v1599 = vadd.f32 %v1514, %v1515
  %1600 = vadd.xlane.f32.xlu0 %v1599
  %v1601 = vpop.xlane.xlu0 %1600
  %v1602 = vadd.f32 %v1516, %v1517
  %1603 = vadd.xlane.f32.xlu0 %v1602
  %v1604 = vpop.xlane.xlu0 %1603
  %v1605 = vadd.f32 %v1518, %v1519
  %1606 = vadd.xlane.f32.xlu0 %v1605
  %v1607 = vpop.xlane.xlu0 %1606
  %v1608 = vadd.f32 %v1520, %v1521
  %1609 = vadd.xlane.f32.xlu0 %v1608
  %v1610 = vpop.xlane.xlu0 %1609
  %v1611 = vadd.f32 %v1522, %v1523
  %1612 = vadd.xlane.f32.xlu0 %v1611
  %v1613 = vpop.xlane.xlu0 %1612
  %v1614 = vadd.f32 %v1524, %v1525
  %1615 = vadd.xlane.f32.xlu0 %v1614
  %v1616 = vpop.xlane.xlu0 %1615
  %v1617 = vadd.f32 %v1526, %v1527
  %1618 = vadd.xlane.f32.xlu0 %v1617
  %v1619 = vpop.xlane.xlu0 %1618
  %v1620 = vadd.f32 %v1528, %v1529
  %1621 = vadd.xlane.f32.xlu0 %v1620
  %v1622 = vpop.xlane.xlu0 %1621
  %v1623 = vadd.f32 %v1530, %v1531
  %1624 = vadd.xlane.f32.xlu0 %v1623
  %v1625 = vpop.xlane.xlu0 %1624
  %v1626 = vadd.f32 %v1532, %v1533
  %1627 = vadd.xlane.f32.xlu0 %v1626
  %v1628 = vpop.xlane.xlu0 %1627
  %v1629 = vadd.f32 %v1534, %v1535
  %1630 = vadd.xlane.f32.xlu0 %v1629
  %v1631 = vpop.xlane.xlu0 %1630
  %v1632 = vlaneseq
  %v1633 = vand.u32 %v1632, 127
  %vm1634 = vcmp.eq.s32.totalorder %v1633, 15
  %v1635 = vsel %vm1634, %v1538, %v1254
  %v1636 = vsel %vm1634, %v1541, %v1261
  %v1637 = vsel %vm1634, %v1544, %v1268
  %v1638 = vsel %vm1634, %v1547, %v1275
  %v1639 = vsel %vm1634, %v1550, %v1282
  %v1640 = vsel %vm1634, %v1553, %v1289
  %v1641 = vsel %vm1634, %v1556, %v1296
  %v1642 = vsel %vm1634, %v1559, %v1303
  %v1643 = vsel %vm1634, %v1562, %v1310
  %v1644 = vsel %vm1634, %v1565, %v1317
  %v1645 = vsel %vm1634, %v1568, %v1324
  %v1646 = vsel %vm1634, %v1571, %v1331
  %v1647 = vsel %vm1634, %v1574, %v1338
  %v1648 = vsel %vm1634, %v1577, %v1345
  %v1649 = vsel %vm1634, %v1580, %v1352
  %v1650 = vsel %vm1634, %v1583, %v1359
  %v1651 = vsel %vm1634, %v1586, %v1366
  %v1652 = vsel %vm1634, %v1589, %v1373
  %v1653 = vsel %vm1634, %v1592, %v1380
  %v1654 = vsel %vm1634, %v1595, %v1387
  %v1655 = vsel %vm1634, %v1598, %v1394
  %v1656 = vsel %vm1634, %v1601, %v1401
  %v1657 = vsel %vm1634, %v1604, %v1408
  %v1658 = vsel %vm1634, %v1607, %v1415
  %v1659 = vsel %vm1634, %v1610, %v1422
  %v1660 = vsel %vm1634, %v1613, %v1429
  %v1661 = vsel %vm1634, %v1616, %v1436
  %v1662 = vsel %vm1634, %v1619, %v1443
  %v1663 = vsel %vm1634, %v1622, %v1450
  %v1664 = vsel %vm1634, %v1625, %v1457
  %v1665 = vsel %vm1634, %v1628, %v1464
  %v1666 = vsel %vm1634, %v1631, %v1471
  %vm1667 = vcmask 130048
  %1668 = vst.msk [vmem:[%s4] sm:$0xff] %vm1667, %v1635
  %1669 = vst.msk [vmem:[%s4 + $0x8] sm:$0xff] %vm1667, %v1636
  %1670 = vst.msk [vmem:[%s4 + $0x10] sm:$0xff] %vm1667, %v1637
  %1671 = vst.msk [vmem:[%s4 + $0x18] sm:$0xff] %vm1667, %v1638
  %1672 = vst.msk [vmem:[%s4 + $0x20] sm:$0xff] %vm1667, %v1639
  %1673 = vst.msk [vmem:[%s4 + $0x28] sm:$0xff] %vm1667, %v1640
  %1674 = vst.msk [vmem:[%s4 + $0x30] sm:$0xff] %vm1667, %v1641
  %1675 = vst.msk [vmem:[%s4 + $0x38] sm:$0xff] %vm1667, %v1642
  %1676 = vst.msk [vmem:[%s4 + $0x40] sm:$0xff] %vm1667, %v1643
  %1677 = vst.msk [vmem:[%s4 + $0x48] sm:$0xff] %vm1667, %v1644
  %1678 = vst.msk [vmem:[%s4 + $0x50] sm:$0xff] %vm1667, %v1645
  %1679 = vst.msk [vmem:[%s4 + $0x58] sm:$0xff] %vm1667, %v1646
  %1680 = vst.msk [vmem:[%s4 + $0x60] sm:$0xff] %vm1667, %v1647
  %1681 = vst.msk [vmem:[%s4 + $0x68] sm:$0xff] %vm1667, %v1648
  %1682 = vst.msk [vmem:[%s4 + $0x70] sm:$0xff] %vm1667, %v1649
  %1683 = vst.msk [vmem:[%s4 + $0x78] sm:$0xff] %vm1667, %v1650
  %1684 = vst.msk [vmem:[%s4 + $0x80] sm:$0xff] %vm1667, %v1651
  %1685 = vst.msk [vmem:[%s4 + $0x88] sm:$0xff] %vm1667, %v1652
  %1686 = vst.msk [vmem:[%s4 + $0x90] sm:$0xff] %vm1667, %v1653
  %1687 = vst.msk [vmem:[%s4 + $0x98] sm:$0xff] %vm1667, %v1654
  %1688 = vst.msk [vmem:[%s4 + $0xa0] sm:$0xff] %vm1667, %v1655
  %1689 = vst.msk [vmem:[%s4 + $0xa8] sm:$0xff] %vm1667, %v1656
  %1690 = vst.msk [vmem:[%s4 + $0xb0] sm:$0xff] %vm1667, %v1657
  %1691 = vst.msk [vmem:[%s4 + $0xb8] sm:$0xff] %vm1667, %v1658
  %1692 = vst.msk [vmem:[%s4 + $0xc0] sm:$0xff] %vm1667, %v1659
  %1693 = vst.msk [vmem:[%s4 + $0xc8] sm:$0xff] %vm1667, %v1660
  %1694 = vst.msk [vmem:[%s4 + $0xd0] sm:$0xff] %vm1667, %v1661
  %1695 = vst.msk [vmem:[%s4 + $0xd8] sm:$0xff] %vm1667, %v1662
  %1696 = vst.msk [vmem:[%s4 + $0xe0] sm:$0xff] %vm1667, %v1663
  %1697 = vst.msk [vmem:[%s4 + $0xe8] sm:$0xff] %vm1667, %v1664
  %1698 = vst.msk [vmem:[%s4 + $0xf0] sm:$0xff] %vm1667, %v1665
  %1699 = vst.msk [vmem:[%s4 + $0xf8] sm:$0xff] %vm1667, %v1666
  // Predicated region
  $region18: #{_lambda_.2} parent=0 // pred_check
    _
  $region19: #{_lambda_.2} parent=0 // pred_check_branch
    %1701 = sbr.rel (0) target = $region21
  $region20: #{_lambda_.2} parent=0 // pred_region
    _
  $region21: #{_lambda_.2} parent=0 // pred_fallthru
    _
  // Predicated region
  $region22: #{_lambda_.2} parent=0 // pred_check
    _
  $region23: #{_lambda_.2} parent=0 // pred_check_branch
    %1703 = sbr.rel (0) target = $region25
  $region24: #{_lambda_.2} parent=0 // pred_region
    _
  $region25: #{_lambda_.2} parent=0 // pred_fallthru
    _

// kernel: _lambda_.3
$region0: #{_lambda_.3}
  #allocation0 [shape = 'u32[]', space=smem, size = 0x4, offset = 0x4, fixed_abs, tag = 'smem constant byte address 0x4 - core index']
  #allocation1 [shape = 'u32[144,128]{1,0:T(1,128)}', space=vmem, size = 0x12000, scoped, tag = 'internal scratch']
  %s0 = inlined_call_operand.vmem [shape: f32[2,15,34], index: 0, kind: input, shape index: {}]
  %s1 = inlined_call_operand.vmem [shape: f32[2,15,34], index: 1, kind: input, shape index: {}]
  %s2 = inlined_call_operand.vmem [shape: f32[2,1,34], index: 2, kind: input, shape index: {}]
  %s3 = inlined_call_operand.vmem [shape: f32[2,15,5], index: 3, kind: output, shape index: {}]
  %s4 = sld [smem:[#allocation0]]
  $region45: #{_lambda_.3} parent=0
    _
  %s6 = ssub.s32 1, %s4
  %s7 = scalar_select 0, %s6, %s4
  loop: start=0, step=1, limit=4
  $region2: #{_lambda_.3} parent=0 // loop_pre_header
    _
  $region3: #{_lambda_.3} parent=0 // loop_header
    %s9 = sphi 0, %s13
    %p10 = scmp.ge.s32.totalorder %s9, 4
    %s19 = sphi 0, %s21
    %s22 = sphi 0, %s19
    %s23 = sphi 0, %s22
    %s39 = sphi 0, %s23
    %s45 = sphi 0, %s47
    %s48 = sphi 0, %s45
    %s49 = sphi 0, %s48
    %s65 = sphi 0, %s49
    %s71 = sphi 0, %s73
    %s74 = sphi 0, %s71
    %s75 = sphi 0, %s74
    %s91 = sphi 0, %s75
    %s97 = sphi 0, %s99
    %s100 = sphi 0, %s97
    %s101 = sphi 0, %s100
    %s117 = sphi 0, %s101
  $region4: #{_lambda_.3} parent=0 // loop_header_branch
    %12 = sbr.rel (%p10) target = $region8
  $region5: #{_lambda_.3} parent=0 // loop_body
    %s14 = ssub.s32 %s9, 1
    %s15 = ssub.s32 %s9, 2
    %s16 = sadd.s32 %s9, 1
    %s17 = ssub.s32 %s9, %s16
    %p18 = scmp.eq.s32.totalorder %s17, 0
    %s20 = sadd.s32 %s19, 1
    %s21 = scalar_select %p18, %s19, %s20
    %p24 = pneg %p18
    %p25 = scmp.eq.s32.totalorder %s9, 1
    %p26 = por %p24, %p25
    %p27 = scmp.ne.s32.totalorder %s19, %s22
    %p28 = scmp.eq.s32.totalorder %s9, 0
    %p29 = por %p27, %p28
    %p30 = scmp.ne.s32.totalorder %s19, %s22
    %p31 = scmp.eq.s32.totalorder %s14, 1
    %p32 = por %p30, %p31
    %p33 = scmp.ne.s32.totalorder %s22, %s23
    %p34 = scmp.eq.s32.totalorder %s14, 0
    %p35 = por %p33, %p34
    %p36 = scmp.ne.s32.totalorder %s22, %s23
    %p37 = scmp.eq.s32.totalorder %s15, 1
    %p38 = por %p36, %p37
    %p40 = scmp.ne.s32.totalorder %s23, %s39
    %p41 = scmp.eq.s32.totalorder %s15, 0
    %p42 = por %p40, %p41
    %s43 = ssub.s32 %s9, %s16
    %p44 = scmp.eq.s32.totalorder %s43, 0
    %s46 = sadd.s32 %s45, 1
    %s47 = scalar_select %p44, %s45, %s46
    %p50 = pneg %p44
    %p51 = scmp.eq.s32.totalorder %s9, 1
    %p52 = por %p50, %p51
    %p53 = scmp.ne.s32.totalorder %s45, %s48
    %p54 = scmp.eq.s32.totalorder %s9, 0
    %p55 = por %p53, %p54
    %p56 = scmp.ne.s32.totalorder %s45, %s48
    %p57 = scmp.eq.s32.totalorder %s14, 1
    %p58 = por %p56, %p57
    %p59 = scmp.ne.s32.totalorder %s48, %s49
    %p60 = scmp.eq.s32.totalorder %s14, 0
    %p61 = por %p59, %p60
    %p62 = scmp.ne.s32.totalorder %s48, %s49
    %p63 = scmp.eq.s32.totalorder %s15, 1
    %p64 = por %p62, %p63
    %p66 = scmp.ne.s32.totalorder %s49, %s65
    %p67 = scmp.eq.s32.totalorder %s15, 0
    %p68 = por %p66, %p67
    %s69 = ssub.s32 %s9, %s16
    %p70 = scmp.eq.s32.totalorder %s69, 0
    %s72 = sadd.s32 %s71, 1
    %s73 = scalar_select %p70, %s71, %s72
    %p76 = pneg %p70
    %p77 = scmp.eq.s32.totalorder %s9, 1
    %p78 = por %p76, %p77
    %p79 = scmp.ne.s32.totalorder %s71, %s74
    %p80 = scmp.eq.s32.totalorder %s9, 0
    %p81 = por %p79, %p80
    %p82 = scmp.ne.s32.totalorder %s71, %s74
    %p83 = scmp.eq.s32.totalorder %s14, 1
    %p84 = por %p82, %p83
    %p85 = scmp.ne.s32.totalorder %s74, %s75
    %p86 = scmp.eq.s32.totalorder %s14, 0
    %p87 = por %p85, %p86
    %p88 = scmp.ne.s32.totalorder %s74, %s75
    %p89 = scmp.eq.s32.totalorder %s15, 1
    %p90 = por %p88, %p89
    %p92 = scmp.ne.s32.totalorder %s75, %s91
    %p93 = scmp.eq.s32.totalorder %s15, 0
    %p94 = por %p92, %p93
    %s95 = ssub.s32 %s9, %s16
    %p96 = scmp.eq.s32.totalorder %s95, 0
    %s98 = sadd.s32 %s97, 1
    %s99 = scalar_select %p96, %s97, %s98
    %p102 = pneg %p96
    %p103 = scmp.eq.s32.totalorder %s9, 1
    %p104 = por %p102, %p103
    %p105 = scmp.ne.s32.totalorder %s97, %s100
    %p106 = scmp.eq.s32.totalorder %s9, 0
    %p107 = por %p105, %p106
    %p108 = scmp.ne.s32.totalorder %s97, %s100
    %p109 = scmp.eq.s32.totalorder %s14, 1
    %p110 = por %p108, %p109
    %p111 = scmp.ne.s32.totalorder %s100, %s101
    %p112 = scmp.eq.s32.totalorder %s14, 0
    %p113 = por %p111, %p112
    %p114 = scmp.ne.s32.totalorder %s100, %s101
    %p115 = scmp.eq.s32.totalorder %s15, 1
    %p116 = por %p114, %p115
    %p118 = scmp.ne.s32.totalorder %s101, %s117
    %p119 = scmp.eq.s32.totalorder %s15, 0
    %p120 = por %p118, %p119
    %p121 = scmp.le.s32.totalorder 1, %s9
    %p122 = scmp.lt.s32.totalorder %s9, 3
    %p123 = pnand %p121, %p122
    %p124 = pneg %p123
    // Predicated region
    $region9: #{_lambda_.3} parent=5 // pred_check
      _
    $region10: #{_lambda_.3} parent=5 // pred_check_branch
      %126 = sbr.rel (%p123) target = $region12
    $region11: #{_lambda_.3} parent=5 // pred_region
      %s127 = ssub.s32 %s9, 1
    $region12: #{_lambda_.3} parent=5 // pred_fallthru
      _
    %p128 = scmp.lt.s32.totalorder %s9, 2
    // Predicated region
    $region13: #{_lambda_.3} parent=5 // pred_check
      %p129 = pneg %p128
    $region14: #{_lambda_.3} parent=5 // pred_check_branch
      %131 = sbr.rel (%p129) target = $region16
    $region15: #{_lambda_.3} parent=5 // pred_region
      // Predicated region
      $region17: #{_lambda_.3} parent=15 // pred_check
        %p132 = pneg %p29
      $region18: #{_lambda_.3} parent=15 // pred_check_branch
        %134 = sbr.rel (%p132) target = $region20
      $region19: #{_lambda_.3} parent=15 // pred_region
        %p135 = scmp.lt.s32.totalorder %s9, 1
        %s136 = scalar_select %p135, %s9, 1
        %s137 = smul.addr %s136, 2
        %s138 = smul.addr %s137, 8
        %s139 = scalar_lea.vmem %s0, %s138
      $region20: #{_lambda_.3} parent=15 // pred_fallthru
        _
      // Predicated region
      $region21: #{_lambda_.3} parent=15 // pred_check
        %p140 = pneg %p55
      $region22: #{_lambda_.3} parent=15 // pred_check_branch
        %142 = sbr.rel (%p140) target = $region24
      $region23: #{_lambda_.3} parent=15 // pred_region
        %p143 = scmp.lt.s32.totalorder %s9, 1
        %s144 = scalar_select %p143, %s9, 1
        %s145 = smul.addr %s144, 2
        %s146 = smul.addr %s145, 8
        %s147 = scalar_lea.vmem %s1, %s146
      $region24: #{_lambda_.3} parent=15 // pred_fallthru
        _
      // Predicated region
      $region25: #{_lambda_.3} parent=15 // pred_check
        %p148 = pneg %p81
      $region26: #{_lambda_.3} parent=15 // pred_check_branch
        %150 = sbr.rel (%p148) target = $region28
      $region27: #{_lambda_.3} parent=15 // pred_region
        %p151 = scmp.lt.s32.totalorder %s9, 1
        %s152 = scalar_select %p151, %s9, 1
        %s153 = scalar_lea.vmem %s2, %s152
      $region28: #{_lambda_.3} parent=15 // pred_fallthru
        _
    $region16: #{_lambda_.3} parent=5 // pred_fallthru
      _
    %p154 = scmp.le.s32.totalorder 1, %s9
    %p155 = scmp.lt.s32.totalorder %s9, 3
    %p156 = pnand %p154, %p155
    %p157 = pneg %p156
    // Predicated region
    $region29: #{_lambda_.3} parent=5 // pred_check
      _
    $region30: #{_lambda_.3} parent=5 // pred_check_branch
      %159 = sbr.rel (%p156) target = $region32
    $region31: #{_lambda_.3} parent=5 // pred_region
      %s160 = ssub.s32 %s9, 1
      %p161 = scmp.lt.s32.totalorder %s14, 1
      %s162 = scalar_select %p161, %s14, 1
      %s163 = smul.addr %s162, 2
      %s164 = smul.addr %s163, 8
      %s165 = scalar_lea.vmem %s0, %s164
      %p166 = pneg %p35
      %p167 = pneg %p32
      %p168 = scmp.lt.s32.totalorder %s14, 1
      %s169 = scalar_select %p168, %s14, 1
      %s170 = smul.addr %s169, 2
      %s171 = smul.addr %s170, 8
      %s172 = scalar_lea.vmem %s1, %s171
      %p173 = pneg %p61
      %p174 = pneg %p58
      %p175 = scmp.lt.s32.totalorder %s14, 1
      %s176 = scalar_select %p175, %s14, 1
      %s177 = scalar_lea.vmem %s2, %s176
      %p178 = pneg %p87
      %p179 = pneg %p84
      %p180 = pneg %p113
      %p181 = pneg %p110
      %p182 = scmp.lt.s32.totalorder %s14, 1
      %s183 = scalar_select %p182, %s14, 1
      %s184 = smul.addr %s183, 2
      %s185 = smul.addr %s184, 8
      %s186 = scalar_lea.vmem %s3, %s185
      %p187 = scmp.lt.s32.totalorder %s14, 1
      %s188 = scalar_select %p187, %s14, 1
      %s189 = smul.addr %s188, 2
      %s190 = smul.addr %s189, 8
      %s191 = scalar_lea.vmem %s0, %s190
      %p192 = scmp.lt.s32.totalorder %s14, 1
      %s193 = scalar_select %p192, %s14, 1
      %s194 = smul.addr %s193, 2
      %s195 = smul.addr %s194, 8
      %s196 = scalar_lea.vmem %s1, %s195
      %p197 = scmp.lt.s32.totalorder %s14, 1
      %s198 = scalar_select %p197, %s14, 1
      %s199 = scalar_lea.vmem %s2, %s198
      %p200 = scmp.lt.s32.totalorder %s14, 1
      %s201 = scalar_select %p200, %s14, 1
      %s202 = smul.addr %s201, 2
      %s203 = smul.addr %s202, 8
      %s204 = scalar_lea.vmem %s3, %s203
      %v205 = vld [vmem:[%s191] sm:$0xff]
      %v206 = vld [vmem:[%s191 + $0x8] sm:$0x7f]
      %v207 = vld [vmem:[%s196] sm:$0xff]
      %v208 = vld [vmem:[%s196 + $0x8] sm:$0x7f]
      %v209 = vld [vmem:[%s199] sm:$0x1]
      %v210 = vadd.f32 %v209, 0.0
      %v212 = vlaneseq
      %v213 = vshrl.u32 %v212, 7
      %v214 = vsub.s32 0, %v213
      %v215 = vrot.slane %v209, %v214
      %v217 = vmul.f32 %v215, %v205
      %v218 = vmul.f32 %v215, %v206
      %v219 = vadd.f32 %v217, 0.0
      %v220 = vadd.f32 %v218, 0.0
      %v221 = vmul.f32 %v217, %v205
      %v222 = vmul.f32 %v218, %v206
      %v223 = vadd.f32 %v221, 0.0
      %v224 = vadd.f32 %v222, 0.0
      %v225 = vmul.f32 %v215, %v207
      %v226 = vmul.f32 %v215, %v208
      %v227 = vmul.f32 %v225, %v207
      %v228 = vmul.f32 %v226, %v208
      %v229 = vadd.f32 %v227, 0.0
      %v230 = vadd.f32 %v228, 0.0
      %231 = vrot.lane.b32.xlu0 %v209, 127
      %v232 = vpop.permute.xlu0 %231
      %v234 = vadd.f32 %v210, %v232
      %237 = vrot.lane.b32.xlu0 %v217, 127
      %v238 = vpop.permute.xlu0 %237
      %239 = vrot.lane.b32.xlu0 %v218, 127
      %v240 = vpop.permute.xlu0 %239
      %v243 = vadd.f32 %v219, %v238
      %v244 = vadd.f32 %v220, %v240
      %247 = vrot.lane.b32.xlu0 %v221, 127
      %v248 = vpop.permute.xlu0 %247
      %249 = vrot.lane.b32.xlu0 %v222, 127
      %v250 = vpop.permute.xlu0 %249
      %v253 = vadd.f32 %v223, %v248
      %v254 = vadd.f32 %v224, %v250
      %257 = vrot.lane.b32.xlu0 %v227, 127
      %v258 = vpop.permute.xlu0 %257
      %259 = vrot.lane.b32.xlu0 %v228, 127
      %v260 = vpop.permute.xlu0 %259
      %v263 = vadd.f32 %v229, %v258
      %v264 = vadd.f32 %v230, %v260
      %265 = vrot.lane.b32.xlu0 %v209, 126
      %v266 = vpop.permute.xlu0 %265
      %v268 = vadd.f32 %v234, %v266
      %269 = vrot.lane.b32.xlu0 %v217, 126
      %v270 = vpop.permute.xlu0 %269
      %271 = vrot.lane.b32.xlu0 %v218, 126
      %v272 = vpop.permute.xlu0 %271
      %v275 = vadd.f32 %v243, %v270
      %v276 = vadd.f32 %v244, %v272
      %277 = vrot.lane.b32.xlu0 %v221, 126
      %v278 = vpop.permute.xlu0 %277
      %279 = vrot.lane.b32.xlu0 %v222, 126
      %v280 = vpop.permute.xlu0 %279
      %v283 = vadd.f32 %v253, %v278
      %v284 = vadd.f32 %v254, %v280
      %285 = vrot.lane.b32.xlu0 %v227, 126
      %v286 = vpop.permute.xlu0 %285
      %287 = vrot.lane.b32.xlu0 %v228, 126
      %v288 = vpop.permute.xlu0 %287
      %v291 = vadd.f32 %v263, %v286
      %v292 = vadd.f32 %v264, %v288
      %293 = vrot.lane.b32.xlu0 %v209, 125
      %v294 = vpop.permute.xlu0 %293
      %v296 = vadd.f32 %v268, %v294
      %297 = vrot.lane.b32.xlu0 %v217, 125
      %v298 = vpop.permute.xlu0 %297
      %299 = vrot.lane.b32.xlu0 %v218, 125
      %v300 = vpop.permute.xlu0 %299
      %v303 = vadd.f32 %v275, %v298
      %v304 = vadd.f32 %v276, %v300
      %305 = vrot.lane.b32.xlu0 %v221, 125
      %v306 = vpop.permute.xlu0 %305
      %307 = vrot.lane.b32.xlu0 %v222, 125
      %v308 = vpop.permute.xlu0 %307
      %v311 = vadd.f32 %v283, %v306
      %v312 = vadd.f32 %v284, %v308
      %313 = vrot.lane.b32.xlu0 %v227, 125
      %v314 = vpop.permute.xlu0 %313
      %315 = vrot.lane.b32.xlu0 %v228, 125
      %v316 = vpop.permute.xlu0 %315
      %v319 = vadd.f32 %v291, %v314
      %v320 = vadd.f32 %v292, %v316
      %321 = vrot.lane.b32.xlu0 %v209, 124
      %v322 = vpop.permute.xlu0 %321
      %v324 = vadd.f32 %v296, %v322
      %325 = vrot.lane.b32.xlu0 %v217, 124
      %v326 = vpop.permute.xlu0 %325
      %327 = vrot.lane.b32.xlu0 %v218, 124
      %v328 = vpop.permute.xlu0 %327
      %v331 = vadd.f32 %v303, %v326
      %v332 = vadd.f32 %v304, %v328
      %333 = vrot.lane.b32.xlu0 %v221, 124
      %v334 = vpop.permute.xlu0 %333
      %335 = vrot.lane.b32.xlu0 %v222, 124
      %v336 = vpop.permute.xlu0 %335
      %v339 = vadd.f32 %v311, %v334
      %v340 = vadd.f32 %v312, %v336
      %341 = vrot.lane.b32.xlu0 %v227, 124
      %v342 = vpop.permute.xlu0 %341
      %343 = vrot.lane.b32.xlu0 %v228, 124
      %v344 = vpop.permute.xlu0 %343
      %v347 = vadd.f32 %v319, %v342
      %v348 = vadd.f32 %v320, %v344
      %349 = vrot.lane.b32.xlu0 %v209, 123
      %v350 = vpop.permute.xlu0 %349
      %v352 = vadd.f32 %v324, %v350
      %353 = vrot.lane.b32.xlu0 %v217, 123
      %v354 = vpop.permute.xlu0 %353
      %355 = vrot.lane.b32.xlu0 %v218, 123
      %v356 = vpop.permute.xlu0 %355
      %v359 = vadd.f32 %v331, %v354
      %v360 = vadd.f32 %v332, %v356
      %361 = vrot.lane.b32.xlu0 %v221, 123
      %v362 = vpop.permute.xlu0 %361
      %363 = vrot.lane.b32.xlu0 %v222, 123
      %v364 = vpop.permute.xlu0 %363
      %v367 = vadd.f32 %v339, %v362
      %v368 = vadd.f32 %v340, %v364
      %369 = vrot.lane.b32.xlu0 %v227, 123
      %v370 = vpop.permute.xlu0 %369
      %371 = vrot.lane.b32.xlu0 %v228, 123
      %v372 = vpop.permute.xlu0 %371
      %v375 = vadd.f32 %v347, %v370
      %v376 = vadd.f32 %v348, %v372
      %377 = vrot.lane.b32.xlu0 %v209, 122
      %v378 = vpop.permute.xlu0 %377
      %v380 = vadd.f32 %v352, %v378
      %381 = vrot.lane.b32.xlu0 %v217, 122
      %v382 = vpop.permute.xlu0 %381
      %383 = vrot.lane.b32.xlu0 %v218, 122
      %v384 = vpop.permute.xlu0 %383
      %v387 = vadd.f32 %v359, %v382
      %v388 = vadd.f32 %v360, %v384
      %389 = vrot.lane.b32.xlu0 %v221, 122
      %v390 = vpop.permute.xlu0 %389
      %391 = vrot.lane.b32.xlu0 %v222, 122
      %v392 = vpop.permute.xlu0 %391
      %v395 = vadd.f32 %v367, %v390
      %v396 = vadd.f32 %v368, %v392
      %397 = vrot.lane.b32.xlu0 %v227, 122
      %v398 = vpop.permute.xlu0 %397
      %399 = vrot.lane.b32.xlu0 %v228, 122
      %v400 = vpop.permute.xlu0 %399
      %v403 = vadd.f32 %v375, %v398
      %v404 = vadd.f32 %v376, %v400
      %405 = vrot.lane.b32.xlu0 %v209, 121
      %v406 = vpop.permute.xlu0 %405
      %v408 = vadd.f32 %v380, %v406
      %409 = vrot.lane.b32.xlu0 %v217, 121
      %v410 = vpop.permute.xlu0 %409
      %411 = vrot.lane.b32.xlu0 %v218, 121
      %v412 = vpop.permute.xlu0 %411
      %v415 = vadd.f32 %v387, %v410
      %v416 = vadd.f32 %v388, %v412
      %417 = vrot.lane.b32.xlu0 %v221, 121
      %v418 = vpop.permute.xlu0 %417
      %419 = vrot.lane.b32.xlu0 %v222, 121
      %v420 = vpop.permute.xlu0 %419
      %v423 = vadd.f32 %v395, %v418
      %v424 = vadd.f32 %v396, %v420
      %425 = vrot.lane.b32.xlu0 %v227, 121
      %v426 = vpop.permute.xlu0 %425
      %427 = vrot.lane.b32.xlu0 %v228, 121
      %v428 = vpop.permute.xlu0 %427
      %v431 = vadd.f32 %v403, %v426
      %v432 = vadd.f32 %v404, %v428
      %433 = vrot.lane.b32.xlu0 %v209, 120
      %v434 = vpop.permute.xlu0 %433
      %v436 = vadd.f32 %v408, %v434
      %437 = vrot.lane.b32.xlu0 %v217, 120
      %v438 = vpop.permute.xlu0 %437
      %439 = vrot.lane.b32.xlu0 %v218, 120
      %v440 = vpop.permute.xlu0 %439
      %v443 = vadd.f32 %v415, %v438
      %v444 = vadd.f32 %v416, %v440
      %445 = vrot.lane.b32.xlu0 %v221, 120
      %v446 = vpop.permute.xlu0 %445
      %447 = vrot.lane.b32.xlu0 %v222, 120
      %v448 = vpop.permute.xlu0 %447
      %v451 = vadd.f32 %v423, %v446
      %v452 = vadd.f32 %v424, %v448
      %453 = vrot.lane.b32.xlu0 %v227, 120
      %v454 = vpop.permute.xlu0 %453
      %455 = vrot.lane.b32.xlu0 %v228, 120
      %v456 = vpop.permute.xlu0 %455
      %v459 = vadd.f32 %v431, %v454
      %v460 = vadd.f32 %v432, %v456
      %461 = vrot.lane.b32.xlu0 %v209, 119
      %v462 = vpop.permute.xlu0 %461
      %v464 = vadd.f32 %v436, %v462
      %465 = vrot.lane.b32.xlu0 %v217, 119
      %v466 = vpop.permute.xlu0 %465
      %467 = vrot.lane.b32.xlu0 %v218, 119
      %v468 = vpop.permute.xlu0 %467
      %v471 = vadd.f32 %v443, %v466
      %v472 = vadd.f32 %v444, %v468
      %473 = vrot.lane.b32.xlu0 %v221, 119
      %v474 = vpop.permute.xlu0 %473
      %475 = vrot.lane.b32.xlu0 %v222, 119
      %v476 = vpop.permute.xlu0 %475
      %v479 = vadd.f32 %v451, %v474
      %v480 = vadd.f32 %v452, %v476
      %481 = vrot.lane.b32.xlu0 %v227, 119
      %v482 = vpop.permute.xlu0 %481
      %483 = vrot.lane.b32.xlu0 %v228, 119
      %v484 = vpop.permute.xlu0 %483
      %v487 = vadd.f32 %v459, %v482
      %v488 = vadd.f32 %v460, %v484
      %489 = vrot.lane.b32.xlu0 %v209, 118
      %v490 = vpop.permute.xlu0 %489
      %v492 = vadd.f32 %v464, %v490
      %493 = vrot.lane.b32.xlu0 %v217, 118
      %v494 = vpop.permute.xlu0 %493
      %495 = vrot.lane.b32.xlu0 %v218, 118
      %v496 = vpop.permute.xlu0 %495
      %v499 = vadd.f32 %v471, %v494
      %v500 = vadd.f32 %v472, %v496
      %501 = vrot.lane.b32.xlu0 %v221, 118
      %v502 = vpop.permute.xlu0 %501
      %503 = vrot.lane.b32.xlu0 %v222, 118
      %v504 = vpop.permute.xlu0 %503
      %v507 = vadd.f32 %v479, %v502
      %v508 = vadd.f32 %v480, %v504
      %509 = vrot.lane.b32.xlu0 %v227, 118
      %v510 = vpop.permute.xlu0 %509
      %511 = vrot.lane.b32.xlu0 %v228, 118
      %v512 = vpop.permute.xlu0 %511
      %v515 = vadd.f32 %v487, %v510
      %v516 = vadd.f32 %v488, %v512
      %517 = vrot.lane.b32.xlu0 %v209, 117
      %v518 = vpop.permute.xlu0 %517
      %v520 = vadd.f32 %v492, %v518
      %521 = vrot.lane.b32.xlu0 %v217, 117
      %v522 = vpop.permute.xlu0 %521
      %523 = vrot.lane.b32.xlu0 %v218, 117
      %v524 = vpop.permute.xlu0 %523
      %v527 = vadd.f32 %v499, %v522
      %v528 = vadd.f32 %v500, %v524
      %529 = vrot.lane.b32.xlu0 %v221, 117
      %v530 = vpop.permute.xlu0 %529
      %531 = vrot.lane.b32.xlu0 %v222, 117
      %v532 = vpop.permute.xlu0 %531
      %v535 = vadd.f32 %v507, %v530
      %v536 = vadd.f32 %v508, %v532
      %537 = vrot.lane.b32.xlu0 %v227, 117
      %v538 = vpop.permute.xlu0 %537
      %539 = vrot.lane.b32.xlu0 %v228, 117
      %v540 = vpop.permute.xlu0 %539
      %v543 = vadd.f32 %v515, %v538
      %v544 = vadd.f32 %v516, %v540
      %545 = vrot.lane.b32.xlu0 %v209, 116
      %v546 = vpop.permute.xlu0 %545
      %v548 = vadd.f32 %v520, %v546
      %549 = vrot.lane.b32.xlu0 %v217, 116
      %v550 = vpop.permute.xlu0 %549
      %551 = vrot.lane.b32.xlu0 %v218, 116
      %v552 = vpop.permute.xlu0 %551
      %v555 = vadd.f32 %v527, %v550
      %v556 = vadd.f32 %v528, %v552
      %557 = vrot.lane.b32.xlu0 %v221, 116
      %v558 = vpop.permute.xlu0 %557
      %559 = vrot.lane.b32.xlu0 %v222, 116
      %v560 = vpop.permute.xlu0 %559
      %v563 = vadd.f32 %v535, %v558
      %v564 = vadd.f32 %v536, %v560
      %565 = vrot.lane.b32.xlu0 %v227, 116
      %v566 = vpop.permute.xlu0 %565
      %567 = vrot.lane.b32.xlu0 %v228, 116
      %v568 = vpop.permute.xlu0 %567
      %v571 = vadd.f32 %v543, %v566
      %v572 = vadd.f32 %v544, %v568
      %573 = vrot.lane.b32.xlu0 %v209, 115
      %v574 = vpop.permute.xlu0 %573
      %v576 = vadd.f32 %v548, %v574
      %577 = vrot.lane.b32.xlu0 %v217, 115
      %v578 = vpop.permute.xlu0 %577
      %579 = vrot.lane.b32.xlu0 %v218, 115
      %v580 = vpop.permute.xlu0 %579
      %v583 = vadd.f32 %v555, %v578
      %v584 = vadd.f32 %v556, %v580
      %585 = vrot.lane.b32.xlu0 %v221, 115
      %v586 = vpop.permute.xlu0 %585
      %587 = vrot.lane.b32.xlu0 %v222, 115
      %v588 = vpop.permute.xlu0 %587
      %v591 = vadd.f32 %v563, %v586
      %v592 = vadd.f32 %v564, %v588
      %593 = vrot.lane.b32.xlu0 %v227, 115
      %v594 = vpop.permute.xlu0 %593
      %595 = vrot.lane.b32.xlu0 %v228, 115
      %v596 = vpop.permute.xlu0 %595
      %v599 = vadd.f32 %v571, %v594
      %v600 = vadd.f32 %v572, %v596
      %601 = vrot.lane.b32.xlu0 %v209, 114
      %v602 = vpop.permute.xlu0 %601
      %v604 = vadd.f32 %v576, %v602
      %605 = vrot.lane.b32.xlu0 %v217, 114
      %v606 = vpop.permute.xlu0 %605
      %607 = vrot.lane.b32.xlu0 %v218, 114
      %v608 = vpop.permute.xlu0 %607
      %v611 = vadd.f32 %v583, %v606
      %v612 = vadd.f32 %v584, %v608
      %613 = vrot.lane.b32.xlu0 %v221, 114
      %v614 = vpop.permute.xlu0 %613
      %615 = vrot.lane.b32.xlu0 %v222, 114
      %v616 = vpop.permute.xlu0 %615
      %v619 = vadd.f32 %v591, %v614
      %v620 = vadd.f32 %v592, %v616
      %621 = vrot.lane.b32.xlu0 %v227, 114
      %v622 = vpop.permute.xlu0 %621
      %623 = vrot.lane.b32.xlu0 %v228, 114
      %v624 = vpop.permute.xlu0 %623
      %v627 = vadd.f32 %v599, %v622
      %v628 = vadd.f32 %v600, %v624
      %629 = vrot.lane.b32.xlu0 %v209, 113
      %v630 = vpop.permute.xlu0 %629
      %v632 = vadd.f32 %v604, %v630
      %633 = vrot.lane.b32.xlu0 %v217, 113
      %v634 = vpop.permute.xlu0 %633
      %635 = vrot.lane.b32.xlu0 %v218, 113
      %v636 = vpop.permute.xlu0 %635
      %v639 = vadd.f32 %v611, %v634
      %v640 = vadd.f32 %v612, %v636
      %641 = vrot.lane.b32.xlu0 %v221, 113
      %v642 = vpop.permute.xlu0 %641
      %643 = vrot.lane.b32.xlu0 %v222, 113
      %v644 = vpop.permute.xlu0 %643
      %v647 = vadd.f32 %v619, %v642
      %v648 = vadd.f32 %v620, %v644
      %649 = vrot.lane.b32.xlu0 %v227, 113
      %v650 = vpop.permute.xlu0 %649
      %651 = vrot.lane.b32.xlu0 %v228, 113
      %v652 = vpop.permute.xlu0 %651
      %v655 = vadd.f32 %v627, %v650
      %v656 = vadd.f32 %v628, %v652
      %657 = vrot.lane.b32.xlu0 %v209, 112
      %v658 = vpop.permute.xlu0 %657
      %v660 = vadd.f32 %v632, %v658
      %661 = vrot.lane.b32.xlu0 %v217, 112
      %v662 = vpop.permute.xlu0 %661
      %663 = vrot.lane.b32.xlu0 %v218, 112
      %v664 = vpop.permute.xlu0 %663
      %v667 = vadd.f32 %v639, %v662
      %v668 = vadd.f32 %v640, %v664
      %669 = vrot.lane.b32.xlu0 %v221, 112
      %v670 = vpop.permute.xlu0 %669
      %671 = vrot.lane.b32.xlu0 %v222, 112
      %v672 = vpop.permute.xlu0 %671
      %v675 = vadd.f32 %v647, %v670
      %v676 = vadd.f32 %v648, %v672
      %677 = vrot.lane.b32.xlu0 %v227, 112
      %v678 = vpop.permute.xlu0 %677
      %679 = vrot.lane.b32.xlu0 %v228, 112
      %v680 = vpop.permute.xlu0 %679
      %v683 = vadd.f32 %v655, %v678
      %v684 = vadd.f32 %v656, %v680
      %685 = vrot.lane.b32.xlu0 %v209, 111
      %v686 = vpop.permute.xlu0 %685
      %v688 = vadd.f32 %v660, %v686
      %689 = vrot.lane.b32.xlu0 %v217, 111
      %v690 = vpop.permute.xlu0 %689
      %691 = vrot.lane.b32.xlu0 %v218, 111
      %v692 = vpop.permute.xlu0 %691
      %v695 = vadd.f32 %v667, %v690
      %v696 = vadd.f32 %v668, %v692
      %697 = vrot.lane.b32.xlu0 %v221, 111
      %v698 = vpop.permute.xlu0 %697
      %699 = vrot.lane.b32.xlu0 %v222, 111
      %v700 = vpop.permute.xlu0 %699
      %v703 = vadd.f32 %v675, %v698
      %v704 = vadd.f32 %v676, %v700
      %705 = vrot.lane.b32.xlu0 %v227, 111
      %v706 = vpop.permute.xlu0 %705
      %707 = vrot.lane.b32.xlu0 %v228, 111
      %v708 = vpop.permute.xlu0 %707
      %v711 = vadd.f32 %v683, %v706
      %v712 = vadd.f32 %v684, %v708
      %713 = vrot.lane.b32.xlu0 %v209, 110
      %v714 = vpop.permute.xlu0 %713
      %v716 = vadd.f32 %v688, %v714
      %717 = vrot.lane.b32.xlu0 %v217, 110
      %v718 = vpop.permute.xlu0 %717
      %719 = vrot.lane.b32.xlu0 %v218, 110
      %v720 = vpop.permute.xlu0 %719
      %v723 = vadd.f32 %v695, %v718
      %v724 = vadd.f32 %v696, %v720
      %725 = vrot.lane.b32.xlu0 %v221, 110
      %v726 = vpop.permute.xlu0 %725
      %727 = vrot.lane.b32.xlu0 %v222, 110
      %v728 = vpop.permute.xlu0 %727
      %v731 = vadd.f32 %v703, %v726
      %v732 = vadd.f32 %v704, %v728
      %733 = vrot.lane.b32.xlu0 %v227, 110
      %v734 = vpop.permute.xlu0 %733
      %735 = vrot.lane.b32.xlu0 %v228, 110
      %v736 = vpop.permute.xlu0 %735
      %v739 = vadd.f32 %v711, %v734
      %v740 = vadd.f32 %v712, %v736
      %741 = vrot.lane.b32.xlu0 %v209, 109
      %v742 = vpop.permute.xlu0 %741
      %v744 = vadd.f32 %v716, %v742
      %745 = vrot.lane.b32.xlu0 %v217, 109
      %v746 = vpop.permute.xlu0 %745
      %747 = vrot.lane.b32.xlu0 %v218, 109
      %v748 = vpop.permute.xlu0 %747
      %v751 = vadd.f32 %v723, %v746
      %v752 = vadd.f32 %v724, %v748
      %753 = vrot.lane.b32.xlu0 %v221, 109
      %v754 = vpop.permute.xlu0 %753
      %755 = vrot.lane.b32.xlu0 %v222, 109
      %v756 = vpop.permute.xlu0 %755
      %v759 = vadd.f32 %v731, %v754
      %v760 = vadd.f32 %v732, %v756
      %761 = vrot.lane.b32.xlu0 %v227, 109
      %v762 = vpop.permute.xlu0 %761
      %763 = vrot.lane.b32.xlu0 %v228, 109
      %v764 = vpop.permute.xlu0 %763
      %v767 = vadd.f32 %v739, %v762
      %v768 = vadd.f32 %v740, %v764
      %769 = vrot.lane.b32.xlu0 %v209, 108
      %v770 = vpop.permute.xlu0 %769
      %v772 = vadd.f32 %v744, %v770
      %773 = vrot.lane.b32.xlu0 %v217, 108
      %v774 = vpop.permute.xlu0 %773
      %775 = vrot.lane.b32.xlu0 %v218, 108
      %v776 = vpop.permute.xlu0 %775
      %v779 = vadd.f32 %v751, %v774
      %v780 = vadd.f32 %v752, %v776
      %781 = vrot.lane.b32.xlu0 %v221, 108
      %v782 = vpop.permute.xlu0 %781
      %783 = vrot.lane.b32.xlu0 %v222, 108
      %v784 = vpop.permute.xlu0 %783
      %v787 = vadd.f32 %v759, %v782
      %v788 = vadd.f32 %v760, %v784
      %789 = vrot.lane.b32.xlu0 %v227, 108
      %v790 = vpop.permute.xlu0 %789
      %791 = vrot.lane.b32.xlu0 %v228, 108
      %v792 = vpop.permute.xlu0 %791
      %v795 = vadd.f32 %v767, %v790
      %v796 = vadd.f32 %v768, %v792
      %797 = vrot.lane.b32.xlu0 %v209, 107
      %v798 = vpop.permute.xlu0 %797
      %v800 = vadd.f32 %v772, %v798
      %801 = vrot.lane.b32.xlu0 %v217, 107
      %v802 = vpop.permute.xlu0 %801
      %803 = vrot.lane.b32.xlu0 %v218, 107
      %v804 = vpop.permute.xlu0 %803
      %v807 = vadd.f32 %v779, %v802
      %v808 = vadd.f32 %v780, %v804
      %809 = vrot.lane.b32.xlu0 %v221, 107
      %v810 = vpop.permute.xlu0 %809
      %811 = vrot.lane.b32.xlu0 %v222, 107
      %v812 = vpop.permute.xlu0 %811
      %v815 = vadd.f32 %v787, %v810
      %v816 = vadd.f32 %v788, %v812
      %817 = vrot.lane.b32.xlu0 %v227, 107
      %v818 = vpop.permute.xlu0 %817
      %819 = vrot.lane.b32.xlu0 %v228, 107
      %v820 = vpop.permute.xlu0 %819
      %v823 = vadd.f32 %v795, %v818
      %v824 = vadd.f32 %v796, %v820
      %825 = vrot.lane.b32.xlu0 %v209, 106
      %v826 = vpop.permute.xlu0 %825
      %v828 = vadd.f32 %v800, %v826
      %829 = vrot.lane.b32.xlu0 %v217, 106
      %v830 = vpop.permute.xlu0 %829
      %831 = vrot.lane.b32.xlu0 %v218, 106
      %v832 = vpop.permute.xlu0 %831
      %v835 = vadd.f32 %v807, %v830
      %v836 = vadd.f32 %v808, %v832
      %837 = vrot.lane.b32.xlu0 %v221, 106
      %v838 = vpop.permute.xlu0 %837
      %839 = vrot.lane.b32.xlu0 %v222, 106
      %v840 = vpop.permute.xlu0 %839
      %v843 = vadd.f32 %v815, %v838
      %v844 = vadd.f32 %v816, %v840
      %845 = vrot.lane.b32.xlu0 %v227, 106
      %v846 = vpop.permute.xlu0 %845
      %847 = vrot.lane.b32.xlu0 %v228, 106
      %v848 = vpop.permute.xlu0 %847
      %v851 = vadd.f32 %v823, %v846
      %v852 = vadd.f32 %v824, %v848
      %853 = vrot.lane.b32.xlu0 %v209, 105
      %v854 = vpop.permute.xlu0 %853
      %v856 = vadd.f32 %v828, %v854
      %857 = vrot.lane.b32.xlu0 %v217, 105
      %v858 = vpop.permute.xlu0 %857
      %859 = vrot.lane.b32.xlu0 %v218, 105
      %v860 = vpop.permute.xlu0 %859
      %v863 = vadd.f32 %v835, %v858
      %v864 = vadd.f32 %v836, %v860
      %865 = vrot.lane.b32.xlu0 %v221, 105
      %v866 = vpop.permute.xlu0 %865
      %867 = vrot.lane.b32.xlu0 %v222, 105
      %v868 = vpop.permute.xlu0 %867
      %v871 = vadd.f32 %v843, %v866
      %v872 = vadd.f32 %v844, %v868
      %873 = vrot.lane.b32.xlu0 %v227, 105
      %v874 = vpop.permute.xlu0 %873
      %875 = vrot.lane.b32.xlu0 %v228, 105
      %v876 = vpop.permute.xlu0 %875
      %v879 = vadd.f32 %v851, %v874
      %v880 = vadd.f32 %v852, %v876
      %881 = vrot.lane.b32.xlu0 %v209, 104
      %v882 = vpop.permute.xlu0 %881
      %v884 = vadd.f32 %v856, %v882
      %885 = vrot.lane.b32.xlu0 %v217, 104
      %v886 = vpop.permute.xlu0 %885
      %887 = vrot.lane.b32.xlu0 %v218, 104
      %v888 = vpop.permute.xlu0 %887
      %v891 = vadd.f32 %v863, %v886
      %v892 = vadd.f32 %v864, %v888
      %893 = vrot.lane.b32.xlu0 %v221, 104
      %v894 = vpop.permute.xlu0 %893
      %895 = vrot.lane.b32.xlu0 %v222, 104
      %v896 = vpop.permute.xlu0 %895
      %v899 = vadd.f32 %v871, %v894
      %v900 = vadd.f32 %v872, %v896
      %901 = vrot.lane.b32.xlu0 %v227, 104
      %v902 = vpop.permute.xlu0 %901
      %903 = vrot.lane.b32.xlu0 %v228, 104
      %v904 = vpop.permute.xlu0 %903
      %v907 = vadd.f32 %v879, %v902
      %v908 = vadd.f32 %v880, %v904
      %909 = vrot.lane.b32.xlu0 %v209, 103
      %v910 = vpop.permute.xlu0 %909
      %v912 = vadd.f32 %v884, %v910
      %913 = vrot.lane.b32.xlu0 %v217, 103
      %v914 = vpop.permute.xlu0 %913
      %915 = vrot.lane.b32.xlu0 %v218, 103
      %v916 = vpop.permute.xlu0 %915
      %v919 = vadd.f32 %v891, %v914
      %v920 = vadd.f32 %v892, %v916
      %921 = vrot.lane.b32.xlu0 %v221, 103
      %v922 = vpop.permute.xlu0 %921
      %923 = vrot.lane.b32.xlu0 %v222, 103
      %v924 = vpop.permute.xlu0 %923
      %v927 = vadd.f32 %v899, %v922
      %v928 = vadd.f32 %v900, %v924
      %929 = vrot.lane.b32.xlu0 %v227, 103
      %v930 = vpop.permute.xlu0 %929
      %931 = vrot.lane.b32.xlu0 %v228, 103
      %v932 = vpop.permute.xlu0 %931
      %v935 = vadd.f32 %v907, %v930
      %v936 = vadd.f32 %v908, %v932
      %937 = vrot.lane.b32.xlu0 %v209, 102
      %v938 = vpop.permute.xlu0 %937
      %v940 = vadd.f32 %v912, %v938
      %941 = vrot.lane.b32.xlu0 %v217, 102
      %v942 = vpop.permute.xlu0 %941
      %943 = vrot.lane.b32.xlu0 %v218, 102
      %v944 = vpop.permute.xlu0 %943
      %v947 = vadd.f32 %v919, %v942
      %v948 = vadd.f32 %v920, %v944
      %949 = vrot.lane.b32.xlu0 %v221, 102
      %v950 = vpop.permute.xlu0 %949
      %951 = vrot.lane.b32.xlu0 %v222, 102
      %v952 = vpop.permute.xlu0 %951
      %v955 = vadd.f32 %v927, %v950
      %v956 = vadd.f32 %v928, %v952
      %957 = vrot.lane.b32.xlu0 %v227, 102
      %v958 = vpop.permute.xlu0 %957
      %959 = vrot.lane.b32.xlu0 %v228, 102
      %v960 = vpop.permute.xlu0 %959
      %v963 = vadd.f32 %v935, %v958
      %v964 = vadd.f32 %v936, %v960
      %965 = vrot.lane.b32.xlu0 %v209, 101
      %v966 = vpop.permute.xlu0 %965
      %v968 = vadd.f32 %v940, %v966
      %969 = vrot.lane.b32.xlu0 %v217, 101
      %v970 = vpop.permute.xlu0 %969
      %971 = vrot.lane.b32.xlu0 %v218, 101
      %v972 = vpop.permute.xlu0 %971
      %v975 = vadd.f32 %v947, %v970
      %v976 = vadd.f32 %v948, %v972
      %977 = vrot.lane.b32.xlu0 %v221, 101
      %v978 = vpop.permute.xlu0 %977
      %979 = vrot.lane.b32.xlu0 %v222, 101
      %v980 = vpop.permute.xlu0 %979
      %v983 = vadd.f32 %v955, %v978
      %v984 = vadd.f32 %v956, %v980
      %985 = vrot.lane.b32.xlu0 %v227, 101
      %v986 = vpop.permute.xlu0 %985
      %987 = vrot.lane.b32.xlu0 %v228, 101
      %v988 = vpop.permute.xlu0 %987
      %v991 = vadd.f32 %v963, %v986
      %v992 = vadd.f32 %v964, %v988
      %993 = vrot.lane.b32.xlu0 %v209, 100
      %v994 = vpop.permute.xlu0 %993
      %v996 = vadd.f32 %v968, %v994
      %997 = vrot.lane.b32.xlu0 %v217, 100
      %v998 = vpop.permute.xlu0 %997
      %999 = vrot.lane.b32.xlu0 %v218, 100
      %v1000 = vpop.permute.xlu0 %999
      %v1003 = vadd.f32 %v975, %v998
      %v1004 = vadd.f32 %v976, %v1000
      %1005 = vrot.lane.b32.xlu0 %v221, 100
      %v1006 = vpop.permute.xlu0 %1005
      %1007 = vrot.lane.b32.xlu0 %v222, 100
      %v1008 = vpop.permute.xlu0 %1007
      %v1011 = vadd.f32 %v983, %v1006
      %v1012 = vadd.f32 %v984, %v1008
      %1013 = vrot.lane.b32.xlu0 %v227, 100
      %v1014 = vpop.permute.xlu0 %1013
      %1015 = vrot.lane.b32.xlu0 %v228, 100
      %v1016 = vpop.permute.xlu0 %1015
      %v1019 = vadd.f32 %v991, %v1014
      %v1020 = vadd.f32 %v992, %v1016
      %1021 = vrot.lane.b32.xlu0 %v209, 99
      %v1022 = vpop.permute.xlu0 %1021
      %v1024 = vadd.f32 %v996, %v1022
      %1025 = vrot.lane.b32.xlu0 %v217, 99
      %v1026 = vpop.permute.xlu0 %1025
      %1027 = vrot.lane.b32.xlu0 %v218, 99
      %v1028 = vpop.permute.xlu0 %1027
      %v1031 = vadd.f32 %v1003, %v1026
      %v1032 = vadd.f32 %v1004, %v1028
      %1033 = vrot.lane.b32.xlu0 %v221, 99
      %v1034 = vpop.permute.xlu0 %1033
      %1035 = vrot.lane.b32.xlu0 %v222, 99
      %v1036 = vpop.permute.xlu0 %1035
      %v1039 = vadd.f32 %v1011, %v1034
      %v1040 = vadd.f32 %v1012, %v1036
      %1041 = vrot.lane.b32.xlu0 %v227, 99
      %v1042 = vpop.permute.xlu0 %1041
      %1043 = vrot.lane.b32.xlu0 %v228, 99
      %v1044 = vpop.permute.xlu0 %1043
      %v1047 = vadd.f32 %v1019, %v1042
      %v1048 = vadd.f32 %v1020, %v1044
      %v1049 = vrsqrt.pop %v1039
      %v1050 = vmul.f32 %v1039, %v1049
      %vm1051 = vcmp.eq.f32.partialorder %v1039, inf
      %v1052 = vsel %vm1051, %v1039, %v1050
      %vm1053 = vcmp.eq.f32.partialorder %v1039, 0.0
      %v1054 = vand.u32 %v1039, 2147483648
      %v1055 = vsel %vm1053, %v1054, %v1052
      %v1056 = vrsqrt.pop %v1040
      %v1057 = vmul.f32 %v1040, %v1056
      %vm1058 = vcmp.eq.f32.partialorder %v1040, inf
      %v1059 = vsel %vm1058, %v1040, %v1057
      %vm1060 = vcmp.eq.f32.partialorder %v1040, 0.0
      %v1061 = vand.u32 %v1040, 2147483648
      %v1062 = vsel %vm1060, %v1061, %v1059
      %v1063 = vrsqrt.pop %v1047
      %v1064 = vmul.f32 %v1047, %v1063
      %vm1065 = vcmp.eq.f32.partialorder %v1047, inf
      %v1066 = vsel %vm1065, %v1047, %v1064
      %vm1067 = vcmp.eq.f32.partialorder %v1047, 0.0
      %v1068 = vand.u32 %v1047, 2147483648
      %v1069 = vsel %vm1067, %v1068, %v1066
      %v1070 = vrsqrt.pop %v1048
      %v1071 = vmul.f32 %v1048, %v1070
      %vm1072 = vcmp.eq.f32.partialorder %v1048, inf
      %v1073 = vsel %vm1072, %v1048, %v1071
      %vm1074 = vcmp.eq.f32.partialorder %v1048, 0.0
      %v1075 = vand.u32 %v1048, 2147483648
      %v1076 = vsel %vm1074, %v1075, %v1073
      %v1077 = vadd.f32 %v1069, 1e-08
      %v1078 = vadd.f32 %v1076, 1e-08
      %v1079 = vrcp.pop %v1077
      %v1080 = vmul.f32 %v1055, %v1079
      %v1081 = vrcp.pop %v1078
      %v1082 = vmul.f32 %v1062, %v1081
      %v1083 = vadd.f32 %v1024, 1e-08
      %v1085 = vlaneseq
      %v1086 = vshrl.u32 %v1085, 7
      %v1087 = vsub.s32 0, %v1086
      %v1088 = vrot.slane %v1083, %v1087
      %v1090 = vrcp.pop %v1088
      %v1091 = vmul.f32 %v1031, %v1090
      %v1092 = vmul.f32 %v1032, %v1090
      %v1093 = vmul.f32 %v207, %v1080
      %v1094 = vmul.f32 %v208, %v1082
      %v1095 = vmul.f32 %v205, 6.623413
      %v1096 = vmul.f32 %v206, 6.623413
      %v1097 = vmin.f32 %v1093, %v1095
      %v1098 = vmin.f32 %v1094, %v1096
      %v1099 = vmul.f32 %v215, %v1097
      %v1100 = vmul.f32 %v215, %v1098
      %v1101 = vadd.f32 %v1099, 0.0
      %v1102 = vadd.f32 %v1100, 0.0
      %1105 = vrot.lane.b32.xlu0 %v1080, 1
      %v1106 = vpop.permute.xlu0 %1105
      %1107 = vrot.lane.b32.xlu0 %v1082, 1
      %v1108 = vpop.permute.xlu0 %1107
      %v1111 = vmul.f32 %v207, %v1106
      %v1112 = vmul.f32 %v208, %v1108
      %v1113 = vmin.f32 %v1111, %v1095
      %v1114 = vmin.f32 %v1112, %v1096
      %v1115 = vmul.f32 %v215, %v1113
      %v1116 = vmul.f32 %v215, %v1114
      %1119 = vrot.lane.b32.xlu0 %v1115, 127
      %v1120 = vpop.permute.xlu0 %1119
      %1121 = vrot.lane.b32.xlu0 %v1116, 127
      %v1122 = vpop.permute.xlu0 %1121
      %v1125 = vadd.f32 %v1101, %v1120
      %v1126 = vadd.f32 %v1102, %v1122
      %1127 = vrot.lane.b32.xlu0 %v1080, 2
      %v1128 = vpop.permute.xlu0 %1127
      %1129 = vrot.lane.b32.xlu0 %v1082, 2
      %v1130 = vpop.permute.xlu0 %1129
      %v1133 = vmul.f32 %v207, %v1128
      %v1134 = vmul.f32 %v208, %v1130
      %v1135 = vmin.f32 %v1133, %v1095
      %v1136 = vmin.f32 %v1134, %v1096
      %v1137 = vmul.f32 %v215, %v1135
      %v1138 = vmul.f32 %v215, %v1136
      %1141 = vrot.lane.b32.xlu0 %v1137, 126
      %v1142 = vpop.permute.xlu0 %1141
      %1143 = vrot.lane.b32.xlu0 %v1138, 126
      %v1144 = vpop.permute.xlu0 %1143
      %v1147 = vadd.f32 %v1125, %v1142
      %v1148 = vadd.f32 %v1126, %v1144
      %1149 = vrot.lane.b32.xlu0 %v1080, 3
      %v1150 = vpop.permute.xlu0 %1149
      %1151 = vrot.lane.b32.xlu0 %v1082, 3
      %v1152 = vpop.permute.xlu0 %1151
      %v1155 = vmul.f32 %v207, %v1150
      %v1156 = vmul.f32 %v208, %v1152
      %v1157 = vmin.f32 %v1155, %v1095
      %v1158 = vmin.f32 %v1156, %v1096
      %v1159 = vmul.f32 %v215, %v1157
      %v1160 = vmul.f32 %v215, %v1158
      %1163 = vrot.lane.b32.xlu0 %v1159, 125
      %v1164 = vpop.permute.xlu0 %1163
      %1165 = vrot.lane.b32.xlu0 %v1160, 125
      %v1166 = vpop.permute.xlu0 %1165
      %v1169 = vadd.f32 %v1147, %v1164
      %v1170 = vadd.f32 %v1148, %v1166
      %1171 = vrot.lane.b32.xlu0 %v1080, 4
      %v1172 = vpop.permute.xlu0 %1171
      %1173 = vrot.lane.b32.xlu0 %v1082, 4
      %v1174 = vpop.permute.xlu0 %1173
      %v1177 = vmul.f32 %v207, %v1172
      %v1178 = vmul.f32 %v208, %v1174
      %v1179 = vmin.f32 %v1177, %v1095
      %v1180 = vmin.f32 %v1178, %v1096
      %v1181 = vmul.f32 %v215, %v1179
      %v1182 = vmul.f32 %v215, %v1180
      %1185 = vrot.lane.b32.xlu0 %v1181, 124
      %v1186 = vpop.permute.xlu0 %1185
      %1187 = vrot.lane.b32.xlu0 %v1182, 124
      %v1188 = vpop.permute.xlu0 %1187
      %v1191 = vadd.f32 %v1169, %v1186
      %v1192 = vadd.f32 %v1170, %v1188
      %1193 = vrot.lane.b32.xlu0 %v1080, 5
      %v1194 = vpop.permute.xlu0 %1193
      %1195 = vrot.lane.b32.xlu0 %v1082, 5
      %v1196 = vpop.permute.xlu0 %1195
      %v1199 = vmul.f32 %v207, %v1194
      %v1200 = vmul.f32 %v208, %v1196
      %v1201 = vmin.f32 %v1199, %v1095
      %v1202 = vmin.f32 %v1200, %v1096
      %v1203 = vmul.f32 %v215, %v1201
      %v1204 = vmul.f32 %v215, %v1202
      %1207 = vrot.lane.b32.xlu0 %v1203, 123
      %v1208 = vpop.permute.xlu0 %1207
      %1209 = vrot.lane.b32.xlu0 %v1204, 123
      %v1210 = vpop.permute.xlu0 %1209
      %v1213 = vadd.f32 %v1191, %v1208
      %v1214 = vadd.f32 %v1192, %v1210
      %1215 = vrot.lane.b32.xlu0 %v1080, 6
      %v1216 = vpop.permute.xlu0 %1215
      %1217 = vrot.lane.b32.xlu0 %v1082, 6
      %v1218 = vpop.permute.xlu0 %1217
      %v1221 = vmul.f32 %v207, %v1216
      %v1222 = vmul.f32 %v208, %v1218
      %v1223 = vmin.f32 %v1221, %v1095
      %v1224 = vmin.f32 %v1222, %v1096
      %v1225 = vmul.f32 %v215, %v1223
      %v1226 = vmul.f32 %v215, %v1224
      %1229 = vrot.lane.b32.xlu0 %v1225, 122
      %v1230 = vpop.permute.xlu0 %1229
      %1231 = vrot.lane.b32.xlu0 %v1226, 122
      %v1232 = vpop.permute.xlu0 %1231
      %v1235 = vadd.f32 %v1213, %v1230
      %v1236 = vadd.f32 %v1214, %v1232
      %1237 = vrot.lane.b32.xlu0 %v1080, 7
      %v1238 = vpop.permute.xlu0 %1237
      %1239 = vrot.lane.b32.xlu0 %v1082, 7
      %v1240 = vpop.permute.xlu0 %1239
      %v1243 = vmul.f32 %v207, %v1238
      %v1244 = vmul.f32 %v208, %v1240
      %v1245 = vmin.f32 %v1243, %v1095
      %v1246 = vmin.f32 %v1244, %v1096
      %v1247 = vmul.f32 %v215, %v1245
      %v1248 = vmul.f32 %v215, %v1246
      %1251 = vrot.lane.b32.xlu0 %v1247, 121
      %v1252 = vpop.permute.xlu0 %1251
      %1253 = vrot.lane.b32.xlu0 %v1248, 121
      %v1254 = vpop.permute.xlu0 %1253
      %v1257 = vadd.f32 %v1235, %v1252
      %v1258 = vadd.f32 %v1236, %v1254
      %1259 = vrot.lane.b32.xlu0 %v1080, 8
      %v1260 = vpop.permute.xlu0 %1259
      %1261 = vrot.lane.b32.xlu0 %v1082, 8
      %v1262 = vpop.permute.xlu0 %1261
      %v1265 = vmul.f32 %v207, %v1260
      %v1266 = vmul.f32 %v208, %v1262
      %v1267 = vmin.f32 %v1265, %v1095
      %v1268 = vmin.f32 %v1266, %v1096
      %v1269 = vmul.f32 %v215, %v1267
      %v1270 = vmul.f32 %v215, %v1268
      %1273 = vrot.lane.b32.xlu0 %v1269, 120
      %v1274 = vpop.permute.xlu0 %1273
      %1275 = vrot.lane.b32.xlu0 %v1270, 120
      %v1276 = vpop.permute.xlu0 %1275
      %v1279 = vadd.f32 %v1257, %v1274
      %v1280 = vadd.f32 %v1258, %v1276
      %1281 = vrot.lane.b32.xlu0 %v1080, 9
      %v1282 = vpop.permute.xlu0 %1281
      %1283 = vrot.lane.b32.xlu0 %v1082, 9
      %v1284 = vpop.permute.xlu0 %1283
      %v1287 = vmul.f32 %v207, %v1282
      %v1288 = vmul.f32 %v208, %v1284
      %v1289 = vmin.f32 %v1287, %v1095
      %v1290 = vmin.f32 %v1288, %v1096
      %v1291 = vmul.f32 %v215, %v1289
      %v1292 = vmul.f32 %v215, %v1290
      %1295 = vrot.lane.b32.xlu0 %v1291, 119
      %v1296 = vpop.permute.xlu0 %1295
      %1297 = vrot.lane.b32.xlu0 %v1292, 119
      %v1298 = vpop.permute.xlu0 %1297
      %v1301 = vadd.f32 %v1279, %v1296
      %v1302 = vadd.f32 %v1280, %v1298
      %1303 = vrot.lane.b32.xlu0 %v1080, 10
      %v1304 = vpop.permute.xlu0 %1303
      %1305 = vrot.lane.b32.xlu0 %v1082, 10
      %v1306 = vpop.permute.xlu0 %1305
      %v1309 = vmul.f32 %v207, %v1304
      %v1310 = vmul.f32 %v208, %v1306
      %v1311 = vmin.f32 %v1309, %v1095
      %v1312 = vmin.f32 %v1310, %v1096
      %v1313 = vmul.f32 %v215, %v1311
      %v1314 = vmul.f32 %v215, %v1312
      %1317 = vrot.lane.b32.xlu0 %v1313, 118
      %v1318 = vpop.permute.xlu0 %1317
      %1319 = vrot.lane.b32.xlu0 %v1314, 118
      %v1320 = vpop.permute.xlu0 %1319
      %v1323 = vadd.f32 %v1301, %v1318
      %v1324 = vadd.f32 %v1302, %v1320
      %1325 = vrot.lane.b32.xlu0 %v1080, 11
      %v1326 = vpop.permute.xlu0 %1325
      %1327 = vrot.lane.b32.xlu0 %v1082, 11
      %v1328 = vpop.permute.xlu0 %1327
      %v1331 = vmul.f32 %v207, %v1326
      %v1332 = vmul.f32 %v208, %v1328
      %v1333 = vmin.f32 %v1331, %v1095
      %v1334 = vmin.f32 %v1332, %v1096
      %v1335 = vmul.f32 %v215, %v1333
      %v1336 = vmul.f32 %v215, %v1334
      %1339 = vrot.lane.b32.xlu0 %v1335, 117
      %v1340 = vpop.permute.xlu0 %1339
      %1341 = vrot.lane.b32.xlu0 %v1336, 117
      %v1342 = vpop.permute.xlu0 %1341
      %v1345 = vadd.f32 %v1323, %v1340
      %v1346 = vadd.f32 %v1324, %v1342
      %1347 = vrot.lane.b32.xlu0 %v1080, 12
      %v1348 = vpop.permute.xlu0 %1347
      %1349 = vrot.lane.b32.xlu0 %v1082, 12
      %v1350 = vpop.permute.xlu0 %1349
      %v1353 = vmul.f32 %v207, %v1348
      %v1354 = vmul.f32 %v208, %v1350
      %v1355 = vmin.f32 %v1353, %v1095
      %v1356 = vmin.f32 %v1354, %v1096
      %v1357 = vmul.f32 %v215, %v1355
      %v1358 = vmul.f32 %v215, %v1356
      %1361 = vrot.lane.b32.xlu0 %v1357, 116
      %v1362 = vpop.permute.xlu0 %1361
      %1363 = vrot.lane.b32.xlu0 %v1358, 116
      %v1364 = vpop.permute.xlu0 %1363
      %v1367 = vadd.f32 %v1345, %v1362
      %v1368 = vadd.f32 %v1346, %v1364
      %1369 = vrot.lane.b32.xlu0 %v1080, 13
      %v1370 = vpop.permute.xlu0 %1369
      %1371 = vrot.lane.b32.xlu0 %v1082, 13
      %v1372 = vpop.permute.xlu0 %1371
      %v1375 = vmul.f32 %v207, %v1370
      %v1376 = vmul.f32 %v208, %v1372
      %v1377 = vmin.f32 %v1375, %v1095
      %v1378 = vmin.f32 %v1376, %v1096
      %v1379 = vmul.f32 %v215, %v1377
      %v1380 = vmul.f32 %v215, %v1378
      %1383 = vrot.lane.b32.xlu0 %v1379, 115
      %v1384 = vpop.permute.xlu0 %1383
      %1385 = vrot.lane.b32.xlu0 %v1380, 115
      %v1386 = vpop.permute.xlu0 %1385
      %v1389 = vadd.f32 %v1367, %v1384
      %v1390 = vadd.f32 %v1368, %v1386
      %1391 = vrot.lane.b32.xlu0 %v1080, 14
      %v1392 = vpop.permute.xlu0 %1391
      %1393 = vrot.lane.b32.xlu0 %v1082, 14
      %v1394 = vpop.permute.xlu0 %1393
      %v1397 = vmul.f32 %v207, %v1392
      %v1398 = vmul.f32 %v208, %v1394
      %v1399 = vmin.f32 %v1397, %v1095
      %v1400 = vmin.f32 %v1398, %v1096
      %v1401 = vmul.f32 %v215, %v1399
      %v1402 = vmul.f32 %v215, %v1400
      %1405 = vrot.lane.b32.xlu0 %v1401, 114
      %v1406 = vpop.permute.xlu0 %1405
      %1407 = vrot.lane.b32.xlu0 %v1402, 114
      %v1408 = vpop.permute.xlu0 %1407
      %v1411 = vadd.f32 %v1389, %v1406
      %v1412 = vadd.f32 %v1390, %v1408
      %1413 = vrot.lane.b32.xlu0 %v1080, 15
      %v1414 = vpop.permute.xlu0 %1413
      %1415 = vrot.lane.b32.xlu0 %v1082, 15
      %v1416 = vpop.permute.xlu0 %1415
      %v1419 = vmul.f32 %v207, %v1414
      %v1420 = vmul.f32 %v208, %v1416
      %v1421 = vmin.f32 %v1419, %v1095
      %v1422 = vmin.f32 %v1420, %v1096
      %v1423 = vmul.f32 %v215, %v1421
      %v1424 = vmul.f32 %v215, %v1422
      %1427 = vrot.lane.b32.xlu0 %v1423, 113
      %v1428 = vpop.permute.xlu0 %1427
      %1429 = vrot.lane.b32.xlu0 %v1424, 113
      %v1430 = vpop.permute.xlu0 %1429
      %v1433 = vadd.f32 %v1411, %v1428
      %v1434 = vadd.f32 %v1412, %v1430
      %1435 = vrot.lane.b32.xlu0 %v1080, 16
      %v1436 = vpop.permute.xlu0 %1435
      %1437 = vrot.lane.b32.xlu0 %v1082, 16
      %v1438 = vpop.permute.xlu0 %1437
      %v1441 = vmul.f32 %v207, %v1436
      %v1442 = vmul.f32 %v208, %v1438
      %v1443 = vmin.f32 %v1441, %v1095
      %v1444 = vmin.f32 %v1442, %v1096
      %v1445 = vmul.f32 %v215, %v1443
      %v1446 = vmul.f32 %v215, %v1444
      %1449 = vrot.lane.b32.xlu0 %v1445, 112
      %v1450 = vpop.permute.xlu0 %1449
      %1451 = vrot.lane.b32.xlu0 %v1446, 112
      %v1452 = vpop.permute.xlu0 %1451
      %v1455 = vadd.f32 %v1433, %v1450
      %v1456 = vadd.f32 %v1434, %v1452
      %1457 = vrot.lane.b32.xlu0 %v1080, 17
      %v1458 = vpop.permute.xlu0 %1457
      %1459 = vrot.lane.b32.xlu0 %v1082, 17
      %v1460 = vpop.permute.xlu0 %1459
      %v1463 = vmul.f32 %v207, %v1458
      %v1464 = vmul.f32 %v208, %v1460
      %v1465 = vmin.f32 %v1463, %v1095
      %v1466 = vmin.f32 %v1464, %v1096
      %v1467 = vmul.f32 %v215, %v1465
      %v1468 = vmul.f32 %v215, %v1466
      %1471 = vrot.lane.b32.xlu0 %v1467, 111
      %v1472 = vpop.permute.xlu0 %1471
      %1473 = vrot.lane.b32.xlu0 %v1468, 111
      %v1474 = vpop.permute.xlu0 %1473
      %v1477 = vadd.f32 %v1455, %v1472
      %v1478 = vadd.f32 %v1456, %v1474
      %1479 = vrot.lane.b32.xlu0 %v1080, 18
      %v1480 = vpop.permute.xlu0 %1479
      %1481 = vrot.lane.b32.xlu0 %v1082, 18
      %v1482 = vpop.permute.xlu0 %1481
      %v1485 = vmul.f32 %v207, %v1480
      %v1486 = vmul.f32 %v208, %v1482
      %v1487 = vmin.f32 %v1485, %v1095
      %v1488 = vmin.f32 %v1486, %v1096
      %v1489 = vmul.f32 %v215, %v1487
      %v1490 = vmul.f32 %v215, %v1488
      %1493 = vrot.lane.b32.xlu0 %v1489, 110
      %v1494 = vpop.permute.xlu0 %1493
      %1495 = vrot.lane.b32.xlu0 %v1490, 110
      %v1496 = vpop.permute.xlu0 %1495
      %v1499 = vadd.f32 %v1477, %v1494
      %v1500 = vadd.f32 %v1478, %v1496
      %1501 = vrot.lane.b32.xlu0 %v1080, 19
      %v1502 = vpop.permute.xlu0 %1501
      %1503 = vrot.lane.b32.xlu0 %v1082, 19
      %v1504 = vpop.permute.xlu0 %1503
      %v1507 = vmul.f32 %v207, %v1502
      %v1508 = vmul.f32 %v208, %v1504
      %v1509 = vmin.f32 %v1507, %v1095
      %v1510 = vmin.f32 %v1508, %v1096
      %v1511 = vmul.f32 %v215, %v1509
      %v1512 = vmul.f32 %v215, %v1510
      %1515 = vrot.lane.b32.xlu0 %v1511, 109
      %v1516 = vpop.permute.xlu0 %1515
      %1517 = vrot.lane.b32.xlu0 %v1512, 109
      %v1518 = vpop.permute.xlu0 %1517
      %v1521 = vadd.f32 %v1499, %v1516
      %v1522 = vadd.f32 %v1500, %v1518
      %1523 = vrot.lane.b32.xlu0 %v1080, 20
      %v1524 = vpop.permute.xlu0 %1523
      %1525 = vrot.lane.b32.xlu0 %v1082, 20
      %v1526 = vpop.permute.xlu0 %1525
      %v1529 = vmul.f32 %v207, %v1524
      %v1530 = vmul.f32 %v208, %v1526
      %v1531 = vmin.f32 %v1529, %v1095
      %v1532 = vmin.f32 %v1530, %v1096
      %v1533 = vmul.f32 %v215, %v1531
      %v1534 = vmul.f32 %v215, %v1532
      %1537 = vrot.lane.b32.xlu0 %v1533, 108
      %v1538 = vpop.permute.xlu0 %1537
      %1539 = vrot.lane.b32.xlu0 %v1534, 108
      %v1540 = vpop.permute.xlu0 %1539
      %v1543 = vadd.f32 %v1521, %v1538
      %v1544 = vadd.f32 %v1522, %v1540
      %1545 = vrot.lane.b32.xlu0 %v1080, 21
      %v1546 = vpop.permute.xlu0 %1545
      %1547 = vrot.lane.b32.xlu0 %v1082, 21
      %v1548 = vpop.permute.xlu0 %1547
      %v1551 = vmul.f32 %v207, %v1546
      %v1552 = vmul.f32 %v208, %v1548
      %v1553 = vmin.f32 %v1551, %v1095
      %v1554 = vmin.f32 %v1552, %v1096
      %v1555 = vmul.f32 %v215, %v1553
      %v1556 = vmul.f32 %v215, %v1554
      %1559 = vrot.lane.b32.xlu0 %v1555, 107
      %v1560 = vpop.permute.xlu0 %1559
      %1561 = vrot.lane.b32.xlu0 %v1556, 107
      %v1562 = vpop.permute.xlu0 %1561
      %v1565 = vadd.f32 %v1543, %v1560
      %v1566 = vadd.f32 %v1544, %v1562
      %1567 = vrot.lane.b32.xlu0 %v1080, 22
      %v1568 = vpop.permute.xlu0 %1567
      %1569 = vrot.lane.b32.xlu0 %v1082, 22
      %v1570 = vpop.permute.xlu0 %1569
      %v1573 = vmul.f32 %v207, %v1568
      %v1574 = vmul.f32 %v208, %v1570
      %v1575 = vmin.f32 %v1573, %v1095
      %v1576 = vmin.f32 %v1574, %v1096
      %v1577 = vmul.f32 %v215, %v1575
      %v1578 = vmul.f32 %v215, %v1576
      %1581 = vrot.lane.b32.xlu0 %v1577, 106
      %v1582 = vpop.permute.xlu0 %1581
      %1583 = vrot.lane.b32.xlu0 %v1578, 106
      %v1584 = vpop.permute.xlu0 %1583
      %v1587 = vadd.f32 %v1565, %v1582
      %v1588 = vadd.f32 %v1566, %v1584
      %1589 = vrot.lane.b32.xlu0 %v1080, 23
      %v1590 = vpop.permute.xlu0 %1589
      %1591 = vrot.lane.b32.xlu0 %v1082, 23
      %v1592 = vpop.permute.xlu0 %1591
      %v1595 = vmul.f32 %v207, %v1590
      %v1596 = vmul.f32 %v208, %v1592
      %v1597 = vmin.f32 %v1595, %v1095
      %v1598 = vmin.f32 %v1596, %v1096
      %v1599 = vmul.f32 %v215, %v1597
      %v1600 = vmul.f32 %v215, %v1598
      %1603 = vrot.lane.b32.xlu0 %v1599, 105
      %v1604 = vpop.permute.xlu0 %1603
      %1605 = vrot.lane.b32.xlu0 %v1600, 105
      %v1606 = vpop.permute.xlu0 %1605
      %v1609 = vadd.f32 %v1587, %v1604
      %v1610 = vadd.f32 %v1588, %v1606
      %1611 = vrot.lane.b32.xlu0 %v1080, 24
      %v1612 = vpop.permute.xlu0 %1611
      %1613 = vrot.lane.b32.xlu0 %v1082, 24
      %v1614 = vpop.permute.xlu0 %1613
      %v1617 = vmul.f32 %v207, %v1612
      %v1618 = vmul.f32 %v208, %v1614
      %v1619 = vmin.f32 %v1617, %v1095
      %v1620 = vmin.f32 %v1618, %v1096
      %v1621 = vmul.f32 %v215, %v1619
      %v1622 = vmul.f32 %v215, %v1620
      %1625 = vrot.lane.b32.xlu0 %v1621, 104
      %v1626 = vpop.permute.xlu0 %1625
      %1627 = vrot.lane.b32.xlu0 %v1622, 104
      %v1628 = vpop.permute.xlu0 %1627
      %v1631 = vadd.f32 %v1609, %v1626
      %v1632 = vadd.f32 %v1610, %v1628
      %1633 = vrot.lane.b32.xlu0 %v1080, 25
      %v1634 = vpop.permute.xlu0 %1633
      %1635 = vrot.lane.b32.xlu0 %v1082, 25
      %v1636 = vpop.permute.xlu0 %1635
      %v1639 = vmul.f32 %v207, %v1634
      %v1640 = vmul.f32 %v208, %v1636
      %v1641 = vmin.f32 %v1639, %v1095
      %v1642 = vmin.f32 %v1640, %v1096
      %v1643 = vmul.f32 %v215, %v1641
      %v1644 = vmul.f32 %v215, %v1642
      %1647 = vrot.lane.b32.xlu0 %v1643, 103
      %v1648 = vpop.permute.xlu0 %1647
      %1649 = vrot.lane.b32.xlu0 %v1644, 103
      %v1650 = vpop.permute.xlu0 %1649
      %v1653 = vadd.f32 %v1631, %v1648
      %v1654 = vadd.f32 %v1632, %v1650
      %1655 = vrot.lane.b32.xlu0 %v1080, 26
      %v1656 = vpop.permute.xlu0 %1655
      %1657 = vrot.lane.b32.xlu0 %v1082, 26
      %v1658 = vpop.permute.xlu0 %1657
      %v1661 = vmul.f32 %v207, %v1656
      %v1662 = vmul.f32 %v208, %v1658
      %v1663 = vmin.f32 %v1661, %v1095
      %v1664 = vmin.f32 %v1662, %v1096
      %v1665 = vmul.f32 %v215, %v1663
      %v1666 = vmul.f32 %v215, %v1664
      %1669 = vrot.lane.b32.xlu0 %v1665, 102
      %v1670 = vpop.permute.xlu0 %1669
      %1671 = vrot.lane.b32.xlu0 %v1666, 102
      %v1672 = vpop.permute.xlu0 %1671
      %v1675 = vadd.f32 %v1653, %v1670
      %v1676 = vadd.f32 %v1654, %v1672
      %1677 = vrot.lane.b32.xlu0 %v1080, 27
      %v1678 = vpop.permute.xlu0 %1677
      %1679 = vrot.lane.b32.xlu0 %v1082, 27
      %v1680 = vpop.permute.xlu0 %1679
      %v1683 = vmul.f32 %v207, %v1678
      %v1684 = vmul.f32 %v208, %v1680
      %v1685 = vmin.f32 %v1683, %v1095
      %v1686 = vmin.f32 %v1684, %v1096
      %v1687 = vmul.f32 %v215, %v1685
      %v1688 = vmul.f32 %v215, %v1686
      %1691 = vrot.lane.b32.xlu0 %v1687, 101
      %v1692 = vpop.permute.xlu0 %1691
      %1693 = vrot.lane.b32.xlu0 %v1688, 101
      %v1694 = vpop.permute.xlu0 %1693
      %v1697 = vadd.f32 %v1675, %v1692
      %v1698 = vadd.f32 %v1676, %v1694
      %1699 = vrot.lane.b32.xlu0 %v1080, 28
      %v1700 = vpop.permute.xlu0 %1699
      %1701 = vrot.lane.b32.xlu0 %v1082, 28
      %v1702 = vpop.permute.xlu0 %1701
      %v1705 = vmul.f32 %v207, %v1700
      %v1706 = vmul.f32 %v208, %v1702
      %v1707 = vmin.f32 %v1705, %v1095
      %v1708 = vmin.f32 %v1706, %v1096
      %v1709 = vmul.f32 %v215, %v1707
      %v1710 = vmul.f32 %v215, %v1708
      %1713 = vrot.lane.b32.xlu0 %v1709, 100
      %v1714 = vpop.permute.xlu0 %1713
      %1715 = vrot.lane.b32.xlu0 %v1710, 100
      %v1716 = vpop.permute.xlu0 %1715
      %v1719 = vadd.f32 %v1697, %v1714
      %v1720 = vadd.f32 %v1698, %v1716
      %1721 = vrot.lane.b32.xlu0 %v1080, 29
      %v1722 = vpop.permute.xlu0 %1721
      %1723 = vrot.lane.b32.xlu0 %v1082, 29
      %v1724 = vpop.permute.xlu0 %1723
      %v1727 = vmul.f32 %v207, %v1722
      %v1728 = vmul.f32 %v208, %v1724
      %v1729 = vmin.f32 %v1727, %v1095
      %v1730 = vmin.f32 %v1728, %v1096
      %v1731 = vmul.f32 %v215, %v1729
      %v1732 = vmul.f32 %v215, %v1730
      %1735 = vrot.lane.b32.xlu0 %v1731, 99
      %v1736 = vpop.permute.xlu0 %1735
      %1737 = vrot.lane.b32.xlu0 %v1732, 99
      %v1738 = vpop.permute.xlu0 %1737
      %v1741 = vadd.f32 %v1719, %v1736
      %v1742 = vadd.f32 %v1720, %v1738
      %v1743 = vmul.f32 %v1741, %v1090
      %v1744 = vmul.f32 %v1742, %v1090
      %v1745 = vsub.f32 %v205, %v1091
      %v1746 = vsub.f32 %v206, %v1092
      %v1747 = vsub.f32 %v1097, %v1743
      %v1748 = vsub.f32 %v1098, %v1744
      %v1749 = vmul.f32 %v215, %v1745
      %v1750 = vmul.f32 %v215, %v1746
      %v1751 = vmul.f32 %v1749, %v1747
      %v1752 = vmul.f32 %v1750, %v1748
      %v1753 = vadd.f32 %v1751, 0.0
      %v1754 = vadd.f32 %v1752, 0.0
      %v1755 = vmul.f32 %v1749, %v1745
      %v1756 = vmul.f32 %v1750, %v1746
      %v1757 = vadd.f32 %v1755, 0.0
      %v1758 = vadd.f32 %v1756, 0.0
      %v1759 = vmul.f32 %v215, %v1747
      %v1760 = vmul.f32 %v215, %v1748
      %v1761 = vmul.f32 %v1759, %v1747
      %v1762 = vmul.f32 %v1760, %v1748
      %v1763 = vadd.f32 %v1761, 0.0
      %v1764 = vadd.f32 %v1762, 0.0
      %1767 = vrot.lane.b32.xlu0 %v1091, 1
      %v1768 = vpop.permute.xlu0 %1767
      %1769 = vrot.lane.b32.xlu0 %v1092, 1
      %v1770 = vpop.permute.xlu0 %1769
      %v1773 = vsub.f32 %v205, %v1768
      %v1774 = vsub.f32 %v206, %v1770
      %1777 = vrot.lane.b32.xlu0 %v1743, 1
      %v1778 = vpop.permute.xlu0 %1777
      %1779 = vrot.lane.b32.xlu0 %v1744, 1
      %v1780 = vpop.permute.xlu0 %1779
      %v1783 = vsub.f32 %v1113, %v1778
      %v1784 = vsub.f32 %v1114, %v1780
      %v1785 = vmul.f32 %v215, %v1773
      %v1786 = vmul.f32 %v215, %v1774
      %v1787 = vmul.f32 %v1785, %v1783
      %v1788 = vmul.f32 %v1786, %v1784
      %1791 = vrot.lane.b32.xlu0 %v1787, 127
      %v1792 = vpop.permute.xlu0 %1791
      %1793 = vrot.lane.b32.xlu0 %v1788, 127
      %v1794 = vpop.permute.xlu0 %1793
      %v1797 = vadd.f32 %v1753, %v1792
      %v1798 = vadd.f32 %v1754, %v1794
      %v1799 = vmul.f32 %v1785, %v1773
      %v1800 = vmul.f32 %v1786, %v1774
      %1803 = vrot.lane.b32.xlu0 %v1799, 127
      %v1804 = vpop.permute.xlu0 %1803
      %1805 = vrot.lane.b32.xlu0 %v1800, 127
      %v1806 = vpop.permute.xlu0 %1805
      %v1809 = vadd.f32 %v1757, %v1804
      %v1810 = vadd.f32 %v1758, %v1806
      %v1811 = vmul.f32 %v215, %v1783
      %v1812 = vmul.f32 %v215, %v1784
      %v1813 = vmul.f32 %v1811, %v1783
      %v1814 = vmul.f32 %v1812, %v1784
      %1817 = vrot.lane.b32.xlu0 %v1813, 127
      %v1818 = vpop.permute.xlu0 %1817
      %1819 = vrot.lane.b32.xlu0 %v1814, 127
      %v1820 = vpop.permute.xlu0 %1819
      %v1823 = vadd.f32 %v1763, %v1818
      %v1824 = vadd.f32 %v1764, %v1820
      %1825 = vrot.lane.b32.xlu0 %v1091, 2
      %v1826 = vpop.permute.xlu0 %1825
      %1827 = vrot.lane.b32.xlu0 %v1092, 2
      %v1828 = vpop.permute.xlu0 %1827
      %v1831 = vsub.f32 %v205, %v1826
      %v1832 = vsub.f32 %v206, %v1828
      %1833 = vrot.lane.b32.xlu0 %v1743, 2
      %v1834 = vpop.permute.xlu0 %1833
      %1835 = vrot.lane.b32.xlu0 %v1744, 2
      %v1836 = vpop.permute.xlu0 %1835
      %v1839 = vsub.f32 %v1135, %v1834
      %v1840 = vsub.f32 %v1136, %v1836
      %v1841 = vmul.f32 %v215, %v1831
      %v1842 = vmul.f32 %v215, %v1832
      %v1843 = vmul.f32 %v1841, %v1839
      %v1844 = vmul.f32 %v1842, %v1840
      %1847 = vrot.lane.b32.xlu0 %v1843, 126
      %v1848 = vpop.permute.xlu0 %1847
      %1849 = vrot.lane.b32.xlu0 %v1844, 126
      %v1850 = vpop.permute.xlu0 %1849
      %v1853 = vadd.f32 %v1797, %v1848
      %v1854 = vadd.f32 %v1798, %v1850
      %v1855 = vmul.f32 %v1841, %v1831
      %v1856 = vmul.f32 %v1842, %v1832
      %1859 = vrot.lane.b32.xlu0 %v1855, 126
      %v1860 = vpop.permute.xlu0 %1859
      %1861 = vrot.lane.b32.xlu0 %v1856, 126
      %v1862 = vpop.permute.xlu0 %1861
      %v1865 = vadd.f32 %v1809, %v1860
      %v1866 = vadd.f32 %v1810, %v1862
      %v1867 = vmul.f32 %v215, %v1839
      %v1868 = vmul.f32 %v215, %v1840
      %v1869 = vmul.f32 %v1867, %v1839
      %v1870 = vmul.f32 %v1868, %v1840
      %1873 = vrot.lane.b32.xlu0 %v1869, 126
      %v1874 = vpop.permute.xlu0 %1873
      %1875 = vrot.lane.b32.xlu0 %v1870, 126
      %v1876 = vpop.permute.xlu0 %1875
      %v1879 = vadd.f32 %v1823, %v1874
      %v1880 = vadd.f32 %v1824, %v1876
      %1881 = vrot.lane.b32.xlu0 %v1091, 3
      %v1882 = vpop.permute.xlu0 %1881
      %1883 = vrot.lane.b32.xlu0 %v1092, 3
      %v1884 = vpop.permute.xlu0 %1883
      %v1887 = vsub.f32 %v205, %v1882
      %v1888 = vsub.f32 %v206, %v1884
      %1889 = vrot.lane.b32.xlu0 %v1743, 3
      %v1890 = vpop.permute.xlu0 %1889
      %1891 = vrot.lane.b32.xlu0 %v1744, 3
      %v1892 = vpop.permute.xlu0 %1891
      %v1895 = vsub.f32 %v1157, %v1890
      %v1896 = vsub.f32 %v1158, %v1892
      %v1897 = vmul.f32 %v215, %v1887
      %v1898 = vmul.f32 %v215, %v1888
      %v1899 = vmul.f32 %v1897, %v1895
      %v1900 = vmul.f32 %v1898, %v1896
      %1903 = vrot.lane.b32.xlu0 %v1899, 125
      %v1904 = vpop.permute.xlu0 %1903
      %1905 = vrot.lane.b32.xlu0 %v1900, 125
      %v1906 = vpop.permute.xlu0 %1905
      %v1909 = vadd.f32 %v1853, %v1904
      %v1910 = vadd.f32 %v1854, %v1906
      %v1911 = vmul.f32 %v1897, %v1887
      %v1912 = vmul.f32 %v1898, %v1888
      %1915 = vrot.lane.b32.xlu0 %v1911, 125
      %v1916 = vpop.permute.xlu0 %1915
      %1917 = vrot.lane.b32.xlu0 %v1912, 125
      %v1918 = vpop.permute.xlu0 %1917
      %v1921 = vadd.f32 %v1865, %v1916
      %v1922 = vadd.f32 %v1866, %v1918
      %v1923 = vmul.f32 %v215, %v1895
      %v1924 = vmul.f32 %v215, %v1896
      %v1925 = vmul.f32 %v1923, %v1895
      %v1926 = vmul.f32 %v1924, %v1896
      %1929 = vrot.lane.b32.xlu0 %v1925, 125
      %v1930 = vpop.permute.xlu0 %1929
      %1931 = vrot.lane.b32.xlu0 %v1926, 125
      %v1932 = vpop.permute.xlu0 %1931
      %v1935 = vadd.f32 %v1879, %v1930
      %v1936 = vadd.f32 %v1880, %v1932
      %1937 = vrot.lane.b32.xlu0 %v1091, 4
      %v1938 = vpop.permute.xlu0 %1937
      %1939 = vrot.lane.b32.xlu0 %v1092, 4
      %v1940 = vpop.permute.xlu0 %1939
      %v1943 = vsub.f32 %v205, %v1938
      %v1944 = vsub.f32 %v206, %v1940
      %1945 = vrot.lane.b32.xlu0 %v1743, 4
      %v1946 = vpop.permute.xlu0 %1945
      %1947 = vrot.lane.b32.xlu0 %v1744, 4
      %v1948 = vpop.permute.xlu0 %1947
      %v1951 = vsub.f32 %v1179, %v1946
      %v1952 = vsub.f32 %v1180, %v1948
      %v1953 = vmul.f32 %v215, %v1943
      %v1954 = vmul.f32 %v215, %v1944
      %v1955 = vmul.f32 %v1953, %v1951
      %v1956 = vmul.f32 %v1954, %v1952
      %1959 = vrot.lane.b32.xlu0 %v1955, 124
      %v1960 = vpop.permute.xlu0 %1959
      %1961 = vrot.lane.b32.xlu0 %v1956, 124
      %v1962 = vpop.permute.xlu0 %1961
      %v1965 = vadd.f32 %v1909, %v1960
      %v1966 = vadd.f32 %v1910, %v1962
      %v1967 = vmul.f32 %v1953, %v1943
      %v1968 = vmul.f32 %v1954, %v1944
      %1971 = vrot.lane.b32.xlu0 %v1967, 124
      %v1972 = vpop.permute.xlu0 %1971
      %1973 = vrot.lane.b32.xlu0 %v1968, 124
      %v1974 = vpop.permute.xlu0 %1973
      %v1977 = vadd.f32 %v1921, %v1972
      %v1978 = vadd.f32 %v1922, %v1974
      %v1979 = vmul.f32 %v215, %v1951
      %v1980 = vmul.f32 %v215, %v1952
      %v1981 = vmul.f32 %v1979, %v1951
      %v1982 = vmul.f32 %v1980, %v1952
      %1985 = vrot.lane.b32.xlu0 %v1981, 124
      %v1986 = vpop.permute.xlu0 %1985
      %1987 = vrot.lane.b32.xlu0 %v1982, 124
      %v1988 = vpop.permute.xlu0 %1987
      %v1991 = vadd.f32 %v1935, %v1986
      %v1992 = vadd.f32 %v1936, %v1988
      %1993 = vrot.lane.b32.xlu0 %v1091, 5
      %v1994 = vpop.permute.xlu0 %1993
      %1995 = vrot.lane.b32.xlu0 %v1092, 5
      %v1996 = vpop.permute.xlu0 %1995
      %v1999 = vsub.f32 %v205, %v1994
      %v2000 = vsub.f32 %v206, %v1996
      %2001 = vrot.lane.b32.xlu0 %v1743, 5
      %v2002 = vpop.permute.xlu0 %2001
      %2003 = vrot.lane.b32.xlu0 %v1744, 5
      %v2004 = vpop.permute.xlu0 %2003
      %v2007 = vsub.f32 %v1201, %v2002
      %v2008 = vsub.f32 %v1202, %v2004
      %v2009 = vmul.f32 %v215, %v1999
      %v2010 = vmul.f32 %v215, %v2000
      %v2011 = vmul.f32 %v2009, %v2007
      %v2012 = vmul.f32 %v2010, %v2008
      %2015 = vrot.lane.b32.xlu0 %v2011, 123
      %v2016 = vpop.permute.xlu0 %2015
      %2017 = vrot.lane.b32.xlu0 %v2012, 123
      %v2018 = vpop.permute.xlu0 %2017
      %v2021 = vadd.f32 %v1965, %v2016
      %v2022 = vadd.f32 %v1966, %v2018
      %v2023 = vmul.f32 %v2009, %v1999
      %v2024 = vmul.f32 %v2010, %v2000
      %2027 = vrot.lane.b32.xlu0 %v2023, 123
      %v2028 = vpop.permute.xlu0 %2027
      %2029 = vrot.lane.b32.xlu0 %v2024, 123
      %v2030 = vpop.permute.xlu0 %2029
      %v2033 = vadd.f32 %v1977, %v2028
      %v2034 = vadd.f32 %v1978, %v2030
      %v2035 = vmul.f32 %v215, %v2007
      %v2036 = vmul.f32 %v215, %v2008
      %v2037 = vmul.f32 %v2035, %v2007
      %v2038 = vmul.f32 %v2036, %v2008
      %2041 = vrot.lane.b32.xlu0 %v2037, 123
      %v2042 = vpop.permute.xlu0 %2041
      %2043 = vrot.lane.b32.xlu0 %v2038, 123
      %v2044 = vpop.permute.xlu0 %2043
      %v2047 = vadd.f32 %v1991, %v2042
      %v2048 = vadd.f32 %v1992, %v2044
      %2049 = vrot.lane.b32.xlu0 %v1091, 6
      %v2050 = vpop.permute.xlu0 %2049
      %2051 = vrot.lane.b32.xlu0 %v1092, 6
      %v2052 = vpop.permute.xlu0 %2051
      %v2055 = vsub.f32 %v205, %v2050
      %v2056 = vsub.f32 %v206, %v2052
      %2057 = vrot.lane.b32.xlu0 %v1743, 6
      %v2058 = vpop.permute.xlu0 %2057
      %2059 = vrot.lane.b32.xlu0 %v1744, 6
      %v2060 = vpop.permute.xlu0 %2059
      %v2063 = vsub.f32 %v1223, %v2058
      %v2064 = vsub.f32 %v1224, %v2060
      %v2065 = vmul.f32 %v215, %v2055
      %v2066 = vmul.f32 %v215, %v2056
      %v2067 = vmul.f32 %v2065, %v2063
      %v2068 = vmul.f32 %v2066, %v2064
      %2071 = vrot.lane.b32.xlu0 %v2067, 122
      %v2072 = vpop.permute.xlu0 %2071
      %2073 = vrot.lane.b32.xlu0 %v2068, 122
      %v2074 = vpop.permute.xlu0 %2073
      %v2077 = vadd.f32 %v2021, %v2072
      %v2078 = vadd.f32 %v2022, %v2074
      %v2079 = vmul.f32 %v2065, %v2055
      %v2080 = vmul.f32 %v2066, %v2056
      %2083 = vrot.lane.b32.xlu0 %v2079, 122
      %v2084 = vpop.permute.xlu0 %2083
      %2085 = vrot.lane.b32.xlu0 %v2080, 122
      %v2086 = vpop.permute.xlu0 %2085
      %v2089 = vadd.f32 %v2033, %v2084
      %v2090 = vadd.f32 %v2034, %v2086
      %v2091 = vmul.f32 %v215, %v2063
      %v2092 = vmul.f32 %v215, %v2064
      %v2093 = vmul.f32 %v2091, %v2063
      %v2094 = vmul.f32 %v2092, %v2064
      %2097 = vrot.lane.b32.xlu0 %v2093, 122
      %v2098 = vpop.permute.xlu0 %2097
      %2099 = vrot.lane.b32.xlu0 %v2094, 122
      %v2100 = vpop.permute.xlu0 %2099
      %v2103 = vadd.f32 %v2047, %v2098
      %v2104 = vadd.f32 %v2048, %v2100
      %2105 = vrot.lane.b32.xlu0 %v1091, 7
      %v2106 = vpop.permute.xlu0 %2105
      %2107 = vrot.lane.b32.xlu0 %v1092, 7
      %v2108 = vpop.permute.xlu0 %2107
      %v2111 = vsub.f32 %v205, %v2106
      %v2112 = vsub.f32 %v206, %v2108
      %2113 = vrot.lane.b32.xlu0 %v1743, 7
      %v2114 = vpop.permute.xlu0 %2113
      %2115 = vrot.lane.b32.xlu0 %v1744, 7
      %v2116 = vpop.permute.xlu0 %2115
      %v2119 = vsub.f32 %v1245, %v2114
      %v2120 = vsub.f32 %v1246, %v2116
      %v2121 = vmul.f32 %v215, %v2111
      %v2122 = vmul.f32 %v215, %v2112
      %v2123 = vmul.f32 %v2121, %v2119
      %v2124 = vmul.f32 %v2122, %v2120
      %2127 = vrot.lane.b32.xlu0 %v2123, 121
      %v2128 = vpop.permute.xlu0 %2127
      %2129 = vrot.lane.b32.xlu0 %v2124, 121
      %v2130 = vpop.permute.xlu0 %2129
      %v2133 = vadd.f32 %v2077, %v2128
      %v2134 = vadd.f32 %v2078, %v2130
      %v2135 = vmul.f32 %v2121, %v2111
      %v2136 = vmul.f32 %v2122, %v2112
      %2139 = vrot.lane.b32.xlu0 %v2135, 121
      %v2140 = vpop.permute.xlu0 %2139
      %2141 = vrot.lane.b32.xlu0 %v2136, 121
      %v2142 = vpop.permute.xlu0 %2141
      %v2145 = vadd.f32 %v2089, %v2140
      %v2146 = vadd.f32 %v2090, %v2142
      %v2147 = vmul.f32 %v215, %v2119
      %v2148 = vmul.f32 %v215, %v2120
      %v2149 = vmul.f32 %v2147, %v2119
      %v2150 = vmul.f32 %v2148, %v2120
      %2153 = vrot.lane.b32.xlu0 %v2149, 121
      %v2154 = vpop.permute.xlu0 %2153
      %2155 = vrot.lane.b32.xlu0 %v2150, 121
      %v2156 = vpop.permute.xlu0 %2155
      %v2159 = vadd.f32 %v2103, %v2154
      %v2160 = vadd.f32 %v2104, %v2156
      %2161 = vrot.lane.b32.xlu0 %v1091, 8
      %v2162 = vpop.permute.xlu0 %2161
      %2163 = vrot.lane.b32.xlu0 %v1092, 8
      %v2164 = vpop.permute.xlu0 %2163
      %v2167 = vsub.f32 %v205, %v2162
      %v2168 = vsub.f32 %v206, %v2164
      %2169 = vrot.lane.b32.xlu0 %v1743, 8
      %v2170 = vpop.permute.xlu0 %2169
      %2171 = vrot.lane.b32.xlu0 %v1744, 8
      %v2172 = vpop.permute.xlu0 %2171
      %v2175 = vsub.f32 %v1267, %v2170
      %v2176 = vsub.f32 %v1268, %v2172
      %v2177 = vmul.f32 %v215, %v2167
      %v2178 = vmul.f32 %v215, %v2168
      %v2179 = vmul.f32 %v2177, %v2175
      %v2180 = vmul.f32 %v2178, %v2176
      %2183 = vrot.lane.b32.xlu0 %v2179, 120
      %v2184 = vpop.permute.xlu0 %2183
      %2185 = vrot.lane.b32.xlu0 %v2180, 120
      %v2186 = vpop.permute.xlu0 %2185
      %v2189 = vadd.f32 %v2133, %v2184
      %v2190 = vadd.f32 %v2134, %v2186
      %v2191 = vmul.f32 %v2177, %v2167
      %v2192 = vmul.f32 %v2178, %v2168
      %2195 = vrot.lane.b32.xlu0 %v2191, 120
      %v2196 = vpop.permute.xlu0 %2195
      %2197 = vrot.lane.b32.xlu0 %v2192, 120
      %v2198 = vpop.permute.xlu0 %2197
      %v2201 = vadd.f32 %v2145, %v2196
      %v2202 = vadd.f32 %v2146, %v2198
      %v2203 = vmul.f32 %v215, %v2175
      %v2204 = vmul.f32 %v215, %v2176
      %v2205 = vmul.f32 %v2203, %v2175
      %v2206 = vmul.f32 %v2204, %v2176
      %2209 = vrot.lane.b32.xlu0 %v2205, 120
      %v2210 = vpop.permute.xlu0 %2209
      %2211 = vrot.lane.b32.xlu0 %v2206, 120
      %v2212 = vpop.permute.xlu0 %2211
      %v2215 = vadd.f32 %v2159, %v2210
      %v2216 = vadd.f32 %v2160, %v2212
      %2217 = vrot.lane.b32.xlu0 %v1091, 9
      %v2218 = vpop.permute.xlu0 %2217
      %2219 = vrot.lane.b32.xlu0 %v1092, 9
      %v2220 = vpop.permute.xlu0 %2219
      %v2223 = vsub.f32 %v205, %v2218
      %v2224 = vsub.f32 %v206, %v2220
      %2225 = vrot.lane.b32.xlu0 %v1743, 9
      %v2226 = vpop.permute.xlu0 %2225
      %2227 = vrot.lane.b32.xlu0 %v1744, 9
      %v2228 = vpop.permute.xlu0 %2227
      %v2231 = vsub.f32 %v1289, %v2226
      %v2232 = vsub.f32 %v1290, %v2228
      %v2233 = vmul.f32 %v215, %v2223
      %v2234 = vmul.f32 %v215, %v2224
      %v2235 = vmul.f32 %v2233, %v2231
      %v2236 = vmul.f32 %v2234, %v2232
      %2239 = vrot.lane.b32.xlu0 %v2235, 119
      %v2240 = vpop.permute.xlu0 %2239
      %2241 = vrot.lane.b32.xlu0 %v2236, 119
      %v2242 = vpop.permute.xlu0 %2241
      %v2245 = vadd.f32 %v2189, %v2240
      %v2246 = vadd.f32 %v2190, %v2242
      %v2247 = vmul.f32 %v2233, %v2223
      %v2248 = vmul.f32 %v2234, %v2224
      %2251 = vrot.lane.b32.xlu0 %v2247, 119
      %v2252 = vpop.permute.xlu0 %2251
      %2253 = vrot.lane.b32.xlu0 %v2248, 119
      %v2254 = vpop.permute.xlu0 %2253
      %v2257 = vadd.f32 %v2201, %v2252
      %v2258 = vadd.f32 %v2202, %v2254
      %v2259 = vmul.f32 %v215, %v2231
      %v2260 = vmul.f32 %v215, %v2232
      %v2261 = vmul.f32 %v2259, %v2231
      %v2262 = vmul.f32 %v2260, %v2232
      %2265 = vrot.lane.b32.xlu0 %v2261, 119
      %v2266 = vpop.permute.xlu0 %2265
      %2267 = vrot.lane.b32.xlu0 %v2262, 119
      %v2268 = vpop.permute.xlu0 %2267
      %v2271 = vadd.f32 %v2215, %v2266
      %v2272 = vadd.f32 %v2216, %v2268
      %2273 = vrot.lane.b32.xlu0 %v1091, 10
      %v2274 = vpop.permute.xlu0 %2273
      %2275 = vrot.lane.b32.xlu0 %v1092, 10
      %v2276 = vpop.permute.xlu0 %2275
      %v2279 = vsub.f32 %v205, %v2274
      %v2280 = vsub.f32 %v206, %v2276
      %2281 = vrot.lane.b32.xlu0 %v1743, 10
      %v2282 = vpop.permute.xlu0 %2281
      %2283 = vrot.lane.b32.xlu0 %v1744, 10
      %v2284 = vpop.permute.xlu0 %2283
      %v2287 = vsub.f32 %v1311, %v2282
      %v2288 = vsub.f32 %v1312, %v2284
      %v2289 = vmul.f32 %v215, %v2279
      %v2290 = vmul.f32 %v215, %v2280
      %v2291 = vmul.f32 %v2289, %v2287
      %v2292 = vmul.f32 %v2290, %v2288
      %2295 = vrot.lane.b32.xlu0 %v2291, 118
      %v2296 = vpop.permute.xlu0 %2295
      %2297 = vrot.lane.b32.xlu0 %v2292, 118
      %v2298 = vpop.permute.xlu0 %2297
      %v2301 = vadd.f32 %v2245, %v2296
      %v2302 = vadd.f32 %v2246, %v2298
      %v2303 = vmul.f32 %v2289, %v2279
      %v2304 = vmul.f32 %v2290, %v2280
      %2307 = vrot.lane.b32.xlu0 %v2303, 118
      %v2308 = vpop.permute.xlu0 %2307
      %2309 = vrot.lane.b32.xlu0 %v2304, 118
      %v2310 = vpop.permute.xlu0 %2309
      %v2313 = vadd.f32 %v2257, %v2308
      %v2314 = vadd.f32 %v2258, %v2310
      %v2315 = vmul.f32 %v215, %v2287
      %v2316 = vmul.f32 %v215, %v2288
      %v2317 = vmul.f32 %v2315, %v2287
      %v2318 = vmul.f32 %v2316, %v2288
      %2321 = vrot.lane.b32.xlu0 %v2317, 118
      %v2322 = vpop.permute.xlu0 %2321
      %2323 = vrot.lane.b32.xlu0 %v2318, 118
      %v2324 = vpop.permute.xlu0 %2323
      %v2327 = vadd.f32 %v2271, %v2322
      %v2328 = vadd.f32 %v2272, %v2324
      %2329 = vrot.lane.b32.xlu0 %v1091, 11
      %v2330 = vpop.permute.xlu0 %2329
      %2331 = vrot.lane.b32.xlu0 %v1092, 11
      %v2332 = vpop.permute.xlu0 %2331
      %v2335 = vsub.f32 %v205, %v2330
      %v2336 = vsub.f32 %v206, %v2332
      %2337 = vrot.lane.b32.xlu0 %v1743, 11
      %v2338 = vpop.permute.xlu0 %2337
      %2339 = vrot.lane.b32.xlu0 %v1744, 11
      %v2340 = vpop.permute.xlu0 %2339
      %v2343 = vsub.f32 %v1333, %v2338
      %v2344 = vsub.f32 %v1334, %v2340
      %v2345 = vmul.f32 %v215, %v2335
      %v2346 = vmul.f32 %v215, %v2336
      %v2347 = vmul.f32 %v2345, %v2343
      %v2348 = vmul.f32 %v2346, %v2344
      %2351 = vrot.lane.b32.xlu0 %v2347, 117
      %v2352 = vpop.permute.xlu0 %2351
      %2353 = vrot.lane.b32.xlu0 %v2348, 117
      %v2354 = vpop.permute.xlu0 %2353
      %v2357 = vadd.f32 %v2301, %v2352
      %v2358 = vadd.f32 %v2302, %v2354
      %v2359 = vmul.f32 %v2345, %v2335
      %v2360 = vmul.f32 %v2346, %v2336
      %2363 = vrot.lane.b32.xlu0 %v2359, 117
      %v2364 = vpop.permute.xlu0 %2363
      %2365 = vrot.lane.b32.xlu0 %v2360, 117
      %v2366 = vpop.permute.xlu0 %2365
      %v2369 = vadd.f32 %v2313, %v2364
      %v2370 = vadd.f32 %v2314, %v2366
      %v2371 = vmul.f32 %v215, %v2343
      %v2372 = vmul.f32 %v215, %v2344
      %v2373 = vmul.f32 %v2371, %v2343
      %v2374 = vmul.f32 %v2372, %v2344
      %2377 = vrot.lane.b32.xlu0 %v2373, 117
      %v2378 = vpop.permute.xlu0 %2377
      %2379 = vrot.lane.b32.xlu0 %v2374, 117
      %v2380 = vpop.permute.xlu0 %2379
      %v2383 = vadd.f32 %v2327, %v2378
      %v2384 = vadd.f32 %v2328, %v2380
      %2385 = vrot.lane.b32.xlu0 %v1091, 12
      %v2386 = vpop.permute.xlu0 %2385
      %2387 = vrot.lane.b32.xlu0 %v1092, 12
      %v2388 = vpop.permute.xlu0 %2387
      %v2391 = vsub.f32 %v205, %v2386
      %v2392 = vsub.f32 %v206, %v2388
      %2393 = vrot.lane.b32.xlu0 %v1743, 12
      %v2394 = vpop.permute.xlu0 %2393
      %2395 = vrot.lane.b32.xlu0 %v1744, 12
      %v2396 = vpop.permute.xlu0 %2395
      %v2399 = vsub.f32 %v1355, %v2394
      %v2400 = vsub.f32 %v1356, %v2396
      %v2401 = vmul.f32 %v215, %v2391
      %v2402 = vmul.f32 %v215, %v2392
      %v2403 = vmul.f32 %v2401, %v2399
      %v2404 = vmul.f32 %v2402, %v2400
      %2407 = vrot.lane.b32.xlu0 %v2403, 116
      %v2408 = vpop.permute.xlu0 %2407
      %2409 = vrot.lane.b32.xlu0 %v2404, 116
      %v2410 = vpop.permute.xlu0 %2409
      %v2413 = vadd.f32 %v2357, %v2408
      %v2414 = vadd.f32 %v2358, %v2410
      %v2415 = vmul.f32 %v2401, %v2391
      %v2416 = vmul.f32 %v2402, %v2392
      %2419 = vrot.lane.b32.xlu0 %v2415, 116
      %v2420 = vpop.permute.xlu0 %2419
      %2421 = vrot.lane.b32.xlu0 %v2416, 116
      %v2422 = vpop.permute.xlu0 %2421
      %v2425 = vadd.f32 %v2369, %v2420
      %v2426 = vadd.f32 %v2370, %v2422
      %v2427 = vmul.f32 %v215, %v2399
      %v2428 = vmul.f32 %v215, %v2400
      %v2429 = vmul.f32 %v2427, %v2399
      %v2430 = vmul.f32 %v2428, %v2400
      %2433 = vrot.lane.b32.xlu0 %v2429, 116
      %v2434 = vpop.permute.xlu0 %2433
      %2435 = vrot.lane.b32.xlu0 %v2430, 116
      %v2436 = vpop.permute.xlu0 %2435
      %v2439 = vadd.f32 %v2383, %v2434
      %v2440 = vadd.f32 %v2384, %v2436
      %2441 = vrot.lane.b32.xlu0 %v1091, 13
      %v2442 = vpop.permute.xlu0 %2441
      %2443 = vrot.lane.b32.xlu0 %v1092, 13
      %v2444 = vpop.permute.xlu0 %2443
      %v2447 = vsub.f32 %v205, %v2442
      %v2448 = vsub.f32 %v206, %v2444
      %2449 = vrot.lane.b32.xlu0 %v1743, 13
      %v2450 = vpop.permute.xlu0 %2449
      %2451 = vrot.lane.b32.xlu0 %v1744, 13
      %v2452 = vpop.permute.xlu0 %2451
      %v2455 = vsub.f32 %v1377, %v2450
      %v2456 = vsub.f32 %v1378, %v2452
      %v2457 = vmul.f32 %v215, %v2447
      %v2458 = vmul.f32 %v215, %v2448
      %v2459 = vmul.f32 %v2457, %v2455
      %v2460 = vmul.f32 %v2458, %v2456
      %2463 = vrot.lane.b32.xlu0 %v2459, 115
      %v2464 = vpop.permute.xlu0 %2463
      %2465 = vrot.lane.b32.xlu0 %v2460, 115
      %v2466 = vpop.permute.xlu0 %2465
      %v2469 = vadd.f32 %v2413, %v2464
      %v2470 = vadd.f32 %v2414, %v2466
      %v2471 = vmul.f32 %v2457, %v2447
      %v2472 = vmul.f32 %v2458, %v2448
      %2475 = vrot.lane.b32.xlu0 %v2471, 115
      %v2476 = vpop.permute.xlu0 %2475
      %2477 = vrot.lane.b32.xlu0 %v2472, 115
      %v2478 = vpop.permute.xlu0 %2477
      %v2481 = vadd.f32 %v2425, %v2476
      %v2482 = vadd.f32 %v2426, %v2478
      %v2483 = vmul.f32 %v215, %v2455
      %v2484 = vmul.f32 %v215, %v2456
      %v2485 = vmul.f32 %v2483, %v2455
      %v2486 = vmul.f32 %v2484, %v2456
      %2489 = vrot.lane.b32.xlu0 %v2485, 115
      %v2490 = vpop.permute.xlu0 %2489
      %2491 = vrot.lane.b32.xlu0 %v2486, 115
      %v2492 = vpop.permute.xlu0 %2491
      %v2495 = vadd.f32 %v2439, %v2490
      %v2496 = vadd.f32 %v2440, %v2492
      %2497 = vrot.lane.b32.xlu0 %v1091, 14
      %v2498 = vpop.permute.xlu0 %2497
      %2499 = vrot.lane.b32.xlu0 %v1092, 14
      %v2500 = vpop.permute.xlu0 %2499
      %v2503 = vsub.f32 %v205, %v2498
      %v2504 = vsub.f32 %v206, %v2500
      %2505 = vrot.lane.b32.xlu0 %v1743, 14
      %v2506 = vpop.permute.xlu0 %2505
      %2507 = vrot.lane.b32.xlu0 %v1744, 14
      %v2508 = vpop.permute.xlu0 %2507
      %v2511 = vsub.f32 %v1399, %v2506
      %v2512 = vsub.f32 %v1400, %v2508
      %v2513 = vmul.f32 %v215, %v2503
      %v2514 = vmul.f32 %v215, %v2504
      %v2515 = vmul.f32 %v2513, %v2511
      %v2516 = vmul.f32 %v2514, %v2512
      %2519 = vrot.lane.b32.xlu0 %v2515, 114
      %v2520 = vpop.permute.xlu0 %2519
      %2521 = vrot.lane.b32.xlu0 %v2516, 114
      %v2522 = vpop.permute.xlu0 %2521
      %v2525 = vadd.f32 %v2469, %v2520
      %v2526 = vadd.f32 %v2470, %v2522
      %v2527 = vmul.f32 %v2513, %v2503
      %v2528 = vmul.f32 %v2514, %v2504
      %2531 = vrot.lane.b32.xlu0 %v2527, 114
      %v2532 = vpop.permute.xlu0 %2531
      %2533 = vrot.lane.b32.xlu0 %v2528, 114
      %v2534 = vpop.permute.xlu0 %2533
      %v2537 = vadd.f32 %v2481, %v2532
      %v2538 = vadd.f32 %v2482, %v2534
      %v2539 = vmul.f32 %v215, %v2511
      %v2540 = vmul.f32 %v215, %v2512
      %v2541 = vmul.f32 %v2539, %v2511
      %v2542 = vmul.f32 %v2540, %v2512
      %2545 = vrot.lane.b32.xlu0 %v2541, 114
      %v2546 = vpop.permute.xlu0 %2545
      %2547 = vrot.lane.b32.xlu0 %v2542, 114
      %v2548 = vpop.permute.xlu0 %2547
      %v2551 = vadd.f32 %v2495, %v2546
      %v2552 = vadd.f32 %v2496, %v2548
      %2553 = vrot.lane.b32.xlu0 %v1091, 15
      %v2554 = vpop.permute.xlu0 %2553
      %2555 = vrot.lane.b32.xlu0 %v1092, 15
      %v2556 = vpop.permute.xlu0 %2555
      %v2559 = vsub.f32 %v205, %v2554
      %v2560 = vsub.f32 %v206, %v2556
      %2561 = vrot.lane.b32.xlu0 %v1743, 15
      %v2562 = vpop.permute.xlu0 %2561
      %2563 = vrot.lane.b32.xlu0 %v1744, 15
      %v2564 = vpop.permute.xlu0 %2563
      %v2567 = vsub.f32 %v1421, %v2562
      %v2568 = vsub.f32 %v1422, %v2564
      %v2569 = vmul.f32 %v215, %v2559
      %v2570 = vmul.f32 %v215, %v2560
      %v2571 = vmul.f32 %v2569, %v2567
      %v2572 = vmul.f32 %v2570, %v2568
      %2575 = vrot.lane.b32.xlu0 %v2571, 113
      %v2576 = vpop.permute.xlu0 %2575
      %2577 = vrot.lane.b32.xlu0 %v2572, 113
      %v2578 = vpop.permute.xlu0 %2577
      %v2581 = vadd.f32 %v2525, %v2576
      %v2582 = vadd.f32 %v2526, %v2578
      %v2583 = vmul.f32 %v2569, %v2559
      %v2584 = vmul.f32 %v2570, %v2560
      %2587 = vrot.lane.b32.xlu0 %v2583, 113
      %v2588 = vpop.permute.xlu0 %2587
      %2589 = vrot.lane.b32.xlu0 %v2584, 113
      %v2590 = vpop.permute.xlu0 %2589
      %v2593 = vadd.f32 %v2537, %v2588
      %v2594 = vadd.f32 %v2538, %v2590
      %v2595 = vmul.f32 %v215, %v2567
      %v2596 = vmul.f32 %v215, %v2568
      %v2597 = vmul.f32 %v2595, %v2567
      %v2598 = vmul.f32 %v2596, %v2568
      %2601 = vrot.lane.b32.xlu0 %v2597, 113
      %v2602 = vpop.permute.xlu0 %2601
      %2603 = vrot.lane.b32.xlu0 %v2598, 113
      %v2604 = vpop.permute.xlu0 %2603
      %v2607 = vadd.f32 %v2551, %v2602
      %v2608 = vadd.f32 %v2552, %v2604
      %2609 = vrot.lane.b32.xlu0 %v1091, 16
      %v2610 = vpop.permute.xlu0 %2609
      %2611 = vrot.lane.b32.xlu0 %v1092, 16
      %v2612 = vpop.permute.xlu0 %2611
      %v2615 = vsub.f32 %v205, %v2610
      %v2616 = vsub.f32 %v206, %v2612
      %2617 = vrot.lane.b32.xlu0 %v1743, 16
      %v2618 = vpop.permute.xlu0 %2617
      %2619 = vrot.lane.b32.xlu0 %v1744, 16
      %v2620 = vpop.permute.xlu0 %2619
      %v2623 = vsub.f32 %v1443, %v2618
      %v2624 = vsub.f32 %v1444, %v2620
      %v2625 = vmul.f32 %v215, %v2615
      %v2626 = vmul.f32 %v215, %v2616
      %v2627 = vmul.f32 %v2625, %v2623
      %v2628 = vmul.f32 %v2626, %v2624
      %2631 = vrot.lane.b32.xlu0 %v2627, 112
      %v2632 = vpop.permute.xlu0 %2631
      %2633 = vrot.lane.b32.xlu0 %v2628, 112
      %v2634 = vpop.permute.xlu0 %2633
      %v2637 = vadd.f32 %v2581, %v2632
      %v2638 = vadd.f32 %v2582, %v2634
      %v2639 = vmul.f32 %v2625, %v2615
      %v2640 = vmul.f32 %v2626, %v2616
      %2643 = vrot.lane.b32.xlu0 %v2639, 112
      %v2644 = vpop.permute.xlu0 %2643
      %2645 = vrot.lane.b32.xlu0 %v2640, 112
      %v2646 = vpop.permute.xlu0 %2645
      %v2649 = vadd.f32 %v2593, %v2644
      %v2650 = vadd.f32 %v2594, %v2646
      %v2651 = vmul.f32 %v215, %v2623
      %v2652 = vmul.f32 %v215, %v2624
      %v2653 = vmul.f32 %v2651, %v2623
      %v2654 = vmul.f32 %v2652, %v2624
      %2657 = vrot.lane.b32.xlu0 %v2653, 112
      %v2658 = vpop.permute.xlu0 %2657
      %2659 = vrot.lane.b32.xlu0 %v2654, 112
      %v2660 = vpop.permute.xlu0 %2659
      %v2663 = vadd.f32 %v2607, %v2658
      %v2664 = vadd.f32 %v2608, %v2660
      %2665 = vrot.lane.b32.xlu0 %v1091, 17
      %v2666 = vpop.permute.xlu0 %2665
      %2667 = vrot.lane.b32.xlu0 %v1092, 17
      %v2668 = vpop.permute.xlu0 %2667
      %v2671 = vsub.f32 %v205, %v2666
      %v2672 = vsub.f32 %v206, %v2668
      %2673 = vrot.lane.b32.xlu0 %v1743, 17
      %v2674 = vpop.permute.xlu0 %2673
      %2675 = vrot.lane.b32.xlu0 %v1744, 17
      %v2676 = vpop.permute.xlu0 %2675
      %v2679 = vsub.f32 %v1465, %v2674
      %v2680 = vsub.f32 %v1466, %v2676
      %v2681 = vmul.f32 %v215, %v2671
      %v2682 = vmul.f32 %v215, %v2672
      %v2683 = vmul.f32 %v2681, %v2679
      %v2684 = vmul.f32 %v2682, %v2680
      %2687 = vrot.lane.b32.xlu0 %v2683, 111
      %v2688 = vpop.permute.xlu0 %2687
      %2689 = vrot.lane.b32.xlu0 %v2684, 111
      %v2690 = vpop.permute.xlu0 %2689
      %v2693 = vadd.f32 %v2637, %v2688
      %v2694 = vadd.f32 %v2638, %v2690
      %v2695 = vmul.f32 %v2681, %v2671
      %v2696 = vmul.f32 %v2682, %v2672
      %2699 = vrot.lane.b32.xlu0 %v2695, 111
      %v2700 = vpop.permute.xlu0 %2699
      %2701 = vrot.lane.b32.xlu0 %v2696, 111
      %v2702 = vpop.permute.xlu0 %2701
      %v2705 = vadd.f32 %v2649, %v2700
      %v2706 = vadd.f32 %v2650, %v2702
      %v2707 = vmul.f32 %v215, %v2679
      %v2708 = vmul.f32 %v215, %v2680
      %v2709 = vmul.f32 %v2707, %v2679
      %v2710 = vmul.f32 %v2708, %v2680
      %2713 = vrot.lane.b32.xlu0 %v2709, 111
      %v2714 = vpop.permute.xlu0 %2713
      %2715 = vrot.lane.b32.xlu0 %v2710, 111
      %v2716 = vpop.permute.xlu0 %2715
      %v2719 = vadd.f32 %v2663, %v2714
      %v2720 = vadd.f32 %v2664, %v2716
      %2721 = vrot.lane.b32.xlu0 %v1091, 18
      %v2722 = vpop.permute.xlu0 %2721
      %2723 = vrot.lane.b32.xlu0 %v1092, 18
      %v2724 = vpop.permute.xlu0 %2723
      %v2727 = vsub.f32 %v205, %v2722
      %v2728 = vsub.f32 %v206, %v2724
      %2729 = vrot.lane.b32.xlu0 %v1743, 18
      %v2730 = vpop.permute.xlu0 %2729
      %2731 = vrot.lane.b32.xlu0 %v1744, 18
      %v2732 = vpop.permute.xlu0 %2731
      %v2735 = vsub.f32 %v1487, %v2730
      %v2736 = vsub.f32 %v1488, %v2732
      %v2737 = vmul.f32 %v215, %v2727
      %v2738 = vmul.f32 %v215, %v2728
      %v2739 = vmul.f32 %v2737, %v2735
      %v2740 = vmul.f32 %v2738, %v2736
      %2743 = vrot.lane.b32.xlu0 %v2739, 110
      %v2744 = vpop.permute.xlu0 %2743
      %2745 = vrot.lane.b32.xlu0 %v2740, 110
      %v2746 = vpop.permute.xlu0 %2745
      %v2749 = vadd.f32 %v2693, %v2744
      %v2750 = vadd.f32 %v2694, %v2746
      %v2751 = vmul.f32 %v2737, %v2727
      %v2752 = vmul.f32 %v2738, %v2728
      %2755 = vrot.lane.b32.xlu0 %v2751, 110
      %v2756 = vpop.permute.xlu0 %2755
      %2757 = vrot.lane.b32.xlu0 %v2752, 110
      %v2758 = vpop.permute.xlu0 %2757
      %v2761 = vadd.f32 %v2705, %v2756
      %v2762 = vadd.f32 %v2706, %v2758
      %v2763 = vmul.f32 %v215, %v2735
      %v2764 = vmul.f32 %v215, %v2736
      %v2765 = vmul.f32 %v2763, %v2735
      %v2766 = vmul.f32 %v2764, %v2736
      %2769 = vrot.lane.b32.xlu0 %v2765, 110
      %v2770 = vpop.permute.xlu0 %2769
      %2771 = vrot.lane.b32.xlu0 %v2766, 110
      %v2772 = vpop.permute.xlu0 %2771
      %v2775 = vadd.f32 %v2719, %v2770
      %v2776 = vadd.f32 %v2720, %v2772
      %2777 = vrot.lane.b32.xlu0 %v1091, 19
      %v2778 = vpop.permute.xlu0 %2777
      %2779 = vrot.lane.b32.xlu0 %v1092, 19
      %v2780 = vpop.permute.xlu0 %2779
      %v2783 = vsub.f32 %v205, %v2778
      %v2784 = vsub.f32 %v206, %v2780
      %2785 = vrot.lane.b32.xlu0 %v1743, 19
      %v2786 = vpop.permute.xlu0 %2785
      %2787 = vrot.lane.b32.xlu0 %v1744, 19
      %v2788 = vpop.permute.xlu0 %2787
      %v2791 = vsub.f32 %v1509, %v2786
      %v2792 = vsub.f32 %v1510, %v2788
      %v2793 = vmul.f32 %v215, %v2783
      %v2794 = vmul.f32 %v215, %v2784
      %v2795 = vmul.f32 %v2793, %v2791
      %v2796 = vmul.f32 %v2794, %v2792
      %2799 = vrot.lane.b32.xlu0 %v2795, 109
      %v2800 = vpop.permute.xlu0 %2799
      %2801 = vrot.lane.b32.xlu0 %v2796, 109
      %v2802 = vpop.permute.xlu0 %2801
      %v2805 = vadd.f32 %v2749, %v2800
      %v2806 = vadd.f32 %v2750, %v2802
      %v2807 = vmul.f32 %v2793, %v2783
      %v2808 = vmul.f32 %v2794, %v2784
      %2811 = vrot.lane.b32.xlu0 %v2807, 109
      %v2812 = vpop.permute.xlu0 %2811
      %2813 = vrot.lane.b32.xlu0 %v2808, 109
      %v2814 = vpop.permute.xlu0 %2813
      %v2817 = vadd.f32 %v2761, %v2812
      %v2818 = vadd.f32 %v2762, %v2814
      %v2819 = vmul.f32 %v215, %v2791
      %v2820 = vmul.f32 %v215, %v2792
      %v2821 = vmul.f32 %v2819, %v2791
      %v2822 = vmul.f32 %v2820, %v2792
      %2825 = vrot.lane.b32.xlu0 %v2821, 109
      %v2826 = vpop.permute.xlu0 %2825
      %2827 = vrot.lane.b32.xlu0 %v2822, 109
      %v2828 = vpop.permute.xlu0 %2827
      %v2831 = vadd.f32 %v2775, %v2826
      %v2832 = vadd.f32 %v2776, %v2828
      %2833 = vrot.lane.b32.xlu0 %v1091, 20
      %v2834 = vpop.permute.xlu0 %2833
      %2835 = vrot.lane.b32.xlu0 %v1092, 20
      %v2836 = vpop.permute.xlu0 %2835
      %v2839 = vsub.f32 %v205, %v2834
      %v2840 = vsub.f32 %v206, %v2836
      %2841 = vrot.lane.b32.xlu0 %v1743, 20
      %v2842 = vpop.permute.xlu0 %2841
      %2843 = vrot.lane.b32.xlu0 %v1744, 20
      %v2844 = vpop.permute.xlu0 %2843
      %v2847 = vsub.f32 %v1531, %v2842
      %v2848 = vsub.f32 %v1532, %v2844
      %v2849 = vmul.f32 %v215, %v2839
      %v2850 = vmul.f32 %v215, %v2840
      %v2851 = vmul.f32 %v2849, %v2847
      %v2852 = vmul.f32 %v2850, %v2848
      %2855 = vrot.lane.b32.xlu0 %v2851, 108
      %v2856 = vpop.permute.xlu0 %2855
      %2857 = vrot.lane.b32.xlu0 %v2852, 108
      %v2858 = vpop.permute.xlu0 %2857
      %v2861 = vadd.f32 %v2805, %v2856
      %v2862 = vadd.f32 %v2806, %v2858
      %v2863 = vmul.f32 %v2849, %v2839
      %v2864 = vmul.f32 %v2850, %v2840
      %2867 = vrot.lane.b32.xlu0 %v2863, 108
      %v2868 = vpop.permute.xlu0 %2867
      %2869 = vrot.lane.b32.xlu0 %v2864, 108
      %v2870 = vpop.permute.xlu0 %2869
      %v2873 = vadd.f32 %v2817, %v2868
      %v2874 = vadd.f32 %v2818, %v2870
      %v2875 = vmul.f32 %v215, %v2847
      %v2876 = vmul.f32 %v215, %v2848
      %v2877 = vmul.f32 %v2875, %v2847
      %v2878 = vmul.f32 %v2876, %v2848
      %2881 = vrot.lane.b32.xlu0 %v2877, 108
      %v2882 = vpop.permute.xlu0 %2881
      %2883 = vrot.lane.b32.xlu0 %v2878, 108
      %v2884 = vpop.permute.xlu0 %2883
      %v2887 = vadd.f32 %v2831, %v2882
      %v2888 = vadd.f32 %v2832, %v2884
      %2889 = vrot.lane.b32.xlu0 %v1091, 21
      %v2890 = vpop.permute.xlu0 %2889
      %2891 = vrot.lane.b32.xlu0 %v1092, 21
      %v2892 = vpop.permute.xlu0 %2891
      %v2895 = vsub.f32 %v205, %v2890
      %v2896 = vsub.f32 %v206, %v2892
      %2897 = vrot.lane.b32.xlu0 %v1743, 21
      %v2898 = vpop.permute.xlu0 %2897
      %2899 = vrot.lane.b32.xlu0 %v1744, 21
      %v2900 = vpop.permute.xlu0 %2899
      %v2903 = vsub.f32 %v1553, %v2898
      %v2904 = vsub.f32 %v1554, %v2900
      %v2905 = vmul.f32 %v215, %v2895
      %v2906 = vmul.f32 %v215, %v2896
      %v2907 = vmul.f32 %v2905, %v2903
      %v2908 = vmul.f32 %v2906, %v2904
      %2911 = vrot.lane.b32.xlu0 %v2907, 107
      %v2912 = vpop.permute.xlu0 %2911
      %2913 = vrot.lane.b32.xlu0 %v2908, 107
      %v2914 = vpop.permute.xlu0 %2913
      %v2917 = vadd.f32 %v2861, %v2912
      %v2918 = vadd.f32 %v2862, %v2914
      %v2919 = vmul.f32 %v2905, %v2895
      %v2920 = vmul.f32 %v2906, %v2896
      %2923 = vrot.lane.b32.xlu0 %v2919, 107
      %v2924 = vpop.permute.xlu0 %2923
      %2925 = vrot.lane.b32.xlu0 %v2920, 107
      %v2926 = vpop.permute.xlu0 %2925
      %v2929 = vadd.f32 %v2873, %v2924
      %v2930 = vadd.f32 %v2874, %v2926
      %v2931 = vmul.f32 %v215, %v2903
      %v2932 = vmul.f32 %v215, %v2904
      %v2933 = vmul.f32 %v2931, %v2903
      %v2934 = vmul.f32 %v2932, %v2904
      %2937 = vrot.lane.b32.xlu0 %v2933, 107
      %v2938 = vpop.permute.xlu0 %2937
      %2939 = vrot.lane.b32.xlu0 %v2934, 107
      %v2940 = vpop.permute.xlu0 %2939
      %v2943 = vadd.f32 %v2887, %v2938
      %v2944 = vadd.f32 %v2888, %v2940
      %2945 = vrot.lane.b32.xlu0 %v1091, 22
      %v2946 = vpop.permute.xlu0 %2945
      %2947 = vrot.lane.b32.xlu0 %v1092, 22
      %v2948 = vpop.permute.xlu0 %2947
      %v2951 = vsub.f32 %v205, %v2946
      %v2952 = vsub.f32 %v206, %v2948
      %2953 = vrot.lane.b32.xlu0 %v1743, 22
      %v2954 = vpop.permute.xlu0 %2953
      %2955 = vrot.lane.b32.xlu0 %v1744, 22
      %v2956 = vpop.permute.xlu0 %2955
      %v2959 = vsub.f32 %v1575, %v2954
      %v2960 = vsub.f32 %v1576, %v2956
      %v2961 = vmul.f32 %v215, %v2951
      %v2962 = vmul.f32 %v215, %v2952
      %v2963 = vmul.f32 %v2961, %v2959
      %v2964 = vmul.f32 %v2962, %v2960
      %2967 = vrot.lane.b32.xlu0 %v2963, 106
      %v2968 = vpop.permute.xlu0 %2967
      %2969 = vrot.lane.b32.xlu0 %v2964, 106
      %v2970 = vpop.permute.xlu0 %2969
      %v2973 = vadd.f32 %v2917, %v2968
      %v2974 = vadd.f32 %v2918, %v2970
      %v2975 = vmul.f32 %v2961, %v2951
      %v2976 = vmul.f32 %v2962, %v2952
      %2979 = vrot.lane.b32.xlu0 %v2975, 106
      %v2980 = vpop.permute.xlu0 %2979
      %2981 = vrot.lane.b32.xlu0 %v2976, 106
      %v2982 = vpop.permute.xlu0 %2981
      %v2985 = vadd.f32 %v2929, %v2980
      %v2986 = vadd.f32 %v2930, %v2982
      %v2987 = vmul.f32 %v215, %v2959
      %v2988 = vmul.f32 %v215, %v2960
      %v2989 = vmul.f32 %v2987, %v2959
      %v2990 = vmul.f32 %v2988, %v2960
      %2993 = vrot.lane.b32.xlu0 %v2989, 106
      %v2994 = vpop.permute.xlu0 %2993
      %2995 = vrot.lane.b32.xlu0 %v2990, 106
      %v2996 = vpop.permute.xlu0 %2995
      %v2999 = vadd.f32 %v2943, %v2994
      %v3000 = vadd.f32 %v2944, %v2996
      %3001 = vrot.lane.b32.xlu0 %v1091, 23
      %v3002 = vpop.permute.xlu0 %3001
      %3003 = vrot.lane.b32.xlu0 %v1092, 23
      %v3004 = vpop.permute.xlu0 %3003
      %v3007 = vsub.f32 %v205, %v3002
      %v3008 = vsub.f32 %v206, %v3004
      %3009 = vrot.lane.b32.xlu0 %v1743, 23
      %v3010 = vpop.permute.xlu0 %3009
      %3011 = vrot.lane.b32.xlu0 %v1744, 23
      %v3012 = vpop.permute.xlu0 %3011
      %v3015 = vsub.f32 %v1597, %v3010
      %v3016 = vsub.f32 %v1598, %v3012
      %v3017 = vmul.f32 %v215, %v3007
      %v3018 = vmul.f32 %v215, %v3008
      %v3019 = vmul.f32 %v3017, %v3015
      %v3020 = vmul.f32 %v3018, %v3016
      %3023 = vrot.lane.b32.xlu0 %v3019, 105
      %v3024 = vpop.permute.xlu0 %3023
      %3025 = vrot.lane.b32.xlu0 %v3020, 105
      %v3026 = vpop.permute.xlu0 %3025
      %v3029 = vadd.f32 %v2973, %v3024
      %v3030 = vadd.f32 %v2974, %v3026
      %v3031 = vmul.f32 %v3017, %v3007
      %v3032 = vmul.f32 %v3018, %v3008
      %3035 = vrot.lane.b32.xlu0 %v3031, 105
      %v3036 = vpop.permute.xlu0 %3035
      %3037 = vrot.lane.b32.xlu0 %v3032, 105
      %v3038 = vpop.permute.xlu0 %3037
      %v3041 = vadd.f32 %v2985, %v3036
      %v3042 = vadd.f32 %v2986, %v3038
      %v3043 = vmul.f32 %v215, %v3015
      %v3044 = vmul.f32 %v215, %v3016
      %v3045 = vmul.f32 %v3043, %v3015
      %v3046 = vmul.f32 %v3044, %v3016
      %3049 = vrot.lane.b32.xlu0 %v3045, 105
      %v3050 = vpop.permute.xlu0 %3049
      %3051 = vrot.lane.b32.xlu0 %v3046, 105
      %v3052 = vpop.permute.xlu0 %3051
      %v3055 = vadd.f32 %v2999, %v3050
      %v3056 = vadd.f32 %v3000, %v3052
      %3057 = vrot.lane.b32.xlu0 %v1091, 24
      %v3058 = vpop.permute.xlu0 %3057
      %3059 = vrot.lane.b32.xlu0 %v1092, 24
      %v3060 = vpop.permute.xlu0 %3059
      %v3063 = vsub.f32 %v205, %v3058
      %v3064 = vsub.f32 %v206, %v3060
      %3065 = vrot.lane.b32.xlu0 %v1743, 24
      %v3066 = vpop.permute.xlu0 %3065
      %3067 = vrot.lane.b32.xlu0 %v1744, 24
      %v3068 = vpop.permute.xlu0 %3067
      %v3071 = vsub.f32 %v1619, %v3066
      %v3072 = vsub.f32 %v1620, %v3068
      %v3073 = vmul.f32 %v215, %v3063
      %v3074 = vmul.f32 %v215, %v3064
      %v3075 = vmul.f32 %v3073, %v3071
      %v3076 = vmul.f32 %v3074, %v3072
      %3079 = vrot.lane.b32.xlu0 %v3075, 104
      %v3080 = vpop.permute.xlu0 %3079
      %3081 = vrot.lane.b32.xlu0 %v3076, 104
      %v3082 = vpop.permute.xlu0 %3081
      %v3085 = vadd.f32 %v3029, %v3080
      %v3086 = vadd.f32 %v3030, %v3082
      %v3087 = vmul.f32 %v3073, %v3063
      %v3088 = vmul.f32 %v3074, %v3064
      %3091 = vrot.lane.b32.xlu0 %v3087, 104
      %v3092 = vpop.permute.xlu0 %3091
      %3093 = vrot.lane.b32.xlu0 %v3088, 104
      %v3094 = vpop.permute.xlu0 %3093
      %v3097 = vadd.f32 %v3041, %v3092
      %v3098 = vadd.f32 %v3042, %v3094
      %v3099 = vmul.f32 %v215, %v3071
      %v3100 = vmul.f32 %v215, %v3072
      %v3101 = vmul.f32 %v3099, %v3071
      %v3102 = vmul.f32 %v3100, %v3072
      %3105 = vrot.lane.b32.xlu0 %v3101, 104
      %v3106 = vpop.permute.xlu0 %3105
      %3107 = vrot.lane.b32.xlu0 %v3102, 104
      %v3108 = vpop.permute.xlu0 %3107
      %v3111 = vadd.f32 %v3055, %v3106
      %v3112 = vadd.f32 %v3056, %v3108
      %3113 = vrot.lane.b32.xlu0 %v1091, 25
      %v3114 = vpop.permute.xlu0 %3113
      %3115 = vrot.lane.b32.xlu0 %v1092, 25
      %v3116 = vpop.permute.xlu0 %3115
      %v3119 = vsub.f32 %v205, %v3114
      %v3120 = vsub.f32 %v206, %v3116
      %3121 = vrot.lane.b32.xlu0 %v1743, 25
      %v3122 = vpop.permute.xlu0 %3121
      %3123 = vrot.lane.b32.xlu0 %v1744, 25
      %v3124 = vpop.permute.xlu0 %3123
      %v3127 = vsub.f32 %v1641, %v3122
      %v3128 = vsub.f32 %v1642, %v3124
      %v3129 = vmul.f32 %v215, %v3119
      %v3130 = vmul.f32 %v215, %v3120
      %v3131 = vmul.f32 %v3129, %v3127
      %v3132 = vmul.f32 %v3130, %v3128
      %3135 = vrot.lane.b32.xlu0 %v3131, 103
      %v3136 = vpop.permute.xlu0 %3135
      %3137 = vrot.lane.b32.xlu0 %v3132, 103
      %v3138 = vpop.permute.xlu0 %3137
      %v3141 = vadd.f32 %v3085, %v3136
      %v3142 = vadd.f32 %v3086, %v3138
      %v3143 = vmul.f32 %v3129, %v3119
      %v3144 = vmul.f32 %v3130, %v3120
      %3147 = vrot.lane.b32.xlu0 %v3143, 103
      %v3148 = vpop.permute.xlu0 %3147
      %3149 = vrot.lane.b32.xlu0 %v3144, 103
      %v3150 = vpop.permute.xlu0 %3149
      %v3153 = vadd.f32 %v3097, %v3148
      %v3154 = vadd.f32 %v3098, %v3150
      %v3155 = vmul.f32 %v215, %v3127
      %v3156 = vmul.f32 %v215, %v3128
      %v3157 = vmul.f32 %v3155, %v3127
      %v3158 = vmul.f32 %v3156, %v3128
      %3161 = vrot.lane.b32.xlu0 %v3157, 103
      %v3162 = vpop.permute.xlu0 %3161
      %3163 = vrot.lane.b32.xlu0 %v3158, 103
      %v3164 = vpop.permute.xlu0 %3163
      %v3167 = vadd.f32 %v3111, %v3162
      %v3168 = vadd.f32 %v3112, %v3164
      %3169 = vrot.lane.b32.xlu0 %v1091, 26
      %v3170 = vpop.permute.xlu0 %3169
      %3171 = vrot.lane.b32.xlu0 %v1092, 26
      %v3172 = vpop.permute.xlu0 %3171
      %v3175 = vsub.f32 %v205, %v3170
      %v3176 = vsub.f32 %v206, %v3172
      %3177 = vrot.lane.b32.xlu0 %v1743, 26
      %v3178 = vpop.permute.xlu0 %3177
      %3179 = vrot.lane.b32.xlu0 %v1744, 26
      %v3180 = vpop.permute.xlu0 %3179
      %v3183 = vsub.f32 %v1663, %v3178
      %v3184 = vsub.f32 %v1664, %v3180
      %v3185 = vmul.f32 %v215, %v3175
      %v3186 = vmul.f32 %v215, %v3176
      %v3187 = vmul.f32 %v3185, %v3183
      %v3188 = vmul.f32 %v3186, %v3184
      %3191 = vrot.lane.b32.xlu0 %v3187, 102
      %v3192 = vpop.permute.xlu0 %3191
      %3193 = vrot.lane.b32.xlu0 %v3188, 102
      %v3194 = vpop.permute.xlu0 %3193
      %v3197 = vadd.f32 %v3141, %v3192
      %v3198 = vadd.f32 %v3142, %v3194
      %v3199 = vmul.f32 %v3185, %v3175
      %v3200 = vmul.f32 %v3186, %v3176
      %3203 = vrot.lane.b32.xlu0 %v3199, 102
      %v3204 = vpop.permute.xlu0 %3203
      %3205 = vrot.lane.b32.xlu0 %v3200, 102
      %v3206 = vpop.permute.xlu0 %3205
      %v3209 = vadd.f32 %v3153, %v3204
      %v3210 = vadd.f32 %v3154, %v3206
      %v3211 = vmul.f32 %v215, %v3183
      %v3212 = vmul.f32 %v215, %v3184
      %v3213 = vmul.f32 %v3211, %v3183
      %v3214 = vmul.f32 %v3212, %v3184
      %3217 = vrot.lane.b32.xlu0 %v3213, 102
      %v3218 = vpop.permute.xlu0 %3217
      %3219 = vrot.lane.b32.xlu0 %v3214, 102
      %v3220 = vpop.permute.xlu0 %3219
      %v3223 = vadd.f32 %v3167, %v3218
      %v3224 = vadd.f32 %v3168, %v3220
      %3225 = vrot.lane.b32.xlu0 %v1091, 27
      %v3226 = vpop.permute.xlu0 %3225
      %3227 = vrot.lane.b32.xlu0 %v1092, 27
      %v3228 = vpop.permute.xlu0 %3227
      %v3231 = vsub.f32 %v205, %v3226
      %v3232 = vsub.f32 %v206, %v3228
      %3233 = vrot.lane.b32.xlu0 %v1743, 27
      %v3234 = vpop.permute.xlu0 %3233
      %3235 = vrot.lane.b32.xlu0 %v1744, 27
      %v3236 = vpop.permute.xlu0 %3235
      %v3239 = vsub.f32 %v1685, %v3234
      %v3240 = vsub.f32 %v1686, %v3236
      %v3241 = vmul.f32 %v215, %v3231
      %v3242 = vmul.f32 %v215, %v3232
      %v3243 = vmul.f32 %v3241, %v3239
      %v3244 = vmul.f32 %v3242, %v3240
      %3247 = vrot.lane.b32.xlu0 %v3243, 101
      %v3248 = vpop.permute.xlu0 %3247
      %3249 = vrot.lane.b32.xlu0 %v3244, 101
      %v3250 = vpop.permute.xlu0 %3249
      %v3253 = vadd.f32 %v3197, %v3248
      %v3254 = vadd.f32 %v3198, %v3250
      %v3255 = vmul.f32 %v3241, %v3231
      %v3256 = vmul.f32 %v3242, %v3232
      %3259 = vrot.lane.b32.xlu0 %v3255, 101
      %v3260 = vpop.permute.xlu0 %3259
      %3261 = vrot.lane.b32.xlu0 %v3256, 101
      %v3262 = vpop.permute.xlu0 %3261
      %v3265 = vadd.f32 %v3209, %v3260
      %v3266 = vadd.f32 %v3210, %v3262
      %v3267 = vmul.f32 %v215, %v3239
      %v3268 = vmul.f32 %v215, %v3240
      %v3269 = vmul.f32 %v3267, %v3239
      %v3270 = vmul.f32 %v3268, %v3240
      %3273 = vrot.lane.b32.xlu0 %v3269, 101
      %v3274 = vpop.permute.xlu0 %3273
      %3275 = vrot.lane.b32.xlu0 %v3270, 101
      %v3276 = vpop.permute.xlu0 %3275
      %v3279 = vadd.f32 %v3223, %v3274
      %v3280 = vadd.f32 %v3224, %v3276
      %3281 = vrot.lane.b32.xlu0 %v1091, 28
      %v3282 = vpop.permute.xlu0 %3281
      %3283 = vrot.lane.b32.xlu0 %v1092, 28
      %v3284 = vpop.permute.xlu0 %3283
      %v3287 = vsub.f32 %v205, %v3282
      %v3288 = vsub.f32 %v206, %v3284
      %3289 = vrot.lane.b32.xlu0 %v1743, 28
      %v3290 = vpop.permute.xlu0 %3289
      %3291 = vrot.lane.b32.xlu0 %v1744, 28
      %v3292 = vpop.permute.xlu0 %3291
      %v3295 = vsub.f32 %v1707, %v3290
      %v3296 = vsub.f32 %v1708, %v3292
      %v3297 = vmul.f32 %v215, %v3287
      %v3298 = vmul.f32 %v215, %v3288
      %v3299 = vmul.f32 %v3297, %v3295
      %v3300 = vmul.f32 %v3298, %v3296
      %3303 = vrot.lane.b32.xlu0 %v3299, 100
      %v3304 = vpop.permute.xlu0 %3303
      %3305 = vrot.lane.b32.xlu0 %v3300, 100
      %v3306 = vpop.permute.xlu0 %3305
      %v3309 = vadd.f32 %v3253, %v3304
      %v3310 = vadd.f32 %v3254, %v3306
      %v3311 = vmul.f32 %v3297, %v3287
      %v3312 = vmul.f32 %v3298, %v3288
      %3315 = vrot.lane.b32.xlu0 %v3311, 100
      %v3316 = vpop.permute.xlu0 %3315
      %3317 = vrot.lane.b32.xlu0 %v3312, 100
      %v3318 = vpop.permute.xlu0 %3317
      %v3321 = vadd.f32 %v3265, %v3316
      %v3322 = vadd.f32 %v3266, %v3318
      %v3323 = vmul.f32 %v215, %v3295
      %v3324 = vmul.f32 %v215, %v3296
      %v3325 = vmul.f32 %v3323, %v3295
      %v3326 = vmul.f32 %v3324, %v3296
      %3329 = vrot.lane.b32.xlu0 %v3325, 100
      %v3330 = vpop.permute.xlu0 %3329
      %3331 = vrot.lane.b32.xlu0 %v3326, 100
      %v3332 = vpop.permute.xlu0 %3331
      %v3335 = vadd.f32 %v3279, %v3330
      %v3336 = vadd.f32 %v3280, %v3332
      %3337 = vrot.lane.b32.xlu0 %v1091, 29
      %v3338 = vpop.permute.xlu0 %3337
      %3339 = vrot.lane.b32.xlu0 %v1092, 29
      %v3340 = vpop.permute.xlu0 %3339
      %v3343 = vsub.f32 %v205, %v3338
      %v3344 = vsub.f32 %v206, %v3340
      %3345 = vrot.lane.b32.xlu0 %v1743, 29
      %v3346 = vpop.permute.xlu0 %3345
      %3347 = vrot.lane.b32.xlu0 %v1744, 29
      %v3348 = vpop.permute.xlu0 %3347
      %v3351 = vsub.f32 %v1729, %v3346
      %v3352 = vsub.f32 %v1730, %v3348
      %v3353 = vmul.f32 %v215, %v3343
      %v3354 = vmul.f32 %v215, %v3344
      %v3355 = vmul.f32 %v3353, %v3351
      %v3356 = vmul.f32 %v3354, %v3352
      %3359 = vrot.lane.b32.xlu0 %v3355, 99
      %v3360 = vpop.permute.xlu0 %3359
      %3361 = vrot.lane.b32.xlu0 %v3356, 99
      %v3362 = vpop.permute.xlu0 %3361
      %v3365 = vadd.f32 %v3309, %v3360
      %v3366 = vadd.f32 %v3310, %v3362
      %v3367 = vmul.f32 %v3353, %v3343
      %v3368 = vmul.f32 %v3354, %v3344
      %3371 = vrot.lane.b32.xlu0 %v3367, 99
      %v3372 = vpop.permute.xlu0 %3371
      %3373 = vrot.lane.b32.xlu0 %v3368, 99
      %v3374 = vpop.permute.xlu0 %3373
      %v3377 = vadd.f32 %v3321, %v3372
      %v3378 = vadd.f32 %v3322, %v3374
      %v3379 = vmul.f32 %v215, %v3351
      %v3380 = vmul.f32 %v215, %v3352
      %v3381 = vmul.f32 %v3379, %v3351
      %v3382 = vmul.f32 %v3380, %v3352
      %3385 = vrot.lane.b32.xlu0 %v3381, 99
      %v3386 = vpop.permute.xlu0 %3385
      %3387 = vrot.lane.b32.xlu0 %v3382, 99
      %v3388 = vpop.permute.xlu0 %3387
      %v3391 = vadd.f32 %v3335, %v3386
      %v3392 = vadd.f32 %v3336, %v3388
      %v3393 = vrsqrt.pop %v3377
      %v3394 = vmul.f32 %v3377, %v3393
      %vm3395 = vcmp.eq.f32.partialorder %v3377, inf
      %v3396 = vsel %vm3395, %v3377, %v3394
      %vm3397 = vcmp.eq.f32.partialorder %v3377, 0.0
      %v3398 = vand.u32 %v3377, 2147483648
      %v3399 = vsel %vm3397, %v3398, %v3396
      %v3400 = vrsqrt.pop %v3378
      %v3401 = vmul.f32 %v3378, %v3400
      %vm3402 = vcmp.eq.f32.partialorder %v3378, inf
      %v3403 = vsel %vm3402, %v3378, %v3401
      %vm3404 = vcmp.eq.f32.partialorder %v3378, 0.0
      %v3405 = vand.u32 %v3378, 2147483648
      %v3406 = vsel %vm3404, %v3405, %v3403
      %v3407 = vadd.f32 %v3399, 1e-08
      %v3408 = vadd.f32 %v3406, 1e-08
      %v3409 = vrsqrt.pop %v3391
      %v3410 = vmul.f32 %v3391, %v3409
      %vm3411 = vcmp.eq.f32.partialorder %v3391, inf
      %v3412 = vsel %vm3411, %v3391, %v3410
      %vm3413 = vcmp.eq.f32.partialorder %v3391, 0.0
      %v3414 = vand.u32 %v3391, 2147483648
      %v3415 = vsel %vm3413, %v3414, %v3412
      %v3416 = vrsqrt.pop %v3392
      %v3417 = vmul.f32 %v3392, %v3416
      %vm3418 = vcmp.eq.f32.partialorder %v3392, inf
      %v3419 = vsel %vm3418, %v3392, %v3417
      %vm3420 = vcmp.eq.f32.partialorder %v3392, 0.0
      %v3421 = vand.u32 %v3392, 2147483648
      %v3422 = vsel %vm3420, %v3421, %v3419
      %v3423 = vadd.f32 %v3415, 1e-08
      %v3424 = vadd.f32 %v3422, 1e-08
      %v3425 = vmul.f32 %v3407, %v3423
      %v3426 = vmul.f32 %v3408, %v3424
      %v3427 = vrcp.pop %v3425
      %v3428 = vmul.f32 %v3365, %v3427
      %v3429 = vrcp.pop %v3426
      %v3430 = vmul.f32 %v3366, %v3429
      %vm3431 = vcmask 39936
      %3432 = vst.msk [vmem:[%s204] sm:$0xff] %vm3431, %v3428
      %vm3433 = vcmask 38912
      %3434 = vst.msk [vmem:[%s204 + $0x8] sm:$0x7f] %vm3433, %v3430
      %p3435 = scmp.lt.s32.totalorder %s14, 1
      %s3436 = scalar_select %p3435, %s14, 1
      %s3437 = smul.addr %s3436, 2
      %s3438 = smul.addr %s3437, 8
      %s3439 = scalar_lea.vmem %s3, %s3438
      // Predicated region
      $region33: #{_lambda_.3} parent=31 // pred_check
        %p3440 = pneg %p110
      $region34: #{_lambda_.3} parent=31 // pred_check_branch
        %3442 = sbr.rel (%p3440) target = $region36
      $region35: #{_lambda_.3} parent=31 // pred_region
        _
      $region36: #{_lambda_.3} parent=31 // pred_fallthru
        _
    $region32: #{_lambda_.3} parent=5 // pred_fallthru
      _
    %p3443 = scmp.le.s32.totalorder 2, %s9
    // Predicated region
    $region37: #{_lambda_.3} parent=5 // pred_check
      %p3444 = pneg %p3443
    $region38: #{_lambda_.3} parent=5 // pred_check_branch
      %3446 = sbr.rel (%p3444) target = $region40
    $region39: #{_lambda_.3} parent=5 // pred_region
      %s3447 = ssub.s32 %s9, 2
      // Predicated region
      $region41: #{_lambda_.3} parent=39 // pred_check
        %p3448 = pneg %p116
      $region42: #{_lambda_.3} parent=39 // pred_check_branch
        %3450 = sbr.rel (%p3448) target = $region44
      $region43: #{_lambda_.3} parent=39 // pred_region
        %p3451 = scmp.lt.s32.totalorder %s15, 1
        %s3452 = scalar_select %p3451, %s15, 1
        %s3453 = smul.addr %s3452, 2
        %s3454 = smul.addr %s3453, 8
        %s3455 = scalar_lea.vmem %s3, %s3454
      $region44: #{_lambda_.3} parent=39 // pred_fallthru
        _
    $region40: #{_lambda_.3} parent=5 // pred_fallthru
      _
  $region6: #{_lambda_.3} parent=0 // loop_footer
    %s13 = sadd.s32 1, %s9
  $region7: #{_lambda_.3} parent=0 // loop_footer_branch
    %8 = sbr.rel target = $region3
  $region8: #{_lambda_.3} parent=0 // loop_exit
    _

</llo_original>
